<compile_context>
chip_gen: v6e
topology: v6e:2x2x1
jax: 0.10.0
libtpu: 0.0.40
codegen_flags: <defaults>
</compile_context>

<pallas_src>
import jax
import jax.numpy as jnp
import numpy as np
from jax.experimental import pallas as pl
from jax.experimental.pallas import tpu as pltpu

# ---- small model config, consistent with the Decoder module structure ----
INPUT_DIM = 24            # PyTorch `input_dim`  (decoder output channels)
OUTPUT_DIM = 8            # PyTorch `output_dim` (decoder input channels)
EMB_DIM_DECODER = (8, 16, 32)
UPSAMPLE = (0, 1)         # len == len(EMB_DIM_DECODER) - 1
DILATION_GROWTH = 2
DEPTH_PER_RES_BLOCK = 2   # activation='relu', norm=None

_PAD = 8                                  # zero-border rows in the scratch
_DOT_PREC = jax.lax.Precision.HIGHEST     # exact f32 MXU matmuls


# ------------------------------ plan builder -------------------------------

def _build_plan(params):
    """Pack all weights into one slab and build a static per-layer plan.

    Activations are kept as a list of "phases": after u stride-2 upsamples the
    sequence x[P*m + p] is stored as P = 2**u per-phase arrays x_p[m] (each of
    per-phase length T0).  A conv tap at full-sequence offset `off` for output
    phase p reads input phase (p+off) % P at per-phase row shift (p+off) // P.
    """
    mats = []

    def add(mat):
        mats.append(np.asarray(mat, np.float32))
        return len(mats) - 1

    plan = []
    P = 1
    max_shift = 0
    max_cin = 0

    def phase_taps(P, offsets):
        nonlocal max_shift
        taps = []
        for p in range(P):
            tp = []
            for off in offsets:
                q = (p + off) % P
                s = (p + off) // P
                max_shift = max(max_shift, abs(s))
                tp.append((q, s))
            taps.append(tp)
        return taps

    def conv_entry(w_oik, bias, dilation, padding, P, pre_relu, post_relu):
        nonlocal max_cin
        w = np.asarray(w_oik, np.float32)                      # (cout, cin, K)
        cout, cin, K = w.shape
        max_cin = max(max_cin, cin)
        # prestack taps:  x_cat (T, K*cin) @ w_cat (K*cin, cout)
        w_cat = np.concatenate([w[:, :, k].T for k in range(K)], axis=0)
        offsets = [k * dilation - padding for k in range(K)]
        return dict(kind='conv', w=add(w_cat),
                    b=add(np.asarray(bias, np.float32).reshape(1, -1)),
                    cin=cin, cout=cout, P=P, taps=phase_taps(P, offsets),
                    pre_relu=pre_relu, post_relu=post_relu)

    def convt_entry(w_iok, bias, P):
        # ConvTranspose1d(k=4, s=2, p=1) in polyphase form:
        #   y[2n]   = x[n] W1 + x[n-1] W3 + b
        #   y[2n+1] = x[n+1] W0 + x[n] W2 + b
        nonlocal max_cin
        w = np.asarray(w_iok, np.float32)                      # (cin, cout, 4)
        cin, cout, K = w.shape
        assert K == 4
        max_cin = max(max_cin, cin)
        w_even = np.concatenate([w[:, :, 1], w[:, :, 3]], axis=0)
        w_odd = np.concatenate([w[:, :, 0], w[:, :, 2]], axis=0)
        return dict(kind='convt', we=add(w_even), wo=add(w_odd),
                    b=add(np.asarray(bias, np.float32).reshape(1, -1)),
                    cin=cin, cout=cout, P=P,
                    taps_even=phase_taps(P, [0, -1]),
                    taps_odd=phase_taps(P, [1, 0]))

    w, b = params['init']                       # init_conv + ReLU
    plan.append(conv_entry(w, b, 1, 1, P, False, True))
    for blk in params['blocks']:
        for rb in blk['res']:                   # ResConv1DBlock (relu, norm=None)
            d = rb['dilation']
            plan.append(dict(
                kind='res', P=P,
                c1=conv_entry(rb['w1'], rb['b1'], d, d, P, True, False),
                c2=conv_entry(rb['w2'], rb['b2'], 1, 0, P, True, False)))
        w, b = blk['conv']                      # Conv1d(cin, cout, 3, 1, 1)
        plan.append(conv_entry(w, b, 1, 1, P, False, False))
        if 'up' in blk:                         # ConvTranspose1d(cout, cout, 4, 2, 1)
            wt, bt = blk['up']
            plan.append(convt_entry(wt, bt, P))
            P *= 2
    w, b = params['post1']                      # post_conv: conv + relu + conv
    plan.append(conv_entry(w, b, 1, 1, P, False, True))
    w, b = params['post2']
    plan.append(conv_entry(w, b, 1, 1, P, False, False))

    # pack everything into one (rows, width) f32 slab, each item 8-row aligned
    width = max(m.shape[1] for m in mats)
    meta, row = [], 0
    for m in mats:
        meta.append((row, m.shape[0], m.shape[1]))
        row += ((m.shape[0] + 7) // 8) * 8
    slab = np.zeros((max(row, 8), width), np.float32)
    for m, (r0, r, c) in zip(mats, meta):
        slab[r0:r0 + r, :c] = m

    return jnp.asarray(slab), meta, plan, P, max_cin, max_shift


# ------------------------------ fused kernel -------------------------------

def _make_kernel(plan, meta, *, T0, pad, p_max, c_scr):
    def kernel(x_ref, slab_ref, out_ref, scr_ref):
        # x_ref   : (1, T0, C0)          one batch element (grid axis)
        # slab_ref: (rows, width)        all packed weights/biases
        # out_ref : (p_max, 1, T0, Cf)   per-phase outputs for this batch
        # scr_ref : (p_max, T0+2*pad, c_scr)  zero-bordered activation scratch

        def wload(i):                               # static slice = cheap view
            r0, r, c = meta[i]
            return slab_ref[r0:r0 + r, 0:c]

        def dot(a, b):
            return jnp.dot(a, b, preferred_element_type=jnp.float32,
                           precision=_DOT_PREC)

        def store_phases(phases, cin, pre_relu):
            # write activations into the scratch interior; borders stay zero,
            # so shifted tap loads see exactly the conv's zero padding.
            for q, xq in enumerate(phases):
                v = jnp.maximum(xq, 0.0) if pre_relu else xq
                scr_ref[q, pad:pad + T0, 0:cin] = v

        def gather(tp, cin):
            taps = [scr_ref[q, pad + s:pad + s + T0, 0:cin] for (q, s) in tp]
            return taps[0] if len(taps) == 1 else jnp.concatenate(taps, axis=-1)

        def apply_conv(phases, op):
            store_phases(phases, op['cin'], op['pre_relu'])
            w, b = wload(op['w']), wload(op['b'])
            outs = []
            for p in range(op['P']):                # one fused dot per phase
                y = dot(gather(op['taps'][p], op['cin']), w) + b
                outs.append(jnp.maximum(y, 0.0) if op['post_relu'] else y)
            return outs

        def apply_convt(phases, op):
            store_phases(phases, op['cin'], False)
            we, wo, b = wload(op['we']), wload(op['wo']), wload(op['b'])
            new = []
            for u in range(op['P']):
                new.append(dot(gather(op['taps_even'][u], op['cin']), we) + b)
                new.append(dot(gather(op['taps_odd'][u], op['cin']), wo) + b)
            return new                              # phase count doubles

        # zero the scratch once per grid step (borders must read as zero-pad)
        scr_ref[...] = jnp.zeros((p_max, T0 + 2 * pad, c_scr), jnp.float32)

        phases = [x_ref[0]]                         # (T0, C0), phase count 1
        for op in plan:
            if op['kind'] == 'conv':
                phases = apply_conv(phases, op)
            elif op['kind'] == 'res':
                # relu -> conv3(dil d, pad d) -> relu -> conv1 -> + residual
                h = apply_conv(phases, op['c1'])
                h = apply_conv(h, op['c2'])
                phases = [a + hh for a, hh in zip(phases, h)]
            else:                                   # 'convt'
                phases = apply_convt(phases, op)

        for p, y in enumerate(phases):
            out_ref[p, 0] = y.astype(out_ref.dtype)

    return kernel


# ------------------------------ forward pass -------------------------------

def decoder_forward_pallas(x_nct, params):
    """x_nct: (B, OUTPUT_DIM, T)  ->  (B, INPUT_DIM, T * 2**num_upsamples)."""
    B, C0, T0 = x_nct.shape
    slab, meta, plan, p_final, c_scr, max_shift = _build_plan(params)
    assert max_shift <= _PAD
    c_final = int(params['post2'][0].shape[0])

    # NCT -> (B, T, C): channels on lanes, time on sublanes.
    x_btc = jnp.transpose(x_nct, (0, 2, 1)).astype(jnp.float32)
    R, W = slab.shape

    kernel = _make_kernel(plan, meta, T0=T0, pad=_PAD,
                          p_max=p_final, c_scr=c_scr)
    out = pl.pallas_call(
        kernel,
        out_shape=jax.ShapeDtypeStruct((p_final, B, T0, c_final), jnp.float32),
        grid_spec=pltpu.PrefetchScalarGridSpec(
            num_scalar_prefetch=0,
            grid=(B,),                                   # batches independent
            in_specs=[pl.BlockSpec((1, T0, C0), lambda b: (b, 0, 0)),
                      pl.BlockSpec((R, W), lambda b: (0, 0))],
            out_specs=pl.BlockSpec((p_final, 1, T0, c_final),
                                   lambda b: (0, b, 0, 0)),
            scratch_shapes=[pltpu.VMEM((p_final, T0 + 2 * _PAD, c_scr),
                                       jnp.float32)],
        ),
        compiler_params=pltpu.CompilerParams(
            dimension_semantics=("parallel",)),          # megacore on v7x
    )(x_btc, slab)

    # (P, B, T0, C): full-sequence position n = P*m + p  ->  (B, C, P*T0).
    out = jnp.transpose(out, (1, 2, 0, 3)).reshape(B, T0 * p_final, c_final)
    return jnp.transpose(out, (0, 2, 1))


# --------------------------- parameter creation ---------------------------

def init_params(key):
    def nxt():
        nonlocal key
        key, sub = jax.random.split(key)
        return sub

    def conv_p(cin, cout, k):
        scale = 1.0 / np.sqrt(cin * k)
        w = jax.random.uniform(nxt(), (cout, cin, k), jnp.float32, -scale, scale)
        b = jax.random.uniform(nxt(), (cout,), jnp.float32, -scale, scale)
        return w, b

    def convt_p(cin, cout, k):
        scale = 1.0 / np.sqrt(cin * k)
        w = jax.random.uniform(nxt(), (cin, cout, k), jnp.float32, -scale, scale)
        b = jax.random.uniform(nxt(), (cout,), jnp.float32, -scale, scale)
        return w, b

    params = {'init': conv_p(OUTPUT_DIM, EMB_DIM_DECODER[0], 3), 'blocks': []}
    for i in range(len(EMB_DIM_DECODER) - 1):
        cin = EMB_DIM_DECODER[i]
        cout = EMB_DIM_DECODER[i + 1]
        # Resnet1D with reverse_dilation=True
        dilations = [DILATION_GROWTH ** d for d in range(DEPTH_PER_RES_BLOCK)][::-1]
        res = []
        for d in dilations:
            w1, b1 = conv_p(cin, cin, 3)   # Conv1d(n_in, n_state, 3, dilation=d)
            w2, b2 = conv_p(cin, cin, 1)   # Conv1d(n_state, n_in, 1)
            res.append({'dilation': int(d), 'w1': w1, 'b1': b1,
                        'w2': w2, 'b2': b2})
        blk = {'res': res, 'conv': conv_p(cin, cout, 3)}
        if UPSAMPLE[i]:
            blk['up'] = convt_p(cout, cout, 4)
        params['blocks'].append(blk)
    params['post1'] = conv_p(EMB_DIM_DECODER[-1], EMB_DIM_DECODER[-1], 3)
    params['post2'] = conv_p(EMB_DIM_DECODER[-1], INPUT_DIM, 3)
    return params


# -------------------- pure-JAX reference (for checking) --------------------

def _conv1d_ref(x_nct, w_oik, bias, dilation=1, padding=0):
    out = jax.lax.conv_general_dilated(
        x_nct, w_oik, window_strides=(1,), padding=[(padding, padding)],
        rhs_dilation=(dilation,), dimension_numbers=('NCH', 'OIH', 'NCH'),
        precision=jax.lax.Precision.HIGHEST)
    return out + bias[None, :, None]


def _conv_transpose1d_ref(x_nct, w_t, bias, stride=2, padding=1):
    K = w_t.shape[2]
    w_oik = jnp.transpose(w_t[:, :, ::-1], (1, 0, 2))
    out = jax.lax.conv_general_dilated(
        x_nct, w_oik, window_strides=(1,),
        padding=[(K - 1 - padding, K - 1 - padding)],
        lhs_dilation=(stride,), dimension_numbers=('NCH', 'OIH', 'NCH'),
        precision=jax.lax.Precision.HIGHEST)
    return out + bias[None, :, None]


def decoder_forward_ref(x_nct, params):
    x = x_nct.astype(jnp.float32)
    w, b = params['init']
    x = jax.nn.relu(_conv1d_ref(x, w, b, 1, 1))
    for blk in params['blocks']:
        for rb in blk['res']:
            d = rb['dilation']
            h = jax.nn.relu(x)
            h = _conv1d_ref(h, rb['w1'], rb['b1'], d, d)
            h = jax.nn.relu(h)
            h = _conv1d_ref(h, rb['w2'], rb['b2'], 1, 0)
            x = x + h
        w, b = blk['conv']
        x = _conv1d_ref(x, w, b, 1, 1)
        if 'up' in blk:
            wt, bt = blk['up']
            x = _conv_transpose1d_ref(x, wt, bt, 2, 1)
    w, b = params['post1']
    x = jax.nn.relu(_conv1d_ref(x, w, b, 1, 1))
    w, b = params['post2']
    x = _conv1d_ref(x, w, b, 1, 1)
    return x


# ----------------------------------- main -----------------------------------

if __name__ == "__main__":
    key = jax.random.PRNGKey(0)
    pkey, xkey = jax.random.split(key)
    params = init_params(pkey)

    B, T = 2, 8
    x = jax.random.normal(xkey, (B, OUTPUT_DIM, T), jnp.float32)  # NCT input

    out = decoder_forward_pallas(x, params)
    out = jax.block_until_ready(out)

    # one upsample stage in UPSAMPLE=(0,1) -> time doubles once
    assert out.shape == (B, INPUT_DIM, 2 * T), out.shape

    ref = decoder_forward_ref(x, params)
    err = float(jnp.max(jnp.abs(out - ref)))
    assert err < 1e-3, f"max abs error vs reference: {err}"

    print("KERNEL_OK")
</pallas_src>

<mosaic_0001>
module attributes {stable_mosaic.version = 11 : i64} {
  func.func @kernel(%arg0: i32, %arg1: memref<1x8x8xf32, #tpu.memory_space<vmem>>, %arg2: memref<720x32xf32, #tpu.memory_space<vmem>>, %arg3: memref<2x1x8x24xf32, #tpu.memory_space<vmem>>, %arg4: memref<2x24x32xf32, #tpu.memory_space<vmem>>) attributes {dimension_semantics = [#tpu.dimension_semantics<parallel>], iteration_bounds = array<i64: 2>, scalar_prefetch = 0 : i64, scratch_operands = 1 : i64, tpu.core_type = #tpu.core_type<tc>, window_params = [{transform_indices = @transform_0, window_bounds = array<i64: 1, 8, 8>}, {pipeline_mode = #tpu.pipeline_mode<synchronous>, transform_indices = @transform_1, window_bounds = array<i64: 720, 32>}, {transform_indices = @transform_2, window_bounds = array<i64: 2, 1, 8, 24>}]} {
    %cst = arith.constant 0.000000e+00 : f32
    %0 = vector.broadcast %cst : f32 to vector<2x24x32xf32>
    %c0 = arith.constant 0 : index
    %c0_0 = arith.constant 0 : index
    %c0_1 = arith.constant 0 : index
    %1 = vector.load %arg4[%c0, %c0_0, %c0_1] : memref<2x24x32xf32, #tpu.memory_space<vmem>>, vector<2x24x32xf32>
    tpu.vector_store %arg4[%c0, %c0_0, %c0_1], %0 {strides = array<i32>} : memref<2x24x32xf32, #tpu.memory_space<vmem>>, vector<2x24x32xf32>,
    %c0_2 = arith.constant 0 : index
    %c0_3 = arith.constant 0 : index
    %c0_4 = arith.constant 0 : index
    %2 = vector.load %arg1[%c0_2, %c0_3, %c0_4] : memref<1x8x8xf32, #tpu.memory_space<vmem>>, vector<1x8x8xf32>
    %3 = vector.shape_cast %2 : vector<1x8x8xf32> to vector<8x8xf32>
    %c0_5 = arith.constant 0 : index
    %c8 = arith.constant 8 : index
    %c0_6 = arith.constant 0 : index
    %4 = vector.load %arg4[%c0_5, %c8, %c0_6] : memref<2x24x32xf32, #tpu.memory_space<vmem>>, vector<1x8x8xf32>
    %5 = vector.shape_cast %4 : vector<1x8x8xf32> to vector<8x8xf32>
    %6 = vector.shape_cast %3 : vector<8x8xf32> to vector<1x8x8xf32>
    tpu.vector_store %arg4[%c0_5, %c8, %c0_6], %6 {strides = array<i32>} : memref<2x24x32xf32, #tpu.memory_space<vmem>>, vector<1x8x8xf32>,
    %c0_7 = arith.constant 0 : index
    %c0_8 = arith.constant 0 : index
    %7 = vector.load %arg2[%c0_7, %c0_8] : memref<720x32xf32, #tpu.memory_space<vmem>>, vector<24x8xf32>
    %c24 = arith.constant 24 : index
    %c0_9 = arith.constant 0 : index
    %8 = vector.load %arg2[%c24, %c0_9] : memref<720x32xf32, #tpu.memory_space<vmem>>, vector<1x8xf32>
    %c0_10 = arith.constant 0 : index
    %c7 = arith.constant 7 : index
    %c0_11 = arith.constant 0 : index
    %9 = vector.load %arg4[%c0_10, %c7, %c0_11] : memref<2x24x32xf32, #tpu.memory_space<vmem>>, vector<1x8x8xf32>
    %10 = vector.shape_cast %9 : vector<1x8x8xf32> to vector<8x8xf32>
    %c0_12 = arith.constant 0 : index
    %c8_13 = arith.constant 8 : index
    %c0_14 = arith.constant 0 : index
    %11 = vector.load %arg4[%c0_12, %c8_13, %c0_14] : memref<2x24x32xf32, #tpu.memory_space<vmem>>, vector<1x8x8xf32>
    %12 = vector.shape_cast %11 : vector<1x8x8xf32> to vector<8x8xf32>
    %c0_15 = arith.constant 0 : index
    %c9 = arith.constant 9 : index
    %c0_16 = arith.constant 0 : index
    %13 = vector.load %arg4[%c0_15, %c9, %c0_16] : memref<2x24x32xf32, #tpu.memory_space<vmem>>, vector<1x8x8xf32>
    %14 = vector.shape_cast %13 : vector<1x8x8xf32> to vector<8x8xf32>
    %15 = tpu.concatenate %10, %12, %14 in 1 : vector<8x8xf32>, vector<8x8xf32>, vector<8x8xf32> -> vector<8x24xf32>
    %cst_17 = arith.constant dense<0.000000e+00> : vector<8x8xf32>
    %16 = tpu.matmul %15, %7, %cst_17 {dimension_numbers = #tpu.dot_dimension_numbers<[1], [0], [0], [1], [0, 0, 1, 1], [], []>, precision = #tpu.contract_precision<fp32>} : vector<8x24xf32>, vector<24x8xf32>, vector<8x8xf32> -> vector<8x8xf32>
    %17 = vector.broadcast %8 : vector<1x8xf32> to vector<8x8xf32>
    %18 = arith.addf %16, %17 : vector<8x8xf32>
    %cst_18 = arith.constant 0.000000e+00 : f32
    %19 = vector.broadcast %cst_18 : f32 to vector<8x8xf32>
    %20 = arith.maximumf %18, %19 : vector<8x8xf32>
    %cst_19 = arith.constant 0.000000e+00 : f32
    %21 = vector.broadcast %cst_19 : f32 to vector<8x8xf32>
    %22 = arith.maximumf %20, %21 : vector<8x8xf32>
    %c0_20 = arith.constant 0 : index
    %c8_21 = arith.constant 8 : index
    %c0_22 = arith.constant 0 : index
    %23 = vector.load %arg4[%c0_20, %c8_21, %c0_22] : memref<2x24x32xf32, #tpu.memory_space<vmem>>, vector<1x8x8xf32>
    %24 = vector.shape_cast %23 : vector<1x8x8xf32> to vector<8x8xf32>
    %25 = vector.shape_cast %22 : vector<8x8xf32> to vector<1x8x8xf32>
    tpu.vector_store %arg4[%c0_20, %c8_21, %c0_22], %25 {strides = array<i32>} : memref<2x24x32xf32, #tpu.memory_space<vmem>>, vector<1x8x8xf32>,
    %c32 = arith.constant 32 : index
    %c0_23 = arith.constant 0 : index
    %26 = vector.load %arg2[%c32, %c0_23] : memref<720x32xf32, #tpu.memory_space<vmem>>, vector<24x8xf32>
    %c56 = arith.constant 56 : index
    %c0_24 = arith.constant 0 : index
    %27 = vector.load %arg2[%c56, %c0_24] : memref<720x32xf32, #tpu.memory_space<vmem>>, vector<1x8xf32>
    %c0_25 = arith.constant 0 : index
    %c6 = arith.constant 6 : index
    %c0_26 = arith.constant 0 : index
    %28 = vector.load %arg4[%c0_25, %c6, %c0_26] : memref<2x24x32xf32, #tpu.memory_space<vmem>>, vector<1x8x8xf32>
    %29 = vector.shape_cast %28 : vector<1x8x8xf32> to vector<8x8xf32>
    %c0_27 = arith.constant 0 : index
    %c8_28 = arith.constant 8 : index
    %c0_29 = arith.constant 0 : index
    %30 = vector.load %arg4[%c0_27, %c8_28, %c0_29] : memref<2x24x32xf32, #tpu.memory_space<vmem>>, vector<1x8x8xf32>
    %31 = vector.shape_cast %30 : vector<1x8x8xf32> to vector<8x8xf32>
    %c0_30 = arith.constant 0 : index
    %c10 = arith.constant 10 : index
    %c0_31 = arith.constant 0 : index
    %32 = vector.load %arg4[%c0_30, %c10, %c0_31] : memref<2x24x32xf32, #tpu.memory_space<vmem>>, vector<1x8x8xf32>
    %33 = vector.shape_cast %32 : vector<1x8x8xf32> to vector<8x8xf32>
    %34 = tpu.concatenate %29, %31, %33 in 1 : vector<8x8xf32>, vector<8x8xf32>, vector<8x8xf32> -> vector<8x24xf32>
    %cst_32 = arith.constant dense<0.000000e+00> : vector<8x8xf32>
    %35 = tpu.matmul %34, %26, %cst_32 {dimension_numbers = #tpu.dot_dimension_numbers<[1], [0], [0], [1], [0, 0, 1, 1], [], []>, precision = #tpu.contract_precision<fp32>} : vector<8x24xf32>, vector<24x8xf32>, vector<8x8xf32> -> vector<8x8xf32>
    %36 = vector.broadcast %27 : vector<1x8xf32> to vector<8x8xf32>
    %37 = arith.addf %35, %36 : vector<8x8xf32>
    %cst_33 = arith.constant 0.000000e+00 : f32
    %38 = vector.broadcast %cst_33 : f32 to vector<8x8xf32>
    %39 = arith.maximumf %37, %38 : vector<8x8xf32>
    %c0_34 = arith.constant 0 : index
    %c8_35 = arith.constant 8 : index
    %c0_36 = arith.constant 0 : index
    %40 = vector.load %arg4[%c0_34, %c8_35, %c0_36] : memref<2x24x32xf32, #tpu.memory_space<vmem>>, vector<1x8x8xf32>
    %41 = vector.shape_cast %40 : vector<1x8x8xf32> to vector<8x8xf32>
    %42 = vector.shape_cast %39 : vector<8x8xf32> to vector<1x8x8xf32>
    tpu.vector_store %arg4[%c0_34, %c8_35, %c0_36], %42 {strides = array<i32>} : memref<2x24x32xf32, #tpu.memory_space<vmem>>, vector<1x8x8xf32>,
    %c64 = arith.constant 64 : index
    %c0_37 = arith.constant 0 : index
    %43 = vector.load %arg2[%c64, %c0_37] : memref<720x32xf32, #tpu.memory_space<vmem>>, vector<8x8xf32>
    %c72 = arith.constant 72 : index
    %c0_38 = arith.constant 0 : index
    %44 = vector.load %arg2[%c72, %c0_38] : memref<720x32xf32, #tpu.memory_space<vmem>>, vector<1x8xf32>
    %c0_39 = arith.constant 0 : index
    %c8_40 = arith.constant 8 : index
    %c0_41 = arith.constant 0 : index
    %45 = vector.load %arg4[%c0_39, %c8_40, %c0_41] : memref<2x24x32xf32, #tpu.memory_space<vmem>>, vector<1x8x8xf32>
    %46 = vector.shape_cast %45 : vector<1x8x8xf32> to vector<8x8xf32>
    %cst_42 = arith.constant dense<0.000000e+00> : vector<8x8xf32>
    %47 = tpu.matmul %46, %43, %cst_42 {dimension_numbers = #tpu.dot_dimension_numbers<[1], [0], [0], [1], [0, 0, 1, 1], [], []>, precision = #tpu.contract_precision<fp32>} : vector<8x8xf32>, vector<8x8xf32>, vector<8x8xf32> -> vector<8x8xf32>
    %48 = vector.broadcast %44 : vector<1x8xf32> to vector<8x8xf32>
    %49 = arith.addf %47, %48 : vector<8x8xf32>
    %50 = arith.addf %20, %49 : vector<8x8xf32>
    %cst_43 = arith.constant 0.000000e+00 : f32
    %51 = vector.broadcast %cst_43 : f32 to vector<8x8xf32>
    %52 = arith.maximumf %50, %51 : vector<8x8xf32>
    %c0_44 = arith.constant 0 : index
    %c8_45 = arith.constant 8 : index
    %c0_46 = arith.constant 0 : index
    %53 = vector.load %arg4[%c0_44, %c8_45, %c0_46] : memref<2x24x32xf32, #tpu.memory_space<vmem>>, vector<1x8x8xf32>
    %54 = vector.shape_cast %53 : vector<1x8x8xf32> to vector<8x8xf32>
    %55 = vector.shape_cast %52 : vector<8x8xf32> to vector<1x8x8xf32>
    tpu.vector_store %arg4[%c0_44, %c8_45, %c0_46], %55 {strides = array<i32>} : memref<2x24x32xf32, #tpu.memory_space<vmem>>, vector<1x8x8xf32>,
    %c80 = arith.constant 80 : index
    %c0_47 = arith.constant 0 : index
    %56 = vector.load %arg2[%c80, %c0_47] : memref<720x32xf32, #tpu.memory_space<vmem>>, vector<24x8xf32>
    %c104 = arith.constant 104 : index
    %c0_48 = arith.constant 0 : index
    %57 = vector.load %arg2[%c104, %c0_48] : memref<720x32xf32, #tpu.memory_space<vmem>>, vector<1x8xf32>
    %c0_49 = arith.constant 0 : index
    %c7_50 = arith.constant 7 : index
    %c0_51 = arith.constant 0 : index
    %58 = vector.load %arg4[%c0_49, %c7_50, %c0_51] : memref<2x24x32xf32, #tpu.memory_space<vmem>>, vector<1x8x8xf32>
    %59 = vector.shape_cast %58 : vector<1x8x8xf32> to vector<8x8xf32>
    %c0_52 = arith.constant 0 : index
    %c8_53 = arith.constant 8 : index
    %c0_54 = arith.constant 0 : index
    %60 = vector.load %arg4[%c0_52, %c8_53, %c0_54] : memref<2x24x32xf32, #tpu.memory_space<vmem>>, vector<1x8x8xf32>
    %61 = vector.shape_cast %60 : vector<1x8x8xf32> to vector<8x8xf32>
    %c0_55 = arith.constant 0 : index
    %c9_56 = arith.constant 9 : index
    %c0_57 = arith.constant 0 : index
    %62 = vector.load %arg4[%c0_55, %c9_56, %c0_57] : memref<2x24x32xf32, #tpu.memory_space<vmem>>, vector<1x8x8xf32>
    %63 = vector.shape_cast %62 : vector<1x8x8xf32> to vector<8x8xf32>
    %64 = tpu.concatenate %59, %61, %63 in 1 : vector<8x8xf32>, vector<8x8xf32>, vector<8x8xf32> -> vector<8x24xf32>
    %cst_58 = arith.constant dense<0.000000e+00> : vector<8x8xf32>
    %65 = tpu.matmul %64, %56, %cst_58 {dimension_numbers = #tpu.dot_dimension_numbers<[1], [0], [0], [1], [0, 0, 1, 1], [], []>, precision = #tpu.contract_precision<fp32>} : vector<8x24xf32>, vector<24x8xf32>, vector<8x8xf32> -> vector<8x8xf32>
    %66 = vector.broadcast %57 : vector<1x8xf32> to vector<8x8xf32>
    %67 = arith.addf %65, %66 : vector<8x8xf32>
    %cst_59 = arith.constant 0.000000e+00 : f32
    %68 = vector.broadcast %cst_59 : f32 to vector<8x8xf32>
    %69 = arith.maximumf %67, %68 : vector<8x8xf32>
    %c0_60 = arith.constant 0 : index
    %c8_61 = arith.constant 8 : index
    %c0_62 = arith.constant 0 : index
    %70 = vector.load %arg4[%c0_60, %c8_61, %c0_62] : memref<2x24x32xf32, #tpu.memory_space<vmem>>, vector<1x8x8xf32>
    %71 = vector.shape_cast %70 : vector<1x8x8xf32> to vector<8x8xf32>
    %72 = vector.shape_cast %69 : vector<8x8xf32> to vector<1x8x8xf32>
    tpu.vector_store %arg4[%c0_60, %c8_61, %c0_62], %72 {strides = array<i32>} : memref<2x24x32xf32, #tpu.memory_space<vmem>>, vector<1x8x8xf32>,
    %c112 = arith.constant 112 : index
    %c0_63 = arith.constant 0 : index
    %73 = vector.load %arg2[%c112, %c0_63] : memref<720x32xf32, #tpu.memory_space<vmem>>, vector<8x8xf32>
    %c120 = arith.constant 120 : index
    %c0_64 = arith.constant 0 : index
    %74 = vector.load %arg2[%c120, %c0_64] : memref<720x32xf32, #tpu.memory_space<vmem>>, vector<1x8xf32>
    %c0_65 = arith.constant 0 : index
    %c8_66 = arith.constant 8 : index
    %c0_67 = arith.constant 0 : index
    %75 = vector.load %arg4[%c0_65, %c8_66, %c0_67] : memref<2x24x32xf32, #tpu.memory_space<vmem>>, vector<1x8x8xf32>
    %76 = vector.shape_cast %75 : vector<1x8x8xf32> to vector<8x8xf32>
    %cst_68 = arith.constant dense<0.000000e+00> : vector<8x8xf32>
    %77 = tpu.matmul %76, %73, %cst_68 {dimension_numbers = #tpu.dot_dimension_numbers<[1], [0], [0], [1], [0, 0, 1, 1], [], []>, precision = #tpu.contract_precision<fp32>} : vector<8x8xf32>, vector<8x8xf32>, vector<8x8xf32> -> vector<8x8xf32>
    %78 = vector.broadcast %74 : vector<1x8xf32> to vector<8x8xf32>
    %79 = arith.addf %77, %78 : vector<8x8xf32>
    %80 = arith.addf %50, %79 : vector<8x8xf32>
    %c0_69 = arith.constant 0 : index
    %c8_70 = arith.constant 8 : index
    %c0_71 = arith.constant 0 : index
    %81 = vector.load %arg4[%c0_69, %c8_70, %c0_71] : memref<2x24x32xf32, #tpu.memory_space<vmem>>, vector<1x8x8xf32>
    %82 = vector.shape_cast %81 : vector<1x8x8xf32> to vector<8x8xf32>
    %83 = vector.shape_cast %80 : vector<8x8xf32> to vector<1x8x8xf32>
    tpu.vector_store %arg4[%c0_69, %c8_70, %c0_71], %83 {strides = array<i32>} : memref<2x24x32xf32, #tpu.memory_space<vmem>>, vector<1x8x8xf32>,
    %c128 = arith.constant 128 : index
    %c0_72 = arith.constant 0 : index
    %84 = vector.load %arg2[%c128, %c0_72] : memref<720x32xf32, #tpu.memory_space<vmem>>, vector<24x16xf32>
    %c152 = arith.constant 152 : index
    %c0_73 = arith.constant 0 : index
    %85 = vector.load %arg2[%c152, %c0_73] : memref<720x32xf32, #tpu.memory_space<vmem>>, vector<1x16xf32>
    %c0_74 = arith.constant 0 : index
    %c7_75 = arith.constant 7 : index
    %c0_76 = arith.constant 0 : index
    %86 = vector.load %arg4[%c0_74, %c7_75, %c0_76] : memref<2x24x32xf32, #tpu.memory_space<vmem>>, vector<1x8x8xf32>
    %87 = vector.shape_cast %86 : vector<1x8x8xf32> to vector<8x8xf32>
    %c0_77 = arith.constant 0 : index
    %c8_78 = arith.constant 8 : index
    %c0_79 = arith.constant 0 : index
    %88 = vector.load %arg4[%c0_77, %c8_78, %c0_79] : memref<2x24x32xf32, #tpu.memory_space<vmem>>, vector<1x8x8xf32>
    %89 = vector.shape_cast %88 : vector<1x8x8xf32> to vector<8x8xf32>
    %c0_80 = arith.constant 0 : index
    %c9_81 = arith.constant 9 : index
    %c0_82 = arith.constant 0 : index
    %90 = vector.load %arg4[%c0_80, %c9_81, %c0_82] : memref<2x24x32xf32, #tpu.memory_space<vmem>>, vector<1x8x8xf32>
    %91 = vector.shape_cast %90 : vector<1x8x8xf32> to vector<8x8xf32>
    %92 = tpu.concatenate %87, %89, %91 in 1 : vector<8x8xf32>, vector<8x8xf32>, vector<8x8xf32> -> vector<8x24xf32>
    %cst_83 = arith.constant dense<0.000000e+00> : vector<8x16xf32>
    %93 = tpu.matmul %92, %84, %cst_83 {dimension_numbers = #tpu.dot_dimension_numbers<[1], [0], [0], [1], [0, 0, 1, 1], [], []>, precision = #tpu.contract_precision<fp32>} : vector<8x24xf32>, vector<24x16xf32>, vector<8x16xf32> -> vector<8x16xf32>
    %94 = vector.broadcast %85 : vector<1x16xf32> to vector<8x16xf32>
    %95 = arith.addf %93, %94 : vector<8x16xf32>
    %cst_84 = arith.constant 0.000000e+00 : f32
    %96 = vector.broadcast %cst_84 : f32 to vector<8x16xf32>
    %97 = arith.maximumf %95, %96 : vector<8x16xf32>
    %c0_85 = arith.constant 0 : index
    %c8_86 = arith.constant 8 : index
    %c0_87 = arith.constant 0 : index
    %98 = vector.load %arg4[%c0_85, %c8_86, %c0_87] : memref<2x24x32xf32, #tpu.memory_space<vmem>>, vector<1x8x16xf32>
    %99 = vector.shape_cast %98 : vector<1x8x16xf32> to vector<8x16xf32>
    %100 = vector.shape_cast %97 : vector<8x16xf32> to vector<1x8x16xf32>
    tpu.vector_store %arg4[%c0_85, %c8_86, %c0_87], %100 {strides = array<i32>} : memref<2x24x32xf32, #tpu.memory_space<vmem>>, vector<1x8x16xf32>,
    %c160 = arith.constant 160 : index
    %c0_88 = arith.constant 0 : index
    %101 = vector.load %arg2[%c160, %c0_88] : memref<720x32xf32, #tpu.memory_space<vmem>>, vector<48x16xf32>
    %c208 = arith.constant 208 : index
    %c0_89 = arith.constant 0 : index
    %102 = vector.load %arg2[%c208, %c0_89] : memref<720x32xf32, #tpu.memory_space<vmem>>, vector<1x16xf32>
    %c0_90 = arith.constant 0 : index
    %c6_91 = arith.constant 6 : index
    %c0_92 = arith.constant 0 : index
    %103 = vector.load %arg4[%c0_90, %c6_91, %c0_92] : memref<2x24x32xf32, #tpu.memory_space<vmem>>, vector<1x8x16xf32>
    %104 = vector.shape_cast %103 : vector<1x8x16xf32> to vector<8x16xf32>
    %c0_93 = arith.constant 0 : index
    %c8_94 = arith.constant 8 : index
    %c0_95 = arith.constant 0 : index
    %105 = vector.load %arg4[%c0_93, %c8_94, %c0_95] : memref<2x24x32xf32, #tpu.memory_space<vmem>>, vector<1x8x16xf32>
    %106 = vector.shape_cast %105 : vector<1x8x16xf32> to vector<8x16xf32>
    %c0_96 = arith.constant 0 : index
    %c10_97 = arith.constant 10 : index
    %c0_98 = arith.constant 0 : index
    %107 = vector.load %arg4[%c0_96, %c10_97, %c0_98] : memref<2x24x32xf32, #tpu.memory_space<vmem>>, vector<1x8x16xf32>
    %108 = vector.shape_cast %107 : vector<1x8x16xf32> to vector<8x16xf32>
    %109 = tpu.concatenate %104, %106, %108 in 1 : vector<8x16xf32>, vector<8x16xf32>, vector<8x16xf32> -> vector<8x48xf32>
    %cst_99 = arith.constant dense<0.000000e+00> : vector<8x16xf32>
    %110 = tpu.matmul %109, %101, %cst_99 {dimension_numbers = #tpu.dot_dimension_numbers<[1], [0], [0], [1], [0, 0, 1, 1], [], []>, precision = #tpu.contract_precision<fp32>} : vector<8x48xf32>, vector<48x16xf32>, vector<8x16xf32> -> vector<8x16xf32>
    %111 = vector.broadcast %102 : vector<1x16xf32> to vector<8x16xf32>
    %112 = arith.addf %110, %111 : vector<8x16xf32>
    %cst_100 = arith.constant 0.000000e+00 : f32
    %113 = vector.broadcast %cst_100 : f32 to vector<8x16xf32>
    %114 = arith.maximumf %112, %113 : vector<8x16xf32>
    %c0_101 = arith.constant 0 : index
    %c8_102 = arith.constant 8 : index
    %c0_103 = arith.constant 0 : index
    %115 = vector.load %arg4[%c0_101, %c8_102, %c0_103] : memref<2x24x32xf32, #tpu.memory_space<vmem>>, vector<1x8x16xf32>
    %116 = vector.shape_cast %115 : vector<1x8x16xf32> to vector<8x16xf32>
    %117 = vector.shape_cast %114 : vector<8x16xf32> to vector<1x8x16xf32>
    tpu.vector_store %arg4[%c0_101, %c8_102, %c0_103], %117 {strides = array<i32>} : memref<2x24x32xf32, #tpu.memory_space<vmem>>, vector<1x8x16xf32>,
    %c216 = arith.constant 216 : index
    %c0_104 = arith.constant 0 : index
    %118 = vector.load %arg2[%c216, %c0_104] : memref<720x32xf32, #tpu.memory_space<vmem>>, vector<16x16xf32>
    %c232 = arith.constant 232 : index
    %c0_105 = arith.constant 0 : index
    %119 = vector.load %arg2[%c232, %c0_105] : memref<720x32xf32, #tpu.memory_space<vmem>>, vector<1x16xf32>
    %c0_106 = arith.constant 0 : index
    %c8_107 = arith.constant 8 : index
    %c0_108 = arith.constant 0 : index
    %120 = vector.load %arg4[%c0_106, %c8_107, %c0_108] : memref<2x24x32xf32, #tpu.memory_space<vmem>>, vector<1x8x16xf32>
    %121 = vector.shape_cast %120 : vector<1x8x16xf32> to vector<8x16xf32>
    %cst_109 = arith.constant dense<0.000000e+00> : vector<8x16xf32>
    %122 = tpu.matmul %121, %118, %cst_109 {dimension_numbers = #tpu.dot_dimension_numbers<[1], [0], [0], [1], [0, 0, 1, 1], [], []>, precision = #tpu.contract_precision<fp32>} : vector<8x16xf32>, vector<16x16xf32>, vector<8x16xf32> -> vector<8x16xf32>
    %123 = vector.broadcast %119 : vector<1x16xf32> to vector<8x16xf32>
    %124 = arith.addf %122, %123 : vector<8x16xf32>
    %125 = arith.addf %95, %124 : vector<8x16xf32>
    %cst_110 = arith.constant 0.000000e+00 : f32
    %126 = vector.broadcast %cst_110 : f32 to vector<8x16xf32>
    %127 = arith.maximumf %125, %126 : vector<8x16xf32>
    %c0_111 = arith.constant 0 : index
    %c8_112 = arith.constant 8 : index
    %c0_113 = arith.constant 0 : index
    %128 = vector.load %arg4[%c0_111, %c8_112, %c0_113] : memref<2x24x32xf32, #tpu.memory_space<vmem>>, vector<1x8x16xf32>
    %129 = vector.shape_cast %128 : vector<1x8x16xf32> to vector<8x16xf32>
    %130 = vector.shape_cast %127 : vector<8x16xf32> to vector<1x8x16xf32>
    tpu.vector_store %arg4[%c0_111, %c8_112, %c0_113], %130 {strides = array<i32>} : memref<2x24x32xf32, #tpu.memory_space<vmem>>, vector<1x8x16xf32>,
    %c240 = arith.constant 240 : index
    %c0_114 = arith.constant 0 : index
    %131 = vector.load %arg2[%c240, %c0_114] : memref<720x32xf32, #tpu.memory_space<vmem>>, vector<48x16xf32>
    %c288 = arith.constant 288 : index
    %c0_115 = arith.constant 0 : index
    %132 = vector.load %arg2[%c288, %c0_115] : memref<720x32xf32, #tpu.memory_space<vmem>>, vector<1x16xf32>
    %c0_116 = arith.constant 0 : index
    %c7_117 = arith.constant 7 : index
    %c0_118 = arith.constant 0 : index
    %133 = vector.load %arg4[%c0_116, %c7_117, %c0_118] : memref<2x24x32xf32, #tpu.memory_space<vmem>>, vector<1x8x16xf32>
    %134 = vector.shape_cast %133 : vector<1x8x16xf32> to vector<8x16xf32>
    %c0_119 = arith.constant 0 : index
    %c8_120 = arith.constant 8 : index
    %c0_121 = arith.constant 0 : index
    %135 = vector.load %arg4[%c0_119, %c8_120, %c0_121] : memref<2x24x32xf32, #tpu.memory_space<vmem>>, vector<1x8x16xf32>
    %136 = vector.shape_cast %135 : vector<1x8x16xf32> to vector<8x16xf32>
    %c0_122 = arith.constant 0 : index
    %c9_123 = arith.constant 9 : index
    %c0_124 = arith.constant 0 : index
    %137 = vector.load %arg4[%c0_122, %c9_123, %c0_124] : memref<2x24x32xf32, #tpu.memory_space<vmem>>, vector<1x8x16xf32>
    %138 = vector.shape_cast %137 : vector<1x8x16xf32> to vector<8x16xf32>
    %139 = tpu.concatenate %134, %136, %138 in 1 : vector<8x16xf32>, vector<8x16xf32>, vector<8x16xf32> -> vector<8x48xf32>
    %cst_125 = arith.constant dense<0.000000e+00> : vector<8x16xf32>
    %140 = tpu.matmul %139, %131, %cst_125 {dimension_numbers = #tpu.dot_dimension_numbers<[1], [0], [0], [1], [0, 0, 1, 1], [], []>, precision = #tpu.contract_precision<fp32>} : vector<8x48xf32>, vector<48x16xf32>, vector<8x16xf32> -> vector<8x16xf32>
    %141 = vector.broadcast %132 : vector<1x16xf32> to vector<8x16xf32>
    %142 = arith.addf %140, %141 : vector<8x16xf32>
    %cst_126 = arith.constant 0.000000e+00 : f32
    %143 = vector.broadcast %cst_126 : f32 to vector<8x16xf32>
    %144 = arith.maximumf %142, %143 : vector<8x16xf32>
    %c0_127 = arith.constant 0 : index
    %c8_128 = arith.constant 8 : index
    %c0_129 = arith.constant 0 : index
    %145 = vector.load %arg4[%c0_127, %c8_128, %c0_129] : memref<2x24x32xf32, #tpu.memory_space<vmem>>, vector<1x8x16xf32>
    %146 = vector.shape_cast %145 : vector<1x8x16xf32> to vector<8x16xf32>
    %147 = vector.shape_cast %144 : vector<8x16xf32> to vector<1x8x16xf32>
    tpu.vector_store %arg4[%c0_127, %c8_128, %c0_129], %147 {strides = array<i32>} : memref<2x24x32xf32, #tpu.memory_space<vmem>>, vector<1x8x16xf32>,
    %c296 = arith.constant 296 : index
    %c0_130 = arith.constant 0 : index
    %148 = vector.load %arg2[%c296, %c0_130] : memref<720x32xf32, #tpu.memory_space<vmem>>, vector<16x16xf32>
    %c312 = arith.constant 312 : index
    %c0_131 = arith.constant 0 : index
    %149 = vector.load %arg2[%c312, %c0_131] : memref<720x32xf32, #tpu.memory_space<vmem>>, vector<1x16xf32>
    %c0_132 = arith.constant 0 : index
    %c8_133 = arith.constant 8 : index
    %c0_134 = arith.constant 0 : index
    %150 = vector.load %arg4[%c0_132, %c8_133, %c0_134] : memref<2x24x32xf32, #tpu.memory_space<vmem>>, vector<1x8x16xf32>
    %151 = vector.shape_cast %150 : vector<1x8x16xf32> to vector<8x16xf32>
    %cst_135 = arith.constant dense<0.000000e+00> : vector<8x16xf32>
    %152 = tpu.matmul %151, %148, %cst_135 {dimension_numbers = #tpu.dot_dimension_numbers<[1], [0], [0], [1], [0, 0, 1, 1], [], []>, precision = #tpu.contract_precision<fp32>} : vector<8x16xf32>, vector<16x16xf32>, vector<8x16xf32> -> vector<8x16xf32>
    %153 = vector.broadcast %149 : vector<1x16xf32> to vector<8x16xf32>
    %154 = arith.addf %152, %153 : vector<8x16xf32>
    %155 = arith.addf %125, %154 : vector<8x16xf32>
    %c0_136 = arith.constant 0 : index
    %c8_137 = arith.constant 8 : index
    %c0_138 = arith.constant 0 : index
    %156 = vector.load %arg4[%c0_136, %c8_137, %c0_138] : memref<2x24x32xf32, #tpu.memory_space<vmem>>, vector<1x8x16xf32>
    %157 = vector.shape_cast %156 : vector<1x8x16xf32> to vector<8x16xf32>
    %158 = vector.shape_cast %155 : vector<8x16xf32> to vector<1x8x16xf32>
    tpu.vector_store %arg4[%c0_136, %c8_137, %c0_138], %158 {strides = array<i32>} : memref<2x24x32xf32, #tpu.memory_space<vmem>>, vector<1x8x16xf32>,
    %c320 = arith.constant 320 : index
    %c0_139 = arith.constant 0 : index
    %159 = vector.load %arg2[%c320, %c0_139] : memref<720x32xf32, #tpu.memory_space<vmem>>, vector<48x32xf32>
    %c368 = arith.constant 368 : index
    %c0_140 = arith.constant 0 : index
    %160 = vector.load %arg2[%c368, %c0_140] : memref<720x32xf32, #tpu.memory_space<vmem>>, vector<1x32xf32>
    %c0_141 = arith.constant 0 : index
    %c7_142 = arith.constant 7 : index
    %c0_143 = arith.constant 0 : index
    %161 = vector.load %arg4[%c0_141, %c7_142, %c0_143] : memref<2x24x32xf32, #tpu.memory_space<vmem>>, vector<1x8x16xf32>
    %162 = vector.shape_cast %161 : vector<1x8x16xf32> to vector<8x16xf32>
    %c0_144 = arith.constant 0 : index
    %c8_145 = arith.constant 8 : index
    %c0_146 = arith.constant 0 : index
    %163 = vector.load %arg4[%c0_144, %c8_145, %c0_146] : memref<2x24x32xf32, #tpu.memory_space<vmem>>, vector<1x8x16xf32>
    %164 = vector.shape_cast %163 : vector<1x8x16xf32> to vector<8x16xf32>
    %c0_147 = arith.constant 0 : index
    %c9_148 = arith.constant 9 : index
    %c0_149 = arith.constant 0 : index
    %165 = vector.load %arg4[%c0_147, %c9_148, %c0_149] : memref<2x24x32xf32, #tpu.memory_space<vmem>>, vector<1x8x16xf32>
    %166 = vector.shape_cast %165 : vector<1x8x16xf32> to vector<8x16xf32>
    %167 = tpu.concatenate %162, %164, %166 in 1 : vector<8x16xf32>, vector<8x16xf32>, vector<8x16xf32> -> vector<8x48xf32>
    %cst_150 = arith.constant dense<0.000000e+00> : vector<8x32xf32>
    %168 = tpu.matmul %167, %159, %cst_150 {dimension_numbers = #tpu.dot_dimension_numbers<[1], [0], [0], [1], [0, 0, 1, 1], [], []>, precision = #tpu.contract_precision<fp32>} : vector<8x48xf32>, vector<48x32xf32>, vector<8x32xf32> -> vector<8x32xf32>
    %169 = vector.broadcast %160 : vector<1x32xf32> to vector<8x32xf32>
    %170 = arith.addf %168, %169 : vector<8x32xf32>
    %c0_151 = arith.constant 0 : index
    %c8_152 = arith.constant 8 : index
    %c0_153 = arith.constant 0 : index
    %171 = vector.load %arg4[%c0_151, %c8_152, %c0_153] : memref<2x24x32xf32, #tpu.memory_space<vmem>>, vector<1x8x32xf32>
    %172 = vector.shape_cast %171 : vector<1x8x32xf32> to vector<8x32xf32>
    %173 = vector.shape_cast %170 : vector<8x32xf32> to vector<1x8x32xf32>
    tpu.vector_store %arg4[%c0_151, %c8_152, %c0_153], %173 {strides = array<i32>} : memref<2x24x32xf32, #tpu.memory_space<vmem>>, vector<1x8x32xf32>,
    %c376 = arith.constant 376 : index
    %c0_154 = arith.constant 0 : index
    %174 = vector.load %arg2[%c376, %c0_154] : memref<720x32xf32, #tpu.memory_space<vmem>>, vector<64x32xf32>
    %c440 = arith.constant 440 : index
    %c0_155 = arith.constant 0 : index
    %175 = vector.load %arg2[%c440, %c0_155] : memref<720x32xf32, #tpu.memory_space<vmem>>, vector<64x32xf32>
    %c504 = arith.constant 504 : index
    %c0_156 = arith.constant 0 : index
    %176 = vector.load %arg2[%c504, %c0_156] : memref<720x32xf32, #tpu.memory_space<vmem>>, vector<1x32xf32>
    %c0_157 = arith.constant 0 : index
    %c8_158 = arith.constant 8 : index
    %c0_159 = arith.constant 0 : index
    %177 = vector.load %arg4[%c0_157, %c8_158, %c0_159] : memref<2x24x32xf32, #tpu.memory_space<vmem>>, vector<1x8x32xf32>
    %178 = vector.shape_cast %177 : vector<1x8x32xf32> to vector<8x32xf32>
    %c0_160 = arith.constant 0 : index
    %c7_161 = arith.constant 7 : index
    %c0_162 = arith.constant 0 : index
    %179 = vector.load %arg4[%c0_160, %c7_161, %c0_162] : memref<2x24x32xf32, #tpu.memory_space<vmem>>, vector<1x8x32xf32>
    %180 = vector.shape_cast %179 : vector<1x8x32xf32> to vector<8x32xf32>
    %181 = tpu.concatenate %178, %180 in 1 : vector<8x32xf32>, vector<8x32xf32> -> vector<8x64xf32>
    %cst_163 = arith.constant dense<0.000000e+00> : vector<8x32xf32>
    %182 = tpu.matmul %181, %174, %cst_163 {dimension_numbers = #tpu.dot_dimension_numbers<[1], [0], [0], [1], [0, 0, 1, 1], [], []>, precision = #tpu.contract_precision<fp32>} : vector<8x64xf32>, vector<64x32xf32>, vector<8x32xf32> -> vector<8x32xf32>
    %183 = vector.broadcast %176 : vector<1x32xf32> to vector<8x32xf32>
    %184 = arith.addf %182, %183 : vector<8x32xf32>
    %c0_164 = arith.constant 0 : index
    %c9_165 = arith.constant 9 : index
    %c0_166 = arith.constant 0 : index
    %185 = vector.load %arg4[%c0_164, %c9_165, %c0_166] : memref<2x24x32xf32, #tpu.memory_space<vmem>>, vector<1x8x32xf32>
    %186 = vector.shape_cast %185 : vector<1x8x32xf32> to vector<8x32xf32>
    %c0_167 = arith.constant 0 : index
    %c8_168 = arith.constant 8 : index
    %c0_169 = arith.constant 0 : index
    %187 = vector.load %arg4[%c0_167, %c8_168, %c0_169] : memref<2x24x32xf32, #tpu.memory_space<vmem>>, vector<1x8x32xf32>
    %188 = vector.shape_cast %187 : vector<1x8x32xf32> to vector<8x32xf32>
    %189 = tpu.concatenate %186, %188 in 1 : vector<8x32xf32>, vector<8x32xf32> -> vector<8x64xf32>
    %cst_170 = arith.constant dense<0.000000e+00> : vector<8x32xf32>
    %190 = tpu.matmul %189, %175, %cst_170 {dimension_numbers = #tpu.dot_dimension_numbers<[1], [0], [0], [1], [0, 0, 1, 1], [], []>, precision = #tpu.contract_precision<fp32>} : vector<8x64xf32>, vector<64x32xf32>, vector<8x32xf32> -> vector<8x32xf32>
    %191 = vector.broadcast %176 : vector<1x32xf32> to vector<8x32xf32>
    %192 = arith.addf %190, %191 : vector<8x32xf32>
    %c0_171 = arith.constant 0 : index
    %c8_172 = arith.constant 8 : index
    %c0_173 = arith.constant 0 : index
    %193 = vector.load %arg4[%c0_171, %c8_172, %c0_173] : memref<2x24x32xf32, #tpu.memory_space<vmem>>, vector<1x8x32xf32>
    %194 = vector.shape_cast %193 : vector<1x8x32xf32> to vector<8x32xf32>
    %195 = vector.shape_cast %184 : vector<8x32xf32> to vector<1x8x32xf32>
    tpu.vector_store %arg4[%c0_171, %c8_172, %c0_173], %195 {strides = array<i32>} : memref<2x24x32xf32, #tpu.memory_space<vmem>>, vector<1x8x32xf32>,
    %c1 = arith.constant 1 : index
    %c8_174 = arith.constant 8 : index
    %c0_175 = arith.constant 0 : index
    %196 = vector.load %arg4[%c1, %c8_174, %c0_175] : memref<2x24x32xf32, #tpu.memory_space<vmem>>, vector<1x8x32xf32>
    %197 = vector.shape_cast %196 : vector<1x8x32xf32> to vector<8x32xf32>
    %198 = vector.shape_cast %192 : vector<8x32xf32> to vector<1x8x32xf32>
    tpu.vector_store %arg4[%c1, %c8_174, %c0_175], %198 {strides = array<i32>} : memref<2x24x32xf32, #tpu.memory_space<vmem>>, vector<1x8x32xf32>,
    %c512 = arith.constant 512 : index
    %c0_176 = arith.constant 0 : index
    %199 = vector.load %arg2[%c512, %c0_176] : memref<720x32xf32, #tpu.memory_space<vmem>>, vector<96x32xf32>
    %c608 = arith.constant 608 : index
    %c0_177 = arith.constant 0 : index
    %200 = vector.load %arg2[%c608, %c0_177] : memref<720x32xf32, #tpu.memory_space<vmem>>, vector<1x32xf32>
    %c1_178 = arith.constant 1 : index
    %c7_179 = arith.constant 7 : index
    %c0_180 = arith.constant 0 : index
    %201 = vector.load %arg4[%c1_178, %c7_179, %c0_180] : memref<2x24x32xf32, #tpu.memory_space<vmem>>, vector<1x8x32xf32>
    %202 = vector.shape_cast %201 : vector<1x8x32xf32> to vector<8x32xf32>
    %c0_181 = arith.constant 0 : index
    %c8_182 = arith.constant 8 : index
    %c0_183 = arith.constant 0 : index
    %203 = vector.load %arg4[%c0_181, %c8_182, %c0_183] : memref<2x24x32xf32, #tpu.memory_space<vmem>>, vector<1x8x32xf32>
    %204 = vector.shape_cast %203 : vector<1x8x32xf32> to vector<8x32xf32>
    %c1_184 = arith.constant 1 : index
    %c8_185 = arith.constant 8 : index
    %c0_186 = arith.constant 0 : index
    %205 = vector.load %arg4[%c1_184, %c8_185, %c0_186] : memref<2x24x32xf32, #tpu.memory_space<vmem>>, vector<1x8x32xf32>
    %206 = vector.shape_cast %205 : vector<1x8x32xf32> to vector<8x32xf32>
    %207 = tpu.concatenate %202, %204, %206 in 1 : vector<8x32xf32>, vector<8x32xf32>, vector<8x32xf32> -> vector<8x96xf32>
    %cst_187 = arith.constant dense<0.000000e+00> : vector<8x32xf32>
    %208 = tpu.matmul %207, %199, %cst_187 {dimension_numbers = #tpu.dot_dimension_numbers<[1], [0], [0], [1], [0, 0, 1, 1], [], []>, precision = #tpu.contract_precision<fp32>} : vector<8x96xf32>, vector<96x32xf32>, vector<8x32xf32> -> vector<8x32xf32>
    %209 = vector.broadcast %200 : vector<1x32xf32> to vector<8x32xf32>
    %210 = arith.addf %208, %209 : vector<8x32xf32>
    %cst_188 = arith.constant 0.000000e+00 : f32
    %211 = vector.broadcast %cst_188 : f32 to vector<8x32xf32>
    %212 = arith.maximumf %210, %211 : vector<8x32xf32>
    %c0_189 = arith.constant 0 : index
    %c8_190 = arith.constant 8 : index
    %c0_191 = arith.constant 0 : index
    %213 = vector.load %arg4[%c0_189, %c8_190, %c0_191] : memref<2x24x32xf32, #tpu.memory_space<vmem>>, vector<1x8x32xf32>
    %214 = vector.shape_cast %213 : vector<1x8x32xf32> to vector<8x32xf32>
    %c1_192 = arith.constant 1 : index
    %c8_193 = arith.constant 8 : index
    %c0_194 = arith.constant 0 : index
    %215 = vector.load %arg4[%c1_192, %c8_193, %c0_194] : memref<2x24x32xf32, #tpu.memory_space<vmem>>, vector<1x8x32xf32>
    %216 = vector.shape_cast %215 : vector<1x8x32xf32> to vector<8x32xf32>
    %c0_195 = arith.constant 0 : index
    %c9_196 = arith.constant 9 : index
    %c0_197 = arith.constant 0 : index
    %217 = vector.load %arg4[%c0_195, %c9_196, %c0_197] : memref<2x24x32xf32, #tpu.memory_space<vmem>>, vector<1x8x32xf32>
    %218 = vector.shape_cast %217 : vector<1x8x32xf32> to vector<8x32xf32>
    %219 = tpu.concatenate %214, %216, %218 in 1 : vector<8x32xf32>, vector<8x32xf32>, vector<8x32xf32> -> vector<8x96xf32>
    %cst_198 = arith.constant dense<0.000000e+00> : vector<8x32xf32>
    %220 = tpu.matmul %219, %199, %cst_198 {dimension_numbers = #tpu.dot_dimension_numbers<[1], [0], [0], [1], [0, 0, 1, 1], [], []>, precision = #tpu.contract_precision<fp32>} : vector<8x96xf32>, vector<96x32xf32>, vector<8x32xf32> -> vector<8x32xf32>
    %221 = vector.broadcast %200 : vector<1x32xf32> to vector<8x32xf32>
    %222 = arith.addf %220, %221 : vector<8x32xf32>
    %cst_199 = arith.constant 0.000000e+00 : f32
    %223 = vector.broadcast %cst_199 : f32 to vector<8x32xf32>
    %224 = arith.maximumf %222, %223 : vector<8x32xf32>
    %c0_200 = arith.constant 0 : index
    %c8_201 = arith.constant 8 : index
    %c0_202 = arith.constant 0 : index
    %225 = vector.load %arg4[%c0_200, %c8_201, %c0_202] : memref<2x24x32xf32, #tpu.memory_space<vmem>>, vector<1x8x32xf32>
    %226 = vector.shape_cast %225 : vector<1x8x32xf32> to vector<8x32xf32>
    %227 = vector.shape_cast %212 : vector<8x32xf32> to vector<1x8x32xf32>
    tpu.vector_store %arg4[%c0_200, %c8_201, %c0_202], %227 {strides = array<i32>} : memref<2x24x32xf32, #tpu.memory_space<vmem>>, vector<1x8x32xf32>,
    %c1_203 = arith.constant 1 : index
    %c8_204 = arith.constant 8 : index
    %c0_205 = arith.constant 0 : index
    %228 = vector.load %arg4[%c1_203, %c8_204, %c0_205] : memref<2x24x32xf32, #tpu.memory_space<vmem>>, vector<1x8x32xf32>
    %229 = vector.shape_cast %228 : vector<1x8x32xf32> to vector<8x32xf32>
    %230 = vector.shape_cast %224 : vector<8x32xf32> to vector<1x8x32xf32>
    tpu.vector_store %arg4[%c1_203, %c8_204, %c0_205], %230 {strides = array<i32>} : memref<2x24x32xf32, #tpu.memory_space<vmem>>, vector<1x8x32xf32>,
    %c616 = arith.constant 616 : index
    %c0_206 = arith.constant 0 : index
    %231 = vector.load %arg2[%c616, %c0_206] : memref<720x32xf32, #tpu.memory_space<vmem>>, vector<96x24xf32>
    %c712 = arith.constant 712 : index
    %c0_207 = arith.constant 0 : index
    %232 = vector.load %arg2[%c712, %c0_207] : memref<720x32xf32, #tpu.memory_space<vmem>>, vector<1x24xf32>
    %c1_208 = arith.constant 1 : index
    %c7_209 = arith.constant 7 : index
    %c0_210 = arith.constant 0 : index
    %233 = vector.load %arg4[%c1_208, %c7_209, %c0_210] : memref<2x24x32xf32, #tpu.memory_space<vmem>>, vector<1x8x32xf32>
    %234 = vector.shape_cast %233 : vector<1x8x32xf32> to vector<8x32xf32>
    %c0_211 = arith.constant 0 : index
    %c8_212 = arith.constant 8 : index
    %c0_213 = arith.constant 0 : index
    %235 = vector.load %arg4[%c0_211, %c8_212, %c0_213] : memref<2x24x32xf32, #tpu.memory_space<vmem>>, vector<1x8x32xf32>
    %236 = vector.shape_cast %235 : vector<1x8x32xf32> to vector<8x32xf32>
    %c1_214 = arith.constant 1 : index
    %c8_215 = arith.constant 8 : index
    %c0_216 = arith.constant 0 : index
    %237 = vector.load %arg4[%c1_214, %c8_215, %c0_216] : memref<2x24x32xf32, #tpu.memory_space<vmem>>, vector<1x8x32xf32>
    %238 = vector.shape_cast %237 : vector<1x8x32xf32> to vector<8x32xf32>
    %239 = tpu.concatenate %234, %236, %238 in 1 : vector<8x32xf32>, vector<8x32xf32>, vector<8x32xf32> -> vector<8x96xf32>
    %cst_217 = arith.constant dense<0.000000e+00> : vector<8x24xf32>
    %240 = tpu.matmul %239, %231, %cst_217 {dimension_numbers = #tpu.dot_dimension_numbers<[1], [0], [0], [1], [0, 0, 1, 1], [], []>, precision = #tpu.contract_precision<fp32>} : vector<8x96xf32>, vector<96x24xf32>, vector<8x24xf32> -> vector<8x24xf32>
    %241 = vector.broadcast %232 : vector<1x24xf32> to vector<8x24xf32>
    %242 = arith.addf %240, %241 : vector<8x24xf32>
    %c0_218 = arith.constant 0 : index
    %c8_219 = arith.constant 8 : index
    %c0_220 = arith.constant 0 : index
    %243 = vector.load %arg4[%c0_218, %c8_219, %c0_220] : memref<2x24x32xf32, #tpu.memory_space<vmem>>, vector<1x8x32xf32>
    %244 = vector.shape_cast %243 : vector<1x8x32xf32> to vector<8x32xf32>
    %c1_221 = arith.constant 1 : index
    %c8_222 = arith.constant 8 : index
    %c0_223 = arith.constant 0 : index
    %245 = vector.load %arg4[%c1_221, %c8_222, %c0_223] : memref<2x24x32xf32, #tpu.memory_space<vmem>>, vector<1x8x32xf32>
    %246 = vector.shape_cast %245 : vector<1x8x32xf32> to vector<8x32xf32>
    %c0_224 = arith.constant 0 : index
    %c9_225 = arith.constant 9 : index
    %c0_226 = arith.constant 0 : index
    %247 = vector.load %arg4[%c0_224, %c9_225, %c0_226] : memref<2x24x32xf32, #tpu.memory_space<vmem>>, vector<1x8x32xf32>
    %248 = vector.shape_cast %247 : vector<1x8x32xf32> to vector<8x32xf32>
    %249 = tpu.concatenate %244, %246, %248 in 1 : vector<8x32xf32>, vector<8x32xf32>, vector<8x32xf32> -> vector<8x96xf32>
    %cst_227 = arith.constant dense<0.000000e+00> : vector<8x24xf32>
    %250 = tpu.matmul %249, %231, %cst_227 {dimension_numbers = #tpu.dot_dimension_numbers<[1], [0], [0], [1], [0, 0, 1, 1], [], []>, precision = #tpu.contract_precision<fp32>} : vector<8x96xf32>, vector<96x24xf32>, vector<8x24xf32> -> vector<8x24xf32>
    %251 = vector.broadcast %232 : vector<1x24xf32> to vector<8x24xf32>
    %252 = arith.addf %250, %251 : vector<8x24xf32>
    %c0_228 = arith.constant 0 : index
    %c0_229 = arith.constant 0 : index
    %c0_230 = arith.constant 0 : index
    %c0_231 = arith.constant 0 : index
    %253 = vector.load %arg3[%c0_228, %c0_229, %c0_230, %c0_231] : memref<2x1x8x24xf32, #tpu.memory_space<vmem>>, vector<1x1x8x24xf32>
    %254 = vector.shape_cast %253 : vector<1x1x8x24xf32> to vector<8x24xf32>
    %255 = vector.shape_cast %242 : vector<8x24xf32> to vector<1x1x8x24xf32>
    tpu.vector_store %arg3[%c0_228, %c0_229, %c0_230, %c0_231], %255 {strides = array<i32>} : memref<2x1x8x24xf32, #tpu.memory_space<vmem>>, vector<1x1x8x24xf32>,
    %c1_232 = arith.constant 1 : index
    %c0_233 = arith.constant 0 : index
    %c0_234 = arith.constant 0 : index
    %c0_235 = arith.constant 0 : index
    %256 = vector.load %arg3[%c1_232, %c0_233, %c0_234, %c0_235] : memref<2x1x8x24xf32, #tpu.memory_space<vmem>>, vector<1x1x8x24xf32>
    %257 = vector.shape_cast %256 : vector<1x1x8x24xf32> to vector<8x24xf32>
    %258 = vector.shape_cast %252 : vector<8x24xf32> to vector<1x1x8x24xf32>
    tpu.vector_store %arg3[%c1_232, %c0_233, %c0_234, %c0_235], %258 {strides = array<i32>} : memref<2x1x8x24xf32, #tpu.memory_space<vmem>>, vector<1x1x8x24xf32>,
    return
  }
  func.func @transform_0(%arg0: i32) -> (i32, i32, i32) {
    %c0_i32 = arith.constant 0 : i32
    %c0_i32_0 = arith.constant 0 : i32
    %c0_i32_1 = arith.constant 0 : i32
    return %arg0, %c0_i32, %c0_i32_0 : i32, i32, i32
  }
  func.func @transform_1(%arg0: i32) -> (i32, i32) {
    %c0_i32 = arith.constant 0 : i32
    %c0_i32_0 = arith.constant 0 : i32
    %c0_i32_1 = arith.constant 0 : i32
    return %c0_i32, %c0_i32_0 : i32, i32
  }
  func.func @transform_2(%arg0: i32) -> (i32, i32, i32, i32) {
    %c0_i32 = arith.constant 0 : i32
    %c0_i32_0 = arith.constant 0 : i32
    %c0_i32_1 = arith.constant 0 : i32
    %c0_i32_2 = arith.constant 0 : i32
    return %c0_i32, %arg0, %c0_i32_0, %c0_i32_1 : i32, i32, i32, i32
  }
}

</mosaic_0001>

<llo_original>
// kernel: tpu_custom_call.1
$region0: #{tpu_custom_call.1}
  #allocation0 [shape = 'u32[]', space=smem, size = 0x4, offset = 0x4, fixed_abs, tag = 'smem constant byte address 0x4 - core index']
  #allocation1 [shape = 'u32[144,128]{1,0:T(1,128)}', space=vmem, size = 0x12000, scoped, tag = 'internal scratch']
  #allocation2 [shape = 'f32[2,24,32]{2,1,0:T(8,128)}', space=vmem, size = 0x6000, scoped, tag = 'scratch operand']
  %s0 = inlined_call_operand.vmem [shape: f32[2,8,8], index: 0, kind: input, shape index: {}]
  %s1 = inlined_call_operand.vmem [shape: f32[720,32], index: 1, kind: input, shape index: {}]
  %s2 = inlined_call_operand.hbm [shape: f32[2,2,8,24], index: 2, kind: output, shape index: {}]
  %s3 = sld [smem:[#allocation0]]
  $region41: #{tpu_custom_call.1} parent=0
    _
  %s5 = ssub.s32 1, %s3
  %s6 = scalar_select 0, %s5, %s3
  $region1: #{tpu_custom_call.1} parent=0
    #allocation3 [shape = 'u8[16384]{0}', space=vmem, size = 0x4000, scoped, tag = 'output window, operand 0']
    #allocation4 [shape = 's32[2]{0}', space=sflag, size = 0x8, scoped, tag = 'scoped memory for tpu_custom_call.1']
    %7 = vsyncpa [#allocation4], 0
    %s8 = scalar_lea.sflag [#allocation4], 1
    %9 = vsyncpa %s8, 0
    loop: start=0, step=1, limit=4
    $region2: #{tpu_custom_call.1} parent=1 // loop_pre_header
      _
    $region3: #{tpu_custom_call.1} parent=1 // loop_header
      %s11 = sphi 0, %s15
      %p12 = scmp.ge.s32.totalorder %s11, 4
      %s21 = sphi 0, %s23
      %s24 = sphi 0, %s21
      %s25 = sphi 0, %s24
      %s41 = sphi 0, %s25
      %s45 = sphi 0, %s45
      %s47 = sphi 0, %s45
      %s48 = sphi 0, %s47
      %s62 = sphi 0, %s48
      %s68 = sphi 0, %s70
      %s71 = sphi 0, %s68
      %s72 = sphi 0, %s71
      %s88 = sphi 0, %s72
    $region4: #{tpu_custom_call.1} parent=1 // loop_header_branch
      %14 = sbr.rel (%p12) target = $region8
    $region5: #{tpu_custom_call.1} parent=1 // loop_body
      %s16 = ssub.s32 %s11, 1
      %s17 = ssub.s32 %s11, 2
      %s18 = sadd.s32 %s11, 1
      %s19 = ssub.s32 %s11, %s18
      %p20 = scmp.eq.s32.totalorder %s19, 0
      %s22 = sadd.s32 %s21, 1
      %s23 = scalar_select %p20, %s21, %s22
      %p26 = pneg %p20
      %p27 = scmp.eq.s32.totalorder %s11, 1
      %p28 = por %p26, %p27
      %p29 = scmp.ne.s32.totalorder %s21, %s24
      %p30 = scmp.eq.s32.totalorder %s11, 0
      %p31 = por %p29, %p30
      %p32 = scmp.ne.s32.totalorder %s21, %s24
      %p33 = scmp.eq.s32.totalorder %s16, 1
      %p34 = por %p32, %p33
      %p35 = scmp.ne.s32.totalorder %s24, %s25
      %p36 = scmp.eq.s32.totalorder %s16, 0
      %p37 = por %p35, %p36
      %p38 = scmp.ne.s32.totalorder %s24, %s25
      %p39 = scmp.eq.s32.totalorder %s17, 1
      %p40 = por %p38, %p39
      %p42 = scmp.ne.s32.totalorder %s25, %s41
      %p43 = scmp.eq.s32.totalorder %s17, 0
      %p44 = por %p42, %p43
      %s46 = sadd.s32 %s45, 1
      %p49 = scmp.eq.s32.totalorder %s11, 1
      %p50 = scmp.ne.s32.totalorder %s45, %s47
      %p51 = scmp.eq.s32.totalorder %s11, 0
      %p52 = por %p50, %p51
      %p53 = scmp.ne.s32.totalorder %s45, %s47
      %p54 = scmp.eq.s32.totalorder %s16, 1
      %p55 = por %p53, %p54
      %p56 = scmp.ne.s32.totalorder %s47, %s48
      %p57 = scmp.eq.s32.totalorder %s16, 0
      %p58 = por %p56, %p57
      %p59 = scmp.ne.s32.totalorder %s47, %s48
      %p60 = scmp.eq.s32.totalorder %s17, 1
      %p61 = por %p59, %p60
      %p63 = scmp.ne.s32.totalorder %s48, %s62
      %p64 = scmp.eq.s32.totalorder %s17, 0
      %p65 = por %p63, %p64
      %s66 = ssub.s32 %s11, %s18
      %p67 = scmp.eq.s32.totalorder %s66, 0
      %s69 = sadd.s32 %s68, 1
      %s70 = scalar_select %p67, %s68, %s69
      %p73 = pneg %p67
      %p74 = scmp.eq.s32.totalorder %s11, 1
      %p75 = por %p73, %p74
      %p76 = scmp.ne.s32.totalorder %s68, %s71
      %p77 = scmp.eq.s32.totalorder %s11, 0
      %p78 = por %p76, %p77
      %p79 = scmp.ne.s32.totalorder %s68, %s71
      %p80 = scmp.eq.s32.totalorder %s16, 1
      %p81 = por %p79, %p80
      %p82 = scmp.ne.s32.totalorder %s71, %s72
      %p83 = scmp.eq.s32.totalorder %s16, 0
      %p84 = por %p82, %p83
      %p85 = scmp.ne.s32.totalorder %s71, %s72
      %p86 = scmp.eq.s32.totalorder %s17, 1
      %p87 = por %p85, %p86
      %p89 = scmp.ne.s32.totalorder %s72, %s88
      %p90 = scmp.eq.s32.totalorder %s17, 0
      %p91 = por %p89, %p90
      %p92 = scmp.le.s32.totalorder 1, %s11
      %p93 = scmp.lt.s32.totalorder %s11, 3
      %p94 = pnand %p92, %p93
      %p95 = pneg %p94
      // Predicated region
      $region9: #{tpu_custom_call.1} parent=5 // pred_check
        _
      $region10: #{tpu_custom_call.1} parent=5 // pred_check_branch
        %97 = sbr.rel (%p94) target = $region12
      $region11: #{tpu_custom_call.1} parent=5 // pred_region
        %s98 = ssub.s32 %s11, 1
        // Predicated region
        $region13: #{tpu_custom_call.1} parent=11 // pred_check
          %p99 = pneg %p58
        $region14: #{tpu_custom_call.1} parent=11 // pred_check_branch
          %101 = sbr.rel (%p99) target = $region16
        $region15: #{tpu_custom_call.1} parent=11 // pred_region
          _
        $region16: #{tpu_custom_call.1} parent=11 // pred_fallthru
          _
      $region12: #{tpu_custom_call.1} parent=5 // pred_fallthru
        _
      %p102 = scmp.lt.s32.totalorder %s11, 2
      // Predicated region
      $region17: #{tpu_custom_call.1} parent=5 // pred_check
        %p103 = pneg %p102
      $region18: #{tpu_custom_call.1} parent=5 // pred_check_branch
        %105 = sbr.rel (%p103) target = $region20
      $region19: #{tpu_custom_call.1} parent=5 // pred_region
        // Predicated region
        $region21: #{tpu_custom_call.1} parent=19 // pred_check
          %p106 = pneg %p31
        $region22: #{tpu_custom_call.1} parent=19 // pred_check_branch
          %108 = sbr.rel (%p106) target = $region24
        $region23: #{tpu_custom_call.1} parent=19 // pred_region
          %p109 = scmp.lt.s32.totalorder %s11, 1
          %s110 = scalar_select %p109, %s11, 1
          %s111 = smul.addr %s110, 8
          %s112 = scalar_lea.vmem %s0, %s111
        $region24: #{tpu_custom_call.1} parent=19 // pred_fallthru
          _
      $region20: #{tpu_custom_call.1} parent=5 // pred_fallthru
        _
      %p113 = scmp.le.s32.totalorder 1, %s11
      %p114 = scmp.lt.s32.totalorder %s11, 3
      %p115 = pnand %p113, %p114
      %p116 = pneg %p115
      // Predicated region
      $region25: #{tpu_custom_call.1} parent=5 // pred_check
        _
      $region26: #{tpu_custom_call.1} parent=5 // pred_check_branch
        %118 = sbr.rel (%p115) target = $region28
      $region27: #{tpu_custom_call.1} parent=5 // pred_region
        %s119 = ssub.s32 %s11, 1
        %p120 = scmp.lt.s32.totalorder %s16, 1
        %s121 = scalar_select %p120, %s16, 1
        %s122 = smul.addr %s121, 8
        %s123 = scalar_lea.vmem %s0, %s122
        %p124 = pneg %p37
        %p125 = pneg %p34
        %p126 = pneg %p58
        %p127 = pneg %p55
        %p128 = pneg %p84
        %p129 = pneg %p81
        %s130 = sand.u32 %s71, 1
        %s131 = scalar_lea.sflag [#allocation4], %s130
        %s132 = sand.u32 %s71, 1
        %s133 = smul.addr %s132, 16
        %s134 = scalar_lea.vmem [#allocation3], %s133
        %p135 = scmp.lt.s32.totalorder %s16, 1
        %s136 = scalar_select %p135, %s16, 1
        %s137 = smul.addr %s136, 8
        %s138 = scalar_lea.vmem %s0, %s137
        %vm139 = vcmask 261120
        %140 = vst.msk [vmem:[#allocation2] sm:$0xff] %vm139, 0.0
        %141 = vst.msk [vmem:[#allocation2 + $0x8] sm:$0xff] %vm139, 0.0
        %142 = vst.msk [vmem:[#allocation2 + $0x10] sm:$0xff] %vm139, 0.0
        %143 = vst.msk [vmem:[#allocation2 + $0x18] sm:$0xff] %vm139, 0.0
        %144 = vst.msk [vmem:[#allocation2 + $0x20] sm:$0xff] %vm139, 0.0
        %145 = vst.msk [vmem:[#allocation2 + $0x28] sm:$0xff] %vm139, 0.0
        %v146 = vld [vmem:[%s138] sm:$0xff]
        %vm147 = vcmask 64512
        %148 = vst.msk [vmem:[#allocation2 + $0x8] sm:$0xff] %vm147, %v146
        %v149 = vld [vmem:[%s1] sm:$0xff]
        %v150 = vld [vmem:[%s1 + $0x8] sm:$0xff]
        %v151 = vld [vmem:[%s1 + $0x10] sm:$0xff]
        %v152 = vld [vmem:[%s1 + $0x18] sm:$0x1]
        %v153 = vld [vmem:[#allocation2 + $0x7] sm:$0xff]
        %v154 = vld [vmem:[#allocation2 + $0x8] sm:$0xff]
        %v155 = vld [vmem:[#allocation2 + $0x9] sm:$0xff]
        %157 = vrot.lane.b32.xlu0 %v154, 8
        %v158 = vpop.permute.xlu0 %157
        %161 = vrot.lane.b32.xlu0 %v155, 16
        %v162 = vpop.permute.xlu0 %161
        %v164 = vsel %vm147, %v153, %v158
        %vm165 = vcmask 130048
        %v166 = vsel %vm165, %v164, %v162
        %v167 = vlaneseq
        %v168 = vshrl.u32 %v167, 7
        %v169 = vsub.s32 0, %v168
        %v170 = vrot.slane %v152, %v169
        %vm171 = vcmask 195584
        %v173 = vsel %vm171, %v166, 0
        %175 = vmatprep.subr.mxu0 0.0
        %176 = vmatpush1.msra.mxu0 0.0
        %177 = vmatprep.subr.mxu0 0.0
        %178 = vmatpush1.msra.mxu0 0.0
        %179 = vmatprep.subr.mxu0 0.0
        %180 = vmatpush1.msra.mxu0 0.0
        %181 = vmatprep.subr.mxu0 0.0
        %182 = vmatpush1.msra.mxu0 0.0
        %183 = vmatprep.subr.mxu0 0.0
        %184 = vmatpush1.msra.mxu0 0.0
        %185 = vmatprep.subr.mxu0 0.0
        %186 = vmatpush1.msra.mxu0 0.0
        %187 = vmatprep.subr.mxu0 0.0
        %188 = vmatpush1.msra.mxu0 0.0
        %189 = vmatprep.subr.mxu0 0.0
        %190 = vmatpush1.msra.mxu0 0.0
        %191 = vmatprep.subr.mxu0 0.0
        %192 = vmatpush1.msra.mxu0 0.0
        %193 = vmatprep.subr.mxu0 0.0
        %194 = vmatpush1.msra.mxu0 0.0
        %195 = vmatprep.subr.mxu0 0.0
        %196 = vmatpush1.msra.mxu0 0.0
        %197 = vmatprep.subr.mxu0 0.0
        %198 = vmatpush1.msra.mxu0 0.0
        %199 = vmatprep.subr.mxu0 0.0
        %200 = vmatpush1.msra.mxu0 0.0
        %201 = vmatprep.subr.mxu0 0.0
        %v202 = vand.u32 %v151, 4294901760
        %203 = vmatpush1.msra.mxu0 %v202
        %204 = vmatprep.subr.mxu0 0.0
        %v205 = vand.u32 %v150, 4294901760
        %206 = vmatpush1.msra.mxu0 %v205
        %207 = vmatprep.subr.mxu0 0.0
        %v208 = vand.u32 %v149, 4294901760
        %209 = vmatpush1.msra.mxu0 %v208
        %210 = vmatprep.subr.mxu0 0.0
        %211 = vmatpush2.msra.mxu0 0.0
        %212 = vmatprep.subr.mxu0 0.0
        %213 = vmatpush2.msra.mxu0 0.0
        %214 = vmatprep.subr.mxu0 0.0
        %215 = vmatpush2.msra.mxu0 0.0
        %216 = vmatprep.subr.mxu0 0.0
        %217 = vmatpush2.msra.mxu0 0.0
        %218 = vmatprep.subr.mxu0 0.0
        %219 = vmatpush2.msra.mxu0 0.0
        %220 = vmatprep.subr.mxu0 0.0
        %221 = vmatpush2.msra.mxu0 0.0
        %222 = vmatprep.subr.mxu0 0.0
        %223 = vmatpush2.msra.mxu0 0.0
        %224 = vmatprep.subr.mxu0 0.0
        %225 = vmatpush2.msra.mxu0 0.0
        %226 = vmatprep.subr.mxu0 0.0
        %227 = vmatpush2.msra.mxu0 0.0
        %228 = vmatprep.subr.mxu0 0.0
        %229 = vmatpush2.msra.mxu0 0.0
        %230 = vmatprep.subr.mxu0 0.0
        %231 = vmatpush2.msra.mxu0 0.0
        %232 = vmatprep.subr.mxu0 0.0
        %233 = vmatpush2.msra.mxu0 0.0
        %234 = vmatprep.subr.mxu0 0.0
        %235 = vmatpush2.msra.mxu0 0.0
        %236 = vmatprep.subr.mxu0 0.0
        %237 = vmatpush2.msra.mxu0 0.0
        %238 = vmatprep.subr.mxu0 0.0
        %239 = vmatpush2.msra.mxu0 0.0
        %240 = vmatprep.subr.mxu0 0.0
        %241 = vmatpush2.msra.mxu0 0.0
        %242 = vmatprep.mubr.f32.mxu0 0.0
        %v243 = vand.u32 %v173, 4294901760
        %v244 = vsub.f32 %v173, %v243
        %v245 = vand.u32 %v244, 4294901760
        %v246 = vsub.f32 %v244, %v245
        %v247 = vand.u32 %v246, 4294901760
        %248 = vmatmul.mubr.f32.gmra.mxu0 %v247
        %v249 = vpop.f32.mrf.mxu0
        %v250 = vadd.f32 %v170, %v249
        %v251 = vpop.f32.mrf.mxu0
        %252 = vdwg.mxu0
        %253 = vmatprep.subr.mxu0 0.0
        %254 = vmatpush1.msra.mxu0 0.0
        %255 = vmatprep.subr.mxu0 0.0
        %256 = vmatpush1.msra.mxu0 0.0
        %257 = vmatprep.subr.mxu0 0.0
        %258 = vmatpush1.msra.mxu0 0.0
        %259 = vmatprep.subr.mxu0 0.0
        %260 = vmatpush1.msra.mxu0 0.0
        %261 = vmatprep.subr.mxu0 0.0
        %262 = vmatpush1.msra.mxu0 0.0
        %263 = vmatprep.subr.mxu0 0.0
        %264 = vmatpush1.msra.mxu0 0.0
        %265 = vmatprep.subr.mxu0 0.0
        %266 = vmatpush1.msra.mxu0 0.0
        %267 = vmatprep.subr.mxu0 0.0
        %268 = vmatpush1.msra.mxu0 0.0
        %269 = vmatprep.subr.mxu0 0.0
        %270 = vmatpush1.msra.mxu0 0.0
        %271 = vmatprep.subr.mxu0 0.0
        %272 = vmatpush1.msra.mxu0 0.0
        %273 = vmatprep.subr.mxu0 0.0
        %274 = vmatpush1.msra.mxu0 0.0
        %275 = vmatprep.subr.mxu0 0.0
        %276 = vmatpush1.msra.mxu0 0.0
        %277 = vmatprep.subr.mxu0 0.0
        %278 = vmatpush1.msra.mxu0 0.0
        %279 = vmatprep.subr.mxu0 0.0
        %v280 = vand.u32 %v151, 4294901760
        %v281 = vsub.f32 %v151, %v280
        %v282 = vand.u32 %v281, 4294901760
        %v283 = vsub.f32 %v281, %v282
        %v284 = vand.u32 %v283, 4294901760
        %285 = vmatpush1.msra.mxu0 %v284
        %286 = vmatprep.subr.mxu0 0.0
        %v287 = vand.u32 %v150, 4294901760
        %v288 = vsub.f32 %v150, %v287
        %v289 = vand.u32 %v288, 4294901760
        %v290 = vsub.f32 %v288, %v289
        %v291 = vand.u32 %v290, 4294901760
        %292 = vmatpush1.msra.mxu0 %v291
        %293 = vmatprep.subr.mxu0 0.0
        %v294 = vand.u32 %v149, 4294901760
        %v295 = vsub.f32 %v149, %v294
        %v296 = vand.u32 %v295, 4294901760
        %v297 = vsub.f32 %v295, %v296
        %v298 = vand.u32 %v297, 4294901760
        %299 = vmatpush1.msra.mxu0 %v298
        %300 = vmatprep.subr.mxu0 0.0
        %301 = vmatpush2.msra.mxu0 0.0
        %302 = vmatprep.subr.mxu0 0.0
        %303 = vmatpush2.msra.mxu0 0.0
        %304 = vmatprep.subr.mxu0 0.0
        %305 = vmatpush2.msra.mxu0 0.0
        %306 = vmatprep.subr.mxu0 0.0
        %307 = vmatpush2.msra.mxu0 0.0
        %308 = vmatprep.subr.mxu0 0.0
        %309 = vmatpush2.msra.mxu0 0.0
        %310 = vmatprep.subr.mxu0 0.0
        %311 = vmatpush2.msra.mxu0 0.0
        %312 = vmatprep.subr.mxu0 0.0
        %313 = vmatpush2.msra.mxu0 0.0
        %314 = vmatprep.subr.mxu0 0.0
        %315 = vmatpush2.msra.mxu0 0.0
        %316 = vmatprep.subr.mxu0 0.0
        %317 = vmatpush2.msra.mxu0 0.0
        %318 = vmatprep.subr.mxu0 0.0
        %319 = vmatpush2.msra.mxu0 0.0
        %320 = vmatprep.subr.mxu0 0.0
        %321 = vmatpush2.msra.mxu0 0.0
        %322 = vmatprep.subr.mxu0 0.0
        %323 = vmatpush2.msra.mxu0 0.0
        %324 = vmatprep.subr.mxu0 0.0
        %325 = vmatpush2.msra.mxu0 0.0
        %326 = vmatprep.subr.mxu0 0.0
        %327 = vmatpush2.msra.mxu0 0.0
        %328 = vmatprep.subr.mxu0 0.0
        %329 = vmatpush2.msra.mxu0 0.0
        %330 = vmatprep.subr.mxu0 0.0
        %331 = vmatpush2.msra.mxu0 0.0
        %332 = vmatprep.mubr.f32.mxu0 0.0
        %v333 = vand.u32 %v173, 4294901760
        %334 = vmatmul.mubr.f32.gmra.mxu0 %v333
        %v335 = vpop.f32.mrf.mxu0
        %v336 = vadd.f32 %v250, %v335
        %v337 = vpop.f32.mrf.mxu0
        %338 = vdwg.mxu0
        %339 = vmatprep.subr.mxu0 0.0
        %340 = vmatpush1.msra.mxu0 0.0
        %341 = vmatprep.subr.mxu0 0.0
        %342 = vmatpush1.msra.mxu0 0.0
        %343 = vmatprep.subr.mxu0 0.0
        %344 = vmatpush1.msra.mxu0 0.0
        %345 = vmatprep.subr.mxu0 0.0
        %346 = vmatpush1.msra.mxu0 0.0
        %347 = vmatprep.subr.mxu0 0.0
        %348 = vmatpush1.msra.mxu0 0.0
        %349 = vmatprep.subr.mxu0 0.0
        %350 = vmatpush1.msra.mxu0 0.0
        %351 = vmatprep.subr.mxu0 0.0
        %352 = vmatpush1.msra.mxu0 0.0
        %353 = vmatprep.subr.mxu0 0.0
        %354 = vmatpush1.msra.mxu0 0.0
        %355 = vmatprep.subr.mxu0 0.0
        %356 = vmatpush1.msra.mxu0 0.0
        %357 = vmatprep.subr.mxu0 0.0
        %358 = vmatpush1.msra.mxu0 0.0
        %359 = vmatprep.subr.mxu0 0.0
        %360 = vmatpush1.msra.mxu0 0.0
        %361 = vmatprep.subr.mxu0 0.0
        %362 = vmatpush1.msra.mxu0 0.0
        %363 = vmatprep.subr.mxu0 0.0
        %364 = vmatpush1.msra.mxu0 0.0
        %365 = vmatprep.subr.mxu0 0.0
        %v366 = vand.u32 %v151, 4294901760
        %v367 = vsub.f32 %v151, %v366
        %368 = vmatpush1.msra.mxu0 %v367
        %369 = vmatprep.subr.mxu0 0.0
        %v370 = vand.u32 %v150, 4294901760
        %v371 = vsub.f32 %v150, %v370
        %372 = vmatpush1.msra.mxu0 %v371
        %373 = vmatprep.subr.mxu0 0.0
        %v374 = vand.u32 %v149, 4294901760
        %v375 = vsub.f32 %v149, %v374
        %376 = vmatpush1.msra.mxu0 %v375
        %377 = vmatprep.subr.mxu0 0.0
        %378 = vmatpush2.msra.mxu0 0.0
        %379 = vmatprep.subr.mxu0 0.0
        %380 = vmatpush2.msra.mxu0 0.0
        %381 = vmatprep.subr.mxu0 0.0
        %382 = vmatpush2.msra.mxu0 0.0
        %383 = vmatprep.subr.mxu0 0.0
        %384 = vmatpush2.msra.mxu0 0.0
        %385 = vmatprep.subr.mxu0 0.0
        %386 = vmatpush2.msra.mxu0 0.0
        %387 = vmatprep.subr.mxu0 0.0
        %388 = vmatpush2.msra.mxu0 0.0
        %389 = vmatprep.subr.mxu0 0.0
        %390 = vmatpush2.msra.mxu0 0.0
        %391 = vmatprep.subr.mxu0 0.0
        %392 = vmatpush2.msra.mxu0 0.0
        %393 = vmatprep.subr.mxu0 0.0
        %394 = vmatpush2.msra.mxu0 0.0
        %395 = vmatprep.subr.mxu0 0.0
        %396 = vmatpush2.msra.mxu0 0.0
        %397 = vmatprep.subr.mxu0 0.0
        %398 = vmatpush2.msra.mxu0 0.0
        %399 = vmatprep.subr.mxu0 0.0
        %400 = vmatpush2.msra.mxu0 0.0
        %401 = vmatprep.subr.mxu0 0.0
        %402 = vmatpush2.msra.mxu0 0.0
        %403 = vmatprep.subr.mxu0 0.0
        %404 = vmatpush2.msra.mxu0 0.0
        %405 = vmatprep.subr.mxu0 0.0
        %406 = vmatpush2.msra.mxu0 0.0
        %407 = vmatprep.subr.mxu0 0.0
        %408 = vmatpush2.msra.mxu0 0.0
        %409 = vmatprep.mubr.f32.mxu0 0.0
        %v410 = vand.u32 %v173, 4294901760
        %v411 = vsub.f32 %v173, %v410
        %412 = vmatmul.mubr.f32.gmra.mxu0 %v411
        %v413 = vpop.f32.mrf.mxu0
        %v414 = vadd.f32 %v336, %v413
        %v415 = vpop.f32.mrf.mxu0
        %416 = vdwg.mxu0
        %417 = vmatprep.subr.mxu0 0.0
        %418 = vmatpush1.msra.mxu0 0.0
        %419 = vmatprep.subr.mxu0 0.0
        %420 = vmatpush1.msra.mxu0 0.0
        %421 = vmatprep.subr.mxu0 0.0
        %422 = vmatpush1.msra.mxu0 0.0
        %423 = vmatprep.subr.mxu0 0.0
        %424 = vmatpush1.msra.mxu0 0.0
        %425 = vmatprep.subr.mxu0 0.0
        %426 = vmatpush1.msra.mxu0 0.0
        %427 = vmatprep.subr.mxu0 0.0
        %428 = vmatpush1.msra.mxu0 0.0
        %429 = vmatprep.subr.mxu0 0.0
        %430 = vmatpush1.msra.mxu0 0.0
        %431 = vmatprep.subr.mxu0 0.0
        %432 = vmatpush1.msra.mxu0 0.0
        %433 = vmatprep.subr.mxu0 0.0
        %434 = vmatpush1.msra.mxu0 0.0
        %435 = vmatprep.subr.mxu0 0.0
        %436 = vmatpush1.msra.mxu0 0.0
        %437 = vmatprep.subr.mxu0 0.0
        %438 = vmatpush1.msra.mxu0 0.0
        %439 = vmatprep.subr.mxu0 0.0
        %440 = vmatpush1.msra.mxu0 0.0
        %441 = vmatprep.subr.mxu0 0.0
        %442 = vmatpush1.msra.mxu0 0.0
        %443 = vmatprep.subr.mxu0 0.0
        %v444 = vand.u32 %v151, 4294901760
        %445 = vmatpush1.msra.mxu0 %v444
        %446 = vmatprep.subr.mxu0 0.0
        %v447 = vand.u32 %v150, 4294901760
        %448 = vmatpush1.msra.mxu0 %v447
        %449 = vmatprep.subr.mxu0 0.0
        %v450 = vand.u32 %v149, 4294901760
        %451 = vmatpush1.msra.mxu0 %v450
        %452 = vmatprep.subr.mxu0 0.0
        %453 = vmatpush2.msra.mxu0 0.0
        %454 = vmatprep.subr.mxu0 0.0
        %455 = vmatpush2.msra.mxu0 0.0
        %456 = vmatprep.subr.mxu0 0.0
        %457 = vmatpush2.msra.mxu0 0.0
        %458 = vmatprep.subr.mxu0 0.0
        %459 = vmatpush2.msra.mxu0 0.0
        %460 = vmatprep.subr.mxu0 0.0
        %461 = vmatpush2.msra.mxu0 0.0
        %462 = vmatprep.subr.mxu0 0.0
        %463 = vmatpush2.msra.mxu0 0.0
        %464 = vmatprep.subr.mxu0 0.0
        %465 = vmatpush2.msra.mxu0 0.0
        %466 = vmatprep.subr.mxu0 0.0
        %467 = vmatpush2.msra.mxu0 0.0
        %468 = vmatprep.subr.mxu0 0.0
        %469 = vmatpush2.msra.mxu0 0.0
        %470 = vmatprep.subr.mxu0 0.0
        %471 = vmatpush2.msra.mxu0 0.0
        %472 = vmatprep.subr.mxu0 0.0
        %473 = vmatpush2.msra.mxu0 0.0
        %474 = vmatprep.subr.mxu0 0.0
        %475 = vmatpush2.msra.mxu0 0.0
        %476 = vmatprep.subr.mxu0 0.0
        %477 = vmatpush2.msra.mxu0 0.0
        %478 = vmatprep.subr.mxu0 0.0
        %479 = vmatpush2.msra.mxu0 0.0
        %480 = vmatprep.subr.mxu0 0.0
        %481 = vmatpush2.msra.mxu0 0.0
        %482 = vmatprep.subr.mxu0 0.0
        %483 = vmatpush2.msra.mxu0 0.0
        %484 = vmatprep.mubr.f32.mxu0 0.0
        %v485 = vand.u32 %v173, 4294901760
        %v486 = vsub.f32 %v173, %v485
        %v487 = vand.u32 %v486, 4294901760
        %488 = vmatmul.mubr.f32.gmra.mxu0 %v487
        %v489 = vpop.f32.mrf.mxu0
        %v490 = vadd.f32 %v414, %v489
        %v491 = vpop.f32.mrf.mxu0
        %492 = vdwg.mxu0
        %493 = vmatprep.subr.mxu0 0.0
        %494 = vmatpush1.msra.mxu0 0.0
        %495 = vmatprep.subr.mxu0 0.0
        %496 = vmatpush1.msra.mxu0 0.0
        %497 = vmatprep.subr.mxu0 0.0
        %498 = vmatpush1.msra.mxu0 0.0
        %499 = vmatprep.subr.mxu0 0.0
        %500 = vmatpush1.msra.mxu0 0.0
        %501 = vmatprep.subr.mxu0 0.0
        %502 = vmatpush1.msra.mxu0 0.0
        %503 = vmatprep.subr.mxu0 0.0
        %504 = vmatpush1.msra.mxu0 0.0
        %505 = vmatprep.subr.mxu0 0.0
        %506 = vmatpush1.msra.mxu0 0.0
        %507 = vmatprep.subr.mxu0 0.0
        %508 = vmatpush1.msra.mxu0 0.0
        %509 = vmatprep.subr.mxu0 0.0
        %510 = vmatpush1.msra.mxu0 0.0
        %511 = vmatprep.subr.mxu0 0.0
        %512 = vmatpush1.msra.mxu0 0.0
        %513 = vmatprep.subr.mxu0 0.0
        %514 = vmatpush1.msra.mxu0 0.0
        %515 = vmatprep.subr.mxu0 0.0
        %516 = vmatpush1.msra.mxu0 0.0
        %517 = vmatprep.subr.mxu0 0.0
        %518 = vmatpush1.msra.mxu0 0.0
        %519 = vmatprep.subr.mxu0 0.0
        %v520 = vand.u32 %v151, 4294901760
        %v521 = vsub.f32 %v151, %v520
        %v522 = vand.u32 %v521, 4294901760
        %523 = vmatpush1.msra.mxu0 %v522
        %524 = vmatprep.subr.mxu0 0.0
        %v525 = vand.u32 %v150, 4294901760
        %v526 = vsub.f32 %v150, %v525
        %v527 = vand.u32 %v526, 4294901760
        %528 = vmatpush1.msra.mxu0 %v527
        %529 = vmatprep.subr.mxu0 0.0
        %v530 = vand.u32 %v149, 4294901760
        %v531 = vsub.f32 %v149, %v530
        %v532 = vand.u32 %v531, 4294901760
        %533 = vmatpush1.msra.mxu0 %v532
        %534 = vmatprep.subr.mxu0 0.0
        %535 = vmatpush2.msra.mxu0 0.0
        %536 = vmatprep.subr.mxu0 0.0
        %537 = vmatpush2.msra.mxu0 0.0
        %538 = vmatprep.subr.mxu0 0.0
        %539 = vmatpush2.msra.mxu0 0.0
        %540 = vmatprep.subr.mxu0 0.0
        %541 = vmatpush2.msra.mxu0 0.0
        %542 = vmatprep.subr.mxu0 0.0
        %543 = vmatpush2.msra.mxu0 0.0
        %544 = vmatprep.subr.mxu0 0.0
        %545 = vmatpush2.msra.mxu0 0.0
        %546 = vmatprep.subr.mxu0 0.0
        %547 = vmatpush2.msra.mxu0 0.0
        %548 = vmatprep.subr.mxu0 0.0
        %549 = vmatpush2.msra.mxu0 0.0
        %550 = vmatprep.subr.mxu0 0.0
        %551 = vmatpush2.msra.mxu0 0.0
        %552 = vmatprep.subr.mxu0 0.0
        %553 = vmatpush2.msra.mxu0 0.0
        %554 = vmatprep.subr.mxu0 0.0
        %555 = vmatpush2.msra.mxu0 0.0
        %556 = vmatprep.subr.mxu0 0.0
        %557 = vmatpush2.msra.mxu0 0.0
        %558 = vmatprep.subr.mxu0 0.0
        %559 = vmatpush2.msra.mxu0 0.0
        %560 = vmatprep.subr.mxu0 0.0
        %561 = vmatpush2.msra.mxu0 0.0
        %562 = vmatprep.subr.mxu0 0.0
        %563 = vmatpush2.msra.mxu0 0.0
        %564 = vmatprep.subr.mxu0 0.0
        %565 = vmatpush2.msra.mxu0 0.0
        %566 = vmatprep.mubr.f32.mxu0 0.0
        %v567 = vand.u32 %v173, 4294901760
        %568 = vmatmul.mubr.f32.gmra.mxu0 %v567
        %v569 = vpop.f32.mrf.mxu0
        %v570 = vadd.f32 %v490, %v569
        %v571 = vpop.f32.mrf.mxu0
        %572 = vdwg.mxu0
        %573 = vmatprep.subr.mxu0 0.0
        %574 = vmatpush1.msra.mxu0 0.0
        %575 = vmatprep.subr.mxu0 0.0
        %576 = vmatpush1.msra.mxu0 0.0
        %577 = vmatprep.subr.mxu0 0.0
        %578 = vmatpush1.msra.mxu0 0.0
        %579 = vmatprep.subr.mxu0 0.0
        %580 = vmatpush1.msra.mxu0 0.0
        %581 = vmatprep.subr.mxu0 0.0
        %582 = vmatpush1.msra.mxu0 0.0
        %583 = vmatprep.subr.mxu0 0.0
        %584 = vmatpush1.msra.mxu0 0.0
        %585 = vmatprep.subr.mxu0 0.0
        %586 = vmatpush1.msra.mxu0 0.0
        %587 = vmatprep.subr.mxu0 0.0
        %588 = vmatpush1.msra.mxu0 0.0
        %589 = vmatprep.subr.mxu0 0.0
        %590 = vmatpush1.msra.mxu0 0.0
        %591 = vmatprep.subr.mxu0 0.0
        %592 = vmatpush1.msra.mxu0 0.0
        %593 = vmatprep.subr.mxu0 0.0
        %594 = vmatpush1.msra.mxu0 0.0
        %595 = vmatprep.subr.mxu0 0.0
        %596 = vmatpush1.msra.mxu0 0.0
        %597 = vmatprep.subr.mxu0 0.0
        %598 = vmatpush1.msra.mxu0 0.0
        %599 = vmatprep.subr.mxu0 0.0
        %v600 = vand.u32 %v151, 4294901760
        %601 = vmatpush1.msra.mxu0 %v600
        %602 = vmatprep.subr.mxu0 0.0
        %v603 = vand.u32 %v150, 4294901760
        %604 = vmatpush1.msra.mxu0 %v603
        %605 = vmatprep.subr.mxu0 0.0
        %v606 = vand.u32 %v149, 4294901760
        %607 = vmatpush1.msra.mxu0 %v606
        %608 = vmatprep.subr.mxu0 0.0
        %609 = vmatpush2.msra.mxu0 0.0
        %610 = vmatprep.subr.mxu0 0.0
        %611 = vmatpush2.msra.mxu0 0.0
        %612 = vmatprep.subr.mxu0 0.0
        %613 = vmatpush2.msra.mxu0 0.0
        %614 = vmatprep.subr.mxu0 0.0
        %615 = vmatpush2.msra.mxu0 0.0
        %616 = vmatprep.subr.mxu0 0.0
        %617 = vmatpush2.msra.mxu0 0.0
        %618 = vmatprep.subr.mxu0 0.0
        %619 = vmatpush2.msra.mxu0 0.0
        %620 = vmatprep.subr.mxu0 0.0
        %621 = vmatpush2.msra.mxu0 0.0
        %622 = vmatprep.subr.mxu0 0.0
        %623 = vmatpush2.msra.mxu0 0.0
        %624 = vmatprep.subr.mxu0 0.0
        %625 = vmatpush2.msra.mxu0 0.0
        %626 = vmatprep.subr.mxu0 0.0
        %627 = vmatpush2.msra.mxu0 0.0
        %628 = vmatprep.subr.mxu0 0.0
        %629 = vmatpush2.msra.mxu0 0.0
        %630 = vmatprep.subr.mxu0 0.0
        %631 = vmatpush2.msra.mxu0 0.0
        %632 = vmatprep.subr.mxu0 0.0
        %633 = vmatpush2.msra.mxu0 0.0
        %634 = vmatprep.subr.mxu0 0.0
        %635 = vmatpush2.msra.mxu0 0.0
        %636 = vmatprep.subr.mxu0 0.0
        %637 = vmatpush2.msra.mxu0 0.0
        %638 = vmatprep.subr.mxu0 0.0
        %639 = vmatpush2.msra.mxu0 0.0
        %640 = vmatprep.mubr.f32.mxu0 0.0
        %v641 = vand.u32 %v173, 4294901760
        %642 = vmatmul.mubr.f32.gmra.mxu0 %v641
        %v643 = vpop.f32.mrf.mxu0
        %v644 = vadd.f32 %v570, %v643
        %v645 = vpop.f32.mrf.mxu0
        %646 = vdwg.mxu0
        %v647 = vmax.f32 %v644, 0.0
        %v648 = vmax.f32 %v647, 0.0
        %649 = vst.msk [vmem:[#allocation2 + $0x8] sm:$0xff] %vm147, %v648
        %v650 = vld [vmem:[%s1 + $0x20] sm:$0xff]
        %v651 = vld [vmem:[%s1 + $0x28] sm:$0xff]
        %v652 = vld [vmem:[%s1 + $0x30] sm:$0xff]
        %v653 = vld [vmem:[%s1 + $0x38] sm:$0x1]
        %v654 = vld [vmem:[#allocation2 + $0x6] sm:$0xff]
        %v655 = vld [vmem:[#allocation2 + $0x8] sm:$0xff]
        %v656 = vld [vmem:[#allocation2 + $0xa] sm:$0xff]
        %658 = vrot.lane.b32.xlu0 %v655, 8
        %v659 = vpop.permute.xlu0 %658
        %662 = vrot.lane.b32.xlu0 %v656, 16
        %v663 = vpop.permute.xlu0 %662
        %v665 = vsel %vm147, %v654, %v659
        %v666 = vsel %vm165, %v665, %v663
        %v667 = vlaneseq
        %v668 = vshrl.u32 %v667, 7
        %v669 = vsub.s32 0, %v668
        %v670 = vrot.slane %v653, %v669
        %v672 = vsel %vm171, %v666, 0
        %674 = vmatprep.subr.mxu0 0.0
        %675 = vmatpush1.msra.mxu0 0.0
        %676 = vmatprep.subr.mxu0 0.0
        %677 = vmatpush1.msra.mxu0 0.0
        %678 = vmatprep.subr.mxu0 0.0
        %679 = vmatpush1.msra.mxu0 0.0
        %680 = vmatprep.subr.mxu0 0.0
        %681 = vmatpush1.msra.mxu0 0.0
        %682 = vmatprep.subr.mxu0 0.0
        %683 = vmatpush1.msra.mxu0 0.0
        %684 = vmatprep.subr.mxu0 0.0
        %685 = vmatpush1.msra.mxu0 0.0
        %686 = vmatprep.subr.mxu0 0.0
        %687 = vmatpush1.msra.mxu0 0.0
        %688 = vmatprep.subr.mxu0 0.0
        %689 = vmatpush1.msra.mxu0 0.0
        %690 = vmatprep.subr.mxu0 0.0
        %691 = vmatpush1.msra.mxu0 0.0
        %692 = vmatprep.subr.mxu0 0.0
        %693 = vmatpush1.msra.mxu0 0.0
        %694 = vmatprep.subr.mxu0 0.0
        %695 = vmatpush1.msra.mxu0 0.0
        %696 = vmatprep.subr.mxu0 0.0
        %697 = vmatpush1.msra.mxu0 0.0
        %698 = vmatprep.subr.mxu0 0.0
        %699 = vmatpush1.msra.mxu0 0.0
        %700 = vmatprep.subr.mxu0 0.0
        %v701 = vand.u32 %v652, 4294901760
        %702 = vmatpush1.msra.mxu0 %v701
        %703 = vmatprep.subr.mxu0 0.0
        %v704 = vand.u32 %v651, 4294901760
        %705 = vmatpush1.msra.mxu0 %v704
        %706 = vmatprep.subr.mxu0 0.0
        %v707 = vand.u32 %v650, 4294901760
        %708 = vmatpush1.msra.mxu0 %v707
        %709 = vmatprep.subr.mxu0 0.0
        %710 = vmatpush2.msra.mxu0 0.0
        %711 = vmatprep.subr.mxu0 0.0
        %712 = vmatpush2.msra.mxu0 0.0
        %713 = vmatprep.subr.mxu0 0.0
        %714 = vmatpush2.msra.mxu0 0.0
        %715 = vmatprep.subr.mxu0 0.0
        %716 = vmatpush2.msra.mxu0 0.0
        %717 = vmatprep.subr.mxu0 0.0
        %718 = vmatpush2.msra.mxu0 0.0
        %719 = vmatprep.subr.mxu0 0.0
        %720 = vmatpush2.msra.mxu0 0.0
        %721 = vmatprep.subr.mxu0 0.0
        %722 = vmatpush2.msra.mxu0 0.0
        %723 = vmatprep.subr.mxu0 0.0
        %724 = vmatpush2.msra.mxu0 0.0
        %725 = vmatprep.subr.mxu0 0.0
        %726 = vmatpush2.msra.mxu0 0.0
        %727 = vmatprep.subr.mxu0 0.0
        %728 = vmatpush2.msra.mxu0 0.0
        %729 = vmatprep.subr.mxu0 0.0
        %730 = vmatpush2.msra.mxu0 0.0
        %731 = vmatprep.subr.mxu0 0.0
        %732 = vmatpush2.msra.mxu0 0.0
        %733 = vmatprep.subr.mxu0 0.0
        %734 = vmatpush2.msra.mxu0 0.0
        %735 = vmatprep.subr.mxu0 0.0
        %736 = vmatpush2.msra.mxu0 0.0
        %737 = vmatprep.subr.mxu0 0.0
        %738 = vmatpush2.msra.mxu0 0.0
        %739 = vmatprep.subr.mxu0 0.0
        %740 = vmatpush2.msra.mxu0 0.0
        %741 = vmatprep.mubr.f32.mxu0 0.0
        %v742 = vand.u32 %v672, 4294901760
        %v743 = vsub.f32 %v672, %v742
        %v744 = vand.u32 %v743, 4294901760
        %v745 = vsub.f32 %v743, %v744
        %v746 = vand.u32 %v745, 4294901760
        %747 = vmatmul.mubr.f32.gmra.mxu0 %v746
        %v748 = vpop.f32.mrf.mxu0
        %v749 = vadd.f32 %v670, %v748
        %v750 = vpop.f32.mrf.mxu0
        %751 = vdwg.mxu0
        %752 = vmatprep.subr.mxu0 0.0
        %753 = vmatpush1.msra.mxu0 0.0
        %754 = vmatprep.subr.mxu0 0.0
        %755 = vmatpush1.msra.mxu0 0.0
        %756 = vmatprep.subr.mxu0 0.0
        %757 = vmatpush1.msra.mxu0 0.0
        %758 = vmatprep.subr.mxu0 0.0
        %759 = vmatpush1.msra.mxu0 0.0
        %760 = vmatprep.subr.mxu0 0.0
        %761 = vmatpush1.msra.mxu0 0.0
        %762 = vmatprep.subr.mxu0 0.0
        %763 = vmatpush1.msra.mxu0 0.0
        %764 = vmatprep.subr.mxu0 0.0
        %765 = vmatpush1.msra.mxu0 0.0
        %766 = vmatprep.subr.mxu0 0.0
        %767 = vmatpush1.msra.mxu0 0.0
        %768 = vmatprep.subr.mxu0 0.0
        %769 = vmatpush1.msra.mxu0 0.0
        %770 = vmatprep.subr.mxu0 0.0
        %771 = vmatpush1.msra.mxu0 0.0
        %772 = vmatprep.subr.mxu0 0.0
        %773 = vmatpush1.msra.mxu0 0.0
        %774 = vmatprep.subr.mxu0 0.0
        %775 = vmatpush1.msra.mxu0 0.0
        %776 = vmatprep.subr.mxu0 0.0
        %777 = vmatpush1.msra.mxu0 0.0
        %778 = vmatprep.subr.mxu0 0.0
        %v779 = vand.u32 %v652, 4294901760
        %v780 = vsub.f32 %v652, %v779
        %v781 = vand.u32 %v780, 4294901760
        %v782 = vsub.f32 %v780, %v781
        %v783 = vand.u32 %v782, 4294901760
        %784 = vmatpush1.msra.mxu0 %v783
        %785 = vmatprep.subr.mxu0 0.0
        %v786 = vand.u32 %v651, 4294901760
        %v787 = vsub.f32 %v651, %v786
        %v788 = vand.u32 %v787, 4294901760
        %v789 = vsub.f32 %v787, %v788
        %v790 = vand.u32 %v789, 4294901760
        %791 = vmatpush1.msra.mxu0 %v790
        %792 = vmatprep.subr.mxu0 0.0
        %v793 = vand.u32 %v650, 4294901760
        %v794 = vsub.f32 %v650, %v793
        %v795 = vand.u32 %v794, 4294901760
        %v796 = vsub.f32 %v794, %v795
        %v797 = vand.u32 %v796, 4294901760
        %798 = vmatpush1.msra.mxu0 %v797
        %799 = vmatprep.subr.mxu0 0.0
        %800 = vmatpush2.msra.mxu0 0.0
        %801 = vmatprep.subr.mxu0 0.0
        %802 = vmatpush2.msra.mxu0 0.0
        %803 = vmatprep.subr.mxu0 0.0
        %804 = vmatpush2.msra.mxu0 0.0
        %805 = vmatprep.subr.mxu0 0.0
        %806 = vmatpush2.msra.mxu0 0.0
        %807 = vmatprep.subr.mxu0 0.0
        %808 = vmatpush2.msra.mxu0 0.0
        %809 = vmatprep.subr.mxu0 0.0
        %810 = vmatpush2.msra.mxu0 0.0
        %811 = vmatprep.subr.mxu0 0.0
        %812 = vmatpush2.msra.mxu0 0.0
        %813 = vmatprep.subr.mxu0 0.0
        %814 = vmatpush2.msra.mxu0 0.0
        %815 = vmatprep.subr.mxu0 0.0
        %816 = vmatpush2.msra.mxu0 0.0
        %817 = vmatprep.subr.mxu0 0.0
        %818 = vmatpush2.msra.mxu0 0.0
        %819 = vmatprep.subr.mxu0 0.0
        %820 = vmatpush2.msra.mxu0 0.0
        %821 = vmatprep.subr.mxu0 0.0
        %822 = vmatpush2.msra.mxu0 0.0
        %823 = vmatprep.subr.mxu0 0.0
        %824 = vmatpush2.msra.mxu0 0.0
        %825 = vmatprep.subr.mxu0 0.0
        %826 = vmatpush2.msra.mxu0 0.0
        %827 = vmatprep.subr.mxu0 0.0
        %828 = vmatpush2.msra.mxu0 0.0
        %829 = vmatprep.subr.mxu0 0.0
        %830 = vmatpush2.msra.mxu0 0.0
        %831 = vmatprep.mubr.f32.mxu0 0.0
        %v832 = vand.u32 %v672, 4294901760
        %833 = vmatmul.mubr.f32.gmra.mxu0 %v832
        %v834 = vpop.f32.mrf.mxu0
        %v835 = vadd.f32 %v749, %v834
        %v836 = vpop.f32.mrf.mxu0
        %837 = vdwg.mxu0
        %838 = vmatprep.subr.mxu0 0.0
        %839 = vmatpush1.msra.mxu0 0.0
        %840 = vmatprep.subr.mxu0 0.0
        %841 = vmatpush1.msra.mxu0 0.0
        %842 = vmatprep.subr.mxu0 0.0
        %843 = vmatpush1.msra.mxu0 0.0
        %844 = vmatprep.subr.mxu0 0.0
        %845 = vmatpush1.msra.mxu0 0.0
        %846 = vmatprep.subr.mxu0 0.0
        %847 = vmatpush1.msra.mxu0 0.0
        %848 = vmatprep.subr.mxu0 0.0
        %849 = vmatpush1.msra.mxu0 0.0
        %850 = vmatprep.subr.mxu0 0.0
        %851 = vmatpush1.msra.mxu0 0.0
        %852 = vmatprep.subr.mxu0 0.0
        %853 = vmatpush1.msra.mxu0 0.0
        %854 = vmatprep.subr.mxu0 0.0
        %855 = vmatpush1.msra.mxu0 0.0
        %856 = vmatprep.subr.mxu0 0.0
        %857 = vmatpush1.msra.mxu0 0.0
        %858 = vmatprep.subr.mxu0 0.0
        %859 = vmatpush1.msra.mxu0 0.0
        %860 = vmatprep.subr.mxu0 0.0
        %861 = vmatpush1.msra.mxu0 0.0
        %862 = vmatprep.subr.mxu0 0.0
        %863 = vmatpush1.msra.mxu0 0.0
        %864 = vmatprep.subr.mxu0 0.0
        %v865 = vand.u32 %v652, 4294901760
        %v866 = vsub.f32 %v652, %v865
        %867 = vmatpush1.msra.mxu0 %v866
        %868 = vmatprep.subr.mxu0 0.0
        %v869 = vand.u32 %v651, 4294901760
        %v870 = vsub.f32 %v651, %v869
        %871 = vmatpush1.msra.mxu0 %v870
        %872 = vmatprep.subr.mxu0 0.0
        %v873 = vand.u32 %v650, 4294901760
        %v874 = vsub.f32 %v650, %v873
        %875 = vmatpush1.msra.mxu0 %v874
        %876 = vmatprep.subr.mxu0 0.0
        %877 = vmatpush2.msra.mxu0 0.0
        %878 = vmatprep.subr.mxu0 0.0
        %879 = vmatpush2.msra.mxu0 0.0
        %880 = vmatprep.subr.mxu0 0.0
        %881 = vmatpush2.msra.mxu0 0.0
        %882 = vmatprep.subr.mxu0 0.0
        %883 = vmatpush2.msra.mxu0 0.0
        %884 = vmatprep.subr.mxu0 0.0
        %885 = vmatpush2.msra.mxu0 0.0
        %886 = vmatprep.subr.mxu0 0.0
        %887 = vmatpush2.msra.mxu0 0.0
        %888 = vmatprep.subr.mxu0 0.0
        %889 = vmatpush2.msra.mxu0 0.0
        %890 = vmatprep.subr.mxu0 0.0
        %891 = vmatpush2.msra.mxu0 0.0
        %892 = vmatprep.subr.mxu0 0.0
        %893 = vmatpush2.msra.mxu0 0.0
        %894 = vmatprep.subr.mxu0 0.0
        %895 = vmatpush2.msra.mxu0 0.0
        %896 = vmatprep.subr.mxu0 0.0
        %897 = vmatpush2.msra.mxu0 0.0
        %898 = vmatprep.subr.mxu0 0.0
        %899 = vmatpush2.msra.mxu0 0.0
        %900 = vmatprep.subr.mxu0 0.0
        %901 = vmatpush2.msra.mxu0 0.0
        %902 = vmatprep.subr.mxu0 0.0
        %903 = vmatpush2.msra.mxu0 0.0
        %904 = vmatprep.subr.mxu0 0.0
        %905 = vmatpush2.msra.mxu0 0.0
        %906 = vmatprep.subr.mxu0 0.0
        %907 = vmatpush2.msra.mxu0 0.0
        %908 = vmatprep.mubr.f32.mxu0 0.0
        %v909 = vand.u32 %v672, 4294901760
        %v910 = vsub.f32 %v672, %v909
        %911 = vmatmul.mubr.f32.gmra.mxu0 %v910
        %v912 = vpop.f32.mrf.mxu0
        %v913 = vadd.f32 %v835, %v912
        %v914 = vpop.f32.mrf.mxu0
        %915 = vdwg.mxu0
        %916 = vmatprep.subr.mxu0 0.0
        %917 = vmatpush1.msra.mxu0 0.0
        %918 = vmatprep.subr.mxu0 0.0
        %919 = vmatpush1.msra.mxu0 0.0
        %920 = vmatprep.subr.mxu0 0.0
        %921 = vmatpush1.msra.mxu0 0.0
        %922 = vmatprep.subr.mxu0 0.0
        %923 = vmatpush1.msra.mxu0 0.0
        %924 = vmatprep.subr.mxu0 0.0
        %925 = vmatpush1.msra.mxu0 0.0
        %926 = vmatprep.subr.mxu0 0.0
        %927 = vmatpush1.msra.mxu0 0.0
        %928 = vmatprep.subr.mxu0 0.0
        %929 = vmatpush1.msra.mxu0 0.0
        %930 = vmatprep.subr.mxu0 0.0
        %931 = vmatpush1.msra.mxu0 0.0
        %932 = vmatprep.subr.mxu0 0.0
        %933 = vmatpush1.msra.mxu0 0.0
        %934 = vmatprep.subr.mxu0 0.0
        %935 = vmatpush1.msra.mxu0 0.0
        %936 = vmatprep.subr.mxu0 0.0
        %937 = vmatpush1.msra.mxu0 0.0
        %938 = vmatprep.subr.mxu0 0.0
        %939 = vmatpush1.msra.mxu0 0.0
        %940 = vmatprep.subr.mxu0 0.0
        %941 = vmatpush1.msra.mxu0 0.0
        %942 = vmatprep.subr.mxu0 0.0
        %v943 = vand.u32 %v652, 4294901760
        %944 = vmatpush1.msra.mxu0 %v943
        %945 = vmatprep.subr.mxu0 0.0
        %v946 = vand.u32 %v651, 4294901760
        %947 = vmatpush1.msra.mxu0 %v946
        %948 = vmatprep.subr.mxu0 0.0
        %v949 = vand.u32 %v650, 4294901760
        %950 = vmatpush1.msra.mxu0 %v949
        %951 = vmatprep.subr.mxu0 0.0
        %952 = vmatpush2.msra.mxu0 0.0
        %953 = vmatprep.subr.mxu0 0.0
        %954 = vmatpush2.msra.mxu0 0.0
        %955 = vmatprep.subr.mxu0 0.0
        %956 = vmatpush2.msra.mxu0 0.0
        %957 = vmatprep.subr.mxu0 0.0
        %958 = vmatpush2.msra.mxu0 0.0
        %959 = vmatprep.subr.mxu0 0.0
        %960 = vmatpush2.msra.mxu0 0.0
        %961 = vmatprep.subr.mxu0 0.0
        %962 = vmatpush2.msra.mxu0 0.0
        %963 = vmatprep.subr.mxu0 0.0
        %964 = vmatpush2.msra.mxu0 0.0
        %965 = vmatprep.subr.mxu0 0.0
        %966 = vmatpush2.msra.mxu0 0.0
        %967 = vmatprep.subr.mxu0 0.0
        %968 = vmatpush2.msra.mxu0 0.0
        %969 = vmatprep.subr.mxu0 0.0
        %970 = vmatpush2.msra.mxu0 0.0
        %971 = vmatprep.subr.mxu0 0.0
        %972 = vmatpush2.msra.mxu0 0.0
        %973 = vmatprep.subr.mxu0 0.0
        %974 = vmatpush2.msra.mxu0 0.0
        %975 = vmatprep.subr.mxu0 0.0
        %976 = vmatpush2.msra.mxu0 0.0
        %977 = vmatprep.subr.mxu0 0.0
        %978 = vmatpush2.msra.mxu0 0.0
        %979 = vmatprep.subr.mxu0 0.0
        %980 = vmatpush2.msra.mxu0 0.0
        %981 = vmatprep.subr.mxu0 0.0
        %982 = vmatpush2.msra.mxu0 0.0
        %983 = vmatprep.mubr.f32.mxu0 0.0
        %v984 = vand.u32 %v672, 4294901760
        %v985 = vsub.f32 %v672, %v984
        %v986 = vand.u32 %v985, 4294901760
        %987 = vmatmul.mubr.f32.gmra.mxu0 %v986
        %v988 = vpop.f32.mrf.mxu0
        %v989 = vadd.f32 %v913, %v988
        %v990 = vpop.f32.mrf.mxu0
        %991 = vdwg.mxu0
        %992 = vmatprep.subr.mxu0 0.0
        %993 = vmatpush1.msra.mxu0 0.0
        %994 = vmatprep.subr.mxu0 0.0
        %995 = vmatpush1.msra.mxu0 0.0
        %996 = vmatprep.subr.mxu0 0.0
        %997 = vmatpush1.msra.mxu0 0.0
        %998 = vmatprep.subr.mxu0 0.0
        %999 = vmatpush1.msra.mxu0 0.0
        %1000 = vmatprep.subr.mxu0 0.0
        %1001 = vmatpush1.msra.mxu0 0.0
        %1002 = vmatprep.subr.mxu0 0.0
        %1003 = vmatpush1.msra.mxu0 0.0
        %1004 = vmatprep.subr.mxu0 0.0
        %1005 = vmatpush1.msra.mxu0 0.0
        %1006 = vmatprep.subr.mxu0 0.0
        %1007 = vmatpush1.msra.mxu0 0.0
        %1008 = vmatprep.subr.mxu0 0.0
        %1009 = vmatpush1.msra.mxu0 0.0
        %1010 = vmatprep.subr.mxu0 0.0
        %1011 = vmatpush1.msra.mxu0 0.0
        %1012 = vmatprep.subr.mxu0 0.0
        %1013 = vmatpush1.msra.mxu0 0.0
        %1014 = vmatprep.subr.mxu0 0.0
        %1015 = vmatpush1.msra.mxu0 0.0
        %1016 = vmatprep.subr.mxu0 0.0
        %1017 = vmatpush1.msra.mxu0 0.0
        %1018 = vmatprep.subr.mxu0 0.0
        %v1019 = vand.u32 %v652, 4294901760
        %v1020 = vsub.f32 %v652, %v1019
        %v1021 = vand.u32 %v1020, 4294901760
        %1022 = vmatpush1.msra.mxu0 %v1021
        %1023 = vmatprep.subr.mxu0 0.0
        %v1024 = vand.u32 %v651, 4294901760
        %v1025 = vsub.f32 %v651, %v1024
        %v1026 = vand.u32 %v1025, 4294901760
        %1027 = vmatpush1.msra.mxu0 %v1026
        %1028 = vmatprep.subr.mxu0 0.0
        %v1029 = vand.u32 %v650, 4294901760
        %v1030 = vsub.f32 %v650, %v1029
        %v1031 = vand.u32 %v1030, 4294901760
        %1032 = vmatpush1.msra.mxu0 %v1031
        %1033 = vmatprep.subr.mxu0 0.0
        %1034 = vmatpush2.msra.mxu0 0.0
        %1035 = vmatprep.subr.mxu0 0.0
        %1036 = vmatpush2.msra.mxu0 0.0
        %1037 = vmatprep.subr.mxu0 0.0
        %1038 = vmatpush2.msra.mxu0 0.0
        %1039 = vmatprep.subr.mxu0 0.0
        %1040 = vmatpush2.msra.mxu0 0.0
        %1041 = vmatprep.subr.mxu0 0.0
        %1042 = vmatpush2.msra.mxu0 0.0
        %1043 = vmatprep.subr.mxu0 0.0
        %1044 = vmatpush2.msra.mxu0 0.0
        %1045 = vmatprep.subr.mxu0 0.0
        %1046 = vmatpush2.msra.mxu0 0.0
        %1047 = vmatprep.subr.mxu0 0.0
        %1048 = vmatpush2.msra.mxu0 0.0
        %1049 = vmatprep.subr.mxu0 0.0
        %1050 = vmatpush2.msra.mxu0 0.0
        %1051 = vmatprep.subr.mxu0 0.0
        %1052 = vmatpush2.msra.mxu0 0.0
        %1053 = vmatprep.subr.mxu0 0.0
        %1054 = vmatpush2.msra.mxu0 0.0
        %1055 = vmatprep.subr.mxu0 0.0
        %1056 = vmatpush2.msra.mxu0 0.0
        %1057 = vmatprep.subr.mxu0 0.0
        %1058 = vmatpush2.msra.mxu0 0.0
        %1059 = vmatprep.subr.mxu0 0.0
        %1060 = vmatpush2.msra.mxu0 0.0
        %1061 = vmatprep.subr.mxu0 0.0
        %1062 = vmatpush2.msra.mxu0 0.0
        %1063 = vmatprep.subr.mxu0 0.0
        %1064 = vmatpush2.msra.mxu0 0.0
        %1065 = vmatprep.mubr.f32.mxu0 0.0
        %v1066 = vand.u32 %v672, 4294901760
        %1067 = vmatmul.mubr.f32.gmra.mxu0 %v1066
        %v1068 = vpop.f32.mrf.mxu0
        %v1069 = vadd.f32 %v989, %v1068
        %v1070 = vpop.f32.mrf.mxu0
        %1071 = vdwg.mxu0
        %1072 = vmatprep.subr.mxu0 0.0
        %1073 = vmatpush1.msra.mxu0 0.0
        %1074 = vmatprep.subr.mxu0 0.0
        %1075 = vmatpush1.msra.mxu0 0.0
        %1076 = vmatprep.subr.mxu0 0.0
        %1077 = vmatpush1.msra.mxu0 0.0
        %1078 = vmatprep.subr.mxu0 0.0
        %1079 = vmatpush1.msra.mxu0 0.0
        %1080 = vmatprep.subr.mxu0 0.0
        %1081 = vmatpush1.msra.mxu0 0.0
        %1082 = vmatprep.subr.mxu0 0.0
        %1083 = vmatpush1.msra.mxu0 0.0
        %1084 = vmatprep.subr.mxu0 0.0
        %1085 = vmatpush1.msra.mxu0 0.0
        %1086 = vmatprep.subr.mxu0 0.0
        %1087 = vmatpush1.msra.mxu0 0.0
        %1088 = vmatprep.subr.mxu0 0.0
        %1089 = vmatpush1.msra.mxu0 0.0
        %1090 = vmatprep.subr.mxu0 0.0
        %1091 = vmatpush1.msra.mxu0 0.0
        %1092 = vmatprep.subr.mxu0 0.0
        %1093 = vmatpush1.msra.mxu0 0.0
        %1094 = vmatprep.subr.mxu0 0.0
        %1095 = vmatpush1.msra.mxu0 0.0
        %1096 = vmatprep.subr.mxu0 0.0
        %1097 = vmatpush1.msra.mxu0 0.0
        %1098 = vmatprep.subr.mxu0 0.0
        %v1099 = vand.u32 %v652, 4294901760
        %1100 = vmatpush1.msra.mxu0 %v1099
        %1101 = vmatprep.subr.mxu0 0.0
        %v1102 = vand.u32 %v651, 4294901760
        %1103 = vmatpush1.msra.mxu0 %v1102
        %1104 = vmatprep.subr.mxu0 0.0
        %v1105 = vand.u32 %v650, 4294901760
        %1106 = vmatpush1.msra.mxu0 %v1105
        %1107 = vmatprep.subr.mxu0 0.0
        %1108 = vmatpush2.msra.mxu0 0.0
        %1109 = vmatprep.subr.mxu0 0.0
        %1110 = vmatpush2.msra.mxu0 0.0
        %1111 = vmatprep.subr.mxu0 0.0
        %1112 = vmatpush2.msra.mxu0 0.0
        %1113 = vmatprep.subr.mxu0 0.0
        %1114 = vmatpush2.msra.mxu0 0.0
        %1115 = vmatprep.subr.mxu0 0.0
        %1116 = vmatpush2.msra.mxu0 0.0
        %1117 = vmatprep.subr.mxu0 0.0
        %1118 = vmatpush2.msra.mxu0 0.0
        %1119 = vmatprep.subr.mxu0 0.0
        %1120 = vmatpush2.msra.mxu0 0.0
        %1121 = vmatprep.subr.mxu0 0.0
        %1122 = vmatpush2.msra.mxu0 0.0
        %1123 = vmatprep.subr.mxu0 0.0
        %1124 = vmatpush2.msra.mxu0 0.0
        %1125 = vmatprep.subr.mxu0 0.0
        %1126 = vmatpush2.msra.mxu0 0.0
        %1127 = vmatprep.subr.mxu0 0.0
        %1128 = vmatpush2.msra.mxu0 0.0
        %1129 = vmatprep.subr.mxu0 0.0
        %1130 = vmatpush2.msra.mxu0 0.0
        %1131 = vmatprep.subr.mxu0 0.0
        %1132 = vmatpush2.msra.mxu0 0.0
        %1133 = vmatprep.subr.mxu0 0.0
        %1134 = vmatpush2.msra.mxu0 0.0
        %1135 = vmatprep.subr.mxu0 0.0
        %1136 = vmatpush2.msra.mxu0 0.0
        %1137 = vmatprep.subr.mxu0 0.0
        %1138 = vmatpush2.msra.mxu0 0.0
        %1139 = vmatprep.mubr.f32.mxu0 0.0
        %v1140 = vand.u32 %v672, 4294901760
        %1141 = vmatmul.mubr.f32.gmra.mxu0 %v1140
        %v1142 = vpop.f32.mrf.mxu0
        %v1143 = vadd.f32 %v1069, %v1142
        %v1144 = vpop.f32.mrf.mxu0
        %1145 = vdwg.mxu0
        %v1146 = vmax.f32 %v1143, 0.0
        %1147 = vst.msk [vmem:[#allocation2 + $0x8] sm:$0xff] %vm147, %v1146
        %v1148 = vld [vmem:[%s1 + $0x40] sm:$0xff]
        %v1149 = vld [vmem:[%s1 + $0x48] sm:$0x1]
        %v1150 = vld [vmem:[#allocation2 + $0x8] sm:$0xff]
        %v1151 = vlaneseq
        %v1152 = vshrl.u32 %v1151, 7
        %v1153 = vsub.s32 0, %v1152
        %v1154 = vrot.slane %v1149, %v1153
        %v1156 = vsel %vm147, %v1150, 0
        %1158 = vmatprep.subr.mxu0 0.0
        %1159 = vmatpush1.msra.mxu0 0.0
        %1160 = vmatprep.subr.mxu0 0.0
        %1161 = vmatpush1.msra.mxu0 0.0
        %1162 = vmatprep.subr.mxu0 0.0
        %1163 = vmatpush1.msra.mxu0 0.0
        %1164 = vmatprep.subr.mxu0 0.0
        %1165 = vmatpush1.msra.mxu0 0.0
        %1166 = vmatprep.subr.mxu0 0.0
        %1167 = vmatpush1.msra.mxu0 0.0
        %1168 = vmatprep.subr.mxu0 0.0
        %1169 = vmatpush1.msra.mxu0 0.0
        %1170 = vmatprep.subr.mxu0 0.0
        %1171 = vmatpush1.msra.mxu0 0.0
        %1172 = vmatprep.subr.mxu0 0.0
        %1173 = vmatpush1.msra.mxu0 0.0
        %1174 = vmatprep.subr.mxu0 0.0
        %1175 = vmatpush1.msra.mxu0 0.0
        %1176 = vmatprep.subr.mxu0 0.0
        %1177 = vmatpush1.msra.mxu0 0.0
        %1178 = vmatprep.subr.mxu0 0.0
        %1179 = vmatpush1.msra.mxu0 0.0
        %1180 = vmatprep.subr.mxu0 0.0
        %1181 = vmatpush1.msra.mxu0 0.0
        %1182 = vmatprep.subr.mxu0 0.0
        %1183 = vmatpush1.msra.mxu0 0.0
        %1184 = vmatprep.subr.mxu0 0.0
        %1185 = vmatpush1.msra.mxu0 0.0
        %1186 = vmatprep.subr.mxu0 0.0
        %1187 = vmatpush1.msra.mxu0 0.0
        %1188 = vmatprep.subr.mxu0 0.0
        %v1189 = vand.u32 %v1148, 4294901760
        %1190 = vmatpush1.msra.mxu0 %v1189
        %1191 = vmatprep.subr.mxu0 0.0
        %1192 = vmatpush2.msra.mxu0 0.0
        %1193 = vmatprep.subr.mxu0 0.0
        %1194 = vmatpush2.msra.mxu0 0.0
        %1195 = vmatprep.subr.mxu0 0.0
        %1196 = vmatpush2.msra.mxu0 0.0
        %1197 = vmatprep.subr.mxu0 0.0
        %1198 = vmatpush2.msra.mxu0 0.0
        %1199 = vmatprep.subr.mxu0 0.0
        %1200 = vmatpush2.msra.mxu0 0.0
        %1201 = vmatprep.subr.mxu0 0.0
        %1202 = vmatpush2.msra.mxu0 0.0
        %1203 = vmatprep.subr.mxu0 0.0
        %1204 = vmatpush2.msra.mxu0 0.0
        %1205 = vmatprep.subr.mxu0 0.0
        %1206 = vmatpush2.msra.mxu0 0.0
        %1207 = vmatprep.subr.mxu0 0.0
        %1208 = vmatpush2.msra.mxu0 0.0
        %1209 = vmatprep.subr.mxu0 0.0
        %1210 = vmatpush2.msra.mxu0 0.0
        %1211 = vmatprep.subr.mxu0 0.0
        %1212 = vmatpush2.msra.mxu0 0.0
        %1213 = vmatprep.subr.mxu0 0.0
        %1214 = vmatpush2.msra.mxu0 0.0
        %1215 = vmatprep.subr.mxu0 0.0
        %1216 = vmatpush2.msra.mxu0 0.0
        %1217 = vmatprep.subr.mxu0 0.0
        %1218 = vmatpush2.msra.mxu0 0.0
        %1219 = vmatprep.subr.mxu0 0.0
        %1220 = vmatpush2.msra.mxu0 0.0
        %1221 = vmatprep.subr.mxu0 0.0
        %1222 = vmatpush2.msra.mxu0 0.0
        %1223 = vmatprep.mubr.f32.mxu0 0.0
        %v1224 = vand.u32 %v1156, 4294901760
        %v1225 = vsub.f32 %v1156, %v1224
        %v1226 = vand.u32 %v1225, 4294901760
        %v1227 = vsub.f32 %v1225, %v1226
        %v1228 = vand.u32 %v1227, 4294901760
        %1229 = vmatmul.mubr.f32.gmra.mxu0 %v1228
        %v1230 = vpop.f32.mrf.mxu0
        %v1231 = vadd.f32 %v1154, %v1230
        %v1232 = vpop.f32.mrf.mxu0
        %1233 = vdwg.mxu0
        %1234 = vmatprep.subr.mxu0 0.0
        %1235 = vmatpush1.msra.mxu0 0.0
        %1236 = vmatprep.subr.mxu0 0.0
        %1237 = vmatpush1.msra.mxu0 0.0
        %1238 = vmatprep.subr.mxu0 0.0
        %1239 = vmatpush1.msra.mxu0 0.0
        %1240 = vmatprep.subr.mxu0 0.0
        %1241 = vmatpush1.msra.mxu0 0.0
        %1242 = vmatprep.subr.mxu0 0.0
        %1243 = vmatpush1.msra.mxu0 0.0
        %1244 = vmatprep.subr.mxu0 0.0
        %1245 = vmatpush1.msra.mxu0 0.0
        %1246 = vmatprep.subr.mxu0 0.0
        %1247 = vmatpush1.msra.mxu0 0.0
        %1248 = vmatprep.subr.mxu0 0.0
        %1249 = vmatpush1.msra.mxu0 0.0
        %1250 = vmatprep.subr.mxu0 0.0
        %1251 = vmatpush1.msra.mxu0 0.0
        %1252 = vmatprep.subr.mxu0 0.0
        %1253 = vmatpush1.msra.mxu0 0.0
        %1254 = vmatprep.subr.mxu0 0.0
        %1255 = vmatpush1.msra.mxu0 0.0
        %1256 = vmatprep.subr.mxu0 0.0
        %1257 = vmatpush1.msra.mxu0 0.0
        %1258 = vmatprep.subr.mxu0 0.0
        %1259 = vmatpush1.msra.mxu0 0.0
        %1260 = vmatprep.subr.mxu0 0.0
        %1261 = vmatpush1.msra.mxu0 0.0
        %1262 = vmatprep.subr.mxu0 0.0
        %1263 = vmatpush1.msra.mxu0 0.0
        %1264 = vmatprep.subr.mxu0 0.0
        %v1265 = vand.u32 %v1148, 4294901760
        %v1266 = vsub.f32 %v1148, %v1265
        %v1267 = vand.u32 %v1266, 4294901760
        %v1268 = vsub.f32 %v1266, %v1267
        %v1269 = vand.u32 %v1268, 4294901760
        %1270 = vmatpush1.msra.mxu0 %v1269
        %1271 = vmatprep.subr.mxu0 0.0
        %1272 = vmatpush2.msra.mxu0 0.0
        %1273 = vmatprep.subr.mxu0 0.0
        %1274 = vmatpush2.msra.mxu0 0.0
        %1275 = vmatprep.subr.mxu0 0.0
        %1276 = vmatpush2.msra.mxu0 0.0
        %1277 = vmatprep.subr.mxu0 0.0
        %1278 = vmatpush2.msra.mxu0 0.0
        %1279 = vmatprep.subr.mxu0 0.0
        %1280 = vmatpush2.msra.mxu0 0.0
        %1281 = vmatprep.subr.mxu0 0.0
        %1282 = vmatpush2.msra.mxu0 0.0
        %1283 = vmatprep.subr.mxu0 0.0
        %1284 = vmatpush2.msra.mxu0 0.0
        %1285 = vmatprep.subr.mxu0 0.0
        %1286 = vmatpush2.msra.mxu0 0.0
        %1287 = vmatprep.subr.mxu0 0.0
        %1288 = vmatpush2.msra.mxu0 0.0
        %1289 = vmatprep.subr.mxu0 0.0
        %1290 = vmatpush2.msra.mxu0 0.0
        %1291 = vmatprep.subr.mxu0 0.0
        %1292 = vmatpush2.msra.mxu0 0.0
        %1293 = vmatprep.subr.mxu0 0.0
        %1294 = vmatpush2.msra.mxu0 0.0
        %1295 = vmatprep.subr.mxu0 0.0
        %1296 = vmatpush2.msra.mxu0 0.0
        %1297 = vmatprep.subr.mxu0 0.0
        %1298 = vmatpush2.msra.mxu0 0.0
        %1299 = vmatprep.subr.mxu0 0.0
        %1300 = vmatpush2.msra.mxu0 0.0
        %1301 = vmatprep.subr.mxu0 0.0
        %1302 = vmatpush2.msra.mxu0 0.0
        %1303 = vmatprep.mubr.f32.mxu0 0.0
        %v1304 = vand.u32 %v1156, 4294901760
        %1305 = vmatmul.mubr.f32.gmra.mxu0 %v1304
        %v1306 = vpop.f32.mrf.mxu0
        %v1307 = vadd.f32 %v1231, %v1306
        %v1308 = vpop.f32.mrf.mxu0
        %1309 = vdwg.mxu0
        %1310 = vmatprep.subr.mxu0 0.0
        %1311 = vmatpush1.msra.mxu0 0.0
        %1312 = vmatprep.subr.mxu0 0.0
        %1313 = vmatpush1.msra.mxu0 0.0
        %1314 = vmatprep.subr.mxu0 0.0
        %1315 = vmatpush1.msra.mxu0 0.0
        %1316 = vmatprep.subr.mxu0 0.0
        %1317 = vmatpush1.msra.mxu0 0.0
        %1318 = vmatprep.subr.mxu0 0.0
        %1319 = vmatpush1.msra.mxu0 0.0
        %1320 = vmatprep.subr.mxu0 0.0
        %1321 = vmatpush1.msra.mxu0 0.0
        %1322 = vmatprep.subr.mxu0 0.0
        %1323 = vmatpush1.msra.mxu0 0.0
        %1324 = vmatprep.subr.mxu0 0.0
        %1325 = vmatpush1.msra.mxu0 0.0
        %1326 = vmatprep.subr.mxu0 0.0
        %1327 = vmatpush1.msra.mxu0 0.0
        %1328 = vmatprep.subr.mxu0 0.0
        %1329 = vmatpush1.msra.mxu0 0.0
        %1330 = vmatprep.subr.mxu0 0.0
        %1331 = vmatpush1.msra.mxu0 0.0
        %1332 = vmatprep.subr.mxu0 0.0
        %1333 = vmatpush1.msra.mxu0 0.0
        %1334 = vmatprep.subr.mxu0 0.0
        %1335 = vmatpush1.msra.mxu0 0.0
        %1336 = vmatprep.subr.mxu0 0.0
        %1337 = vmatpush1.msra.mxu0 0.0
        %1338 = vmatprep.subr.mxu0 0.0
        %1339 = vmatpush1.msra.mxu0 0.0
        %1340 = vmatprep.subr.mxu0 0.0
        %v1341 = vand.u32 %v1148, 4294901760
        %v1342 = vsub.f32 %v1148, %v1341
        %1343 = vmatpush1.msra.mxu0 %v1342
        %1344 = vmatprep.subr.mxu0 0.0
        %1345 = vmatpush2.msra.mxu0 0.0
        %1346 = vmatprep.subr.mxu0 0.0
        %1347 = vmatpush2.msra.mxu0 0.0
        %1348 = vmatprep.subr.mxu0 0.0
        %1349 = vmatpush2.msra.mxu0 0.0
        %1350 = vmatprep.subr.mxu0 0.0
        %1351 = vmatpush2.msra.mxu0 0.0
        %1352 = vmatprep.subr.mxu0 0.0
        %1353 = vmatpush2.msra.mxu0 0.0
        %1354 = vmatprep.subr.mxu0 0.0
        %1355 = vmatpush2.msra.mxu0 0.0
        %1356 = vmatprep.subr.mxu0 0.0
        %1357 = vmatpush2.msra.mxu0 0.0
        %1358 = vmatprep.subr.mxu0 0.0
        %1359 = vmatpush2.msra.mxu0 0.0
        %1360 = vmatprep.subr.mxu0 0.0
        %1361 = vmatpush2.msra.mxu0 0.0
        %1362 = vmatprep.subr.mxu0 0.0
        %1363 = vmatpush2.msra.mxu0 0.0
        %1364 = vmatprep.subr.mxu0 0.0
        %1365 = vmatpush2.msra.mxu0 0.0
        %1366 = vmatprep.subr.mxu0 0.0
        %1367 = vmatpush2.msra.mxu0 0.0
        %1368 = vmatprep.subr.mxu0 0.0
        %1369 = vmatpush2.msra.mxu0 0.0
        %1370 = vmatprep.subr.mxu0 0.0
        %1371 = vmatpush2.msra.mxu0 0.0
        %1372 = vmatprep.subr.mxu0 0.0
        %1373 = vmatpush2.msra.mxu0 0.0
        %1374 = vmatprep.subr.mxu0 0.0
        %1375 = vmatpush2.msra.mxu0 0.0
        %1376 = vmatprep.mubr.f32.mxu0 0.0
        %v1377 = vand.u32 %v1156, 4294901760
        %v1378 = vsub.f32 %v1156, %v1377
        %1379 = vmatmul.mubr.f32.gmra.mxu0 %v1378
        %v1380 = vpop.f32.mrf.mxu0
        %v1381 = vadd.f32 %v1307, %v1380
        %v1382 = vpop.f32.mrf.mxu0
        %1383 = vdwg.mxu0
        %1384 = vmatprep.subr.mxu0 0.0
        %1385 = vmatpush1.msra.mxu0 0.0
        %1386 = vmatprep.subr.mxu0 0.0
        %1387 = vmatpush1.msra.mxu0 0.0
        %1388 = vmatprep.subr.mxu0 0.0
        %1389 = vmatpush1.msra.mxu0 0.0
        %1390 = vmatprep.subr.mxu0 0.0
        %1391 = vmatpush1.msra.mxu0 0.0
        %1392 = vmatprep.subr.mxu0 0.0
        %1393 = vmatpush1.msra.mxu0 0.0
        %1394 = vmatprep.subr.mxu0 0.0
        %1395 = vmatpush1.msra.mxu0 0.0
        %1396 = vmatprep.subr.mxu0 0.0
        %1397 = vmatpush1.msra.mxu0 0.0
        %1398 = vmatprep.subr.mxu0 0.0
        %1399 = vmatpush1.msra.mxu0 0.0
        %1400 = vmatprep.subr.mxu0 0.0
        %1401 = vmatpush1.msra.mxu0 0.0
        %1402 = vmatprep.subr.mxu0 0.0
        %1403 = vmatpush1.msra.mxu0 0.0
        %1404 = vmatprep.subr.mxu0 0.0
        %1405 = vmatpush1.msra.mxu0 0.0
        %1406 = vmatprep.subr.mxu0 0.0
        %1407 = vmatpush1.msra.mxu0 0.0
        %1408 = vmatprep.subr.mxu0 0.0
        %1409 = vmatpush1.msra.mxu0 0.0
        %1410 = vmatprep.subr.mxu0 0.0
        %1411 = vmatpush1.msra.mxu0 0.0
        %1412 = vmatprep.subr.mxu0 0.0
        %1413 = vmatpush1.msra.mxu0 0.0
        %1414 = vmatprep.subr.mxu0 0.0
        %v1415 = vand.u32 %v1148, 4294901760
        %1416 = vmatpush1.msra.mxu0 %v1415
        %1417 = vmatprep.subr.mxu0 0.0
        %1418 = vmatpush2.msra.mxu0 0.0
        %1419 = vmatprep.subr.mxu0 0.0
        %1420 = vmatpush2.msra.mxu0 0.0
        %1421 = vmatprep.subr.mxu0 0.0
        %1422 = vmatpush2.msra.mxu0 0.0
        %1423 = vmatprep.subr.mxu0 0.0
        %1424 = vmatpush2.msra.mxu0 0.0
        %1425 = vmatprep.subr.mxu0 0.0
        %1426 = vmatpush2.msra.mxu0 0.0
        %1427 = vmatprep.subr.mxu0 0.0
        %1428 = vmatpush2.msra.mxu0 0.0
        %1429 = vmatprep.subr.mxu0 0.0
        %1430 = vmatpush2.msra.mxu0 0.0
        %1431 = vmatprep.subr.mxu0 0.0
        %1432 = vmatpush2.msra.mxu0 0.0
        %1433 = vmatprep.subr.mxu0 0.0
        %1434 = vmatpush2.msra.mxu0 0.0
        %1435 = vmatprep.subr.mxu0 0.0
        %1436 = vmatpush2.msra.mxu0 0.0
        %1437 = vmatprep.subr.mxu0 0.0
        %1438 = vmatpush2.msra.mxu0 0.0
        %1439 = vmatprep.subr.mxu0 0.0
        %1440 = vmatpush2.msra.mxu0 0.0
        %1441 = vmatprep.subr.mxu0 0.0
        %1442 = vmatpush2.msra.mxu0 0.0
        %1443 = vmatprep.subr.mxu0 0.0
        %1444 = vmatpush2.msra.mxu0 0.0
        %1445 = vmatprep.subr.mxu0 0.0
        %1446 = vmatpush2.msra.mxu0 0.0
        %1447 = vmatprep.subr.mxu0 0.0
        %1448 = vmatpush2.msra.mxu0 0.0
        %1449 = vmatprep.mubr.f32.mxu0 0.0
        %v1450 = vand.u32 %v1156, 4294901760
        %v1451 = vsub.f32 %v1156, %v1450
        %v1452 = vand.u32 %v1451, 4294901760
        %1453 = vmatmul.mubr.f32.gmra.mxu0 %v1452
        %v1454 = vpop.f32.mrf.mxu0
        %v1455 = vadd.f32 %v1381, %v1454
        %v1456 = vpop.f32.mrf.mxu0
        %1457 = vdwg.mxu0
        %1458 = vmatprep.subr.mxu0 0.0
        %1459 = vmatpush1.msra.mxu0 0.0
        %1460 = vmatprep.subr.mxu0 0.0
        %1461 = vmatpush1.msra.mxu0 0.0
        %1462 = vmatprep.subr.mxu0 0.0
        %1463 = vmatpush1.msra.mxu0 0.0
        %1464 = vmatprep.subr.mxu0 0.0
        %1465 = vmatpush1.msra.mxu0 0.0
        %1466 = vmatprep.subr.mxu0 0.0
        %1467 = vmatpush1.msra.mxu0 0.0
        %1468 = vmatprep.subr.mxu0 0.0
        %1469 = vmatpush1.msra.mxu0 0.0
        %1470 = vmatprep.subr.mxu0 0.0
        %1471 = vmatpush1.msra.mxu0 0.0
        %1472 = vmatprep.subr.mxu0 0.0
        %1473 = vmatpush1.msra.mxu0 0.0
        %1474 = vmatprep.subr.mxu0 0.0
        %1475 = vmatpush1.msra.mxu0 0.0
        %1476 = vmatprep.subr.mxu0 0.0
        %1477 = vmatpush1.msra.mxu0 0.0
        %1478 = vmatprep.subr.mxu0 0.0
        %1479 = vmatpush1.msra.mxu0 0.0
        %1480 = vmatprep.subr.mxu0 0.0
        %1481 = vmatpush1.msra.mxu0 0.0
        %1482 = vmatprep.subr.mxu0 0.0
        %1483 = vmatpush1.msra.mxu0 0.0
        %1484 = vmatprep.subr.mxu0 0.0
        %1485 = vmatpush1.msra.mxu0 0.0
        %1486 = vmatprep.subr.mxu0 0.0
        %1487 = vmatpush1.msra.mxu0 0.0
        %1488 = vmatprep.subr.mxu0 0.0
        %v1489 = vand.u32 %v1148, 4294901760
        %v1490 = vsub.f32 %v1148, %v1489
        %v1491 = vand.u32 %v1490, 4294901760
        %1492 = vmatpush1.msra.mxu0 %v1491
        %1493 = vmatprep.subr.mxu0 0.0
        %1494 = vmatpush2.msra.mxu0 0.0
        %1495 = vmatprep.subr.mxu0 0.0
        %1496 = vmatpush2.msra.mxu0 0.0
        %1497 = vmatprep.subr.mxu0 0.0
        %1498 = vmatpush2.msra.mxu0 0.0
        %1499 = vmatprep.subr.mxu0 0.0
        %1500 = vmatpush2.msra.mxu0 0.0
        %1501 = vmatprep.subr.mxu0 0.0
        %1502 = vmatpush2.msra.mxu0 0.0
        %1503 = vmatprep.subr.mxu0 0.0
        %1504 = vmatpush2.msra.mxu0 0.0
        %1505 = vmatprep.subr.mxu0 0.0
        %1506 = vmatpush2.msra.mxu0 0.0
        %1507 = vmatprep.subr.mxu0 0.0
        %1508 = vmatpush2.msra.mxu0 0.0
        %1509 = vmatprep.subr.mxu0 0.0
        %1510 = vmatpush2.msra.mxu0 0.0
        %1511 = vmatprep.subr.mxu0 0.0
        %1512 = vmatpush2.msra.mxu0 0.0
        %1513 = vmatprep.subr.mxu0 0.0
        %1514 = vmatpush2.msra.mxu0 0.0
        %1515 = vmatprep.subr.mxu0 0.0
        %1516 = vmatpush2.msra.mxu0 0.0
        %1517 = vmatprep.subr.mxu0 0.0
        %1518 = vmatpush2.msra.mxu0 0.0
        %1519 = vmatprep.subr.mxu0 0.0
        %1520 = vmatpush2.msra.mxu0 0.0
        %1521 = vmatprep.subr.mxu0 0.0
        %1522 = vmatpush2.msra.mxu0 0.0
        %1523 = vmatprep.subr.mxu0 0.0
        %1524 = vmatpush2.msra.mxu0 0.0
        %1525 = vmatprep.mubr.f32.mxu0 0.0
        %v1526 = vand.u32 %v1156, 4294901760
        %1527 = vmatmul.mubr.f32.gmra.mxu0 %v1526
        %v1528 = vpop.f32.mrf.mxu0
        %v1529 = vadd.f32 %v1455, %v1528
        %v1530 = vpop.f32.mrf.mxu0
        %1531 = vdwg.mxu0
        %1532 = vmatprep.subr.mxu0 0.0
        %1533 = vmatpush1.msra.mxu0 0.0
        %1534 = vmatprep.subr.mxu0 0.0
        %1535 = vmatpush1.msra.mxu0 0.0
        %1536 = vmatprep.subr.mxu0 0.0
        %1537 = vmatpush1.msra.mxu0 0.0
        %1538 = vmatprep.subr.mxu0 0.0
        %1539 = vmatpush1.msra.mxu0 0.0
        %1540 = vmatprep.subr.mxu0 0.0
        %1541 = vmatpush1.msra.mxu0 0.0
        %1542 = vmatprep.subr.mxu0 0.0
        %1543 = vmatpush1.msra.mxu0 0.0
        %1544 = vmatprep.subr.mxu0 0.0
        %1545 = vmatpush1.msra.mxu0 0.0
        %1546 = vmatprep.subr.mxu0 0.0
        %1547 = vmatpush1.msra.mxu0 0.0
        %1548 = vmatprep.subr.mxu0 0.0
        %1549 = vmatpush1.msra.mxu0 0.0
        %1550 = vmatprep.subr.mxu0 0.0
        %1551 = vmatpush1.msra.mxu0 0.0
        %1552 = vmatprep.subr.mxu0 0.0
        %1553 = vmatpush1.msra.mxu0 0.0
        %1554 = vmatprep.subr.mxu0 0.0
        %1555 = vmatpush1.msra.mxu0 0.0
        %1556 = vmatprep.subr.mxu0 0.0
        %1557 = vmatpush1.msra.mxu0 0.0
        %1558 = vmatprep.subr.mxu0 0.0
        %1559 = vmatpush1.msra.mxu0 0.0
        %1560 = vmatprep.subr.mxu0 0.0
        %1561 = vmatpush1.msra.mxu0 0.0
        %1562 = vmatprep.subr.mxu0 0.0
        %v1563 = vand.u32 %v1148, 4294901760
        %1564 = vmatpush1.msra.mxu0 %v1563
        %1565 = vmatprep.subr.mxu0 0.0
        %1566 = vmatpush2.msra.mxu0 0.0
        %1567 = vmatprep.subr.mxu0 0.0
        %1568 = vmatpush2.msra.mxu0 0.0
        %1569 = vmatprep.subr.mxu0 0.0
        %1570 = vmatpush2.msra.mxu0 0.0
        %1571 = vmatprep.subr.mxu0 0.0
        %1572 = vmatpush2.msra.mxu0 0.0
        %1573 = vmatprep.subr.mxu0 0.0
        %1574 = vmatpush2.msra.mxu0 0.0
        %1575 = vmatprep.subr.mxu0 0.0
        %1576 = vmatpush2.msra.mxu0 0.0
        %1577 = vmatprep.subr.mxu0 0.0
        %1578 = vmatpush2.msra.mxu0 0.0
        %1579 = vmatprep.subr.mxu0 0.0
        %1580 = vmatpush2.msra.mxu0 0.0
        %1581 = vmatprep.subr.mxu0 0.0
        %1582 = vmatpush2.msra.mxu0 0.0
        %1583 = vmatprep.subr.mxu0 0.0
        %1584 = vmatpush2.msra.mxu0 0.0
        %1585 = vmatprep.subr.mxu0 0.0
        %1586 = vmatpush2.msra.mxu0 0.0
        %1587 = vmatprep.subr.mxu0 0.0
        %1588 = vmatpush2.msra.mxu0 0.0
        %1589 = vmatprep.subr.mxu0 0.0
        %1590 = vmatpush2.msra.mxu0 0.0
        %1591 = vmatprep.subr.mxu0 0.0
        %1592 = vmatpush2.msra.mxu0 0.0
        %1593 = vmatprep.subr.mxu0 0.0
        %1594 = vmatpush2.msra.mxu0 0.0
        %1595 = vmatprep.subr.mxu0 0.0
        %1596 = vmatpush2.msra.mxu0 0.0
        %1597 = vmatprep.mubr.f32.mxu0 0.0
        %v1598 = vand.u32 %v1156, 4294901760
        %1599 = vmatmul.mubr.f32.gmra.mxu0 %v1598
        %v1600 = vpop.f32.mrf.mxu0
        %v1601 = vadd.f32 %v1529, %v1600
        %v1602 = vpop.f32.mrf.mxu0
        %1603 = vdwg.mxu0
        %v1604 = vadd.f32 %v647, %v1601
        %v1605 = vmax.f32 %v1604, 0.0
        %1606 = vst.msk [vmem:[#allocation2 + $0x8] sm:$0xff] %vm147, %v1605
        %v1607 = vld [vmem:[%s1 + $0x50] sm:$0xff]
        %v1608 = vld [vmem:[%s1 + $0x58] sm:$0xff]
        %v1609 = vld [vmem:[%s1 + $0x60] sm:$0xff]
        %v1610 = vld [vmem:[%s1 + $0x68] sm:$0x1]
        %v1611 = vld [vmem:[#allocation2 + $0x7] sm:$0xff]
        %v1612 = vld [vmem:[#allocation2 + $0x8] sm:$0xff]
        %v1613 = vld [vmem:[#allocation2 + $0x9] sm:$0xff]
        %1615 = vrot.lane.b32.xlu0 %v1612, 8
        %v1616 = vpop.permute.xlu0 %1615
        %1619 = vrot.lane.b32.xlu0 %v1613, 16
        %v1620 = vpop.permute.xlu0 %1619
        %v1622 = vsel %vm147, %v1611, %v1616
        %v1623 = vsel %vm165, %v1622, %v1620
        %v1624 = vlaneseq
        %v1625 = vshrl.u32 %v1624, 7
        %v1626 = vsub.s32 0, %v1625
        %v1627 = vrot.slane %v1610, %v1626
        %v1629 = vsel %vm171, %v1623, 0
        %1631 = vmatprep.subr.mxu0 0.0
        %1632 = vmatpush1.msra.mxu0 0.0
        %1633 = vmatprep.subr.mxu0 0.0
        %1634 = vmatpush1.msra.mxu0 0.0
        %1635 = vmatprep.subr.mxu0 0.0
        %1636 = vmatpush1.msra.mxu0 0.0
        %1637 = vmatprep.subr.mxu0 0.0
        %1638 = vmatpush1.msra.mxu0 0.0
        %1639 = vmatprep.subr.mxu0 0.0
        %1640 = vmatpush1.msra.mxu0 0.0
        %1641 = vmatprep.subr.mxu0 0.0
        %1642 = vmatpush1.msra.mxu0 0.0
        %1643 = vmatprep.subr.mxu0 0.0
        %1644 = vmatpush1.msra.mxu0 0.0
        %1645 = vmatprep.subr.mxu0 0.0
        %1646 = vmatpush1.msra.mxu0 0.0
        %1647 = vmatprep.subr.mxu0 0.0
        %1648 = vmatpush1.msra.mxu0 0.0
        %1649 = vmatprep.subr.mxu0 0.0
        %1650 = vmatpush1.msra.mxu0 0.0
        %1651 = vmatprep.subr.mxu0 0.0
        %1652 = vmatpush1.msra.mxu0 0.0
        %1653 = vmatprep.subr.mxu0 0.0
        %1654 = vmatpush1.msra.mxu0 0.0
        %1655 = vmatprep.subr.mxu0 0.0
        %1656 = vmatpush1.msra.mxu0 0.0
        %1657 = vmatprep.subr.mxu0 0.0
        %v1658 = vand.u32 %v1609, 4294901760
        %1659 = vmatpush1.msra.mxu0 %v1658
        %1660 = vmatprep.subr.mxu0 0.0
        %v1661 = vand.u32 %v1608, 4294901760
        %1662 = vmatpush1.msra.mxu0 %v1661
        %1663 = vmatprep.subr.mxu0 0.0
        %v1664 = vand.u32 %v1607, 4294901760
        %1665 = vmatpush1.msra.mxu0 %v1664
        %1666 = vmatprep.subr.mxu0 0.0
        %1667 = vmatpush2.msra.mxu0 0.0
        %1668 = vmatprep.subr.mxu0 0.0
        %1669 = vmatpush2.msra.mxu0 0.0
        %1670 = vmatprep.subr.mxu0 0.0
        %1671 = vmatpush2.msra.mxu0 0.0
        %1672 = vmatprep.subr.mxu0 0.0
        %1673 = vmatpush2.msra.mxu0 0.0
        %1674 = vmatprep.subr.mxu0 0.0
        %1675 = vmatpush2.msra.mxu0 0.0
        %1676 = vmatprep.subr.mxu0 0.0
        %1677 = vmatpush2.msra.mxu0 0.0
        %1678 = vmatprep.subr.mxu0 0.0
        %1679 = vmatpush2.msra.mxu0 0.0
        %1680 = vmatprep.subr.mxu0 0.0
        %1681 = vmatpush2.msra.mxu0 0.0
        %1682 = vmatprep.subr.mxu0 0.0
        %1683 = vmatpush2.msra.mxu0 0.0
        %1684 = vmatprep.subr.mxu0 0.0
        %1685 = vmatpush2.msra.mxu0 0.0
        %1686 = vmatprep.subr.mxu0 0.0
        %1687 = vmatpush2.msra.mxu0 0.0
        %1688 = vmatprep.subr.mxu0 0.0
        %1689 = vmatpush2.msra.mxu0 0.0
        %1690 = vmatprep.subr.mxu0 0.0
        %1691 = vmatpush2.msra.mxu0 0.0
        %1692 = vmatprep.subr.mxu0 0.0
        %1693 = vmatpush2.msra.mxu0 0.0
        %1694 = vmatprep.subr.mxu0 0.0
        %1695 = vmatpush2.msra.mxu0 0.0
        %1696 = vmatprep.subr.mxu0 0.0
        %1697 = vmatpush2.msra.mxu0 0.0
        %1698 = vmatprep.mubr.f32.mxu0 0.0
        %v1699 = vand.u32 %v1629, 4294901760
        %v1700 = vsub.f32 %v1629, %v1699
        %v1701 = vand.u32 %v1700, 4294901760
        %v1702 = vsub.f32 %v1700, %v1701
        %v1703 = vand.u32 %v1702, 4294901760
        %1704 = vmatmul.mubr.f32.gmra.mxu0 %v1703
        %v1705 = vpop.f32.mrf.mxu0
        %v1706 = vadd.f32 %v1627, %v1705
        %v1707 = vpop.f32.mrf.mxu0
        %1708 = vdwg.mxu0
        %1709 = vmatprep.subr.mxu0 0.0
        %1710 = vmatpush1.msra.mxu0 0.0
        %1711 = vmatprep.subr.mxu0 0.0
        %1712 = vmatpush1.msra.mxu0 0.0
        %1713 = vmatprep.subr.mxu0 0.0
        %1714 = vmatpush1.msra.mxu0 0.0
        %1715 = vmatprep.subr.mxu0 0.0
        %1716 = vmatpush1.msra.mxu0 0.0
        %1717 = vmatprep.subr.mxu0 0.0
        %1718 = vmatpush1.msra.mxu0 0.0
        %1719 = vmatprep.subr.mxu0 0.0
        %1720 = vmatpush1.msra.mxu0 0.0
        %1721 = vmatprep.subr.mxu0 0.0
        %1722 = vmatpush1.msra.mxu0 0.0
        %1723 = vmatprep.subr.mxu0 0.0
        %1724 = vmatpush1.msra.mxu0 0.0
        %1725 = vmatprep.subr.mxu0 0.0
        %1726 = vmatpush1.msra.mxu0 0.0
        %1727 = vmatprep.subr.mxu0 0.0
        %1728 = vmatpush1.msra.mxu0 0.0
        %1729 = vmatprep.subr.mxu0 0.0
        %1730 = vmatpush1.msra.mxu0 0.0
        %1731 = vmatprep.subr.mxu0 0.0
        %1732 = vmatpush1.msra.mxu0 0.0
        %1733 = vmatprep.subr.mxu0 0.0
        %1734 = vmatpush1.msra.mxu0 0.0
        %1735 = vmatprep.subr.mxu0 0.0
        %v1736 = vand.u32 %v1609, 4294901760
        %v1737 = vsub.f32 %v1609, %v1736
        %v1738 = vand.u32 %v1737, 4294901760
        %v1739 = vsub.f32 %v1737, %v1738
        %v1740 = vand.u32 %v1739, 4294901760
        %1741 = vmatpush1.msra.mxu0 %v1740
        %1742 = vmatprep.subr.mxu0 0.0
        %v1743 = vand.u32 %v1608, 4294901760
        %v1744 = vsub.f32 %v1608, %v1743
        %v1745 = vand.u32 %v1744, 4294901760
        %v1746 = vsub.f32 %v1744, %v1745
        %v1747 = vand.u32 %v1746, 4294901760
        %1748 = vmatpush1.msra.mxu0 %v1747
        %1749 = vmatprep.subr.mxu0 0.0
        %v1750 = vand.u32 %v1607, 4294901760
        %v1751 = vsub.f32 %v1607, %v1750
        %v1752 = vand.u32 %v1751, 4294901760
        %v1753 = vsub.f32 %v1751, %v1752
        %v1754 = vand.u32 %v1753, 4294901760
        %1755 = vmatpush1.msra.mxu0 %v1754
        %1756 = vmatprep.subr.mxu0 0.0
        %1757 = vmatpush2.msra.mxu0 0.0
        %1758 = vmatprep.subr.mxu0 0.0
        %1759 = vmatpush2.msra.mxu0 0.0
        %1760 = vmatprep.subr.mxu0 0.0
        %1761 = vmatpush2.msra.mxu0 0.0
        %1762 = vmatprep.subr.mxu0 0.0
        %1763 = vmatpush2.msra.mxu0 0.0
        %1764 = vmatprep.subr.mxu0 0.0
        %1765 = vmatpush2.msra.mxu0 0.0
        %1766 = vmatprep.subr.mxu0 0.0
        %1767 = vmatpush2.msra.mxu0 0.0
        %1768 = vmatprep.subr.mxu0 0.0
        %1769 = vmatpush2.msra.mxu0 0.0
        %1770 = vmatprep.subr.mxu0 0.0
        %1771 = vmatpush2.msra.mxu0 0.0
        %1772 = vmatprep.subr.mxu0 0.0
        %1773 = vmatpush2.msra.mxu0 0.0
        %1774 = vmatprep.subr.mxu0 0.0
        %1775 = vmatpush2.msra.mxu0 0.0
        %1776 = vmatprep.subr.mxu0 0.0
        %1777 = vmatpush2.msra.mxu0 0.0
        %1778 = vmatprep.subr.mxu0 0.0
        %1779 = vmatpush2.msra.mxu0 0.0
        %1780 = vmatprep.subr.mxu0 0.0
        %1781 = vmatpush2.msra.mxu0 0.0
        %1782 = vmatprep.subr.mxu0 0.0
        %1783 = vmatpush2.msra.mxu0 0.0
        %1784 = vmatprep.subr.mxu0 0.0
        %1785 = vmatpush2.msra.mxu0 0.0
        %1786 = vmatprep.subr.mxu0 0.0
        %1787 = vmatpush2.msra.mxu0 0.0
        %1788 = vmatprep.mubr.f32.mxu0 0.0
        %v1789 = vand.u32 %v1629, 4294901760
        %1790 = vmatmul.mubr.f32.gmra.mxu0 %v1789
        %v1791 = vpop.f32.mrf.mxu0
        %v1792 = vadd.f32 %v1706, %v1791
        %v1793 = vpop.f32.mrf.mxu0
        %1794 = vdwg.mxu0
        %1795 = vmatprep.subr.mxu0 0.0
        %1796 = vmatpush1.msra.mxu0 0.0
        %1797 = vmatprep.subr.mxu0 0.0
        %1798 = vmatpush1.msra.mxu0 0.0
        %1799 = vmatprep.subr.mxu0 0.0
        %1800 = vmatpush1.msra.mxu0 0.0
        %1801 = vmatprep.subr.mxu0 0.0
        %1802 = vmatpush1.msra.mxu0 0.0
        %1803 = vmatprep.subr.mxu0 0.0
        %1804 = vmatpush1.msra.mxu0 0.0
        %1805 = vmatprep.subr.mxu0 0.0
        %1806 = vmatpush1.msra.mxu0 0.0
        %1807 = vmatprep.subr.mxu0 0.0
        %1808 = vmatpush1.msra.mxu0 0.0
        %1809 = vmatprep.subr.mxu0 0.0
        %1810 = vmatpush1.msra.mxu0 0.0
        %1811 = vmatprep.subr.mxu0 0.0
        %1812 = vmatpush1.msra.mxu0 0.0
        %1813 = vmatprep.subr.mxu0 0.0
        %1814 = vmatpush1.msra.mxu0 0.0
        %1815 = vmatprep.subr.mxu0 0.0
        %1816 = vmatpush1.msra.mxu0 0.0
        %1817 = vmatprep.subr.mxu0 0.0
        %1818 = vmatpush1.msra.mxu0 0.0
        %1819 = vmatprep.subr.mxu0 0.0
        %1820 = vmatpush1.msra.mxu0 0.0
        %1821 = vmatprep.subr.mxu0 0.0
        %v1822 = vand.u32 %v1609, 4294901760
        %v1823 = vsub.f32 %v1609, %v1822
        %1824 = vmatpush1.msra.mxu0 %v1823
        %1825 = vmatprep.subr.mxu0 0.0
        %v1826 = vand.u32 %v1608, 4294901760
        %v1827 = vsub.f32 %v1608, %v1826
        %1828 = vmatpush1.msra.mxu0 %v1827
        %1829 = vmatprep.subr.mxu0 0.0
        %v1830 = vand.u32 %v1607, 4294901760
        %v1831 = vsub.f32 %v1607, %v1830
        %1832 = vmatpush1.msra.mxu0 %v1831
        %1833 = vmatprep.subr.mxu0 0.0
        %1834 = vmatpush2.msra.mxu0 0.0
        %1835 = vmatprep.subr.mxu0 0.0
        %1836 = vmatpush2.msra.mxu0 0.0
        %1837 = vmatprep.subr.mxu0 0.0
        %1838 = vmatpush2.msra.mxu0 0.0
        %1839 = vmatprep.subr.mxu0 0.0
        %1840 = vmatpush2.msra.mxu0 0.0
        %1841 = vmatprep.subr.mxu0 0.0
        %1842 = vmatpush2.msra.mxu0 0.0
        %1843 = vmatprep.subr.mxu0 0.0
        %1844 = vmatpush2.msra.mxu0 0.0
        %1845 = vmatprep.subr.mxu0 0.0
        %1846 = vmatpush2.msra.mxu0 0.0
        %1847 = vmatprep.subr.mxu0 0.0
        %1848 = vmatpush2.msra.mxu0 0.0
        %1849 = vmatprep.subr.mxu0 0.0
        %1850 = vmatpush2.msra.mxu0 0.0
        %1851 = vmatprep.subr.mxu0 0.0
        %1852 = vmatpush2.msra.mxu0 0.0
        %1853 = vmatprep.subr.mxu0 0.0
        %1854 = vmatpush2.msra.mxu0 0.0
        %1855 = vmatprep.subr.mxu0 0.0
        %1856 = vmatpush2.msra.mxu0 0.0
        %1857 = vmatprep.subr.mxu0 0.0
        %1858 = vmatpush2.msra.mxu0 0.0
        %1859 = vmatprep.subr.mxu0 0.0
        %1860 = vmatpush2.msra.mxu0 0.0
        %1861 = vmatprep.subr.mxu0 0.0
        %1862 = vmatpush2.msra.mxu0 0.0
        %1863 = vmatprep.subr.mxu0 0.0
        %1864 = vmatpush2.msra.mxu0 0.0
        %1865 = vmatprep.mubr.f32.mxu0 0.0
        %v1866 = vand.u32 %v1629, 4294901760
        %v1867 = vsub.f32 %v1629, %v1866
        %1868 = vmatmul.mubr.f32.gmra.mxu0 %v1867
        %v1869 = vpop.f32.mrf.mxu0
        %v1870 = vadd.f32 %v1792, %v1869
        %v1871 = vpop.f32.mrf.mxu0
        %1872 = vdwg.mxu0
        %1873 = vmatprep.subr.mxu0 0.0
        %1874 = vmatpush1.msra.mxu0 0.0
        %1875 = vmatprep.subr.mxu0 0.0
        %1876 = vmatpush1.msra.mxu0 0.0
        %1877 = vmatprep.subr.mxu0 0.0
        %1878 = vmatpush1.msra.mxu0 0.0
        %1879 = vmatprep.subr.mxu0 0.0
        %1880 = vmatpush1.msra.mxu0 0.0
        %1881 = vmatprep.subr.mxu0 0.0
        %1882 = vmatpush1.msra.mxu0 0.0
        %1883 = vmatprep.subr.mxu0 0.0
        %1884 = vmatpush1.msra.mxu0 0.0
        %1885 = vmatprep.subr.mxu0 0.0
        %1886 = vmatpush1.msra.mxu0 0.0
        %1887 = vmatprep.subr.mxu0 0.0
        %1888 = vmatpush1.msra.mxu0 0.0
        %1889 = vmatprep.subr.mxu0 0.0
        %1890 = vmatpush1.msra.mxu0 0.0
        %1891 = vmatprep.subr.mxu0 0.0
        %1892 = vmatpush1.msra.mxu0 0.0
        %1893 = vmatprep.subr.mxu0 0.0
        %1894 = vmatpush1.msra.mxu0 0.0
        %1895 = vmatprep.subr.mxu0 0.0
        %1896 = vmatpush1.msra.mxu0 0.0
        %1897 = vmatprep.subr.mxu0 0.0
        %1898 = vmatpush1.msra.mxu0 0.0
        %1899 = vmatprep.subr.mxu0 0.0
        %v1900 = vand.u32 %v1609, 4294901760
        %1901 = vmatpush1.msra.mxu0 %v1900
        %1902 = vmatprep.subr.mxu0 0.0
        %v1903 = vand.u32 %v1608, 4294901760
        %1904 = vmatpush1.msra.mxu0 %v1903
        %1905 = vmatprep.subr.mxu0 0.0
        %v1906 = vand.u32 %v1607, 4294901760
        %1907 = vmatpush1.msra.mxu0 %v1906
        %1908 = vmatprep.subr.mxu0 0.0
        %1909 = vmatpush2.msra.mxu0 0.0
        %1910 = vmatprep.subr.mxu0 0.0
        %1911 = vmatpush2.msra.mxu0 0.0
        %1912 = vmatprep.subr.mxu0 0.0
        %1913 = vmatpush2.msra.mxu0 0.0
        %1914 = vmatprep.subr.mxu0 0.0
        %1915 = vmatpush2.msra.mxu0 0.0
        %1916 = vmatprep.subr.mxu0 0.0
        %1917 = vmatpush2.msra.mxu0 0.0
        %1918 = vmatprep.subr.mxu0 0.0
        %1919 = vmatpush2.msra.mxu0 0.0
        %1920 = vmatprep.subr.mxu0 0.0
        %1921 = vmatpush2.msra.mxu0 0.0
        %1922 = vmatprep.subr.mxu0 0.0
        %1923 = vmatpush2.msra.mxu0 0.0
        %1924 = vmatprep.subr.mxu0 0.0
        %1925 = vmatpush2.msra.mxu0 0.0
        %1926 = vmatprep.subr.mxu0 0.0
        %1927 = vmatpush2.msra.mxu0 0.0
        %1928 = vmatprep.subr.mxu0 0.0
        %1929 = vmatpush2.msra.mxu0 0.0
        %1930 = vmatprep.subr.mxu0 0.0
        %1931 = vmatpush2.msra.mxu0 0.0
        %1932 = vmatprep.subr.mxu0 0.0
        %1933 = vmatpush2.msra.mxu0 0.0
        %1934 = vmatprep.subr.mxu0 0.0
        %1935 = vmatpush2.msra.mxu0 0.0
        %1936 = vmatprep.subr.mxu0 0.0
        %1937 = vmatpush2.msra.mxu0 0.0
        %1938 = vmatprep.subr.mxu0 0.0
        %1939 = vmatpush2.msra.mxu0 0.0
        %1940 = vmatprep.mubr.f32.mxu0 0.0
        %v1941 = vand.u32 %v1629, 4294901760
        %v1942 = vsub.f32 %v1629, %v1941
        %v1943 = vand.u32 %v1942, 4294901760
        %1944 = vmatmul.mubr.f32.gmra.mxu0 %v1943
        %v1945 = vpop.f32.mrf.mxu0
        %v1946 = vadd.f32 %v1870, %v1945
        %v1947 = vpop.f32.mrf.mxu0
        %1948 = vdwg.mxu0
        %1949 = vmatprep.subr.mxu0 0.0
        %1950 = vmatpush1.msra.mxu0 0.0
        %1951 = vmatprep.subr.mxu0 0.0
        %1952 = vmatpush1.msra.mxu0 0.0
        %1953 = vmatprep.subr.mxu0 0.0
        %1954 = vmatpush1.msra.mxu0 0.0
        %1955 = vmatprep.subr.mxu0 0.0
        %1956 = vmatpush1.msra.mxu0 0.0
        %1957 = vmatprep.subr.mxu0 0.0
        %1958 = vmatpush1.msra.mxu0 0.0
        %1959 = vmatprep.subr.mxu0 0.0
        %1960 = vmatpush1.msra.mxu0 0.0
        %1961 = vmatprep.subr.mxu0 0.0
        %1962 = vmatpush1.msra.mxu0 0.0
        %1963 = vmatprep.subr.mxu0 0.0
        %1964 = vmatpush1.msra.mxu0 0.0
        %1965 = vmatprep.subr.mxu0 0.0
        %1966 = vmatpush1.msra.mxu0 0.0
        %1967 = vmatprep.subr.mxu0 0.0
        %1968 = vmatpush1.msra.mxu0 0.0
        %1969 = vmatprep.subr.mxu0 0.0
        %1970 = vmatpush1.msra.mxu0 0.0
        %1971 = vmatprep.subr.mxu0 0.0
        %1972 = vmatpush1.msra.mxu0 0.0
        %1973 = vmatprep.subr.mxu0 0.0
        %1974 = vmatpush1.msra.mxu0 0.0
        %1975 = vmatprep.subr.mxu0 0.0
        %v1976 = vand.u32 %v1609, 4294901760
        %v1977 = vsub.f32 %v1609, %v1976
        %v1978 = vand.u32 %v1977, 4294901760
        %1979 = vmatpush1.msra.mxu0 %v1978
        %1980 = vmatprep.subr.mxu0 0.0
        %v1981 = vand.u32 %v1608, 4294901760
        %v1982 = vsub.f32 %v1608, %v1981
        %v1983 = vand.u32 %v1982, 4294901760
        %1984 = vmatpush1.msra.mxu0 %v1983
        %1985 = vmatprep.subr.mxu0 0.0
        %v1986 = vand.u32 %v1607, 4294901760
        %v1987 = vsub.f32 %v1607, %v1986
        %v1988 = vand.u32 %v1987, 4294901760
        %1989 = vmatpush1.msra.mxu0 %v1988
        %1990 = vmatprep.subr.mxu0 0.0
        %1991 = vmatpush2.msra.mxu0 0.0
        %1992 = vmatprep.subr.mxu0 0.0
        %1993 = vmatpush2.msra.mxu0 0.0
        %1994 = vmatprep.subr.mxu0 0.0
        %1995 = vmatpush2.msra.mxu0 0.0
        %1996 = vmatprep.subr.mxu0 0.0
        %1997 = vmatpush2.msra.mxu0 0.0
        %1998 = vmatprep.subr.mxu0 0.0
        %1999 = vmatpush2.msra.mxu0 0.0
        %2000 = vmatprep.subr.mxu0 0.0
        %2001 = vmatpush2.msra.mxu0 0.0
        %2002 = vmatprep.subr.mxu0 0.0
        %2003 = vmatpush2.msra.mxu0 0.0
        %2004 = vmatprep.subr.mxu0 0.0
        %2005 = vmatpush2.msra.mxu0 0.0
        %2006 = vmatprep.subr.mxu0 0.0
        %2007 = vmatpush2.msra.mxu0 0.0
        %2008 = vmatprep.subr.mxu0 0.0
        %2009 = vmatpush2.msra.mxu0 0.0
        %2010 = vmatprep.subr.mxu0 0.0
        %2011 = vmatpush2.msra.mxu0 0.0
        %2012 = vmatprep.subr.mxu0 0.0
        %2013 = vmatpush2.msra.mxu0 0.0
        %2014 = vmatprep.subr.mxu0 0.0
        %2015 = vmatpush2.msra.mxu0 0.0
        %2016 = vmatprep.subr.mxu0 0.0
        %2017 = vmatpush2.msra.mxu0 0.0
        %2018 = vmatprep.subr.mxu0 0.0
        %2019 = vmatpush2.msra.mxu0 0.0
        %2020 = vmatprep.subr.mxu0 0.0
        %2021 = vmatpush2.msra.mxu0 0.0
        %2022 = vmatprep.mubr.f32.mxu0 0.0
        %v2023 = vand.u32 %v1629, 4294901760
        %2024 = vmatmul.mubr.f32.gmra.mxu0 %v2023
        %v2025 = vpop.f32.mrf.mxu0
        %v2026 = vadd.f32 %v1946, %v2025
        %v2027 = vpop.f32.mrf.mxu0
        %2028 = vdwg.mxu0
        %2029 = vmatprep.subr.mxu0 0.0
        %2030 = vmatpush1.msra.mxu0 0.0
        %2031 = vmatprep.subr.mxu0 0.0
        %2032 = vmatpush1.msra.mxu0 0.0
        %2033 = vmatprep.subr.mxu0 0.0
        %2034 = vmatpush1.msra.mxu0 0.0
        %2035 = vmatprep.subr.mxu0 0.0
        %2036 = vmatpush1.msra.mxu0 0.0
        %2037 = vmatprep.subr.mxu0 0.0
        %2038 = vmatpush1.msra.mxu0 0.0
        %2039 = vmatprep.subr.mxu0 0.0
        %2040 = vmatpush1.msra.mxu0 0.0
        %2041 = vmatprep.subr.mxu0 0.0
        %2042 = vmatpush1.msra.mxu0 0.0
        %2043 = vmatprep.subr.mxu0 0.0
        %2044 = vmatpush1.msra.mxu0 0.0
        %2045 = vmatprep.subr.mxu0 0.0
        %2046 = vmatpush1.msra.mxu0 0.0
        %2047 = vmatprep.subr.mxu0 0.0
        %2048 = vmatpush1.msra.mxu0 0.0
        %2049 = vmatprep.subr.mxu0 0.0
        %2050 = vmatpush1.msra.mxu0 0.0
        %2051 = vmatprep.subr.mxu0 0.0
        %2052 = vmatpush1.msra.mxu0 0.0
        %2053 = vmatprep.subr.mxu0 0.0
        %2054 = vmatpush1.msra.mxu0 0.0
        %2055 = vmatprep.subr.mxu0 0.0
        %v2056 = vand.u32 %v1609, 4294901760
        %2057 = vmatpush1.msra.mxu0 %v2056
        %2058 = vmatprep.subr.mxu0 0.0
        %v2059 = vand.u32 %v1608, 4294901760
        %2060 = vmatpush1.msra.mxu0 %v2059
        %2061 = vmatprep.subr.mxu0 0.0
        %v2062 = vand.u32 %v1607, 4294901760
        %2063 = vmatpush1.msra.mxu0 %v2062
        %2064 = vmatprep.subr.mxu0 0.0
        %2065 = vmatpush2.msra.mxu0 0.0
        %2066 = vmatprep.subr.mxu0 0.0
        %2067 = vmatpush2.msra.mxu0 0.0
        %2068 = vmatprep.subr.mxu0 0.0
        %2069 = vmatpush2.msra.mxu0 0.0
        %2070 = vmatprep.subr.mxu0 0.0
        %2071 = vmatpush2.msra.mxu0 0.0
        %2072 = vmatprep.subr.mxu0 0.0
        %2073 = vmatpush2.msra.mxu0 0.0
        %2074 = vmatprep.subr.mxu0 0.0
        %2075 = vmatpush2.msra.mxu0 0.0
        %2076 = vmatprep.subr.mxu0 0.0
        %2077 = vmatpush2.msra.mxu0 0.0
        %2078 = vmatprep.subr.mxu0 0.0
        %2079 = vmatpush2.msra.mxu0 0.0
        %2080 = vmatprep.subr.mxu0 0.0
        %2081 = vmatpush2.msra.mxu0 0.0
        %2082 = vmatprep.subr.mxu0 0.0
        %2083 = vmatpush2.msra.mxu0 0.0
        %2084 = vmatprep.subr.mxu0 0.0
        %2085 = vmatpush2.msra.mxu0 0.0
        %2086 = vmatprep.subr.mxu0 0.0
        %2087 = vmatpush2.msra.mxu0 0.0
        %2088 = vmatprep.subr.mxu0 0.0
        %2089 = vmatpush2.msra.mxu0 0.0
        %2090 = vmatprep.subr.mxu0 0.0
        %2091 = vmatpush2.msra.mxu0 0.0
        %2092 = vmatprep.subr.mxu0 0.0
        %2093 = vmatpush2.msra.mxu0 0.0
        %2094 = vmatprep.subr.mxu0 0.0
        %2095 = vmatpush2.msra.mxu0 0.0
        %2096 = vmatprep.mubr.f32.mxu0 0.0
        %v2097 = vand.u32 %v1629, 4294901760
        %2098 = vmatmul.mubr.f32.gmra.mxu0 %v2097
        %v2099 = vpop.f32.mrf.mxu0
        %v2100 = vadd.f32 %v2026, %v2099
        %v2101 = vpop.f32.mrf.mxu0
        %2102 = vdwg.mxu0
        %v2103 = vmax.f32 %v2100, 0.0
        %2104 = vst.msk [vmem:[#allocation2 + $0x8] sm:$0xff] %vm147, %v2103
        %v2105 = vld [vmem:[%s1 + $0x70] sm:$0xff]
        %v2106 = vld [vmem:[%s1 + $0x78] sm:$0x1]
        %v2107 = vld [vmem:[#allocation2 + $0x8] sm:$0xff]
        %v2108 = vlaneseq
        %v2109 = vshrl.u32 %v2108, 7
        %v2110 = vsub.s32 0, %v2109
        %v2111 = vrot.slane %v2106, %v2110
        %v2113 = vsel %vm147, %v2107, 0
        %2115 = vmatprep.subr.mxu0 0.0
        %2116 = vmatpush1.msra.mxu0 0.0
        %2117 = vmatprep.subr.mxu0 0.0
        %2118 = vmatpush1.msra.mxu0 0.0
        %2119 = vmatprep.subr.mxu0 0.0
        %2120 = vmatpush1.msra.mxu0 0.0
        %2121 = vmatprep.subr.mxu0 0.0
        %2122 = vmatpush1.msra.mxu0 0.0
        %2123 = vmatprep.subr.mxu0 0.0
        %2124 = vmatpush1.msra.mxu0 0.0
        %2125 = vmatprep.subr.mxu0 0.0
        %2126 = vmatpush1.msra.mxu0 0.0
        %2127 = vmatprep.subr.mxu0 0.0
        %2128 = vmatpush1.msra.mxu0 0.0
        %2129 = vmatprep.subr.mxu0 0.0
        %2130 = vmatpush1.msra.mxu0 0.0
        %2131 = vmatprep.subr.mxu0 0.0
        %2132 = vmatpush1.msra.mxu0 0.0
        %2133 = vmatprep.subr.mxu0 0.0
        %2134 = vmatpush1.msra.mxu0 0.0
        %2135 = vmatprep.subr.mxu0 0.0
        %2136 = vmatpush1.msra.mxu0 0.0
        %2137 = vmatprep.subr.mxu0 0.0
        %2138 = vmatpush1.msra.mxu0 0.0
        %2139 = vmatprep.subr.mxu0 0.0
        %2140 = vmatpush1.msra.mxu0 0.0
        %2141 = vmatprep.subr.mxu0 0.0
        %2142 = vmatpush1.msra.mxu0 0.0
        %2143 = vmatprep.subr.mxu0 0.0
        %2144 = vmatpush1.msra.mxu0 0.0
        %2145 = vmatprep.subr.mxu0 0.0
        %v2146 = vand.u32 %v2105, 4294901760
        %2147 = vmatpush1.msra.mxu0 %v2146
        %2148 = vmatprep.subr.mxu0 0.0
        %2149 = vmatpush2.msra.mxu0 0.0
        %2150 = vmatprep.subr.mxu0 0.0
        %2151 = vmatpush2.msra.mxu0 0.0
        %2152 = vmatprep.subr.mxu0 0.0
        %2153 = vmatpush2.msra.mxu0 0.0
        %2154 = vmatprep.subr.mxu0 0.0
        %2155 = vmatpush2.msra.mxu0 0.0
        %2156 = vmatprep.subr.mxu0 0.0
        %2157 = vmatpush2.msra.mxu0 0.0
        %2158 = vmatprep.subr.mxu0 0.0
        %2159 = vmatpush2.msra.mxu0 0.0
        %2160 = vmatprep.subr.mxu0 0.0
        %2161 = vmatpush2.msra.mxu0 0.0
        %2162 = vmatprep.subr.mxu0 0.0
        %2163 = vmatpush2.msra.mxu0 0.0
        %2164 = vmatprep.subr.mxu0 0.0
        %2165 = vmatpush2.msra.mxu0 0.0
        %2166 = vmatprep.subr.mxu0 0.0
        %2167 = vmatpush2.msra.mxu0 0.0
        %2168 = vmatprep.subr.mxu0 0.0
        %2169 = vmatpush2.msra.mxu0 0.0
        %2170 = vmatprep.subr.mxu0 0.0
        %2171 = vmatpush2.msra.mxu0 0.0
        %2172 = vmatprep.subr.mxu0 0.0
        %2173 = vmatpush2.msra.mxu0 0.0
        %2174 = vmatprep.subr.mxu0 0.0
        %2175 = vmatpush2.msra.mxu0 0.0
        %2176 = vmatprep.subr.mxu0 0.0
        %2177 = vmatpush2.msra.mxu0 0.0
        %2178 = vmatprep.subr.mxu0 0.0
        %2179 = vmatpush2.msra.mxu0 0.0
        %2180 = vmatprep.mubr.f32.mxu0 0.0
        %v2181 = vand.u32 %v2113, 4294901760
        %v2182 = vsub.f32 %v2113, %v2181
        %v2183 = vand.u32 %v2182, 4294901760
        %v2184 = vsub.f32 %v2182, %v2183
        %v2185 = vand.u32 %v2184, 4294901760
        %2186 = vmatmul.mubr.f32.gmra.mxu0 %v2185
        %v2187 = vpop.f32.mrf.mxu0
        %v2188 = vadd.f32 %v2111, %v2187
        %v2189 = vpop.f32.mrf.mxu0
        %2190 = vdwg.mxu0
        %2191 = vmatprep.subr.mxu0 0.0
        %2192 = vmatpush1.msra.mxu0 0.0
        %2193 = vmatprep.subr.mxu0 0.0
        %2194 = vmatpush1.msra.mxu0 0.0
        %2195 = vmatprep.subr.mxu0 0.0
        %2196 = vmatpush1.msra.mxu0 0.0
        %2197 = vmatprep.subr.mxu0 0.0
        %2198 = vmatpush1.msra.mxu0 0.0
        %2199 = vmatprep.subr.mxu0 0.0
        %2200 = vmatpush1.msra.mxu0 0.0
        %2201 = vmatprep.subr.mxu0 0.0
        %2202 = vmatpush1.msra.mxu0 0.0
        %2203 = vmatprep.subr.mxu0 0.0
        %2204 = vmatpush1.msra.mxu0 0.0
        %2205 = vmatprep.subr.mxu0 0.0
        %2206 = vmatpush1.msra.mxu0 0.0
        %2207 = vmatprep.subr.mxu0 0.0
        %2208 = vmatpush1.msra.mxu0 0.0
        %2209 = vmatprep.subr.mxu0 0.0
        %2210 = vmatpush1.msra.mxu0 0.0
        %2211 = vmatprep.subr.mxu0 0.0
        %2212 = vmatpush1.msra.mxu0 0.0
        %2213 = vmatprep.subr.mxu0 0.0
        %2214 = vmatpush1.msra.mxu0 0.0
        %2215 = vmatprep.subr.mxu0 0.0
        %2216 = vmatpush1.msra.mxu0 0.0
        %2217 = vmatprep.subr.mxu0 0.0
        %2218 = vmatpush1.msra.mxu0 0.0
        %2219 = vmatprep.subr.mxu0 0.0
        %2220 = vmatpush1.msra.mxu0 0.0
        %2221 = vmatprep.subr.mxu0 0.0
        %v2222 = vand.u32 %v2105, 4294901760
        %v2223 = vsub.f32 %v2105, %v2222
        %v2224 = vand.u32 %v2223, 4294901760
        %v2225 = vsub.f32 %v2223, %v2224
        %v2226 = vand.u32 %v2225, 4294901760
        %2227 = vmatpush1.msra.mxu0 %v2226
        %2228 = vmatprep.subr.mxu0 0.0
        %2229 = vmatpush2.msra.mxu0 0.0
        %2230 = vmatprep.subr.mxu0 0.0
        %2231 = vmatpush2.msra.mxu0 0.0
        %2232 = vmatprep.subr.mxu0 0.0
        %2233 = vmatpush2.msra.mxu0 0.0
        %2234 = vmatprep.subr.mxu0 0.0
        %2235 = vmatpush2.msra.mxu0 0.0
        %2236 = vmatprep.subr.mxu0 0.0
        %2237 = vmatpush2.msra.mxu0 0.0
        %2238 = vmatprep.subr.mxu0 0.0
        %2239 = vmatpush2.msra.mxu0 0.0
        %2240 = vmatprep.subr.mxu0 0.0
        %2241 = vmatpush2.msra.mxu0 0.0
        %2242 = vmatprep.subr.mxu0 0.0
        %2243 = vmatpush2.msra.mxu0 0.0
        %2244 = vmatprep.subr.mxu0 0.0
        %2245 = vmatpush2.msra.mxu0 0.0
        %2246 = vmatprep.subr.mxu0 0.0
        %2247 = vmatpush2.msra.mxu0 0.0
        %2248 = vmatprep.subr.mxu0 0.0
        %2249 = vmatpush2.msra.mxu0 0.0
        %2250 = vmatprep.subr.mxu0 0.0
        %2251 = vmatpush2.msra.mxu0 0.0
        %2252 = vmatprep.subr.mxu0 0.0
        %2253 = vmatpush2.msra.mxu0 0.0
        %2254 = vmatprep.subr.mxu0 0.0
        %2255 = vmatpush2.msra.mxu0 0.0
        %2256 = vmatprep.subr.mxu0 0.0
        %2257 = vmatpush2.msra.mxu0 0.0
        %2258 = vmatprep.subr.mxu0 0.0
        %2259 = vmatpush2.msra.mxu0 0.0
        %2260 = vmatprep.mubr.f32.mxu0 0.0
        %v2261 = vand.u32 %v2113, 4294901760
        %2262 = vmatmul.mubr.f32.gmra.mxu0 %v2261
        %v2263 = vpop.f32.mrf.mxu0
        %v2264 = vadd.f32 %v2188, %v2263
        %v2265 = vpop.f32.mrf.mxu0
        %2266 = vdwg.mxu0
        %2267 = vmatprep.subr.mxu0 0.0
        %2268 = vmatpush1.msra.mxu0 0.0
        %2269 = vmatprep.subr.mxu0 0.0
        %2270 = vmatpush1.msra.mxu0 0.0
        %2271 = vmatprep.subr.mxu0 0.0
        %2272 = vmatpush1.msra.mxu0 0.0
        %2273 = vmatprep.subr.mxu0 0.0
        %2274 = vmatpush1.msra.mxu0 0.0
        %2275 = vmatprep.subr.mxu0 0.0
        %2276 = vmatpush1.msra.mxu0 0.0
        %2277 = vmatprep.subr.mxu0 0.0
        %2278 = vmatpush1.msra.mxu0 0.0
        %2279 = vmatprep.subr.mxu0 0.0
        %2280 = vmatpush1.msra.mxu0 0.0
        %2281 = vmatprep.subr.mxu0 0.0
        %2282 = vmatpush1.msra.mxu0 0.0
        %2283 = vmatprep.subr.mxu0 0.0
        %2284 = vmatpush1.msra.mxu0 0.0
        %2285 = vmatprep.subr.mxu0 0.0
        %2286 = vmatpush1.msra.mxu0 0.0
        %2287 = vmatprep.subr.mxu0 0.0
        %2288 = vmatpush1.msra.mxu0 0.0
        %2289 = vmatprep.subr.mxu0 0.0
        %2290 = vmatpush1.msra.mxu0 0.0
        %2291 = vmatprep.subr.mxu0 0.0
        %2292 = vmatpush1.msra.mxu0 0.0
        %2293 = vmatprep.subr.mxu0 0.0
        %2294 = vmatpush1.msra.mxu0 0.0
        %2295 = vmatprep.subr.mxu0 0.0
        %2296 = vmatpush1.msra.mxu0 0.0
        %2297 = vmatprep.subr.mxu0 0.0
        %v2298 = vand.u32 %v2105, 4294901760
        %v2299 = vsub.f32 %v2105, %v2298
        %2300 = vmatpush1.msra.mxu0 %v2299
        %2301 = vmatprep.subr.mxu0 0.0
        %2302 = vmatpush2.msra.mxu0 0.0
        %2303 = vmatprep.subr.mxu0 0.0
        %2304 = vmatpush2.msra.mxu0 0.0
        %2305 = vmatprep.subr.mxu0 0.0
        %2306 = vmatpush2.msra.mxu0 0.0
        %2307 = vmatprep.subr.mxu0 0.0
        %2308 = vmatpush2.msra.mxu0 0.0
        %2309 = vmatprep.subr.mxu0 0.0
        %2310 = vmatpush2.msra.mxu0 0.0
        %2311 = vmatprep.subr.mxu0 0.0
        %2312 = vmatpush2.msra.mxu0 0.0
        %2313 = vmatprep.subr.mxu0 0.0
        %2314 = vmatpush2.msra.mxu0 0.0
        %2315 = vmatprep.subr.mxu0 0.0
        %2316 = vmatpush2.msra.mxu0 0.0
        %2317 = vmatprep.subr.mxu0 0.0
        %2318 = vmatpush2.msra.mxu0 0.0
        %2319 = vmatprep.subr.mxu0 0.0
        %2320 = vmatpush2.msra.mxu0 0.0
        %2321 = vmatprep.subr.mxu0 0.0
        %2322 = vmatpush2.msra.mxu0 0.0
        %2323 = vmatprep.subr.mxu0 0.0
        %2324 = vmatpush2.msra.mxu0 0.0
        %2325 = vmatprep.subr.mxu0 0.0
        %2326 = vmatpush2.msra.mxu0 0.0
        %2327 = vmatprep.subr.mxu0 0.0
        %2328 = vmatpush2.msra.mxu0 0.0
        %2329 = vmatprep.subr.mxu0 0.0
        %2330 = vmatpush2.msra.mxu0 0.0
        %2331 = vmatprep.subr.mxu0 0.0
        %2332 = vmatpush2.msra.mxu0 0.0
        %2333 = vmatprep.mubr.f32.mxu0 0.0
        %v2334 = vand.u32 %v2113, 4294901760
        %v2335 = vsub.f32 %v2113, %v2334
        %2336 = vmatmul.mubr.f32.gmra.mxu0 %v2335
        %v2337 = vpop.f32.mrf.mxu0
        %v2338 = vadd.f32 %v2264, %v2337
        %v2339 = vpop.f32.mrf.mxu0
        %2340 = vdwg.mxu0
        %2341 = vmatprep.subr.mxu0 0.0
        %2342 = vmatpush1.msra.mxu0 0.0
        %2343 = vmatprep.subr.mxu0 0.0
        %2344 = vmatpush1.msra.mxu0 0.0
        %2345 = vmatprep.subr.mxu0 0.0
        %2346 = vmatpush1.msra.mxu0 0.0
        %2347 = vmatprep.subr.mxu0 0.0
        %2348 = vmatpush1.msra.mxu0 0.0
        %2349 = vmatprep.subr.mxu0 0.0
        %2350 = vmatpush1.msra.mxu0 0.0
        %2351 = vmatprep.subr.mxu0 0.0
        %2352 = vmatpush1.msra.mxu0 0.0
        %2353 = vmatprep.subr.mxu0 0.0
        %2354 = vmatpush1.msra.mxu0 0.0
        %2355 = vmatprep.subr.mxu0 0.0
        %2356 = vmatpush1.msra.mxu0 0.0
        %2357 = vmatprep.subr.mxu0 0.0
        %2358 = vmatpush1.msra.mxu0 0.0
        %2359 = vmatprep.subr.mxu0 0.0
        %2360 = vmatpush1.msra.mxu0 0.0
        %2361 = vmatprep.subr.mxu0 0.0
        %2362 = vmatpush1.msra.mxu0 0.0
        %2363 = vmatprep.subr.mxu0 0.0
        %2364 = vmatpush1.msra.mxu0 0.0
        %2365 = vmatprep.subr.mxu0 0.0
        %2366 = vmatpush1.msra.mxu0 0.0
        %2367 = vmatprep.subr.mxu0 0.0
        %2368 = vmatpush1.msra.mxu0 0.0
        %2369 = vmatprep.subr.mxu0 0.0
        %2370 = vmatpush1.msra.mxu0 0.0
        %2371 = vmatprep.subr.mxu0 0.0
        %v2372 = vand.u32 %v2105, 4294901760
        %2373 = vmatpush1.msra.mxu0 %v2372
        %2374 = vmatprep.subr.mxu0 0.0
        %2375 = vmatpush2.msra.mxu0 0.0
        %2376 = vmatprep.subr.mxu0 0.0
        %2377 = vmatpush2.msra.mxu0 0.0
        %2378 = vmatprep.subr.mxu0 0.0
        %2379 = vmatpush2.msra.mxu0 0.0
        %2380 = vmatprep.subr.mxu0 0.0
        %2381 = vmatpush2.msra.mxu0 0.0
        %2382 = vmatprep.subr.mxu0 0.0
        %2383 = vmatpush2.msra.mxu0 0.0
        %2384 = vmatprep.subr.mxu0 0.0
        %2385 = vmatpush2.msra.mxu0 0.0
        %2386 = vmatprep.subr.mxu0 0.0
        %2387 = vmatpush2.msra.mxu0 0.0
        %2388 = vmatprep.subr.mxu0 0.0
        %2389 = vmatpush2.msra.mxu0 0.0
        %2390 = vmatprep.subr.mxu0 0.0
        %2391 = vmatpush2.msra.mxu0 0.0
        %2392 = vmatprep.subr.mxu0 0.0
        %2393 = vmatpush2.msra.mxu0 0.0
        %2394 = vmatprep.subr.mxu0 0.0
        %2395 = vmatpush2.msra.mxu0 0.0
        %2396 = vmatprep.subr.mxu0 0.0
        %2397 = vmatpush2.msra.mxu0 0.0
        %2398 = vmatprep.subr.mxu0 0.0
        %2399 = vmatpush2.msra.mxu0 0.0
        %2400 = vmatprep.subr.mxu0 0.0
        %2401 = vmatpush2.msra.mxu0 0.0
        %2402 = vmatprep.subr.mxu0 0.0
        %2403 = vmatpush2.msra.mxu0 0.0
        %2404 = vmatprep.subr.mxu0 0.0
        %2405 = vmatpush2.msra.mxu0 0.0
        %2406 = vmatprep.mubr.f32.mxu0 0.0
        %v2407 = vand.u32 %v2113, 4294901760
        %v2408 = vsub.f32 %v2113, %v2407
        %v2409 = vand.u32 %v2408, 4294901760
        %2410 = vmatmul.mubr.f32.gmra.mxu0 %v2409
        %v2411 = vpop.f32.mrf.mxu0
        %v2412 = vadd.f32 %v2338, %v2411
        %v2413 = vpop.f32.mrf.mxu0
        %2414 = vdwg.mxu0
        %2415 = vmatprep.subr.mxu0 0.0
        %2416 = vmatpush1.msra.mxu0 0.0
        %2417 = vmatprep.subr.mxu0 0.0
        %2418 = vmatpush1.msra.mxu0 0.0
        %2419 = vmatprep.subr.mxu0 0.0
        %2420 = vmatpush1.msra.mxu0 0.0
        %2421 = vmatprep.subr.mxu0 0.0
        %2422 = vmatpush1.msra.mxu0 0.0
        %2423 = vmatprep.subr.mxu0 0.0
        %2424 = vmatpush1.msra.mxu0 0.0
        %2425 = vmatprep.subr.mxu0 0.0
        %2426 = vmatpush1.msra.mxu0 0.0
        %2427 = vmatprep.subr.mxu0 0.0
        %2428 = vmatpush1.msra.mxu0 0.0
        %2429 = vmatprep.subr.mxu0 0.0
        %2430 = vmatpush1.msra.mxu0 0.0
        %2431 = vmatprep.subr.mxu0 0.0
        %2432 = vmatpush1.msra.mxu0 0.0
        %2433 = vmatprep.subr.mxu0 0.0
        %2434 = vmatpush1.msra.mxu0 0.0
        %2435 = vmatprep.subr.mxu0 0.0
        %2436 = vmatpush1.msra.mxu0 0.0
        %2437 = vmatprep.subr.mxu0 0.0
        %2438 = vmatpush1.msra.mxu0 0.0
        %2439 = vmatprep.subr.mxu0 0.0
        %2440 = vmatpush1.msra.mxu0 0.0
        %2441 = vmatprep.subr.mxu0 0.0
        %2442 = vmatpush1.msra.mxu0 0.0
        %2443 = vmatprep.subr.mxu0 0.0
        %2444 = vmatpush1.msra.mxu0 0.0
        %2445 = vmatprep.subr.mxu0 0.0
        %v2446 = vand.u32 %v2105, 4294901760
        %v2447 = vsub.f32 %v2105, %v2446
        %v2448 = vand.u32 %v2447, 4294901760
        %2449 = vmatpush1.msra.mxu0 %v2448
        %2450 = vmatprep.subr.mxu0 0.0
        %2451 = vmatpush2.msra.mxu0 0.0
        %2452 = vmatprep.subr.mxu0 0.0
        %2453 = vmatpush2.msra.mxu0 0.0
        %2454 = vmatprep.subr.mxu0 0.0
        %2455 = vmatpush2.msra.mxu0 0.0
        %2456 = vmatprep.subr.mxu0 0.0
        %2457 = vmatpush2.msra.mxu0 0.0
        %2458 = vmatprep.subr.mxu0 0.0
        %2459 = vmatpush2.msra.mxu0 0.0
        %2460 = vmatprep.subr.mxu0 0.0
        %2461 = vmatpush2.msra.mxu0 0.0
        %2462 = vmatprep.subr.mxu0 0.0
        %2463 = vmatpush2.msra.mxu0 0.0
        %2464 = vmatprep.subr.mxu0 0.0
        %2465 = vmatpush2.msra.mxu0 0.0
        %2466 = vmatprep.subr.mxu0 0.0
        %2467 = vmatpush2.msra.mxu0 0.0
        %2468 = vmatprep.subr.mxu0 0.0
        %2469 = vmatpush2.msra.mxu0 0.0
        %2470 = vmatprep.subr.mxu0 0.0
        %2471 = vmatpush2.msra.mxu0 0.0
        %2472 = vmatprep.subr.mxu0 0.0
        %2473 = vmatpush2.msra.mxu0 0.0
        %2474 = vmatprep.subr.mxu0 0.0
        %2475 = vmatpush2.msra.mxu0 0.0
        %2476 = vmatprep.subr.mxu0 0.0
        %2477 = vmatpush2.msra.mxu0 0.0
        %2478 = vmatprep.subr.mxu0 0.0
        %2479 = vmatpush2.msra.mxu0 0.0
        %2480 = vmatprep.subr.mxu0 0.0
        %2481 = vmatpush2.msra.mxu0 0.0
        %2482 = vmatprep.mubr.f32.mxu0 0.0
        %v2483 = vand.u32 %v2113, 4294901760
        %2484 = vmatmul.mubr.f32.gmra.mxu0 %v2483
        %v2485 = vpop.f32.mrf.mxu0
        %v2486 = vadd.f32 %v2412, %v2485
        %v2487 = vpop.f32.mrf.mxu0
        %2488 = vdwg.mxu0
        %2489 = vmatprep.subr.mxu0 0.0
        %2490 = vmatpush1.msra.mxu0 0.0
        %2491 = vmatprep.subr.mxu0 0.0
        %2492 = vmatpush1.msra.mxu0 0.0
        %2493 = vmatprep.subr.mxu0 0.0
        %2494 = vmatpush1.msra.mxu0 0.0
        %2495 = vmatprep.subr.mxu0 0.0
        %2496 = vmatpush1.msra.mxu0 0.0
        %2497 = vmatprep.subr.mxu0 0.0
        %2498 = vmatpush1.msra.mxu0 0.0
        %2499 = vmatprep.subr.mxu0 0.0
        %2500 = vmatpush1.msra.mxu0 0.0
        %2501 = vmatprep.subr.mxu0 0.0
        %2502 = vmatpush1.msra.mxu0 0.0
        %2503 = vmatprep.subr.mxu0 0.0
        %2504 = vmatpush1.msra.mxu0 0.0
        %2505 = vmatprep.subr.mxu0 0.0
        %2506 = vmatpush1.msra.mxu0 0.0
        %2507 = vmatprep.subr.mxu0 0.0
        %2508 = vmatpush1.msra.mxu0 0.0
        %2509 = vmatprep.subr.mxu0 0.0
        %2510 = vmatpush1.msra.mxu0 0.0
        %2511 = vmatprep.subr.mxu0 0.0
        %2512 = vmatpush1.msra.mxu0 0.0
        %2513 = vmatprep.subr.mxu0 0.0
        %2514 = vmatpush1.msra.mxu0 0.0
        %2515 = vmatprep.subr.mxu0 0.0
        %2516 = vmatpush1.msra.mxu0 0.0
        %2517 = vmatprep.subr.mxu0 0.0
        %2518 = vmatpush1.msra.mxu0 0.0
        %2519 = vmatprep.subr.mxu0 0.0
        %v2520 = vand.u32 %v2105, 4294901760
        %2521 = vmatpush1.msra.mxu0 %v2520
        %2522 = vmatprep.subr.mxu0 0.0
        %2523 = vmatpush2.msra.mxu0 0.0
        %2524 = vmatprep.subr.mxu0 0.0
        %2525 = vmatpush2.msra.mxu0 0.0
        %2526 = vmatprep.subr.mxu0 0.0
        %2527 = vmatpush2.msra.mxu0 0.0
        %2528 = vmatprep.subr.mxu0 0.0
        %2529 = vmatpush2.msra.mxu0 0.0
        %2530 = vmatprep.subr.mxu0 0.0
        %2531 = vmatpush2.msra.mxu0 0.0
        %2532 = vmatprep.subr.mxu0 0.0
        %2533 = vmatpush2.msra.mxu0 0.0
        %2534 = vmatprep.subr.mxu0 0.0
        %2535 = vmatpush2.msra.mxu0 0.0
        %2536 = vmatprep.subr.mxu0 0.0
        %2537 = vmatpush2.msra.mxu0 0.0
        %2538 = vmatprep.subr.mxu0 0.0
        %2539 = vmatpush2.msra.mxu0 0.0
        %2540 = vmatprep.subr.mxu0 0.0
        %2541 = vmatpush2.msra.mxu0 0.0
        %2542 = vmatprep.subr.mxu0 0.0
        %2543 = vmatpush2.msra.mxu0 0.0
        %2544 = vmatprep.subr.mxu0 0.0
        %2545 = vmatpush2.msra.mxu0 0.0
        %2546 = vmatprep.subr.mxu0 0.0
        %2547 = vmatpush2.msra.mxu0 0.0
        %2548 = vmatprep.subr.mxu0 0.0
        %2549 = vmatpush2.msra.mxu0 0.0
        %2550 = vmatprep.subr.mxu0 0.0
        %2551 = vmatpush2.msra.mxu0 0.0
        %2552 = vmatprep.subr.mxu0 0.0
        %2553 = vmatpush2.msra.mxu0 0.0
        %2554 = vmatprep.mubr.f32.mxu0 0.0
        %v2555 = vand.u32 %v2113, 4294901760
        %2556 = vmatmul.mubr.f32.gmra.mxu0 %v2555
        %v2557 = vpop.f32.mrf.mxu0
        %v2558 = vadd.f32 %v2486, %v2557
        %v2559 = vpop.f32.mrf.mxu0
        %2560 = vdwg.mxu0
        %v2561 = vadd.f32 %v1604, %v2558
        %2562 = vst.msk [vmem:[#allocation2 + $0x8] sm:$0xff] %vm147, %v2561
        %v2563 = vld [vmem:[%s1 + $0x80] sm:$0xff]
        %v2564 = vld [vmem:[%s1 + $0x88] sm:$0xff]
        %v2565 = vld [vmem:[%s1 + $0x90] sm:$0xff]
        %v2566 = vld [vmem:[%s1 + $0x98] sm:$0x1]
        %v2567 = vld [vmem:[#allocation2 + $0x7] sm:$0xff]
        %v2568 = vld [vmem:[#allocation2 + $0x8] sm:$0xff]
        %v2569 = vld [vmem:[#allocation2 + $0x9] sm:$0xff]
        %2571 = vrot.lane.b32.xlu0 %v2568, 8
        %v2572 = vpop.permute.xlu0 %2571
        %2575 = vrot.lane.b32.xlu0 %v2569, 16
        %v2576 = vpop.permute.xlu0 %2575
        %v2578 = vsel %vm147, %v2567, %v2572
        %v2579 = vsel %vm165, %v2578, %v2576
        %v2580 = vlaneseq
        %v2581 = vshrl.u32 %v2580, 7
        %v2582 = vsub.s32 0, %v2581
        %v2583 = vrot.slane %v2566, %v2582
        %v2585 = vsel %vm171, %v2579, 0
        %2587 = vmatprep.subr.mxu0 0.0
        %2588 = vmatpush1.msra.mxu0 0.0
        %2589 = vmatprep.subr.mxu0 0.0
        %2590 = vmatpush1.msra.mxu0 0.0
        %2591 = vmatprep.subr.mxu0 0.0
        %2592 = vmatpush1.msra.mxu0 0.0
        %2593 = vmatprep.subr.mxu0 0.0
        %2594 = vmatpush1.msra.mxu0 0.0
        %2595 = vmatprep.subr.mxu0 0.0
        %2596 = vmatpush1.msra.mxu0 0.0
        %2597 = vmatprep.subr.mxu0 0.0
        %2598 = vmatpush1.msra.mxu0 0.0
        %2599 = vmatprep.subr.mxu0 0.0
        %2600 = vmatpush1.msra.mxu0 0.0
        %2601 = vmatprep.subr.mxu0 0.0
        %2602 = vmatpush1.msra.mxu0 0.0
        %2603 = vmatprep.subr.mxu0 0.0
        %2604 = vmatpush1.msra.mxu0 0.0
        %2605 = vmatprep.subr.mxu0 0.0
        %2606 = vmatpush1.msra.mxu0 0.0
        %2607 = vmatprep.subr.mxu0 0.0
        %2608 = vmatpush1.msra.mxu0 0.0
        %2609 = vmatprep.subr.mxu0 0.0
        %2610 = vmatpush1.msra.mxu0 0.0
        %2611 = vmatprep.subr.mxu0 0.0
        %2612 = vmatpush1.msra.mxu0 0.0
        %2613 = vmatprep.subr.mxu0 0.0
        %v2614 = vand.u32 %v2565, 4294901760
        %2615 = vmatpush1.msra.mxu0 %v2614
        %2616 = vmatprep.subr.mxu0 0.0
        %v2617 = vand.u32 %v2564, 4294901760
        %2618 = vmatpush1.msra.mxu0 %v2617
        %2619 = vmatprep.subr.mxu0 0.0
        %v2620 = vand.u32 %v2563, 4294901760
        %2621 = vmatpush1.msra.mxu0 %v2620
        %2622 = vmatprep.subr.mxu0 0.0
        %2623 = vmatpush2.msra.mxu0 0.0
        %2624 = vmatprep.subr.mxu0 0.0
        %2625 = vmatpush2.msra.mxu0 0.0
        %2626 = vmatprep.subr.mxu0 0.0
        %2627 = vmatpush2.msra.mxu0 0.0
        %2628 = vmatprep.subr.mxu0 0.0
        %2629 = vmatpush2.msra.mxu0 0.0
        %2630 = vmatprep.subr.mxu0 0.0
        %2631 = vmatpush2.msra.mxu0 0.0
        %2632 = vmatprep.subr.mxu0 0.0
        %2633 = vmatpush2.msra.mxu0 0.0
        %2634 = vmatprep.subr.mxu0 0.0
        %2635 = vmatpush2.msra.mxu0 0.0
        %2636 = vmatprep.subr.mxu0 0.0
        %2637 = vmatpush2.msra.mxu0 0.0
        %2638 = vmatprep.subr.mxu0 0.0
        %2639 = vmatpush2.msra.mxu0 0.0
        %2640 = vmatprep.subr.mxu0 0.0
        %2641 = vmatpush2.msra.mxu0 0.0
        %2642 = vmatprep.subr.mxu0 0.0
        %2643 = vmatpush2.msra.mxu0 0.0
        %2644 = vmatprep.subr.mxu0 0.0
        %2645 = vmatpush2.msra.mxu0 0.0
        %2646 = vmatprep.subr.mxu0 0.0
        %2647 = vmatpush2.msra.mxu0 0.0
        %2648 = vmatprep.subr.mxu0 0.0
        %2649 = vmatpush2.msra.mxu0 0.0
        %2650 = vmatprep.subr.mxu0 0.0
        %2651 = vmatpush2.msra.mxu0 0.0
        %2652 = vmatprep.subr.mxu0 0.0
        %2653 = vmatpush2.msra.mxu0 0.0
        %2654 = vmatprep.mubr.f32.mxu0 0.0
        %v2655 = vand.u32 %v2585, 4294901760
        %v2656 = vsub.f32 %v2585, %v2655
        %v2657 = vand.u32 %v2656, 4294901760
        %v2658 = vsub.f32 %v2656, %v2657
        %v2659 = vand.u32 %v2658, 4294901760
        %2660 = vmatmul.mubr.f32.gmra.mxu0 %v2659
        %v2661 = vpop.f32.mrf.mxu0
        %v2662 = vadd.f32 %v2583, %v2661
        %v2663 = vpop.f32.mrf.mxu0
        %2664 = vdwg.mxu0
        %2665 = vmatprep.subr.mxu0 0.0
        %2666 = vmatpush1.msra.mxu0 0.0
        %2667 = vmatprep.subr.mxu0 0.0
        %2668 = vmatpush1.msra.mxu0 0.0
        %2669 = vmatprep.subr.mxu0 0.0
        %2670 = vmatpush1.msra.mxu0 0.0
        %2671 = vmatprep.subr.mxu0 0.0
        %2672 = vmatpush1.msra.mxu0 0.0
        %2673 = vmatprep.subr.mxu0 0.0
        %2674 = vmatpush1.msra.mxu0 0.0
        %2675 = vmatprep.subr.mxu0 0.0
        %2676 = vmatpush1.msra.mxu0 0.0
        %2677 = vmatprep.subr.mxu0 0.0
        %2678 = vmatpush1.msra.mxu0 0.0
        %2679 = vmatprep.subr.mxu0 0.0
        %2680 = vmatpush1.msra.mxu0 0.0
        %2681 = vmatprep.subr.mxu0 0.0
        %2682 = vmatpush1.msra.mxu0 0.0
        %2683 = vmatprep.subr.mxu0 0.0
        %2684 = vmatpush1.msra.mxu0 0.0
        %2685 = vmatprep.subr.mxu0 0.0
        %2686 = vmatpush1.msra.mxu0 0.0
        %2687 = vmatprep.subr.mxu0 0.0
        %2688 = vmatpush1.msra.mxu0 0.0
        %2689 = vmatprep.subr.mxu0 0.0
        %2690 = vmatpush1.msra.mxu0 0.0
        %2691 = vmatprep.subr.mxu0 0.0
        %v2692 = vand.u32 %v2565, 4294901760
        %v2693 = vsub.f32 %v2565, %v2692
        %v2694 = vand.u32 %v2693, 4294901760
        %v2695 = vsub.f32 %v2693, %v2694
        %v2696 = vand.u32 %v2695, 4294901760
        %2697 = vmatpush1.msra.mxu0 %v2696
        %2698 = vmatprep.subr.mxu0 0.0
        %v2699 = vand.u32 %v2564, 4294901760
        %v2700 = vsub.f32 %v2564, %v2699
        %v2701 = vand.u32 %v2700, 4294901760
        %v2702 = vsub.f32 %v2700, %v2701
        %v2703 = vand.u32 %v2702, 4294901760
        %2704 = vmatpush1.msra.mxu0 %v2703
        %2705 = vmatprep.subr.mxu0 0.0
        %v2706 = vand.u32 %v2563, 4294901760
        %v2707 = vsub.f32 %v2563, %v2706
        %v2708 = vand.u32 %v2707, 4294901760
        %v2709 = vsub.f32 %v2707, %v2708
        %v2710 = vand.u32 %v2709, 4294901760
        %2711 = vmatpush1.msra.mxu0 %v2710
        %2712 = vmatprep.subr.mxu0 0.0
        %2713 = vmatpush2.msra.mxu0 0.0
        %2714 = vmatprep.subr.mxu0 0.0
        %2715 = vmatpush2.msra.mxu0 0.0
        %2716 = vmatprep.subr.mxu0 0.0
        %2717 = vmatpush2.msra.mxu0 0.0
        %2718 = vmatprep.subr.mxu0 0.0
        %2719 = vmatpush2.msra.mxu0 0.0
        %2720 = vmatprep.subr.mxu0 0.0
        %2721 = vmatpush2.msra.mxu0 0.0
        %2722 = vmatprep.subr.mxu0 0.0
        %2723 = vmatpush2.msra.mxu0 0.0
        %2724 = vmatprep.subr.mxu0 0.0
        %2725 = vmatpush2.msra.mxu0 0.0
        %2726 = vmatprep.subr.mxu0 0.0
        %2727 = vmatpush2.msra.mxu0 0.0
        %2728 = vmatprep.subr.mxu0 0.0
        %2729 = vmatpush2.msra.mxu0 0.0
        %2730 = vmatprep.subr.mxu0 0.0
        %2731 = vmatpush2.msra.mxu0 0.0
        %2732 = vmatprep.subr.mxu0 0.0
        %2733 = vmatpush2.msra.mxu0 0.0
        %2734 = vmatprep.subr.mxu0 0.0
        %2735 = vmatpush2.msra.mxu0 0.0
        %2736 = vmatprep.subr.mxu0 0.0
        %2737 = vmatpush2.msra.mxu0 0.0
        %2738 = vmatprep.subr.mxu0 0.0
        %2739 = vmatpush2.msra.mxu0 0.0
        %2740 = vmatprep.subr.mxu0 0.0
        %2741 = vmatpush2.msra.mxu0 0.0
        %2742 = vmatprep.subr.mxu0 0.0
        %2743 = vmatpush2.msra.mxu0 0.0
        %2744 = vmatprep.mubr.f32.mxu0 0.0
        %v2745 = vand.u32 %v2585, 4294901760
        %2746 = vmatmul.mubr.f32.gmra.mxu0 %v2745
        %v2747 = vpop.f32.mrf.mxu0
        %v2748 = vadd.f32 %v2662, %v2747
        %v2749 = vpop.f32.mrf.mxu0
        %2750 = vdwg.mxu0
        %2751 = vmatprep.subr.mxu0 0.0
        %2752 = vmatpush1.msra.mxu0 0.0
        %2753 = vmatprep.subr.mxu0 0.0
        %2754 = vmatpush1.msra.mxu0 0.0
        %2755 = vmatprep.subr.mxu0 0.0
        %2756 = vmatpush1.msra.mxu0 0.0
        %2757 = vmatprep.subr.mxu0 0.0
        %2758 = vmatpush1.msra.mxu0 0.0
        %2759 = vmatprep.subr.mxu0 0.0
        %2760 = vmatpush1.msra.mxu0 0.0
        %2761 = vmatprep.subr.mxu0 0.0
        %2762 = vmatpush1.msra.mxu0 0.0
        %2763 = vmatprep.subr.mxu0 0.0
        %2764 = vmatpush1.msra.mxu0 0.0
        %2765 = vmatprep.subr.mxu0 0.0
        %2766 = vmatpush1.msra.mxu0 0.0
        %2767 = vmatprep.subr.mxu0 0.0
        %2768 = vmatpush1.msra.mxu0 0.0
        %2769 = vmatprep.subr.mxu0 0.0
        %2770 = vmatpush1.msra.mxu0 0.0
        %2771 = vmatprep.subr.mxu0 0.0
        %2772 = vmatpush1.msra.mxu0 0.0
        %2773 = vmatprep.subr.mxu0 0.0
        %2774 = vmatpush1.msra.mxu0 0.0
        %2775 = vmatprep.subr.mxu0 0.0
        %2776 = vmatpush1.msra.mxu0 0.0
        %2777 = vmatprep.subr.mxu0 0.0
        %v2778 = vand.u32 %v2565, 4294901760
        %v2779 = vsub.f32 %v2565, %v2778
        %2780 = vmatpush1.msra.mxu0 %v2779
        %2781 = vmatprep.subr.mxu0 0.0
        %v2782 = vand.u32 %v2564, 4294901760
        %v2783 = vsub.f32 %v2564, %v2782
        %2784 = vmatpush1.msra.mxu0 %v2783
        %2785 = vmatprep.subr.mxu0 0.0
        %v2786 = vand.u32 %v2563, 4294901760
        %v2787 = vsub.f32 %v2563, %v2786
        %2788 = vmatpush1.msra.mxu0 %v2787
        %2789 = vmatprep.subr.mxu0 0.0
        %2790 = vmatpush2.msra.mxu0 0.0
        %2791 = vmatprep.subr.mxu0 0.0
        %2792 = vmatpush2.msra.mxu0 0.0
        %2793 = vmatprep.subr.mxu0 0.0
        %2794 = vmatpush2.msra.mxu0 0.0
        %2795 = vmatprep.subr.mxu0 0.0
        %2796 = vmatpush2.msra.mxu0 0.0
        %2797 = vmatprep.subr.mxu0 0.0
        %2798 = vmatpush2.msra.mxu0 0.0
        %2799 = vmatprep.subr.mxu0 0.0
        %2800 = vmatpush2.msra.mxu0 0.0
        %2801 = vmatprep.subr.mxu0 0.0
        %2802 = vmatpush2.msra.mxu0 0.0
        %2803 = vmatprep.subr.mxu0 0.0
        %2804 = vmatpush2.msra.mxu0 0.0
        %2805 = vmatprep.subr.mxu0 0.0
        %2806 = vmatpush2.msra.mxu0 0.0
        %2807 = vmatprep.subr.mxu0 0.0
        %2808 = vmatpush2.msra.mxu0 0.0
        %2809 = vmatprep.subr.mxu0 0.0
        %2810 = vmatpush2.msra.mxu0 0.0
        %2811 = vmatprep.subr.mxu0 0.0
        %2812 = vmatpush2.msra.mxu0 0.0
        %2813 = vmatprep.subr.mxu0 0.0
        %2814 = vmatpush2.msra.mxu0 0.0
        %2815 = vmatprep.subr.mxu0 0.0
        %2816 = vmatpush2.msra.mxu0 0.0
        %2817 = vmatprep.subr.mxu0 0.0
        %2818 = vmatpush2.msra.mxu0 0.0
        %2819 = vmatprep.subr.mxu0 0.0
        %2820 = vmatpush2.msra.mxu0 0.0
        %2821 = vmatprep.mubr.f32.mxu0 0.0
        %v2822 = vand.u32 %v2585, 4294901760
        %v2823 = vsub.f32 %v2585, %v2822
        %2824 = vmatmul.mubr.f32.gmra.mxu0 %v2823
        %v2825 = vpop.f32.mrf.mxu0
        %v2826 = vadd.f32 %v2748, %v2825
        %v2827 = vpop.f32.mrf.mxu0
        %2828 = vdwg.mxu0
        %2829 = vmatprep.subr.mxu0 0.0
        %2830 = vmatpush1.msra.mxu0 0.0
        %2831 = vmatprep.subr.mxu0 0.0
        %2832 = vmatpush1.msra.mxu0 0.0
        %2833 = vmatprep.subr.mxu0 0.0
        %2834 = vmatpush1.msra.mxu0 0.0
        %2835 = vmatprep.subr.mxu0 0.0
        %2836 = vmatpush1.msra.mxu0 0.0
        %2837 = vmatprep.subr.mxu0 0.0
        %2838 = vmatpush1.msra.mxu0 0.0
        %2839 = vmatprep.subr.mxu0 0.0
        %2840 = vmatpush1.msra.mxu0 0.0
        %2841 = vmatprep.subr.mxu0 0.0
        %2842 = vmatpush1.msra.mxu0 0.0
        %2843 = vmatprep.subr.mxu0 0.0
        %2844 = vmatpush1.msra.mxu0 0.0
        %2845 = vmatprep.subr.mxu0 0.0
        %2846 = vmatpush1.msra.mxu0 0.0
        %2847 = vmatprep.subr.mxu0 0.0
        %2848 = vmatpush1.msra.mxu0 0.0
        %2849 = vmatprep.subr.mxu0 0.0
        %2850 = vmatpush1.msra.mxu0 0.0
        %2851 = vmatprep.subr.mxu0 0.0
        %2852 = vmatpush1.msra.mxu0 0.0
        %2853 = vmatprep.subr.mxu0 0.0
        %2854 = vmatpush1.msra.mxu0 0.0
        %2855 = vmatprep.subr.mxu0 0.0
        %v2856 = vand.u32 %v2565, 4294901760
        %2857 = vmatpush1.msra.mxu0 %v2856
        %2858 = vmatprep.subr.mxu0 0.0
        %v2859 = vand.u32 %v2564, 4294901760
        %2860 = vmatpush1.msra.mxu0 %v2859
        %2861 = vmatprep.subr.mxu0 0.0
        %v2862 = vand.u32 %v2563, 4294901760
        %2863 = vmatpush1.msra.mxu0 %v2862
        %2864 = vmatprep.subr.mxu0 0.0
        %2865 = vmatpush2.msra.mxu0 0.0
        %2866 = vmatprep.subr.mxu0 0.0
        %2867 = vmatpush2.msra.mxu0 0.0
        %2868 = vmatprep.subr.mxu0 0.0
        %2869 = vmatpush2.msra.mxu0 0.0
        %2870 = vmatprep.subr.mxu0 0.0
        %2871 = vmatpush2.msra.mxu0 0.0
        %2872 = vmatprep.subr.mxu0 0.0
        %2873 = vmatpush2.msra.mxu0 0.0
        %2874 = vmatprep.subr.mxu0 0.0
        %2875 = vmatpush2.msra.mxu0 0.0
        %2876 = vmatprep.subr.mxu0 0.0
        %2877 = vmatpush2.msra.mxu0 0.0
        %2878 = vmatprep.subr.mxu0 0.0
        %2879 = vmatpush2.msra.mxu0 0.0
        %2880 = vmatprep.subr.mxu0 0.0
        %2881 = vmatpush2.msra.mxu0 0.0
        %2882 = vmatprep.subr.mxu0 0.0
        %2883 = vmatpush2.msra.mxu0 0.0
        %2884 = vmatprep.subr.mxu0 0.0
        %2885 = vmatpush2.msra.mxu0 0.0
        %2886 = vmatprep.subr.mxu0 0.0
        %2887 = vmatpush2.msra.mxu0 0.0
        %2888 = vmatprep.subr.mxu0 0.0
        %2889 = vmatpush2.msra.mxu0 0.0
        %2890 = vmatprep.subr.mxu0 0.0
        %2891 = vmatpush2.msra.mxu0 0.0
        %2892 = vmatprep.subr.mxu0 0.0
        %2893 = vmatpush2.msra.mxu0 0.0
        %2894 = vmatprep.subr.mxu0 0.0
        %2895 = vmatpush2.msra.mxu0 0.0
        %2896 = vmatprep.mubr.f32.mxu0 0.0
        %v2897 = vand.u32 %v2585, 4294901760
        %v2898 = vsub.f32 %v2585, %v2897
        %v2899 = vand.u32 %v2898, 4294901760
        %2900 = vmatmul.mubr.f32.gmra.mxu0 %v2899
        %v2901 = vpop.f32.mrf.mxu0
        %v2902 = vadd.f32 %v2826, %v2901
        %v2903 = vpop.f32.mrf.mxu0
        %2904 = vdwg.mxu0
        %2905 = vmatprep.subr.mxu0 0.0
        %2906 = vmatpush1.msra.mxu0 0.0
        %2907 = vmatprep.subr.mxu0 0.0
        %2908 = vmatpush1.msra.mxu0 0.0
        %2909 = vmatprep.subr.mxu0 0.0
        %2910 = vmatpush1.msra.mxu0 0.0
        %2911 = vmatprep.subr.mxu0 0.0
        %2912 = vmatpush1.msra.mxu0 0.0
        %2913 = vmatprep.subr.mxu0 0.0
        %2914 = vmatpush1.msra.mxu0 0.0
        %2915 = vmatprep.subr.mxu0 0.0
        %2916 = vmatpush1.msra.mxu0 0.0
        %2917 = vmatprep.subr.mxu0 0.0
        %2918 = vmatpush1.msra.mxu0 0.0
        %2919 = vmatprep.subr.mxu0 0.0
        %2920 = vmatpush1.msra.mxu0 0.0
        %2921 = vmatprep.subr.mxu0 0.0
        %2922 = vmatpush1.msra.mxu0 0.0
        %2923 = vmatprep.subr.mxu0 0.0
        %2924 = vmatpush1.msra.mxu0 0.0
        %2925 = vmatprep.subr.mxu0 0.0
        %2926 = vmatpush1.msra.mxu0 0.0
        %2927 = vmatprep.subr.mxu0 0.0
        %2928 = vmatpush1.msra.mxu0 0.0
        %2929 = vmatprep.subr.mxu0 0.0
        %2930 = vmatpush1.msra.mxu0 0.0
        %2931 = vmatprep.subr.mxu0 0.0
        %v2932 = vand.u32 %v2565, 4294901760
        %v2933 = vsub.f32 %v2565, %v2932
        %v2934 = vand.u32 %v2933, 4294901760
        %2935 = vmatpush1.msra.mxu0 %v2934
        %2936 = vmatprep.subr.mxu0 0.0
        %v2937 = vand.u32 %v2564, 4294901760
        %v2938 = vsub.f32 %v2564, %v2937
        %v2939 = vand.u32 %v2938, 4294901760
        %2940 = vmatpush1.msra.mxu0 %v2939
        %2941 = vmatprep.subr.mxu0 0.0
        %v2942 = vand.u32 %v2563, 4294901760
        %v2943 = vsub.f32 %v2563, %v2942
        %v2944 = vand.u32 %v2943, 4294901760
        %2945 = vmatpush1.msra.mxu0 %v2944
        %2946 = vmatprep.subr.mxu0 0.0
        %2947 = vmatpush2.msra.mxu0 0.0
        %2948 = vmatprep.subr.mxu0 0.0
        %2949 = vmatpush2.msra.mxu0 0.0
        %2950 = vmatprep.subr.mxu0 0.0
        %2951 = vmatpush2.msra.mxu0 0.0
        %2952 = vmatprep.subr.mxu0 0.0
        %2953 = vmatpush2.msra.mxu0 0.0
        %2954 = vmatprep.subr.mxu0 0.0
        %2955 = vmatpush2.msra.mxu0 0.0
        %2956 = vmatprep.subr.mxu0 0.0
        %2957 = vmatpush2.msra.mxu0 0.0
        %2958 = vmatprep.subr.mxu0 0.0
        %2959 = vmatpush2.msra.mxu0 0.0
        %2960 = vmatprep.subr.mxu0 0.0
        %2961 = vmatpush2.msra.mxu0 0.0
        %2962 = vmatprep.subr.mxu0 0.0
        %2963 = vmatpush2.msra.mxu0 0.0
        %2964 = vmatprep.subr.mxu0 0.0
        %2965 = vmatpush2.msra.mxu0 0.0
        %2966 = vmatprep.subr.mxu0 0.0
        %2967 = vmatpush2.msra.mxu0 0.0
        %2968 = vmatprep.subr.mxu0 0.0
        %2969 = vmatpush2.msra.mxu0 0.0
        %2970 = vmatprep.subr.mxu0 0.0
        %2971 = vmatpush2.msra.mxu0 0.0
        %2972 = vmatprep.subr.mxu0 0.0
        %2973 = vmatpush2.msra.mxu0 0.0
        %2974 = vmatprep.subr.mxu0 0.0
        %2975 = vmatpush2.msra.mxu0 0.0
        %2976 = vmatprep.subr.mxu0 0.0
        %2977 = vmatpush2.msra.mxu0 0.0
        %2978 = vmatprep.mubr.f32.mxu0 0.0
        %v2979 = vand.u32 %v2585, 4294901760
        %2980 = vmatmul.mubr.f32.gmra.mxu0 %v2979
        %v2981 = vpop.f32.mrf.mxu0
        %v2982 = vadd.f32 %v2902, %v2981
        %v2983 = vpop.f32.mrf.mxu0
        %2984 = vdwg.mxu0
        %2985 = vmatprep.subr.mxu0 0.0
        %2986 = vmatpush1.msra.mxu0 0.0
        %2987 = vmatprep.subr.mxu0 0.0
        %2988 = vmatpush1.msra.mxu0 0.0
        %2989 = vmatprep.subr.mxu0 0.0
        %2990 = vmatpush1.msra.mxu0 0.0
        %2991 = vmatprep.subr.mxu0 0.0
        %2992 = vmatpush1.msra.mxu0 0.0
        %2993 = vmatprep.subr.mxu0 0.0
        %2994 = vmatpush1.msra.mxu0 0.0
        %2995 = vmatprep.subr.mxu0 0.0
        %2996 = vmatpush1.msra.mxu0 0.0
        %2997 = vmatprep.subr.mxu0 0.0
        %2998 = vmatpush1.msra.mxu0 0.0
        %2999 = vmatprep.subr.mxu0 0.0
        %3000 = vmatpush1.msra.mxu0 0.0
        %3001 = vmatprep.subr.mxu0 0.0
        %3002 = vmatpush1.msra.mxu0 0.0
        %3003 = vmatprep.subr.mxu0 0.0
        %3004 = vmatpush1.msra.mxu0 0.0
        %3005 = vmatprep.subr.mxu0 0.0
        %3006 = vmatpush1.msra.mxu0 0.0
        %3007 = vmatprep.subr.mxu0 0.0
        %3008 = vmatpush1.msra.mxu0 0.0
        %3009 = vmatprep.subr.mxu0 0.0
        %3010 = vmatpush1.msra.mxu0 0.0
        %3011 = vmatprep.subr.mxu0 0.0
        %v3012 = vand.u32 %v2565, 4294901760
        %3013 = vmatpush1.msra.mxu0 %v3012
        %3014 = vmatprep.subr.mxu0 0.0
        %v3015 = vand.u32 %v2564, 4294901760
        %3016 = vmatpush1.msra.mxu0 %v3015
        %3017 = vmatprep.subr.mxu0 0.0
        %v3018 = vand.u32 %v2563, 4294901760
        %3019 = vmatpush1.msra.mxu0 %v3018
        %3020 = vmatprep.subr.mxu0 0.0
        %3021 = vmatpush2.msra.mxu0 0.0
        %3022 = vmatprep.subr.mxu0 0.0
        %3023 = vmatpush2.msra.mxu0 0.0
        %3024 = vmatprep.subr.mxu0 0.0
        %3025 = vmatpush2.msra.mxu0 0.0
        %3026 = vmatprep.subr.mxu0 0.0
        %3027 = vmatpush2.msra.mxu0 0.0
        %3028 = vmatprep.subr.mxu0 0.0
        %3029 = vmatpush2.msra.mxu0 0.0
        %3030 = vmatprep.subr.mxu0 0.0
        %3031 = vmatpush2.msra.mxu0 0.0
        %3032 = vmatprep.subr.mxu0 0.0
        %3033 = vmatpush2.msra.mxu0 0.0
        %3034 = vmatprep.subr.mxu0 0.0
        %3035 = vmatpush2.msra.mxu0 0.0
        %3036 = vmatprep.subr.mxu0 0.0
        %3037 = vmatpush2.msra.mxu0 0.0
        %3038 = vmatprep.subr.mxu0 0.0
        %3039 = vmatpush2.msra.mxu0 0.0
        %3040 = vmatprep.subr.mxu0 0.0
        %3041 = vmatpush2.msra.mxu0 0.0
        %3042 = vmatprep.subr.mxu0 0.0
        %3043 = vmatpush2.msra.mxu0 0.0
        %3044 = vmatprep.subr.mxu0 0.0
        %3045 = vmatpush2.msra.mxu0 0.0
        %3046 = vmatprep.subr.mxu0 0.0
        %3047 = vmatpush2.msra.mxu0 0.0
        %3048 = vmatprep.subr.mxu0 0.0
        %3049 = vmatpush2.msra.mxu0 0.0
        %3050 = vmatprep.subr.mxu0 0.0
        %3051 = vmatpush2.msra.mxu0 0.0
        %3052 = vmatprep.mubr.f32.mxu0 0.0
        %v3053 = vand.u32 %v2585, 4294901760
        %3054 = vmatmul.mubr.f32.gmra.mxu0 %v3053
        %v3055 = vpop.f32.mrf.mxu0
        %v3056 = vadd.f32 %v2982, %v3055
        %v3057 = vpop.f32.mrf.mxu0
        %3058 = vdwg.mxu0
        %v3059 = vmax.f32 %v3056, 0.0
        %3060 = vst.msk [vmem:[#allocation2 + $0x8] sm:$0xff] %vm165, %v3059
        %v3061 = vld [vmem:[%s1 + $0xa0] sm:$0xff]
        %v3062 = vld [vmem:[%s1 + $0xa8] sm:$0xff]
        %v3063 = vld [vmem:[%s1 + $0xb0] sm:$0xff]
        %v3064 = vld [vmem:[%s1 + $0xb8] sm:$0xff]
        %v3065 = vld [vmem:[%s1 + $0xc0] sm:$0xff]
        %v3066 = vld [vmem:[%s1 + $0xc8] sm:$0xff]
        %v3067 = vld [vmem:[%s1 + $0xd0] sm:$0x1]
        %v3068 = vld [vmem:[#allocation2 + $0x6] sm:$0xff]
        %v3069 = vld [vmem:[#allocation2 + $0x8] sm:$0xff]
        %v3070 = vld [vmem:[#allocation2 + $0xa] sm:$0xff]
        %3072 = vrot.lane.b32.xlu0 %v3069, 16
        %v3073 = vpop.permute.xlu0 %3072
        %3076 = vrot.lane.b32.xlu0 %v3070, 32
        %v3077 = vpop.permute.xlu0 %3076
        %v3079 = vsel %vm165, %v3068, %v3073
        %v3080 = vsel %vm139, %v3079, %v3077
        %v3081 = vlaneseq
        %v3082 = vshrl.u32 %v3081, 7
        %v3083 = vsub.s32 0, %v3082
        %v3084 = vrot.slane %v3067, %v3083
        %vm3085 = vcmask 392192
        %v3087 = vsel %vm3085, %v3080, 0
        %3089 = vmatprep.subr.mxu0 0.0
        %3090 = vmatpush1.msra.mxu0 0.0
        %3091 = vmatprep.subr.mxu0 0.0
        %3092 = vmatpush1.msra.mxu0 0.0
        %3093 = vmatprep.subr.mxu0 0.0
        %3094 = vmatpush1.msra.mxu0 0.0
        %3095 = vmatprep.subr.mxu0 0.0
        %3096 = vmatpush1.msra.mxu0 0.0
        %3097 = vmatprep.subr.mxu0 0.0
        %3098 = vmatpush1.msra.mxu0 0.0
        %3099 = vmatprep.subr.mxu0 0.0
        %3100 = vmatpush1.msra.mxu0 0.0
        %3101 = vmatprep.subr.mxu0 0.0
        %3102 = vmatpush1.msra.mxu0 0.0
        %3103 = vmatprep.subr.mxu0 0.0
        %3104 = vmatpush1.msra.mxu0 0.0
        %3105 = vmatprep.subr.mxu0 0.0
        %3106 = vmatpush1.msra.mxu0 0.0
        %3107 = vmatprep.subr.mxu0 0.0
        %3108 = vmatpush1.msra.mxu0 0.0
        %3109 = vmatprep.subr.mxu0 0.0
        %v3110 = vand.u32 %v3066, 4294901760
        %3111 = vmatpush1.msra.mxu0 %v3110
        %3112 = vmatprep.subr.mxu0 0.0
        %v3113 = vand.u32 %v3065, 4294901760
        %3114 = vmatpush1.msra.mxu0 %v3113
        %3115 = vmatprep.subr.mxu0 0.0
        %v3116 = vand.u32 %v3064, 4294901760
        %3117 = vmatpush1.msra.mxu0 %v3116
        %3118 = vmatprep.subr.mxu0 0.0
        %v3119 = vand.u32 %v3063, 4294901760
        %3120 = vmatpush1.msra.mxu0 %v3119
        %3121 = vmatprep.subr.mxu0 0.0
        %v3122 = vand.u32 %v3062, 4294901760
        %3123 = vmatpush1.msra.mxu0 %v3122
        %3124 = vmatprep.subr.mxu0 0.0
        %v3125 = vand.u32 %v3061, 4294901760
        %3126 = vmatpush1.msra.mxu0 %v3125
        %3127 = vmatprep.subr.mxu0 0.0
        %3128 = vmatpush2.msra.mxu0 0.0
        %3129 = vmatprep.subr.mxu0 0.0
        %3130 = vmatpush2.msra.mxu0 0.0
        %3131 = vmatprep.subr.mxu0 0.0
        %3132 = vmatpush2.msra.mxu0 0.0
        %3133 = vmatprep.subr.mxu0 0.0
        %3134 = vmatpush2.msra.mxu0 0.0
        %3135 = vmatprep.subr.mxu0 0.0
        %3136 = vmatpush2.msra.mxu0 0.0
        %3137 = vmatprep.subr.mxu0 0.0
        %3138 = vmatpush2.msra.mxu0 0.0
        %3139 = vmatprep.subr.mxu0 0.0
        %3140 = vmatpush2.msra.mxu0 0.0
        %3141 = vmatprep.subr.mxu0 0.0
        %3142 = vmatpush2.msra.mxu0 0.0
        %3143 = vmatprep.subr.mxu0 0.0
        %3144 = vmatpush2.msra.mxu0 0.0
        %3145 = vmatprep.subr.mxu0 0.0
        %3146 = vmatpush2.msra.mxu0 0.0
        %3147 = vmatprep.subr.mxu0 0.0
        %3148 = vmatpush2.msra.mxu0 0.0
        %3149 = vmatprep.subr.mxu0 0.0
        %3150 = vmatpush2.msra.mxu0 0.0
        %3151 = vmatprep.subr.mxu0 0.0
        %3152 = vmatpush2.msra.mxu0 0.0
        %3153 = vmatprep.subr.mxu0 0.0
        %3154 = vmatpush2.msra.mxu0 0.0
        %3155 = vmatprep.subr.mxu0 0.0
        %3156 = vmatpush2.msra.mxu0 0.0
        %3157 = vmatprep.subr.mxu0 0.0
        %3158 = vmatpush2.msra.mxu0 0.0
        %3159 = vmatprep.mubr.f32.mxu0 0.0
        %v3160 = vand.u32 %v3087, 4294901760
        %v3161 = vsub.f32 %v3087, %v3160
        %v3162 = vand.u32 %v3161, 4294901760
        %v3163 = vsub.f32 %v3161, %v3162
        %v3164 = vand.u32 %v3163, 4294901760
        %3165 = vmatmul.mubr.f32.gmra.mxu0 %v3164
        %v3166 = vpop.f32.mrf.mxu0
        %v3167 = vadd.f32 %v3084, %v3166
        %v3168 = vpop.f32.mrf.mxu0
        %3169 = vdwg.mxu0
        %3170 = vmatprep.subr.mxu0 0.0
        %3171 = vmatpush1.msra.mxu0 0.0
        %3172 = vmatprep.subr.mxu0 0.0
        %3173 = vmatpush1.msra.mxu0 0.0
        %3174 = vmatprep.subr.mxu0 0.0
        %3175 = vmatpush1.msra.mxu0 0.0
        %3176 = vmatprep.subr.mxu0 0.0
        %3177 = vmatpush1.msra.mxu0 0.0
        %3178 = vmatprep.subr.mxu0 0.0
        %3179 = vmatpush1.msra.mxu0 0.0
        %3180 = vmatprep.subr.mxu0 0.0
        %3181 = vmatpush1.msra.mxu0 0.0
        %3182 = vmatprep.subr.mxu0 0.0
        %3183 = vmatpush1.msra.mxu0 0.0
        %3184 = vmatprep.subr.mxu0 0.0
        %3185 = vmatpush1.msra.mxu0 0.0
        %3186 = vmatprep.subr.mxu0 0.0
        %3187 = vmatpush1.msra.mxu0 0.0
        %3188 = vmatprep.subr.mxu0 0.0
        %3189 = vmatpush1.msra.mxu0 0.0
        %3190 = vmatprep.subr.mxu0 0.0
        %v3191 = vand.u32 %v3066, 4294901760
        %v3192 = vsub.f32 %v3066, %v3191
        %v3193 = vand.u32 %v3192, 4294901760
        %v3194 = vsub.f32 %v3192, %v3193
        %v3195 = vand.u32 %v3194, 4294901760
        %3196 = vmatpush1.msra.mxu0 %v3195
        %3197 = vmatprep.subr.mxu0 0.0
        %v3198 = vand.u32 %v3065, 4294901760
        %v3199 = vsub.f32 %v3065, %v3198
        %v3200 = vand.u32 %v3199, 4294901760
        %v3201 = vsub.f32 %v3199, %v3200
        %v3202 = vand.u32 %v3201, 4294901760
        %3203 = vmatpush1.msra.mxu0 %v3202
        %3204 = vmatprep.subr.mxu0 0.0
        %v3205 = vand.u32 %v3064, 4294901760
        %v3206 = vsub.f32 %v3064, %v3205
        %v3207 = vand.u32 %v3206, 4294901760
        %v3208 = vsub.f32 %v3206, %v3207
        %v3209 = vand.u32 %v3208, 4294901760
        %3210 = vmatpush1.msra.mxu0 %v3209
        %3211 = vmatprep.subr.mxu0 0.0
        %v3212 = vand.u32 %v3063, 4294901760
        %v3213 = vsub.f32 %v3063, %v3212
        %v3214 = vand.u32 %v3213, 4294901760
        %v3215 = vsub.f32 %v3213, %v3214
        %v3216 = vand.u32 %v3215, 4294901760
        %3217 = vmatpush1.msra.mxu0 %v3216
        %3218 = vmatprep.subr.mxu0 0.0
        %v3219 = vand.u32 %v3062, 4294901760
        %v3220 = vsub.f32 %v3062, %v3219
        %v3221 = vand.u32 %v3220, 4294901760
        %v3222 = vsub.f32 %v3220, %v3221
        %v3223 = vand.u32 %v3222, 4294901760
        %3224 = vmatpush1.msra.mxu0 %v3223
        %3225 = vmatprep.subr.mxu0 0.0
        %v3226 = vand.u32 %v3061, 4294901760
        %v3227 = vsub.f32 %v3061, %v3226
        %v3228 = vand.u32 %v3227, 4294901760
        %v3229 = vsub.f32 %v3227, %v3228
        %v3230 = vand.u32 %v3229, 4294901760
        %3231 = vmatpush1.msra.mxu0 %v3230
        %3232 = vmatprep.subr.mxu0 0.0
        %3233 = vmatpush2.msra.mxu0 0.0
        %3234 = vmatprep.subr.mxu0 0.0
        %3235 = vmatpush2.msra.mxu0 0.0
        %3236 = vmatprep.subr.mxu0 0.0
        %3237 = vmatpush2.msra.mxu0 0.0
        %3238 = vmatprep.subr.mxu0 0.0
        %3239 = vmatpush2.msra.mxu0 0.0
        %3240 = vmatprep.subr.mxu0 0.0
        %3241 = vmatpush2.msra.mxu0 0.0
        %3242 = vmatprep.subr.mxu0 0.0
        %3243 = vmatpush2.msra.mxu0 0.0
        %3244 = vmatprep.subr.mxu0 0.0
        %3245 = vmatpush2.msra.mxu0 0.0
        %3246 = vmatprep.subr.mxu0 0.0
        %3247 = vmatpush2.msra.mxu0 0.0
        %3248 = vmatprep.subr.mxu0 0.0
        %3249 = vmatpush2.msra.mxu0 0.0
        %3250 = vmatprep.subr.mxu0 0.0
        %3251 = vmatpush2.msra.mxu0 0.0
        %3252 = vmatprep.subr.mxu0 0.0
        %3253 = vmatpush2.msra.mxu0 0.0
        %3254 = vmatprep.subr.mxu0 0.0
        %3255 = vmatpush2.msra.mxu0 0.0
        %3256 = vmatprep.subr.mxu0 0.0
        %3257 = vmatpush2.msra.mxu0 0.0
        %3258 = vmatprep.subr.mxu0 0.0
        %3259 = vmatpush2.msra.mxu0 0.0
        %3260 = vmatprep.subr.mxu0 0.0
        %3261 = vmatpush2.msra.mxu0 0.0
        %3262 = vmatprep.subr.mxu0 0.0
        %3263 = vmatpush2.msra.mxu0 0.0
        %3264 = vmatprep.mubr.f32.mxu0 0.0
        %v3265 = vand.u32 %v3087, 4294901760
        %3266 = vmatmul.mubr.f32.gmra.mxu0 %v3265
        %v3267 = vpop.f32.mrf.mxu0
        %v3268 = vadd.f32 %v3167, %v3267
        %v3269 = vpop.f32.mrf.mxu0
        %3270 = vdwg.mxu0
        %3271 = vmatprep.subr.mxu0 0.0
        %3272 = vmatpush1.msra.mxu0 0.0
        %3273 = vmatprep.subr.mxu0 0.0
        %3274 = vmatpush1.msra.mxu0 0.0
        %3275 = vmatprep.subr.mxu0 0.0
        %3276 = vmatpush1.msra.mxu0 0.0
        %3277 = vmatprep.subr.mxu0 0.0
        %3278 = vmatpush1.msra.mxu0 0.0
        %3279 = vmatprep.subr.mxu0 0.0
        %3280 = vmatpush1.msra.mxu0 0.0
        %3281 = vmatprep.subr.mxu0 0.0
        %3282 = vmatpush1.msra.mxu0 0.0
        %3283 = vmatprep.subr.mxu0 0.0
        %3284 = vmatpush1.msra.mxu0 0.0
        %3285 = vmatprep.subr.mxu0 0.0
        %3286 = vmatpush1.msra.mxu0 0.0
        %3287 = vmatprep.subr.mxu0 0.0
        %3288 = vmatpush1.msra.mxu0 0.0
        %3289 = vmatprep.subr.mxu0 0.0
        %3290 = vmatpush1.msra.mxu0 0.0
        %3291 = vmatprep.subr.mxu0 0.0
        %v3292 = vand.u32 %v3066, 4294901760
        %v3293 = vsub.f32 %v3066, %v3292
        %3294 = vmatpush1.msra.mxu0 %v3293
        %3295 = vmatprep.subr.mxu0 0.0
        %v3296 = vand.u32 %v3065, 4294901760
        %v3297 = vsub.f32 %v3065, %v3296
        %3298 = vmatpush1.msra.mxu0 %v3297
        %3299 = vmatprep.subr.mxu0 0.0
        %v3300 = vand.u32 %v3064, 4294901760
        %v3301 = vsub.f32 %v3064, %v3300
        %3302 = vmatpush1.msra.mxu0 %v3301
        %3303 = vmatprep.subr.mxu0 0.0
        %v3304 = vand.u32 %v3063, 4294901760
        %v3305 = vsub.f32 %v3063, %v3304
        %3306 = vmatpush1.msra.mxu0 %v3305
        %3307 = vmatprep.subr.mxu0 0.0
        %v3308 = vand.u32 %v3062, 4294901760
        %v3309 = vsub.f32 %v3062, %v3308
        %3310 = vmatpush1.msra.mxu0 %v3309
        %3311 = vmatprep.subr.mxu0 0.0
        %v3312 = vand.u32 %v3061, 4294901760
        %v3313 = vsub.f32 %v3061, %v3312
        %3314 = vmatpush1.msra.mxu0 %v3313
        %3315 = vmatprep.subr.mxu0 0.0
        %3316 = vmatpush2.msra.mxu0 0.0
        %3317 = vmatprep.subr.mxu0 0.0
        %3318 = vmatpush2.msra.mxu0 0.0
        %3319 = vmatprep.subr.mxu0 0.0
        %3320 = vmatpush2.msra.mxu0 0.0
        %3321 = vmatprep.subr.mxu0 0.0
        %3322 = vmatpush2.msra.mxu0 0.0
        %3323 = vmatprep.subr.mxu0 0.0
        %3324 = vmatpush2.msra.mxu0 0.0
        %3325 = vmatprep.subr.mxu0 0.0
        %3326 = vmatpush2.msra.mxu0 0.0
        %3327 = vmatprep.subr.mxu0 0.0
        %3328 = vmatpush2.msra.mxu0 0.0
        %3329 = vmatprep.subr.mxu0 0.0
        %3330 = vmatpush2.msra.mxu0 0.0
        %3331 = vmatprep.subr.mxu0 0.0
        %3332 = vmatpush2.msra.mxu0 0.0
        %3333 = vmatprep.subr.mxu0 0.0
        %3334 = vmatpush2.msra.mxu0 0.0
        %3335 = vmatprep.subr.mxu0 0.0
        %3336 = vmatpush2.msra.mxu0 0.0
        %3337 = vmatprep.subr.mxu0 0.0
        %3338 = vmatpush2.msra.mxu0 0.0
        %3339 = vmatprep.subr.mxu0 0.0
        %3340 = vmatpush2.msra.mxu0 0.0
        %3341 = vmatprep.subr.mxu0 0.0
        %3342 = vmatpush2.msra.mxu0 0.0
        %3343 = vmatprep.subr.mxu0 0.0
        %3344 = vmatpush2.msra.mxu0 0.0
        %3345 = vmatprep.subr.mxu0 0.0
        %3346 = vmatpush2.msra.mxu0 0.0
        %3347 = vmatprep.mubr.f32.mxu0 0.0
        %v3348 = vand.u32 %v3087, 4294901760
        %v3349 = vsub.f32 %v3087, %v3348
        %3350 = vmatmul.mubr.f32.gmra.mxu0 %v3349
        %v3351 = vpop.f32.mrf.mxu0
        %v3352 = vadd.f32 %v3268, %v3351
        %v3353 = vpop.f32.mrf.mxu0
        %3354 = vdwg.mxu0
        %3355 = vmatprep.subr.mxu0 0.0
        %3356 = vmatpush1.msra.mxu0 0.0
        %3357 = vmatprep.subr.mxu0 0.0
        %3358 = vmatpush1.msra.mxu0 0.0
        %3359 = vmatprep.subr.mxu0 0.0
        %3360 = vmatpush1.msra.mxu0 0.0
        %3361 = vmatprep.subr.mxu0 0.0
        %3362 = vmatpush1.msra.mxu0 0.0
        %3363 = vmatprep.subr.mxu0 0.0
        %3364 = vmatpush1.msra.mxu0 0.0
        %3365 = vmatprep.subr.mxu0 0.0
        %3366 = vmatpush1.msra.mxu0 0.0
        %3367 = vmatprep.subr.mxu0 0.0
        %3368 = vmatpush1.msra.mxu0 0.0
        %3369 = vmatprep.subr.mxu0 0.0
        %3370 = vmatpush1.msra.mxu0 0.0
        %3371 = vmatprep.subr.mxu0 0.0
        %3372 = vmatpush1.msra.mxu0 0.0
        %3373 = vmatprep.subr.mxu0 0.0
        %3374 = vmatpush1.msra.mxu0 0.0
        %3375 = vmatprep.subr.mxu0 0.0
        %v3376 = vand.u32 %v3066, 4294901760
        %3377 = vmatpush1.msra.mxu0 %v3376
        %3378 = vmatprep.subr.mxu0 0.0
        %v3379 = vand.u32 %v3065, 4294901760
        %3380 = vmatpush1.msra.mxu0 %v3379
        %3381 = vmatprep.subr.mxu0 0.0
        %v3382 = vand.u32 %v3064, 4294901760
        %3383 = vmatpush1.msra.mxu0 %v3382
        %3384 = vmatprep.subr.mxu0 0.0
        %v3385 = vand.u32 %v3063, 4294901760
        %3386 = vmatpush1.msra.mxu0 %v3385
        %3387 = vmatprep.subr.mxu0 0.0
        %v3388 = vand.u32 %v3062, 4294901760
        %3389 = vmatpush1.msra.mxu0 %v3388
        %3390 = vmatprep.subr.mxu0 0.0
        %v3391 = vand.u32 %v3061, 4294901760
        %3392 = vmatpush1.msra.mxu0 %v3391
        %3393 = vmatprep.subr.mxu0 0.0
        %3394 = vmatpush2.msra.mxu0 0.0
        %3395 = vmatprep.subr.mxu0 0.0
        %3396 = vmatpush2.msra.mxu0 0.0
        %3397 = vmatprep.subr.mxu0 0.0
        %3398 = vmatpush2.msra.mxu0 0.0
        %3399 = vmatprep.subr.mxu0 0.0
        %3400 = vmatpush2.msra.mxu0 0.0
        %3401 = vmatprep.subr.mxu0 0.0
        %3402 = vmatpush2.msra.mxu0 0.0
        %3403 = vmatprep.subr.mxu0 0.0
        %3404 = vmatpush2.msra.mxu0 0.0
        %3405 = vmatprep.subr.mxu0 0.0
        %3406 = vmatpush2.msra.mxu0 0.0
        %3407 = vmatprep.subr.mxu0 0.0
        %3408 = vmatpush2.msra.mxu0 0.0
        %3409 = vmatprep.subr.mxu0 0.0
        %3410 = vmatpush2.msra.mxu0 0.0
        %3411 = vmatprep.subr.mxu0 0.0
        %3412 = vmatpush2.msra.mxu0 0.0
        %3413 = vmatprep.subr.mxu0 0.0
        %3414 = vmatpush2.msra.mxu0 0.0
        %3415 = vmatprep.subr.mxu0 0.0
        %3416 = vmatpush2.msra.mxu0 0.0
        %3417 = vmatprep.subr.mxu0 0.0
        %3418 = vmatpush2.msra.mxu0 0.0
        %3419 = vmatprep.subr.mxu0 0.0
        %3420 = vmatpush2.msra.mxu0 0.0
        %3421 = vmatprep.subr.mxu0 0.0
        %3422 = vmatpush2.msra.mxu0 0.0
        %3423 = vmatprep.subr.mxu0 0.0
        %3424 = vmatpush2.msra.mxu0 0.0
        %3425 = vmatprep.mubr.f32.mxu0 0.0
        %v3426 = vand.u32 %v3087, 4294901760
        %v3427 = vsub.f32 %v3087, %v3426
        %v3428 = vand.u32 %v3427, 4294901760
        %3429 = vmatmul.mubr.f32.gmra.mxu0 %v3428
        %v3430 = vpop.f32.mrf.mxu0
        %v3431 = vadd.f32 %v3352, %v3430
        %v3432 = vpop.f32.mrf.mxu0
        %3433 = vdwg.mxu0
        %3434 = vmatprep.subr.mxu0 0.0
        %3435 = vmatpush1.msra.mxu0 0.0
        %3436 = vmatprep.subr.mxu0 0.0
        %3437 = vmatpush1.msra.mxu0 0.0
        %3438 = vmatprep.subr.mxu0 0.0
        %3439 = vmatpush1.msra.mxu0 0.0
        %3440 = vmatprep.subr.mxu0 0.0
        %3441 = vmatpush1.msra.mxu0 0.0
        %3442 = vmatprep.subr.mxu0 0.0
        %3443 = vmatpush1.msra.mxu0 0.0
        %3444 = vmatprep.subr.mxu0 0.0
        %3445 = vmatpush1.msra.mxu0 0.0
        %3446 = vmatprep.subr.mxu0 0.0
        %3447 = vmatpush1.msra.mxu0 0.0
        %3448 = vmatprep.subr.mxu0 0.0
        %3449 = vmatpush1.msra.mxu0 0.0
        %3450 = vmatprep.subr.mxu0 0.0
        %3451 = vmatpush1.msra.mxu0 0.0
        %3452 = vmatprep.subr.mxu0 0.0
        %3453 = vmatpush1.msra.mxu0 0.0
        %3454 = vmatprep.subr.mxu0 0.0
        %v3455 = vand.u32 %v3066, 4294901760
        %v3456 = vsub.f32 %v3066, %v3455
        %v3457 = vand.u32 %v3456, 4294901760
        %3458 = vmatpush1.msra.mxu0 %v3457
        %3459 = vmatprep.subr.mxu0 0.0
        %v3460 = vand.u32 %v3065, 4294901760
        %v3461 = vsub.f32 %v3065, %v3460
        %v3462 = vand.u32 %v3461, 4294901760
        %3463 = vmatpush1.msra.mxu0 %v3462
        %3464 = vmatprep.subr.mxu0 0.0
        %v3465 = vand.u32 %v3064, 4294901760
        %v3466 = vsub.f32 %v3064, %v3465
        %v3467 = vand.u32 %v3466, 4294901760
        %3468 = vmatpush1.msra.mxu0 %v3467
        %3469 = vmatprep.subr.mxu0 0.0
        %v3470 = vand.u32 %v3063, 4294901760
        %v3471 = vsub.f32 %v3063, %v3470
        %v3472 = vand.u32 %v3471, 4294901760
        %3473 = vmatpush1.msra.mxu0 %v3472
        %3474 = vmatprep.subr.mxu0 0.0
        %v3475 = vand.u32 %v3062, 4294901760
        %v3476 = vsub.f32 %v3062, %v3475
        %v3477 = vand.u32 %v3476, 4294901760
        %3478 = vmatpush1.msra.mxu0 %v3477
        %3479 = vmatprep.subr.mxu0 0.0
        %v3480 = vand.u32 %v3061, 4294901760
        %v3481 = vsub.f32 %v3061, %v3480
        %v3482 = vand.u32 %v3481, 4294901760
        %3483 = vmatpush1.msra.mxu0 %v3482
        %3484 = vmatprep.subr.mxu0 0.0
        %3485 = vmatpush2.msra.mxu0 0.0
        %3486 = vmatprep.subr.mxu0 0.0
        %3487 = vmatpush2.msra.mxu0 0.0
        %3488 = vmatprep.subr.mxu0 0.0
        %3489 = vmatpush2.msra.mxu0 0.0
        %3490 = vmatprep.subr.mxu0 0.0
        %3491 = vmatpush2.msra.mxu0 0.0
        %3492 = vmatprep.subr.mxu0 0.0
        %3493 = vmatpush2.msra.mxu0 0.0
        %3494 = vmatprep.subr.mxu0 0.0
        %3495 = vmatpush2.msra.mxu0 0.0
        %3496 = vmatprep.subr.mxu0 0.0
        %3497 = vmatpush2.msra.mxu0 0.0
        %3498 = vmatprep.subr.mxu0 0.0
        %3499 = vmatpush2.msra.mxu0 0.0
        %3500 = vmatprep.subr.mxu0 0.0
        %3501 = vmatpush2.msra.mxu0 0.0
        %3502 = vmatprep.subr.mxu0 0.0
        %3503 = vmatpush2.msra.mxu0 0.0
        %3504 = vmatprep.subr.mxu0 0.0
        %3505 = vmatpush2.msra.mxu0 0.0
        %3506 = vmatprep.subr.mxu0 0.0
        %3507 = vmatpush2.msra.mxu0 0.0
        %3508 = vmatprep.subr.mxu0 0.0
        %3509 = vmatpush2.msra.mxu0 0.0
        %3510 = vmatprep.subr.mxu0 0.0
        %3511 = vmatpush2.msra.mxu0 0.0
        %3512 = vmatprep.subr.mxu0 0.0
        %3513 = vmatpush2.msra.mxu0 0.0
        %3514 = vmatprep.subr.mxu0 0.0
        %3515 = vmatpush2.msra.mxu0 0.0
        %3516 = vmatprep.mubr.f32.mxu0 0.0
        %v3517 = vand.u32 %v3087, 4294901760
        %3518 = vmatmul.mubr.f32.gmra.mxu0 %v3517
        %v3519 = vpop.f32.mrf.mxu0
        %v3520 = vadd.f32 %v3431, %v3519
        %v3521 = vpop.f32.mrf.mxu0
        %3522 = vdwg.mxu0
        %3523 = vmatprep.subr.mxu0 0.0
        %3524 = vmatpush1.msra.mxu0 0.0
        %3525 = vmatprep.subr.mxu0 0.0
        %3526 = vmatpush1.msra.mxu0 0.0
        %3527 = vmatprep.subr.mxu0 0.0
        %3528 = vmatpush1.msra.mxu0 0.0
        %3529 = vmatprep.subr.mxu0 0.0
        %3530 = vmatpush1.msra.mxu0 0.0
        %3531 = vmatprep.subr.mxu0 0.0
        %3532 = vmatpush1.msra.mxu0 0.0
        %3533 = vmatprep.subr.mxu0 0.0
        %3534 = vmatpush1.msra.mxu0 0.0
        %3535 = vmatprep.subr.mxu0 0.0
        %3536 = vmatpush1.msra.mxu0 0.0
        %3537 = vmatprep.subr.mxu0 0.0
        %3538 = vmatpush1.msra.mxu0 0.0
        %3539 = vmatprep.subr.mxu0 0.0
        %3540 = vmatpush1.msra.mxu0 0.0
        %3541 = vmatprep.subr.mxu0 0.0
        %3542 = vmatpush1.msra.mxu0 0.0
        %3543 = vmatprep.subr.mxu0 0.0
        %v3544 = vand.u32 %v3066, 4294901760
        %3545 = vmatpush1.msra.mxu0 %v3544
        %3546 = vmatprep.subr.mxu0 0.0
        %v3547 = vand.u32 %v3065, 4294901760
        %3548 = vmatpush1.msra.mxu0 %v3547
        %3549 = vmatprep.subr.mxu0 0.0
        %v3550 = vand.u32 %v3064, 4294901760
        %3551 = vmatpush1.msra.mxu0 %v3550
        %3552 = vmatprep.subr.mxu0 0.0
        %v3553 = vand.u32 %v3063, 4294901760
        %3554 = vmatpush1.msra.mxu0 %v3553
        %3555 = vmatprep.subr.mxu0 0.0
        %v3556 = vand.u32 %v3062, 4294901760
        %3557 = vmatpush1.msra.mxu0 %v3556
        %3558 = vmatprep.subr.mxu0 0.0
        %v3559 = vand.u32 %v3061, 4294901760
        %3560 = vmatpush1.msra.mxu0 %v3559
        %3561 = vmatprep.subr.mxu0 0.0
        %3562 = vmatpush2.msra.mxu0 0.0
        %3563 = vmatprep.subr.mxu0 0.0
        %3564 = vmatpush2.msra.mxu0 0.0
        %3565 = vmatprep.subr.mxu0 0.0
        %3566 = vmatpush2.msra.mxu0 0.0
        %3567 = vmatprep.subr.mxu0 0.0
        %3568 = vmatpush2.msra.mxu0 0.0
        %3569 = vmatprep.subr.mxu0 0.0
        %3570 = vmatpush2.msra.mxu0 0.0
        %3571 = vmatprep.subr.mxu0 0.0
        %3572 = vmatpush2.msra.mxu0 0.0
        %3573 = vmatprep.subr.mxu0 0.0
        %3574 = vmatpush2.msra.mxu0 0.0
        %3575 = vmatprep.subr.mxu0 0.0
        %3576 = vmatpush2.msra.mxu0 0.0
        %3577 = vmatprep.subr.mxu0 0.0
        %3578 = vmatpush2.msra.mxu0 0.0
        %3579 = vmatprep.subr.mxu0 0.0
        %3580 = vmatpush2.msra.mxu0 0.0
        %3581 = vmatprep.subr.mxu0 0.0
        %3582 = vmatpush2.msra.mxu0 0.0
        %3583 = vmatprep.subr.mxu0 0.0
        %3584 = vmatpush2.msra.mxu0 0.0
        %3585 = vmatprep.subr.mxu0 0.0
        %3586 = vmatpush2.msra.mxu0 0.0
        %3587 = vmatprep.subr.mxu0 0.0
        %3588 = vmatpush2.msra.mxu0 0.0
        %3589 = vmatprep.subr.mxu0 0.0
        %3590 = vmatpush2.msra.mxu0 0.0
        %3591 = vmatprep.subr.mxu0 0.0
        %3592 = vmatpush2.msra.mxu0 0.0
        %3593 = vmatprep.mubr.f32.mxu0 0.0
        %v3594 = vand.u32 %v3087, 4294901760
        %3595 = vmatmul.mubr.f32.gmra.mxu0 %v3594
        %v3596 = vpop.f32.mrf.mxu0
        %v3597 = vadd.f32 %v3520, %v3596
        %v3598 = vpop.f32.mrf.mxu0
        %3599 = vdwg.mxu0
        %v3600 = vmax.f32 %v3597, 0.0
        %3601 = vst.msk [vmem:[#allocation2 + $0x8] sm:$0xff] %vm165, %v3600
        %v3602 = vld [vmem:[%s1 + $0xd8] sm:$0xff]
        %v3603 = vld [vmem:[%s1 + $0xe0] sm:$0xff]
        %v3604 = vld [vmem:[%s1 + $0xe8] sm:$0x1]
        %v3605 = vld [vmem:[#allocation2 + $0x8] sm:$0xff]
        %v3606 = vlaneseq
        %v3607 = vshrl.u32 %v3606, 7
        %v3608 = vsub.s32 0, %v3607
        %v3609 = vrot.slane %v3604, %v3608
        %v3611 = vsel %vm165, %v3605, 0
        %3613 = vmatprep.subr.mxu0 0.0
        %3614 = vmatpush1.msra.mxu0 0.0
        %3615 = vmatprep.subr.mxu0 0.0
        %3616 = vmatpush1.msra.mxu0 0.0
        %3617 = vmatprep.subr.mxu0 0.0
        %3618 = vmatpush1.msra.mxu0 0.0
        %3619 = vmatprep.subr.mxu0 0.0
        %3620 = vmatpush1.msra.mxu0 0.0
        %3621 = vmatprep.subr.mxu0 0.0
        %3622 = vmatpush1.msra.mxu0 0.0
        %3623 = vmatprep.subr.mxu0 0.0
        %3624 = vmatpush1.msra.mxu0 0.0
        %3625 = vmatprep.subr.mxu0 0.0
        %3626 = vmatpush1.msra.mxu0 0.0
        %3627 = vmatprep.subr.mxu0 0.0
        %3628 = vmatpush1.msra.mxu0 0.0
        %3629 = vmatprep.subr.mxu0 0.0
        %3630 = vmatpush1.msra.mxu0 0.0
        %3631 = vmatprep.subr.mxu0 0.0
        %3632 = vmatpush1.msra.mxu0 0.0
        %3633 = vmatprep.subr.mxu0 0.0
        %3634 = vmatpush1.msra.mxu0 0.0
        %3635 = vmatprep.subr.mxu0 0.0
        %3636 = vmatpush1.msra.mxu0 0.0
        %3637 = vmatprep.subr.mxu0 0.0
        %3638 = vmatpush1.msra.mxu0 0.0
        %3639 = vmatprep.subr.mxu0 0.0
        %3640 = vmatpush1.msra.mxu0 0.0
        %3641 = vmatprep.subr.mxu0 0.0
        %v3642 = vand.u32 %v3603, 4294901760
        %3643 = vmatpush1.msra.mxu0 %v3642
        %3644 = vmatprep.subr.mxu0 0.0
        %v3645 = vand.u32 %v3602, 4294901760
        %3646 = vmatpush1.msra.mxu0 %v3645
        %3647 = vmatprep.subr.mxu0 0.0
        %3648 = vmatpush2.msra.mxu0 0.0
        %3649 = vmatprep.subr.mxu0 0.0
        %3650 = vmatpush2.msra.mxu0 0.0
        %3651 = vmatprep.subr.mxu0 0.0
        %3652 = vmatpush2.msra.mxu0 0.0
        %3653 = vmatprep.subr.mxu0 0.0
        %3654 = vmatpush2.msra.mxu0 0.0
        %3655 = vmatprep.subr.mxu0 0.0
        %3656 = vmatpush2.msra.mxu0 0.0
        %3657 = vmatprep.subr.mxu0 0.0
        %3658 = vmatpush2.msra.mxu0 0.0
        %3659 = vmatprep.subr.mxu0 0.0
        %3660 = vmatpush2.msra.mxu0 0.0
        %3661 = vmatprep.subr.mxu0 0.0
        %3662 = vmatpush2.msra.mxu0 0.0
        %3663 = vmatprep.subr.mxu0 0.0
        %3664 = vmatpush2.msra.mxu0 0.0
        %3665 = vmatprep.subr.mxu0 0.0
        %3666 = vmatpush2.msra.mxu0 0.0
        %3667 = vmatprep.subr.mxu0 0.0
        %3668 = vmatpush2.msra.mxu0 0.0
        %3669 = vmatprep.subr.mxu0 0.0
        %3670 = vmatpush2.msra.mxu0 0.0
        %3671 = vmatprep.subr.mxu0 0.0
        %3672 = vmatpush2.msra.mxu0 0.0
        %3673 = vmatprep.subr.mxu0 0.0
        %3674 = vmatpush2.msra.mxu0 0.0
        %3675 = vmatprep.subr.mxu0 0.0
        %3676 = vmatpush2.msra.mxu0 0.0
        %3677 = vmatprep.subr.mxu0 0.0
        %3678 = vmatpush2.msra.mxu0 0.0
        %3679 = vmatprep.mubr.f32.mxu0 0.0
        %v3680 = vand.u32 %v3611, 4294901760
        %v3681 = vsub.f32 %v3611, %v3680
        %v3682 = vand.u32 %v3681, 4294901760
        %v3683 = vsub.f32 %v3681, %v3682
        %v3684 = vand.u32 %v3683, 4294901760
        %3685 = vmatmul.mubr.f32.gmra.mxu0 %v3684
        %v3686 = vpop.f32.mrf.mxu0
        %v3687 = vadd.f32 %v3609, %v3686
        %v3688 = vpop.f32.mrf.mxu0
        %3689 = vdwg.mxu0
        %3690 = vmatprep.subr.mxu0 0.0
        %3691 = vmatpush1.msra.mxu0 0.0
        %3692 = vmatprep.subr.mxu0 0.0
        %3693 = vmatpush1.msra.mxu0 0.0
        %3694 = vmatprep.subr.mxu0 0.0
        %3695 = vmatpush1.msra.mxu0 0.0
        %3696 = vmatprep.subr.mxu0 0.0
        %3697 = vmatpush1.msra.mxu0 0.0
        %3698 = vmatprep.subr.mxu0 0.0
        %3699 = vmatpush1.msra.mxu0 0.0
        %3700 = vmatprep.subr.mxu0 0.0
        %3701 = vmatpush1.msra.mxu0 0.0
        %3702 = vmatprep.subr.mxu0 0.0
        %3703 = vmatpush1.msra.mxu0 0.0
        %3704 = vmatprep.subr.mxu0 0.0
        %3705 = vmatpush1.msra.mxu0 0.0
        %3706 = vmatprep.subr.mxu0 0.0
        %3707 = vmatpush1.msra.mxu0 0.0
        %3708 = vmatprep.subr.mxu0 0.0
        %3709 = vmatpush1.msra.mxu0 0.0
        %3710 = vmatprep.subr.mxu0 0.0
        %3711 = vmatpush1.msra.mxu0 0.0
        %3712 = vmatprep.subr.mxu0 0.0
        %3713 = vmatpush1.msra.mxu0 0.0
        %3714 = vmatprep.subr.mxu0 0.0
        %3715 = vmatpush1.msra.mxu0 0.0
        %3716 = vmatprep.subr.mxu0 0.0
        %3717 = vmatpush1.msra.mxu0 0.0
        %3718 = vmatprep.subr.mxu0 0.0
        %v3719 = vand.u32 %v3603, 4294901760
        %v3720 = vsub.f32 %v3603, %v3719
        %v3721 = vand.u32 %v3720, 4294901760
        %v3722 = vsub.f32 %v3720, %v3721
        %v3723 = vand.u32 %v3722, 4294901760
        %3724 = vmatpush1.msra.mxu0 %v3723
        %3725 = vmatprep.subr.mxu0 0.0
        %v3726 = vand.u32 %v3602, 4294901760
        %v3727 = vsub.f32 %v3602, %v3726
        %v3728 = vand.u32 %v3727, 4294901760
        %v3729 = vsub.f32 %v3727, %v3728
        %v3730 = vand.u32 %v3729, 4294901760
        %3731 = vmatpush1.msra.mxu0 %v3730
        %3732 = vmatprep.subr.mxu0 0.0
        %3733 = vmatpush2.msra.mxu0 0.0
        %3734 = vmatprep.subr.mxu0 0.0
        %3735 = vmatpush2.msra.mxu0 0.0
        %3736 = vmatprep.subr.mxu0 0.0
        %3737 = vmatpush2.msra.mxu0 0.0
        %3738 = vmatprep.subr.mxu0 0.0
        %3739 = vmatpush2.msra.mxu0 0.0
        %3740 = vmatprep.subr.mxu0 0.0
        %3741 = vmatpush2.msra.mxu0 0.0
        %3742 = vmatprep.subr.mxu0 0.0
        %3743 = vmatpush2.msra.mxu0 0.0
        %3744 = vmatprep.subr.mxu0 0.0
        %3745 = vmatpush2.msra.mxu0 0.0
        %3746 = vmatprep.subr.mxu0 0.0
        %3747 = vmatpush2.msra.mxu0 0.0
        %3748 = vmatprep.subr.mxu0 0.0
        %3749 = vmatpush2.msra.mxu0 0.0
        %3750 = vmatprep.subr.mxu0 0.0
        %3751 = vmatpush2.msra.mxu0 0.0
        %3752 = vmatprep.subr.mxu0 0.0
        %3753 = vmatpush2.msra.mxu0 0.0
        %3754 = vmatprep.subr.mxu0 0.0
        %3755 = vmatpush2.msra.mxu0 0.0
        %3756 = vmatprep.subr.mxu0 0.0
        %3757 = vmatpush2.msra.mxu0 0.0
        %3758 = vmatprep.subr.mxu0 0.0
        %3759 = vmatpush2.msra.mxu0 0.0
        %3760 = vmatprep.subr.mxu0 0.0
        %3761 = vmatpush2.msra.mxu0 0.0
        %3762 = vmatprep.subr.mxu0 0.0
        %3763 = vmatpush2.msra.mxu0 0.0
        %3764 = vmatprep.mubr.f32.mxu0 0.0
        %v3765 = vand.u32 %v3611, 4294901760
        %3766 = vmatmul.mubr.f32.gmra.mxu0 %v3765
        %v3767 = vpop.f32.mrf.mxu0
        %v3768 = vadd.f32 %v3687, %v3767
        %v3769 = vpop.f32.mrf.mxu0
        %3770 = vdwg.mxu0
        %3771 = vmatprep.subr.mxu0 0.0
        %3772 = vmatpush1.msra.mxu0 0.0
        %3773 = vmatprep.subr.mxu0 0.0
        %3774 = vmatpush1.msra.mxu0 0.0
        %3775 = vmatprep.subr.mxu0 0.0
        %3776 = vmatpush1.msra.mxu0 0.0
        %3777 = vmatprep.subr.mxu0 0.0
        %3778 = vmatpush1.msra.mxu0 0.0
        %3779 = vmatprep.subr.mxu0 0.0
        %3780 = vmatpush1.msra.mxu0 0.0
        %3781 = vmatprep.subr.mxu0 0.0
        %3782 = vmatpush1.msra.mxu0 0.0
        %3783 = vmatprep.subr.mxu0 0.0
        %3784 = vmatpush1.msra.mxu0 0.0
        %3785 = vmatprep.subr.mxu0 0.0
        %3786 = vmatpush1.msra.mxu0 0.0
        %3787 = vmatprep.subr.mxu0 0.0
        %3788 = vmatpush1.msra.mxu0 0.0
        %3789 = vmatprep.subr.mxu0 0.0
        %3790 = vmatpush1.msra.mxu0 0.0
        %3791 = vmatprep.subr.mxu0 0.0
        %3792 = vmatpush1.msra.mxu0 0.0
        %3793 = vmatprep.subr.mxu0 0.0
        %3794 = vmatpush1.msra.mxu0 0.0
        %3795 = vmatprep.subr.mxu0 0.0
        %3796 = vmatpush1.msra.mxu0 0.0
        %3797 = vmatprep.subr.mxu0 0.0
        %3798 = vmatpush1.msra.mxu0 0.0
        %3799 = vmatprep.subr.mxu0 0.0
        %v3800 = vand.u32 %v3603, 4294901760
        %v3801 = vsub.f32 %v3603, %v3800
        %3802 = vmatpush1.msra.mxu0 %v3801
        %3803 = vmatprep.subr.mxu0 0.0
        %v3804 = vand.u32 %v3602, 4294901760
        %v3805 = vsub.f32 %v3602, %v3804
        %3806 = vmatpush1.msra.mxu0 %v3805
        %3807 = vmatprep.subr.mxu0 0.0
        %3808 = vmatpush2.msra.mxu0 0.0
        %3809 = vmatprep.subr.mxu0 0.0
        %3810 = vmatpush2.msra.mxu0 0.0
        %3811 = vmatprep.subr.mxu0 0.0
        %3812 = vmatpush2.msra.mxu0 0.0
        %3813 = vmatprep.subr.mxu0 0.0
        %3814 = vmatpush2.msra.mxu0 0.0
        %3815 = vmatprep.subr.mxu0 0.0
        %3816 = vmatpush2.msra.mxu0 0.0
        %3817 = vmatprep.subr.mxu0 0.0
        %3818 = vmatpush2.msra.mxu0 0.0
        %3819 = vmatprep.subr.mxu0 0.0
        %3820 = vmatpush2.msra.mxu0 0.0
        %3821 = vmatprep.subr.mxu0 0.0
        %3822 = vmatpush2.msra.mxu0 0.0
        %3823 = vmatprep.subr.mxu0 0.0
        %3824 = vmatpush2.msra.mxu0 0.0
        %3825 = vmatprep.subr.mxu0 0.0
        %3826 = vmatpush2.msra.mxu0 0.0
        %3827 = vmatprep.subr.mxu0 0.0
        %3828 = vmatpush2.msra.mxu0 0.0
        %3829 = vmatprep.subr.mxu0 0.0
        %3830 = vmatpush2.msra.mxu0 0.0
        %3831 = vmatprep.subr.mxu0 0.0
        %3832 = vmatpush2.msra.mxu0 0.0
        %3833 = vmatprep.subr.mxu0 0.0
        %3834 = vmatpush2.msra.mxu0 0.0
        %3835 = vmatprep.subr.mxu0 0.0
        %3836 = vmatpush2.msra.mxu0 0.0
        %3837 = vmatprep.subr.mxu0 0.0
        %3838 = vmatpush2.msra.mxu0 0.0
        %3839 = vmatprep.mubr.f32.mxu0 0.0
        %v3840 = vand.u32 %v3611, 4294901760
        %v3841 = vsub.f32 %v3611, %v3840
        %3842 = vmatmul.mubr.f32.gmra.mxu0 %v3841
        %v3843 = vpop.f32.mrf.mxu0
        %v3844 = vadd.f32 %v3768, %v3843
        %v3845 = vpop.f32.mrf.mxu0
        %3846 = vdwg.mxu0
        %3847 = vmatprep.subr.mxu0 0.0
        %3848 = vmatpush1.msra.mxu0 0.0
        %3849 = vmatprep.subr.mxu0 0.0
        %3850 = vmatpush1.msra.mxu0 0.0
        %3851 = vmatprep.subr.mxu0 0.0
        %3852 = vmatpush1.msra.mxu0 0.0
        %3853 = vmatprep.subr.mxu0 0.0
        %3854 = vmatpush1.msra.mxu0 0.0
        %3855 = vmatprep.subr.mxu0 0.0
        %3856 = vmatpush1.msra.mxu0 0.0
        %3857 = vmatprep.subr.mxu0 0.0
        %3858 = vmatpush1.msra.mxu0 0.0
        %3859 = vmatprep.subr.mxu0 0.0
        %3860 = vmatpush1.msra.mxu0 0.0
        %3861 = vmatprep.subr.mxu0 0.0
        %3862 = vmatpush1.msra.mxu0 0.0
        %3863 = vmatprep.subr.mxu0 0.0
        %3864 = vmatpush1.msra.mxu0 0.0
        %3865 = vmatprep.subr.mxu0 0.0
        %3866 = vmatpush1.msra.mxu0 0.0
        %3867 = vmatprep.subr.mxu0 0.0
        %3868 = vmatpush1.msra.mxu0 0.0
        %3869 = vmatprep.subr.mxu0 0.0
        %3870 = vmatpush1.msra.mxu0 0.0
        %3871 = vmatprep.subr.mxu0 0.0
        %3872 = vmatpush1.msra.mxu0 0.0
        %3873 = vmatprep.subr.mxu0 0.0
        %3874 = vmatpush1.msra.mxu0 0.0
        %3875 = vmatprep.subr.mxu0 0.0
        %v3876 = vand.u32 %v3603, 4294901760
        %3877 = vmatpush1.msra.mxu0 %v3876
        %3878 = vmatprep.subr.mxu0 0.0
        %v3879 = vand.u32 %v3602, 4294901760
        %3880 = vmatpush1.msra.mxu0 %v3879
        %3881 = vmatprep.subr.mxu0 0.0
        %3882 = vmatpush2.msra.mxu0 0.0
        %3883 = vmatprep.subr.mxu0 0.0
        %3884 = vmatpush2.msra.mxu0 0.0
        %3885 = vmatprep.subr.mxu0 0.0
        %3886 = vmatpush2.msra.mxu0 0.0
        %3887 = vmatprep.subr.mxu0 0.0
        %3888 = vmatpush2.msra.mxu0 0.0
        %3889 = vmatprep.subr.mxu0 0.0
        %3890 = vmatpush2.msra.mxu0 0.0
        %3891 = vmatprep.subr.mxu0 0.0
        %3892 = vmatpush2.msra.mxu0 0.0
        %3893 = vmatprep.subr.mxu0 0.0
        %3894 = vmatpush2.msra.mxu0 0.0
        %3895 = vmatprep.subr.mxu0 0.0
        %3896 = vmatpush2.msra.mxu0 0.0
        %3897 = vmatprep.subr.mxu0 0.0
        %3898 = vmatpush2.msra.mxu0 0.0
        %3899 = vmatprep.subr.mxu0 0.0
        %3900 = vmatpush2.msra.mxu0 0.0
        %3901 = vmatprep.subr.mxu0 0.0
        %3902 = vmatpush2.msra.mxu0 0.0
        %3903 = vmatprep.subr.mxu0 0.0
        %3904 = vmatpush2.msra.mxu0 0.0
        %3905 = vmatprep.subr.mxu0 0.0
        %3906 = vmatpush2.msra.mxu0 0.0
        %3907 = vmatprep.subr.mxu0 0.0
        %3908 = vmatpush2.msra.mxu0 0.0
        %3909 = vmatprep.subr.mxu0 0.0
        %3910 = vmatpush2.msra.mxu0 0.0
        %3911 = vmatprep.subr.mxu0 0.0
        %3912 = vmatpush2.msra.mxu0 0.0
        %3913 = vmatprep.mubr.f32.mxu0 0.0
        %v3914 = vand.u32 %v3611, 4294901760
        %v3915 = vsub.f32 %v3611, %v3914
        %v3916 = vand.u32 %v3915, 4294901760
        %3917 = vmatmul.mubr.f32.gmra.mxu0 %v3916
        %v3918 = vpop.f32.mrf.mxu0
        %v3919 = vadd.f32 %v3844, %v3918
        %v3920 = vpop.f32.mrf.mxu0
        %3921 = vdwg.mxu0
        %3922 = vmatprep.subr.mxu0 0.0
        %3923 = vmatpush1.msra.mxu0 0.0
        %3924 = vmatprep.subr.mxu0 0.0
        %3925 = vmatpush1.msra.mxu0 0.0
        %3926 = vmatprep.subr.mxu0 0.0
        %3927 = vmatpush1.msra.mxu0 0.0
        %3928 = vmatprep.subr.mxu0 0.0
        %3929 = vmatpush1.msra.mxu0 0.0
        %3930 = vmatprep.subr.mxu0 0.0
        %3931 = vmatpush1.msra.mxu0 0.0
        %3932 = vmatprep.subr.mxu0 0.0
        %3933 = vmatpush1.msra.mxu0 0.0
        %3934 = vmatprep.subr.mxu0 0.0
        %3935 = vmatpush1.msra.mxu0 0.0
        %3936 = vmatprep.subr.mxu0 0.0
        %3937 = vmatpush1.msra.mxu0 0.0
        %3938 = vmatprep.subr.mxu0 0.0
        %3939 = vmatpush1.msra.mxu0 0.0
        %3940 = vmatprep.subr.mxu0 0.0
        %3941 = vmatpush1.msra.mxu0 0.0
        %3942 = vmatprep.subr.mxu0 0.0
        %3943 = vmatpush1.msra.mxu0 0.0
        %3944 = vmatprep.subr.mxu0 0.0
        %3945 = vmatpush1.msra.mxu0 0.0
        %3946 = vmatprep.subr.mxu0 0.0
        %3947 = vmatpush1.msra.mxu0 0.0
        %3948 = vmatprep.subr.mxu0 0.0
        %3949 = vmatpush1.msra.mxu0 0.0
        %3950 = vmatprep.subr.mxu0 0.0
        %v3951 = vand.u32 %v3603, 4294901760
        %v3952 = vsub.f32 %v3603, %v3951
        %v3953 = vand.u32 %v3952, 4294901760
        %3954 = vmatpush1.msra.mxu0 %v3953
        %3955 = vmatprep.subr.mxu0 0.0
        %v3956 = vand.u32 %v3602, 4294901760
        %v3957 = vsub.f32 %v3602, %v3956
        %v3958 = vand.u32 %v3957, 4294901760
        %3959 = vmatpush1.msra.mxu0 %v3958
        %3960 = vmatprep.subr.mxu0 0.0
        %3961 = vmatpush2.msra.mxu0 0.0
        %3962 = vmatprep.subr.mxu0 0.0
        %3963 = vmatpush2.msra.mxu0 0.0
        %3964 = vmatprep.subr.mxu0 0.0
        %3965 = vmatpush2.msra.mxu0 0.0
        %3966 = vmatprep.subr.mxu0 0.0
        %3967 = vmatpush2.msra.mxu0 0.0
        %3968 = vmatprep.subr.mxu0 0.0
        %3969 = vmatpush2.msra.mxu0 0.0
        %3970 = vmatprep.subr.mxu0 0.0
        %3971 = vmatpush2.msra.mxu0 0.0
        %3972 = vmatprep.subr.mxu0 0.0
        %3973 = vmatpush2.msra.mxu0 0.0
        %3974 = vmatprep.subr.mxu0 0.0
        %3975 = vmatpush2.msra.mxu0 0.0
        %3976 = vmatprep.subr.mxu0 0.0
        %3977 = vmatpush2.msra.mxu0 0.0
        %3978 = vmatprep.subr.mxu0 0.0
        %3979 = vmatpush2.msra.mxu0 0.0
        %3980 = vmatprep.subr.mxu0 0.0
        %3981 = vmatpush2.msra.mxu0 0.0
        %3982 = vmatprep.subr.mxu0 0.0
        %3983 = vmatpush2.msra.mxu0 0.0
        %3984 = vmatprep.subr.mxu0 0.0
        %3985 = vmatpush2.msra.mxu0 0.0
        %3986 = vmatprep.subr.mxu0 0.0
        %3987 = vmatpush2.msra.mxu0 0.0
        %3988 = vmatprep.subr.mxu0 0.0
        %3989 = vmatpush2.msra.mxu0 0.0
        %3990 = vmatprep.subr.mxu0 0.0
        %3991 = vmatpush2.msra.mxu0 0.0
        %3992 = vmatprep.mubr.f32.mxu0 0.0
        %v3993 = vand.u32 %v3611, 4294901760
        %3994 = vmatmul.mubr.f32.gmra.mxu0 %v3993
        %v3995 = vpop.f32.mrf.mxu0
        %v3996 = vadd.f32 %v3919, %v3995
        %v3997 = vpop.f32.mrf.mxu0
        %3998 = vdwg.mxu0
        %3999 = vmatprep.subr.mxu0 0.0
        %4000 = vmatpush1.msra.mxu0 0.0
        %4001 = vmatprep.subr.mxu0 0.0
        %4002 = vmatpush1.msra.mxu0 0.0
        %4003 = vmatprep.subr.mxu0 0.0
        %4004 = vmatpush1.msra.mxu0 0.0
        %4005 = vmatprep.subr.mxu0 0.0
        %4006 = vmatpush1.msra.mxu0 0.0
        %4007 = vmatprep.subr.mxu0 0.0
        %4008 = vmatpush1.msra.mxu0 0.0
        %4009 = vmatprep.subr.mxu0 0.0
        %4010 = vmatpush1.msra.mxu0 0.0
        %4011 = vmatprep.subr.mxu0 0.0
        %4012 = vmatpush1.msra.mxu0 0.0
        %4013 = vmatprep.subr.mxu0 0.0
        %4014 = vmatpush1.msra.mxu0 0.0
        %4015 = vmatprep.subr.mxu0 0.0
        %4016 = vmatpush1.msra.mxu0 0.0
        %4017 = vmatprep.subr.mxu0 0.0
        %4018 = vmatpush1.msra.mxu0 0.0
        %4019 = vmatprep.subr.mxu0 0.0
        %4020 = vmatpush1.msra.mxu0 0.0
        %4021 = vmatprep.subr.mxu0 0.0
        %4022 = vmatpush1.msra.mxu0 0.0
        %4023 = vmatprep.subr.mxu0 0.0
        %4024 = vmatpush1.msra.mxu0 0.0
        %4025 = vmatprep.subr.mxu0 0.0
        %4026 = vmatpush1.msra.mxu0 0.0
        %4027 = vmatprep.subr.mxu0 0.0
        %v4028 = vand.u32 %v3603, 4294901760
        %4029 = vmatpush1.msra.mxu0 %v4028
        %4030 = vmatprep.subr.mxu0 0.0
        %v4031 = vand.u32 %v3602, 4294901760
        %4032 = vmatpush1.msra.mxu0 %v4031
        %4033 = vmatprep.subr.mxu0 0.0
        %4034 = vmatpush2.msra.mxu0 0.0
        %4035 = vmatprep.subr.mxu0 0.0
        %4036 = vmatpush2.msra.mxu0 0.0
        %4037 = vmatprep.subr.mxu0 0.0
        %4038 = vmatpush2.msra.mxu0 0.0
        %4039 = vmatprep.subr.mxu0 0.0
        %4040 = vmatpush2.msra.mxu0 0.0
        %4041 = vmatprep.subr.mxu0 0.0
        %4042 = vmatpush2.msra.mxu0 0.0
        %4043 = vmatprep.subr.mxu0 0.0
        %4044 = vmatpush2.msra.mxu0 0.0
        %4045 = vmatprep.subr.mxu0 0.0
        %4046 = vmatpush2.msra.mxu0 0.0
        %4047 = vmatprep.subr.mxu0 0.0
        %4048 = vmatpush2.msra.mxu0 0.0
        %4049 = vmatprep.subr.mxu0 0.0
        %4050 = vmatpush2.msra.mxu0 0.0
        %4051 = vmatprep.subr.mxu0 0.0
        %4052 = vmatpush2.msra.mxu0 0.0
        %4053 = vmatprep.subr.mxu0 0.0
        %4054 = vmatpush2.msra.mxu0 0.0
        %4055 = vmatprep.subr.mxu0 0.0
        %4056 = vmatpush2.msra.mxu0 0.0
        %4057 = vmatprep.subr.mxu0 0.0
        %4058 = vmatpush2.msra.mxu0 0.0
        %4059 = vmatprep.subr.mxu0 0.0
        %4060 = vmatpush2.msra.mxu0 0.0
        %4061 = vmatprep.subr.mxu0 0.0
        %4062 = vmatpush2.msra.mxu0 0.0
        %4063 = vmatprep.subr.mxu0 0.0
        %4064 = vmatpush2.msra.mxu0 0.0
        %4065 = vmatprep.mubr.f32.mxu0 0.0
        %v4066 = vand.u32 %v3611, 4294901760
        %4067 = vmatmul.mubr.f32.gmra.mxu0 %v4066
        %v4068 = vpop.f32.mrf.mxu0
        %v4069 = vadd.f32 %v3996, %v4068
        %v4070 = vpop.f32.mrf.mxu0
        %4071 = vdwg.mxu0
        %v4072 = vadd.f32 %v3056, %v4069
        %v4073 = vmax.f32 %v4072, 0.0
        %4074 = vst.msk [vmem:[#allocation2 + $0x8] sm:$0xff] %vm165, %v4073
        %v4075 = vld [vmem:[%s1 + $0xf0] sm:$0xff]
        %v4076 = vld [vmem:[%s1 + $0xf8] sm:$0xff]
        %v4077 = vld [vmem:[%s1 + $0x100] sm:$0xff]
        %v4078 = vld [vmem:[%s1 + $0x108] sm:$0xff]
        %v4079 = vld [vmem:[%s1 + $0x110] sm:$0xff]
        %v4080 = vld [vmem:[%s1 + $0x118] sm:$0xff]
        %v4081 = vld [vmem:[%s1 + $0x120] sm:$0x1]
        %v4082 = vld [vmem:[#allocation2 + $0x7] sm:$0xff]
        %v4083 = vld [vmem:[#allocation2 + $0x8] sm:$0xff]
        %v4084 = vld [vmem:[#allocation2 + $0x9] sm:$0xff]
        %4086 = vrot.lane.b32.xlu0 %v4083, 16
        %v4087 = vpop.permute.xlu0 %4086
        %4090 = vrot.lane.b32.xlu0 %v4084, 32
        %v4091 = vpop.permute.xlu0 %4090
        %v4093 = vsel %vm165, %v4082, %v4087
        %v4094 = vsel %vm139, %v4093, %v4091
        %v4095 = vlaneseq
        %v4096 = vshrl.u32 %v4095, 7
        %v4097 = vsub.s32 0, %v4096
        %v4098 = vrot.slane %v4081, %v4097
        %v4100 = vsel %vm3085, %v4094, 0
        %4102 = vmatprep.subr.mxu0 0.0
        %4103 = vmatpush1.msra.mxu0 0.0
        %4104 = vmatprep.subr.mxu0 0.0
        %4105 = vmatpush1.msra.mxu0 0.0
        %4106 = vmatprep.subr.mxu0 0.0
        %4107 = vmatpush1.msra.mxu0 0.0
        %4108 = vmatprep.subr.mxu0 0.0
        %4109 = vmatpush1.msra.mxu0 0.0
        %4110 = vmatprep.subr.mxu0 0.0
        %4111 = vmatpush1.msra.mxu0 0.0
        %4112 = vmatprep.subr.mxu0 0.0
        %4113 = vmatpush1.msra.mxu0 0.0
        %4114 = vmatprep.subr.mxu0 0.0
        %4115 = vmatpush1.msra.mxu0 0.0
        %4116 = vmatprep.subr.mxu0 0.0
        %4117 = vmatpush1.msra.mxu0 0.0
        %4118 = vmatprep.subr.mxu0 0.0
        %4119 = vmatpush1.msra.mxu0 0.0
        %4120 = vmatprep.subr.mxu0 0.0
        %4121 = vmatpush1.msra.mxu0 0.0
        %4122 = vmatprep.subr.mxu0 0.0
        %v4123 = vand.u32 %v4080, 4294901760
        %4124 = vmatpush1.msra.mxu0 %v4123
        %4125 = vmatprep.subr.mxu0 0.0
        %v4126 = vand.u32 %v4079, 4294901760
        %4127 = vmatpush1.msra.mxu0 %v4126
        %4128 = vmatprep.subr.mxu0 0.0
        %v4129 = vand.u32 %v4078, 4294901760
        %4130 = vmatpush1.msra.mxu0 %v4129
        %4131 = vmatprep.subr.mxu0 0.0
        %v4132 = vand.u32 %v4077, 4294901760
        %4133 = vmatpush1.msra.mxu0 %v4132
        %4134 = vmatprep.subr.mxu0 0.0
        %v4135 = vand.u32 %v4076, 4294901760
        %4136 = vmatpush1.msra.mxu0 %v4135
        %4137 = vmatprep.subr.mxu0 0.0
        %v4138 = vand.u32 %v4075, 4294901760
        %4139 = vmatpush1.msra.mxu0 %v4138
        %4140 = vmatprep.subr.mxu0 0.0
        %4141 = vmatpush2.msra.mxu0 0.0
        %4142 = vmatprep.subr.mxu0 0.0
        %4143 = vmatpush2.msra.mxu0 0.0
        %4144 = vmatprep.subr.mxu0 0.0
        %4145 = vmatpush2.msra.mxu0 0.0
        %4146 = vmatprep.subr.mxu0 0.0
        %4147 = vmatpush2.msra.mxu0 0.0
        %4148 = vmatprep.subr.mxu0 0.0
        %4149 = vmatpush2.msra.mxu0 0.0
        %4150 = vmatprep.subr.mxu0 0.0
        %4151 = vmatpush2.msra.mxu0 0.0
        %4152 = vmatprep.subr.mxu0 0.0
        %4153 = vmatpush2.msra.mxu0 0.0
        %4154 = vmatprep.subr.mxu0 0.0
        %4155 = vmatpush2.msra.mxu0 0.0
        %4156 = vmatprep.subr.mxu0 0.0
        %4157 = vmatpush2.msra.mxu0 0.0
        %4158 = vmatprep.subr.mxu0 0.0
        %4159 = vmatpush2.msra.mxu0 0.0
        %4160 = vmatprep.subr.mxu0 0.0
        %4161 = vmatpush2.msra.mxu0 0.0
        %4162 = vmatprep.subr.mxu0 0.0
        %4163 = vmatpush2.msra.mxu0 0.0
        %4164 = vmatprep.subr.mxu0 0.0
        %4165 = vmatpush2.msra.mxu0 0.0
        %4166 = vmatprep.subr.mxu0 0.0
        %4167 = vmatpush2.msra.mxu0 0.0
        %4168 = vmatprep.subr.mxu0 0.0
        %4169 = vmatpush2.msra.mxu0 0.0
        %4170 = vmatprep.subr.mxu0 0.0
        %4171 = vmatpush2.msra.mxu0 0.0
        %4172 = vmatprep.mubr.f32.mxu0 0.0
        %v4173 = vand.u32 %v4100, 4294901760
        %v4174 = vsub.f32 %v4100, %v4173
        %v4175 = vand.u32 %v4174, 4294901760
        %v4176 = vsub.f32 %v4174, %v4175
        %v4177 = vand.u32 %v4176, 4294901760
        %4178 = vmatmul.mubr.f32.gmra.mxu0 %v4177
        %v4179 = vpop.f32.mrf.mxu0
        %v4180 = vadd.f32 %v4098, %v4179
        %v4181 = vpop.f32.mrf.mxu0
        %4182 = vdwg.mxu0
        %4183 = vmatprep.subr.mxu0 0.0
        %4184 = vmatpush1.msra.mxu0 0.0
        %4185 = vmatprep.subr.mxu0 0.0
        %4186 = vmatpush1.msra.mxu0 0.0
        %4187 = vmatprep.subr.mxu0 0.0
        %4188 = vmatpush1.msra.mxu0 0.0
        %4189 = vmatprep.subr.mxu0 0.0
        %4190 = vmatpush1.msra.mxu0 0.0
        %4191 = vmatprep.subr.mxu0 0.0
        %4192 = vmatpush1.msra.mxu0 0.0
        %4193 = vmatprep.subr.mxu0 0.0
        %4194 = vmatpush1.msra.mxu0 0.0
        %4195 = vmatprep.subr.mxu0 0.0
        %4196 = vmatpush1.msra.mxu0 0.0
        %4197 = vmatprep.subr.mxu0 0.0
        %4198 = vmatpush1.msra.mxu0 0.0
        %4199 = vmatprep.subr.mxu0 0.0
        %4200 = vmatpush1.msra.mxu0 0.0
        %4201 = vmatprep.subr.mxu0 0.0
        %4202 = vmatpush1.msra.mxu0 0.0
        %4203 = vmatprep.subr.mxu0 0.0
        %v4204 = vand.u32 %v4080, 4294901760
        %v4205 = vsub.f32 %v4080, %v4204
        %v4206 = vand.u32 %v4205, 4294901760
        %v4207 = vsub.f32 %v4205, %v4206
        %v4208 = vand.u32 %v4207, 4294901760
        %4209 = vmatpush1.msra.mxu0 %v4208
        %4210 = vmatprep.subr.mxu0 0.0
        %v4211 = vand.u32 %v4079, 4294901760
        %v4212 = vsub.f32 %v4079, %v4211
        %v4213 = vand.u32 %v4212, 4294901760
        %v4214 = vsub.f32 %v4212, %v4213
        %v4215 = vand.u32 %v4214, 4294901760
        %4216 = vmatpush1.msra.mxu0 %v4215
        %4217 = vmatprep.subr.mxu0 0.0
        %v4218 = vand.u32 %v4078, 4294901760
        %v4219 = vsub.f32 %v4078, %v4218
        %v4220 = vand.u32 %v4219, 4294901760
        %v4221 = vsub.f32 %v4219, %v4220
        %v4222 = vand.u32 %v4221, 4294901760
        %4223 = vmatpush1.msra.mxu0 %v4222
        %4224 = vmatprep.subr.mxu0 0.0
        %v4225 = vand.u32 %v4077, 4294901760
        %v4226 = vsub.f32 %v4077, %v4225
        %v4227 = vand.u32 %v4226, 4294901760
        %v4228 = vsub.f32 %v4226, %v4227
        %v4229 = vand.u32 %v4228, 4294901760
        %4230 = vmatpush1.msra.mxu0 %v4229
        %4231 = vmatprep.subr.mxu0 0.0
        %v4232 = vand.u32 %v4076, 4294901760
        %v4233 = vsub.f32 %v4076, %v4232
        %v4234 = vand.u32 %v4233, 4294901760
        %v4235 = vsub.f32 %v4233, %v4234
        %v4236 = vand.u32 %v4235, 4294901760
        %4237 = vmatpush1.msra.mxu0 %v4236
        %4238 = vmatprep.subr.mxu0 0.0
        %v4239 = vand.u32 %v4075, 4294901760
        %v4240 = vsub.f32 %v4075, %v4239
        %v4241 = vand.u32 %v4240, 4294901760
        %v4242 = vsub.f32 %v4240, %v4241
        %v4243 = vand.u32 %v4242, 4294901760
        %4244 = vmatpush1.msra.mxu0 %v4243
        %4245 = vmatprep.subr.mxu0 0.0
        %4246 = vmatpush2.msra.mxu0 0.0
        %4247 = vmatprep.subr.mxu0 0.0
        %4248 = vmatpush2.msra.mxu0 0.0
        %4249 = vmatprep.subr.mxu0 0.0
        %4250 = vmatpush2.msra.mxu0 0.0
        %4251 = vmatprep.subr.mxu0 0.0
        %4252 = vmatpush2.msra.mxu0 0.0
        %4253 = vmatprep.subr.mxu0 0.0
        %4254 = vmatpush2.msra.mxu0 0.0
        %4255 = vmatprep.subr.mxu0 0.0
        %4256 = vmatpush2.msra.mxu0 0.0
        %4257 = vmatprep.subr.mxu0 0.0
        %4258 = vmatpush2.msra.mxu0 0.0
        %4259 = vmatprep.subr.mxu0 0.0
        %4260 = vmatpush2.msra.mxu0 0.0
        %4261 = vmatprep.subr.mxu0 0.0
        %4262 = vmatpush2.msra.mxu0 0.0
        %4263 = vmatprep.subr.mxu0 0.0
        %4264 = vmatpush2.msra.mxu0 0.0
        %4265 = vmatprep.subr.mxu0 0.0
        %4266 = vmatpush2.msra.mxu0 0.0
        %4267 = vmatprep.subr.mxu0 0.0
        %4268 = vmatpush2.msra.mxu0 0.0
        %4269 = vmatprep.subr.mxu0 0.0
        %4270 = vmatpush2.msra.mxu0 0.0
        %4271 = vmatprep.subr.mxu0 0.0
        %4272 = vmatpush2.msra.mxu0 0.0
        %4273 = vmatprep.subr.mxu0 0.0
        %4274 = vmatpush2.msra.mxu0 0.0
        %4275 = vmatprep.subr.mxu0 0.0
        %4276 = vmatpush2.msra.mxu0 0.0
        %4277 = vmatprep.mubr.f32.mxu0 0.0
        %v4278 = vand.u32 %v4100, 4294901760
        %4279 = vmatmul.mubr.f32.gmra.mxu0 %v4278
        %v4280 = vpop.f32.mrf.mxu0
        %v4281 = vadd.f32 %v4180, %v4280
        %v4282 = vpop.f32.mrf.mxu0
        %4283 = vdwg.mxu0
        %4284 = vmatprep.subr.mxu0 0.0
        %4285 = vmatpush1.msra.mxu0 0.0
        %4286 = vmatprep.subr.mxu0 0.0
        %4287 = vmatpush1.msra.mxu0 0.0
        %4288 = vmatprep.subr.mxu0 0.0
        %4289 = vmatpush1.msra.mxu0 0.0
        %4290 = vmatprep.subr.mxu0 0.0
        %4291 = vmatpush1.msra.mxu0 0.0
        %4292 = vmatprep.subr.mxu0 0.0
        %4293 = vmatpush1.msra.mxu0 0.0
        %4294 = vmatprep.subr.mxu0 0.0
        %4295 = vmatpush1.msra.mxu0 0.0
        %4296 = vmatprep.subr.mxu0 0.0
        %4297 = vmatpush1.msra.mxu0 0.0
        %4298 = vmatprep.subr.mxu0 0.0
        %4299 = vmatpush1.msra.mxu0 0.0
        %4300 = vmatprep.subr.mxu0 0.0
        %4301 = vmatpush1.msra.mxu0 0.0
        %4302 = vmatprep.subr.mxu0 0.0
        %4303 = vmatpush1.msra.mxu0 0.0
        %4304 = vmatprep.subr.mxu0 0.0
        %v4305 = vand.u32 %v4080, 4294901760
        %v4306 = vsub.f32 %v4080, %v4305
        %4307 = vmatpush1.msra.mxu0 %v4306
        %4308 = vmatprep.subr.mxu0 0.0
        %v4309 = vand.u32 %v4079, 4294901760
        %v4310 = vsub.f32 %v4079, %v4309
        %4311 = vmatpush1.msra.mxu0 %v4310
        %4312 = vmatprep.subr.mxu0 0.0
        %v4313 = vand.u32 %v4078, 4294901760
        %v4314 = vsub.f32 %v4078, %v4313
        %4315 = vmatpush1.msra.mxu0 %v4314
        %4316 = vmatprep.subr.mxu0 0.0
        %v4317 = vand.u32 %v4077, 4294901760
        %v4318 = vsub.f32 %v4077, %v4317
        %4319 = vmatpush1.msra.mxu0 %v4318
        %4320 = vmatprep.subr.mxu0 0.0
        %v4321 = vand.u32 %v4076, 4294901760
        %v4322 = vsub.f32 %v4076, %v4321
        %4323 = vmatpush1.msra.mxu0 %v4322
        %4324 = vmatprep.subr.mxu0 0.0
        %v4325 = vand.u32 %v4075, 4294901760
        %v4326 = vsub.f32 %v4075, %v4325
        %4327 = vmatpush1.msra.mxu0 %v4326
        %4328 = vmatprep.subr.mxu0 0.0
        %4329 = vmatpush2.msra.mxu0 0.0
        %4330 = vmatprep.subr.mxu0 0.0
        %4331 = vmatpush2.msra.mxu0 0.0
        %4332 = vmatprep.subr.mxu0 0.0
        %4333 = vmatpush2.msra.mxu0 0.0
        %4334 = vmatprep.subr.mxu0 0.0
        %4335 = vmatpush2.msra.mxu0 0.0
        %4336 = vmatprep.subr.mxu0 0.0
        %4337 = vmatpush2.msra.mxu0 0.0
        %4338 = vmatprep.subr.mxu0 0.0
        %4339 = vmatpush2.msra.mxu0 0.0
        %4340 = vmatprep.subr.mxu0 0.0
        %4341 = vmatpush2.msra.mxu0 0.0
        %4342 = vmatprep.subr.mxu0 0.0
        %4343 = vmatpush2.msra.mxu0 0.0
        %4344 = vmatprep.subr.mxu0 0.0
        %4345 = vmatpush2.msra.mxu0 0.0
        %4346 = vmatprep.subr.mxu0 0.0
        %4347 = vmatpush2.msra.mxu0 0.0
        %4348 = vmatprep.subr.mxu0 0.0
        %4349 = vmatpush2.msra.mxu0 0.0
        %4350 = vmatprep.subr.mxu0 0.0
        %4351 = vmatpush2.msra.mxu0 0.0
        %4352 = vmatprep.subr.mxu0 0.0
        %4353 = vmatpush2.msra.mxu0 0.0
        %4354 = vmatprep.subr.mxu0 0.0
        %4355 = vmatpush2.msra.mxu0 0.0
        %4356 = vmatprep.subr.mxu0 0.0
        %4357 = vmatpush2.msra.mxu0 0.0
        %4358 = vmatprep.subr.mxu0 0.0
        %4359 = vmatpush2.msra.mxu0 0.0
        %4360 = vmatprep.mubr.f32.mxu0 0.0
        %v4361 = vand.u32 %v4100, 4294901760
        %v4362 = vsub.f32 %v4100, %v4361
        %4363 = vmatmul.mubr.f32.gmra.mxu0 %v4362
        %v4364 = vpop.f32.mrf.mxu0
        %v4365 = vadd.f32 %v4281, %v4364
        %v4366 = vpop.f32.mrf.mxu0
        %4367 = vdwg.mxu0
        %4368 = vmatprep.subr.mxu0 0.0
        %4369 = vmatpush1.msra.mxu0 0.0
        %4370 = vmatprep.subr.mxu0 0.0
        %4371 = vmatpush1.msra.mxu0 0.0
        %4372 = vmatprep.subr.mxu0 0.0
        %4373 = vmatpush1.msra.mxu0 0.0
        %4374 = vmatprep.subr.mxu0 0.0
        %4375 = vmatpush1.msra.mxu0 0.0
        %4376 = vmatprep.subr.mxu0 0.0
        %4377 = vmatpush1.msra.mxu0 0.0
        %4378 = vmatprep.subr.mxu0 0.0
        %4379 = vmatpush1.msra.mxu0 0.0
        %4380 = vmatprep.subr.mxu0 0.0
        %4381 = vmatpush1.msra.mxu0 0.0
        %4382 = vmatprep.subr.mxu0 0.0
        %4383 = vmatpush1.msra.mxu0 0.0
        %4384 = vmatprep.subr.mxu0 0.0
        %4385 = vmatpush1.msra.mxu0 0.0
        %4386 = vmatprep.subr.mxu0 0.0
        %4387 = vmatpush1.msra.mxu0 0.0
        %4388 = vmatprep.subr.mxu0 0.0
        %v4389 = vand.u32 %v4080, 4294901760
        %4390 = vmatpush1.msra.mxu0 %v4389
        %4391 = vmatprep.subr.mxu0 0.0
        %v4392 = vand.u32 %v4079, 4294901760
        %4393 = vmatpush1.msra.mxu0 %v4392
        %4394 = vmatprep.subr.mxu0 0.0
        %v4395 = vand.u32 %v4078, 4294901760
        %4396 = vmatpush1.msra.mxu0 %v4395
        %4397 = vmatprep.subr.mxu0 0.0
        %v4398 = vand.u32 %v4077, 4294901760
        %4399 = vmatpush1.msra.mxu0 %v4398
        %4400 = vmatprep.subr.mxu0 0.0
        %v4401 = vand.u32 %v4076, 4294901760
        %4402 = vmatpush1.msra.mxu0 %v4401
        %4403 = vmatprep.subr.mxu0 0.0
        %v4404 = vand.u32 %v4075, 4294901760
        %4405 = vmatpush1.msra.mxu0 %v4404
        %4406 = vmatprep.subr.mxu0 0.0
        %4407 = vmatpush2.msra.mxu0 0.0
        %4408 = vmatprep.subr.mxu0 0.0
        %4409 = vmatpush2.msra.mxu0 0.0
        %4410 = vmatprep.subr.mxu0 0.0
        %4411 = vmatpush2.msra.mxu0 0.0
        %4412 = vmatprep.subr.mxu0 0.0
        %4413 = vmatpush2.msra.mxu0 0.0
        %4414 = vmatprep.subr.mxu0 0.0
        %4415 = vmatpush2.msra.mxu0 0.0
        %4416 = vmatprep.subr.mxu0 0.0
        %4417 = vmatpush2.msra.mxu0 0.0
        %4418 = vmatprep.subr.mxu0 0.0
        %4419 = vmatpush2.msra.mxu0 0.0
        %4420 = vmatprep.subr.mxu0 0.0
        %4421 = vmatpush2.msra.mxu0 0.0
        %4422 = vmatprep.subr.mxu0 0.0
        %4423 = vmatpush2.msra.mxu0 0.0
        %4424 = vmatprep.subr.mxu0 0.0
        %4425 = vmatpush2.msra.mxu0 0.0
        %4426 = vmatprep.subr.mxu0 0.0
        %4427 = vmatpush2.msra.mxu0 0.0
        %4428 = vmatprep.subr.mxu0 0.0
        %4429 = vmatpush2.msra.mxu0 0.0
        %4430 = vmatprep.subr.mxu0 0.0
        %4431 = vmatpush2.msra.mxu0 0.0
        %4432 = vmatprep.subr.mxu0 0.0
        %4433 = vmatpush2.msra.mxu0 0.0
        %4434 = vmatprep.subr.mxu0 0.0
        %4435 = vmatpush2.msra.mxu0 0.0
        %4436 = vmatprep.subr.mxu0 0.0
        %4437 = vmatpush2.msra.mxu0 0.0
        %4438 = vmatprep.mubr.f32.mxu0 0.0
        %v4439 = vand.u32 %v4100, 4294901760
        %v4440 = vsub.f32 %v4100, %v4439
        %v4441 = vand.u32 %v4440, 4294901760
        %4442 = vmatmul.mubr.f32.gmra.mxu0 %v4441
        %v4443 = vpop.f32.mrf.mxu0
        %v4444 = vadd.f32 %v4365, %v4443
        %v4445 = vpop.f32.mrf.mxu0
        %4446 = vdwg.mxu0
        %4447 = vmatprep.subr.mxu0 0.0
        %4448 = vmatpush1.msra.mxu0 0.0
        %4449 = vmatprep.subr.mxu0 0.0
        %4450 = vmatpush1.msra.mxu0 0.0
        %4451 = vmatprep.subr.mxu0 0.0
        %4452 = vmatpush1.msra.mxu0 0.0
        %4453 = vmatprep.subr.mxu0 0.0
        %4454 = vmatpush1.msra.mxu0 0.0
        %4455 = vmatprep.subr.mxu0 0.0
        %4456 = vmatpush1.msra.mxu0 0.0
        %4457 = vmatprep.subr.mxu0 0.0
        %4458 = vmatpush1.msra.mxu0 0.0
        %4459 = vmatprep.subr.mxu0 0.0
        %4460 = vmatpush1.msra.mxu0 0.0
        %4461 = vmatprep.subr.mxu0 0.0
        %4462 = vmatpush1.msra.mxu0 0.0
        %4463 = vmatprep.subr.mxu0 0.0
        %4464 = vmatpush1.msra.mxu0 0.0
        %4465 = vmatprep.subr.mxu0 0.0
        %4466 = vmatpush1.msra.mxu0 0.0
        %4467 = vmatprep.subr.mxu0 0.0
        %v4468 = vand.u32 %v4080, 4294901760
        %v4469 = vsub.f32 %v4080, %v4468
        %v4470 = vand.u32 %v4469, 4294901760
        %4471 = vmatpush1.msra.mxu0 %v4470
        %4472 = vmatprep.subr.mxu0 0.0
        %v4473 = vand.u32 %v4079, 4294901760
        %v4474 = vsub.f32 %v4079, %v4473
        %v4475 = vand.u32 %v4474, 4294901760
        %4476 = vmatpush1.msra.mxu0 %v4475
        %4477 = vmatprep.subr.mxu0 0.0
        %v4478 = vand.u32 %v4078, 4294901760
        %v4479 = vsub.f32 %v4078, %v4478
        %v4480 = vand.u32 %v4479, 4294901760
        %4481 = vmatpush1.msra.mxu0 %v4480
        %4482 = vmatprep.subr.mxu0 0.0
        %v4483 = vand.u32 %v4077, 4294901760
        %v4484 = vsub.f32 %v4077, %v4483
        %v4485 = vand.u32 %v4484, 4294901760
        %4486 = vmatpush1.msra.mxu0 %v4485
        %4487 = vmatprep.subr.mxu0 0.0
        %v4488 = vand.u32 %v4076, 4294901760
        %v4489 = vsub.f32 %v4076, %v4488
        %v4490 = vand.u32 %v4489, 4294901760
        %4491 = vmatpush1.msra.mxu0 %v4490
        %4492 = vmatprep.subr.mxu0 0.0
        %v4493 = vand.u32 %v4075, 4294901760
        %v4494 = vsub.f32 %v4075, %v4493
        %v4495 = vand.u32 %v4494, 4294901760
        %4496 = vmatpush1.msra.mxu0 %v4495
        %4497 = vmatprep.subr.mxu0 0.0
        %4498 = vmatpush2.msra.mxu0 0.0
        %4499 = vmatprep.subr.mxu0 0.0
        %4500 = vmatpush2.msra.mxu0 0.0
        %4501 = vmatprep.subr.mxu0 0.0
        %4502 = vmatpush2.msra.mxu0 0.0
        %4503 = vmatprep.subr.mxu0 0.0
        %4504 = vmatpush2.msra.mxu0 0.0
        %4505 = vmatprep.subr.mxu0 0.0
        %4506 = vmatpush2.msra.mxu0 0.0
        %4507 = vmatprep.subr.mxu0 0.0
        %4508 = vmatpush2.msra.mxu0 0.0
        %4509 = vmatprep.subr.mxu0 0.0
        %4510 = vmatpush2.msra.mxu0 0.0
        %4511 = vmatprep.subr.mxu0 0.0
        %4512 = vmatpush2.msra.mxu0 0.0
        %4513 = vmatprep.subr.mxu0 0.0
        %4514 = vmatpush2.msra.mxu0 0.0
        %4515 = vmatprep.subr.mxu0 0.0
        %4516 = vmatpush2.msra.mxu0 0.0
        %4517 = vmatprep.subr.mxu0 0.0
        %4518 = vmatpush2.msra.mxu0 0.0
        %4519 = vmatprep.subr.mxu0 0.0
        %4520 = vmatpush2.msra.mxu0 0.0
        %4521 = vmatprep.subr.mxu0 0.0
        %4522 = vmatpush2.msra.mxu0 0.0
        %4523 = vmatprep.subr.mxu0 0.0
        %4524 = vmatpush2.msra.mxu0 0.0
        %4525 = vmatprep.subr.mxu0 0.0
        %4526 = vmatpush2.msra.mxu0 0.0
        %4527 = vmatprep.subr.mxu0 0.0
        %4528 = vmatpush2.msra.mxu0 0.0
        %4529 = vmatprep.mubr.f32.mxu0 0.0
        %v4530 = vand.u32 %v4100, 4294901760
        %4531 = vmatmul.mubr.f32.gmra.mxu0 %v4530
        %v4532 = vpop.f32.mrf.mxu0
        %v4533 = vadd.f32 %v4444, %v4532
        %v4534 = vpop.f32.mrf.mxu0
        %4535 = vdwg.mxu0
        %4536 = vmatprep.subr.mxu0 0.0
        %4537 = vmatpush1.msra.mxu0 0.0
        %4538 = vmatprep.subr.mxu0 0.0
        %4539 = vmatpush1.msra.mxu0 0.0
        %4540 = vmatprep.subr.mxu0 0.0
        %4541 = vmatpush1.msra.mxu0 0.0
        %4542 = vmatprep.subr.mxu0 0.0
        %4543 = vmatpush1.msra.mxu0 0.0
        %4544 = vmatprep.subr.mxu0 0.0
        %4545 = vmatpush1.msra.mxu0 0.0
        %4546 = vmatprep.subr.mxu0 0.0
        %4547 = vmatpush1.msra.mxu0 0.0
        %4548 = vmatprep.subr.mxu0 0.0
        %4549 = vmatpush1.msra.mxu0 0.0
        %4550 = vmatprep.subr.mxu0 0.0
        %4551 = vmatpush1.msra.mxu0 0.0
        %4552 = vmatprep.subr.mxu0 0.0
        %4553 = vmatpush1.msra.mxu0 0.0
        %4554 = vmatprep.subr.mxu0 0.0
        %4555 = vmatpush1.msra.mxu0 0.0
        %4556 = vmatprep.subr.mxu0 0.0
        %v4557 = vand.u32 %v4080, 4294901760
        %4558 = vmatpush1.msra.mxu0 %v4557
        %4559 = vmatprep.subr.mxu0 0.0
        %v4560 = vand.u32 %v4079, 4294901760
        %4561 = vmatpush1.msra.mxu0 %v4560
        %4562 = vmatprep.subr.mxu0 0.0
        %v4563 = vand.u32 %v4078, 4294901760
        %4564 = vmatpush1.msra.mxu0 %v4563
        %4565 = vmatprep.subr.mxu0 0.0
        %v4566 = vand.u32 %v4077, 4294901760
        %4567 = vmatpush1.msra.mxu0 %v4566
        %4568 = vmatprep.subr.mxu0 0.0
        %v4569 = vand.u32 %v4076, 4294901760
        %4570 = vmatpush1.msra.mxu0 %v4569
        %4571 = vmatprep.subr.mxu0 0.0
        %v4572 = vand.u32 %v4075, 4294901760
        %4573 = vmatpush1.msra.mxu0 %v4572
        %4574 = vmatprep.subr.mxu0 0.0
        %4575 = vmatpush2.msra.mxu0 0.0
        %4576 = vmatprep.subr.mxu0 0.0
        %4577 = vmatpush2.msra.mxu0 0.0
        %4578 = vmatprep.subr.mxu0 0.0
        %4579 = vmatpush2.msra.mxu0 0.0
        %4580 = vmatprep.subr.mxu0 0.0
        %4581 = vmatpush2.msra.mxu0 0.0
        %4582 = vmatprep.subr.mxu0 0.0
        %4583 = vmatpush2.msra.mxu0 0.0
        %4584 = vmatprep.subr.mxu0 0.0
        %4585 = vmatpush2.msra.mxu0 0.0
        %4586 = vmatprep.subr.mxu0 0.0
        %4587 = vmatpush2.msra.mxu0 0.0
        %4588 = vmatprep.subr.mxu0 0.0
        %4589 = vmatpush2.msra.mxu0 0.0
        %4590 = vmatprep.subr.mxu0 0.0
        %4591 = vmatpush2.msra.mxu0 0.0
        %4592 = vmatprep.subr.mxu0 0.0
        %4593 = vmatpush2.msra.mxu0 0.0
        %4594 = vmatprep.subr.mxu0 0.0
        %4595 = vmatpush2.msra.mxu0 0.0
        %4596 = vmatprep.subr.mxu0 0.0
        %4597 = vmatpush2.msra.mxu0 0.0
        %4598 = vmatprep.subr.mxu0 0.0
        %4599 = vmatpush2.msra.mxu0 0.0
        %4600 = vmatprep.subr.mxu0 0.0
        %4601 = vmatpush2.msra.mxu0 0.0
        %4602 = vmatprep.subr.mxu0 0.0
        %4603 = vmatpush2.msra.mxu0 0.0
        %4604 = vmatprep.subr.mxu0 0.0
        %4605 = vmatpush2.msra.mxu0 0.0
        %4606 = vmatprep.mubr.f32.mxu0 0.0
        %v4607 = vand.u32 %v4100, 4294901760
        %4608 = vmatmul.mubr.f32.gmra.mxu0 %v4607
        %v4609 = vpop.f32.mrf.mxu0
        %v4610 = vadd.f32 %v4533, %v4609
        %v4611 = vpop.f32.mrf.mxu0
        %4612 = vdwg.mxu0
        %v4613 = vmax.f32 %v4610, 0.0
        %4614 = vst.msk [vmem:[#allocation2 + $0x8] sm:$0xff] %vm165, %v4613
        %v4615 = vld [vmem:[%s1 + $0x128] sm:$0xff]
        %v4616 = vld [vmem:[%s1 + $0x130] sm:$0xff]
        %v4617 = vld [vmem:[%s1 + $0x138] sm:$0x1]
        %v4618 = vld [vmem:[#allocation2 + $0x8] sm:$0xff]
        %v4619 = vlaneseq
        %v4620 = vshrl.u32 %v4619, 7
        %v4621 = vsub.s32 0, %v4620
        %v4622 = vrot.slane %v4617, %v4621
        %v4624 = vsel %vm165, %v4618, 0
        %4626 = vmatprep.subr.mxu0 0.0
        %4627 = vmatpush1.msra.mxu0 0.0
        %4628 = vmatprep.subr.mxu0 0.0
        %4629 = vmatpush1.msra.mxu0 0.0
        %4630 = vmatprep.subr.mxu0 0.0
        %4631 = vmatpush1.msra.mxu0 0.0
        %4632 = vmatprep.subr.mxu0 0.0
        %4633 = vmatpush1.msra.mxu0 0.0
        %4634 = vmatprep.subr.mxu0 0.0
        %4635 = vmatpush1.msra.mxu0 0.0
        %4636 = vmatprep.subr.mxu0 0.0
        %4637 = vmatpush1.msra.mxu0 0.0
        %4638 = vmatprep.subr.mxu0 0.0
        %4639 = vmatpush1.msra.mxu0 0.0
        %4640 = vmatprep.subr.mxu0 0.0
        %4641 = vmatpush1.msra.mxu0 0.0
        %4642 = vmatprep.subr.mxu0 0.0
        %4643 = vmatpush1.msra.mxu0 0.0
        %4644 = vmatprep.subr.mxu0 0.0
        %4645 = vmatpush1.msra.mxu0 0.0
        %4646 = vmatprep.subr.mxu0 0.0
        %4647 = vmatpush1.msra.mxu0 0.0
        %4648 = vmatprep.subr.mxu0 0.0
        %4649 = vmatpush1.msra.mxu0 0.0
        %4650 = vmatprep.subr.mxu0 0.0
        %4651 = vmatpush1.msra.mxu0 0.0
        %4652 = vmatprep.subr.mxu0 0.0
        %4653 = vmatpush1.msra.mxu0 0.0
        %4654 = vmatprep.subr.mxu0 0.0
        %v4655 = vand.u32 %v4616, 4294901760
        %4656 = vmatpush1.msra.mxu0 %v4655
        %4657 = vmatprep.subr.mxu0 0.0
        %v4658 = vand.u32 %v4615, 4294901760
        %4659 = vmatpush1.msra.mxu0 %v4658
        %4660 = vmatprep.subr.mxu0 0.0
        %4661 = vmatpush2.msra.mxu0 0.0
        %4662 = vmatprep.subr.mxu0 0.0
        %4663 = vmatpush2.msra.mxu0 0.0
        %4664 = vmatprep.subr.mxu0 0.0
        %4665 = vmatpush2.msra.mxu0 0.0
        %4666 = vmatprep.subr.mxu0 0.0
        %4667 = vmatpush2.msra.mxu0 0.0
        %4668 = vmatprep.subr.mxu0 0.0
        %4669 = vmatpush2.msra.mxu0 0.0
        %4670 = vmatprep.subr.mxu0 0.0
        %4671 = vmatpush2.msra.mxu0 0.0
        %4672 = vmatprep.subr.mxu0 0.0
        %4673 = vmatpush2.msra.mxu0 0.0
        %4674 = vmatprep.subr.mxu0 0.0
        %4675 = vmatpush2.msra.mxu0 0.0
        %4676 = vmatprep.subr.mxu0 0.0
        %4677 = vmatpush2.msra.mxu0 0.0
        %4678 = vmatprep.subr.mxu0 0.0
        %4679 = vmatpush2.msra.mxu0 0.0
        %4680 = vmatprep.subr.mxu0 0.0
        %4681 = vmatpush2.msra.mxu0 0.0
        %4682 = vmatprep.subr.mxu0 0.0
        %4683 = vmatpush2.msra.mxu0 0.0
        %4684 = vmatprep.subr.mxu0 0.0
        %4685 = vmatpush2.msra.mxu0 0.0
        %4686 = vmatprep.subr.mxu0 0.0
        %4687 = vmatpush2.msra.mxu0 0.0
        %4688 = vmatprep.subr.mxu0 0.0
        %4689 = vmatpush2.msra.mxu0 0.0
        %4690 = vmatprep.subr.mxu0 0.0
        %4691 = vmatpush2.msra.mxu0 0.0
        %4692 = vmatprep.mubr.f32.mxu0 0.0
        %v4693 = vand.u32 %v4624, 4294901760
        %v4694 = vsub.f32 %v4624, %v4693
        %v4695 = vand.u32 %v4694, 4294901760
        %v4696 = vsub.f32 %v4694, %v4695
        %v4697 = vand.u32 %v4696, 4294901760
        %4698 = vmatmul.mubr.f32.gmra.mxu0 %v4697
        %v4699 = vpop.f32.mrf.mxu0
        %v4700 = vadd.f32 %v4622, %v4699
        %v4701 = vpop.f32.mrf.mxu0
        %4702 = vdwg.mxu0
        %4703 = vmatprep.subr.mxu0 0.0
        %4704 = vmatpush1.msra.mxu0 0.0
        %4705 = vmatprep.subr.mxu0 0.0
        %4706 = vmatpush1.msra.mxu0 0.0
        %4707 = vmatprep.subr.mxu0 0.0
        %4708 = vmatpush1.msra.mxu0 0.0
        %4709 = vmatprep.subr.mxu0 0.0
        %4710 = vmatpush1.msra.mxu0 0.0
        %4711 = vmatprep.subr.mxu0 0.0
        %4712 = vmatpush1.msra.mxu0 0.0
        %4713 = vmatprep.subr.mxu0 0.0
        %4714 = vmatpush1.msra.mxu0 0.0
        %4715 = vmatprep.subr.mxu0 0.0
        %4716 = vmatpush1.msra.mxu0 0.0
        %4717 = vmatprep.subr.mxu0 0.0
        %4718 = vmatpush1.msra.mxu0 0.0
        %4719 = vmatprep.subr.mxu0 0.0
        %4720 = vmatpush1.msra.mxu0 0.0
        %4721 = vmatprep.subr.mxu0 0.0
        %4722 = vmatpush1.msra.mxu0 0.0
        %4723 = vmatprep.subr.mxu0 0.0
        %4724 = vmatpush1.msra.mxu0 0.0
        %4725 = vmatprep.subr.mxu0 0.0
        %4726 = vmatpush1.msra.mxu0 0.0
        %4727 = vmatprep.subr.mxu0 0.0
        %4728 = vmatpush1.msra.mxu0 0.0
        %4729 = vmatprep.subr.mxu0 0.0
        %4730 = vmatpush1.msra.mxu0 0.0
        %4731 = vmatprep.subr.mxu0 0.0
        %v4732 = vand.u32 %v4616, 4294901760
        %v4733 = vsub.f32 %v4616, %v4732
        %v4734 = vand.u32 %v4733, 4294901760
        %v4735 = vsub.f32 %v4733, %v4734
        %v4736 = vand.u32 %v4735, 4294901760
        %4737 = vmatpush1.msra.mxu0 %v4736
        %4738 = vmatprep.subr.mxu0 0.0
        %v4739 = vand.u32 %v4615, 4294901760
        %v4740 = vsub.f32 %v4615, %v4739
        %v4741 = vand.u32 %v4740, 4294901760
        %v4742 = vsub.f32 %v4740, %v4741
        %v4743 = vand.u32 %v4742, 4294901760
        %4744 = vmatpush1.msra.mxu0 %v4743
        %4745 = vmatprep.subr.mxu0 0.0
        %4746 = vmatpush2.msra.mxu0 0.0
        %4747 = vmatprep.subr.mxu0 0.0
        %4748 = vmatpush2.msra.mxu0 0.0
        %4749 = vmatprep.subr.mxu0 0.0
        %4750 = vmatpush2.msra.mxu0 0.0
        %4751 = vmatprep.subr.mxu0 0.0
        %4752 = vmatpush2.msra.mxu0 0.0
        %4753 = vmatprep.subr.mxu0 0.0
        %4754 = vmatpush2.msra.mxu0 0.0
        %4755 = vmatprep.subr.mxu0 0.0
        %4756 = vmatpush2.msra.mxu0 0.0
        %4757 = vmatprep.subr.mxu0 0.0
        %4758 = vmatpush2.msra.mxu0 0.0
        %4759 = vmatprep.subr.mxu0 0.0
        %4760 = vmatpush2.msra.mxu0 0.0
        %4761 = vmatprep.subr.mxu0 0.0
        %4762 = vmatpush2.msra.mxu0 0.0
        %4763 = vmatprep.subr.mxu0 0.0
        %4764 = vmatpush2.msra.mxu0 0.0
        %4765 = vmatprep.subr.mxu0 0.0
        %4766 = vmatpush2.msra.mxu0 0.0
        %4767 = vmatprep.subr.mxu0 0.0
        %4768 = vmatpush2.msra.mxu0 0.0
        %4769 = vmatprep.subr.mxu0 0.0
        %4770 = vmatpush2.msra.mxu0 0.0
        %4771 = vmatprep.subr.mxu0 0.0
        %4772 = vmatpush2.msra.mxu0 0.0
        %4773 = vmatprep.subr.mxu0 0.0
        %4774 = vmatpush2.msra.mxu0 0.0
        %4775 = vmatprep.subr.mxu0 0.0
        %4776 = vmatpush2.msra.mxu0 0.0
        %4777 = vmatprep.mubr.f32.mxu0 0.0
        %v4778 = vand.u32 %v4624, 4294901760
        %4779 = vmatmul.mubr.f32.gmra.mxu0 %v4778
        %v4780 = vpop.f32.mrf.mxu0
        %v4781 = vadd.f32 %v4700, %v4780
        %v4782 = vpop.f32.mrf.mxu0
        %4783 = vdwg.mxu0
        %4784 = vmatprep.subr.mxu0 0.0
        %4785 = vmatpush1.msra.mxu0 0.0
        %4786 = vmatprep.subr.mxu0 0.0
        %4787 = vmatpush1.msra.mxu0 0.0
        %4788 = vmatprep.subr.mxu0 0.0
        %4789 = vmatpush1.msra.mxu0 0.0
        %4790 = vmatprep.subr.mxu0 0.0
        %4791 = vmatpush1.msra.mxu0 0.0
        %4792 = vmatprep.subr.mxu0 0.0
        %4793 = vmatpush1.msra.mxu0 0.0
        %4794 = vmatprep.subr.mxu0 0.0
        %4795 = vmatpush1.msra.mxu0 0.0
        %4796 = vmatprep.subr.mxu0 0.0
        %4797 = vmatpush1.msra.mxu0 0.0
        %4798 = vmatprep.subr.mxu0 0.0
        %4799 = vmatpush1.msra.mxu0 0.0
        %4800 = vmatprep.subr.mxu0 0.0
        %4801 = vmatpush1.msra.mxu0 0.0
        %4802 = vmatprep.subr.mxu0 0.0
        %4803 = vmatpush1.msra.mxu0 0.0
        %4804 = vmatprep.subr.mxu0 0.0
        %4805 = vmatpush1.msra.mxu0 0.0
        %4806 = vmatprep.subr.mxu0 0.0
        %4807 = vmatpush1.msra.mxu0 0.0
        %4808 = vmatprep.subr.mxu0 0.0
        %4809 = vmatpush1.msra.mxu0 0.0
        %4810 = vmatprep.subr.mxu0 0.0
        %4811 = vmatpush1.msra.mxu0 0.0
        %4812 = vmatprep.subr.mxu0 0.0
        %v4813 = vand.u32 %v4616, 4294901760
        %v4814 = vsub.f32 %v4616, %v4813
        %4815 = vmatpush1.msra.mxu0 %v4814
        %4816 = vmatprep.subr.mxu0 0.0
        %v4817 = vand.u32 %v4615, 4294901760
        %v4818 = vsub.f32 %v4615, %v4817
        %4819 = vmatpush1.msra.mxu0 %v4818
        %4820 = vmatprep.subr.mxu0 0.0
        %4821 = vmatpush2.msra.mxu0 0.0
        %4822 = vmatprep.subr.mxu0 0.0
        %4823 = vmatpush2.msra.mxu0 0.0
        %4824 = vmatprep.subr.mxu0 0.0
        %4825 = vmatpush2.msra.mxu0 0.0
        %4826 = vmatprep.subr.mxu0 0.0
        %4827 = vmatpush2.msra.mxu0 0.0
        %4828 = vmatprep.subr.mxu0 0.0
        %4829 = vmatpush2.msra.mxu0 0.0
        %4830 = vmatprep.subr.mxu0 0.0
        %4831 = vmatpush2.msra.mxu0 0.0
        %4832 = vmatprep.subr.mxu0 0.0
        %4833 = vmatpush2.msra.mxu0 0.0
        %4834 = vmatprep.subr.mxu0 0.0
        %4835 = vmatpush2.msra.mxu0 0.0
        %4836 = vmatprep.subr.mxu0 0.0
        %4837 = vmatpush2.msra.mxu0 0.0
        %4838 = vmatprep.subr.mxu0 0.0
        %4839 = vmatpush2.msra.mxu0 0.0
        %4840 = vmatprep.subr.mxu0 0.0
        %4841 = vmatpush2.msra.mxu0 0.0
        %4842 = vmatprep.subr.mxu0 0.0
        %4843 = vmatpush2.msra.mxu0 0.0
        %4844 = vmatprep.subr.mxu0 0.0
        %4845 = vmatpush2.msra.mxu0 0.0
        %4846 = vmatprep.subr.mxu0 0.0
        %4847 = vmatpush2.msra.mxu0 0.0
        %4848 = vmatprep.subr.mxu0 0.0
        %4849 = vmatpush2.msra.mxu0 0.0
        %4850 = vmatprep.subr.mxu0 0.0
        %4851 = vmatpush2.msra.mxu0 0.0
        %4852 = vmatprep.mubr.f32.mxu0 0.0
        %v4853 = vand.u32 %v4624, 4294901760
        %v4854 = vsub.f32 %v4624, %v4853
        %4855 = vmatmul.mubr.f32.gmra.mxu0 %v4854
        %v4856 = vpop.f32.mrf.mxu0
        %v4857 = vadd.f32 %v4781, %v4856
        %v4858 = vpop.f32.mrf.mxu0
        %4859 = vdwg.mxu0
        %4860 = vmatprep.subr.mxu0 0.0
        %4861 = vmatpush1.msra.mxu0 0.0
        %4862 = vmatprep.subr.mxu0 0.0
        %4863 = vmatpush1.msra.mxu0 0.0
        %4864 = vmatprep.subr.mxu0 0.0
        %4865 = vmatpush1.msra.mxu0 0.0
        %4866 = vmatprep.subr.mxu0 0.0
        %4867 = vmatpush1.msra.mxu0 0.0
        %4868 = vmatprep.subr.mxu0 0.0
        %4869 = vmatpush1.msra.mxu0 0.0
        %4870 = vmatprep.subr.mxu0 0.0
        %4871 = vmatpush1.msra.mxu0 0.0
        %4872 = vmatprep.subr.mxu0 0.0
        %4873 = vmatpush1.msra.mxu0 0.0
        %4874 = vmatprep.subr.mxu0 0.0
        %4875 = vmatpush1.msra.mxu0 0.0
        %4876 = vmatprep.subr.mxu0 0.0
        %4877 = vmatpush1.msra.mxu0 0.0
        %4878 = vmatprep.subr.mxu0 0.0
        %4879 = vmatpush1.msra.mxu0 0.0
        %4880 = vmatprep.subr.mxu0 0.0
        %4881 = vmatpush1.msra.mxu0 0.0
        %4882 = vmatprep.subr.mxu0 0.0
        %4883 = vmatpush1.msra.mxu0 0.0
        %4884 = vmatprep.subr.mxu0 0.0
        %4885 = vmatpush1.msra.mxu0 0.0
        %4886 = vmatprep.subr.mxu0 0.0
        %4887 = vmatpush1.msra.mxu0 0.0
        %4888 = vmatprep.subr.mxu0 0.0
        %v4889 = vand.u32 %v4616, 4294901760
        %4890 = vmatpush1.msra.mxu0 %v4889
        %4891 = vmatprep.subr.mxu0 0.0
        %v4892 = vand.u32 %v4615, 4294901760
        %4893 = vmatpush1.msra.mxu0 %v4892
        %4894 = vmatprep.subr.mxu0 0.0
        %4895 = vmatpush2.msra.mxu0 0.0
        %4896 = vmatprep.subr.mxu0 0.0
        %4897 = vmatpush2.msra.mxu0 0.0
        %4898 = vmatprep.subr.mxu0 0.0
        %4899 = vmatpush2.msra.mxu0 0.0
        %4900 = vmatprep.subr.mxu0 0.0
        %4901 = vmatpush2.msra.mxu0 0.0
        %4902 = vmatprep.subr.mxu0 0.0
        %4903 = vmatpush2.msra.mxu0 0.0
        %4904 = vmatprep.subr.mxu0 0.0
        %4905 = vmatpush2.msra.mxu0 0.0
        %4906 = vmatprep.subr.mxu0 0.0
        %4907 = vmatpush2.msra.mxu0 0.0
        %4908 = vmatprep.subr.mxu0 0.0
        %4909 = vmatpush2.msra.mxu0 0.0
        %4910 = vmatprep.subr.mxu0 0.0
        %4911 = vmatpush2.msra.mxu0 0.0
        %4912 = vmatprep.subr.mxu0 0.0
        %4913 = vmatpush2.msra.mxu0 0.0
        %4914 = vmatprep.subr.mxu0 0.0
        %4915 = vmatpush2.msra.mxu0 0.0
        %4916 = vmatprep.subr.mxu0 0.0
        %4917 = vmatpush2.msra.mxu0 0.0
        %4918 = vmatprep.subr.mxu0 0.0
        %4919 = vmatpush2.msra.mxu0 0.0
        %4920 = vmatprep.subr.mxu0 0.0
        %4921 = vmatpush2.msra.mxu0 0.0
        %4922 = vmatprep.subr.mxu0 0.0
        %4923 = vmatpush2.msra.mxu0 0.0
        %4924 = vmatprep.subr.mxu0 0.0
        %4925 = vmatpush2.msra.mxu0 0.0
        %4926 = vmatprep.mubr.f32.mxu0 0.0
        %v4927 = vand.u32 %v4624, 4294901760
        %v4928 = vsub.f32 %v4624, %v4927
        %v4929 = vand.u32 %v4928, 4294901760
        %4930 = vmatmul.mubr.f32.gmra.mxu0 %v4929
        %v4931 = vpop.f32.mrf.mxu0
        %v4932 = vadd.f32 %v4857, %v4931
        %v4933 = vpop.f32.mrf.mxu0
        %4934 = vdwg.mxu0
        %4935 = vmatprep.subr.mxu0 0.0
        %4936 = vmatpush1.msra.mxu0 0.0
        %4937 = vmatprep.subr.mxu0 0.0
        %4938 = vmatpush1.msra.mxu0 0.0
        %4939 = vmatprep.subr.mxu0 0.0
        %4940 = vmatpush1.msra.mxu0 0.0
        %4941 = vmatprep.subr.mxu0 0.0
        %4942 = vmatpush1.msra.mxu0 0.0
        %4943 = vmatprep.subr.mxu0 0.0
        %4944 = vmatpush1.msra.mxu0 0.0
        %4945 = vmatprep.subr.mxu0 0.0
        %4946 = vmatpush1.msra.mxu0 0.0
        %4947 = vmatprep.subr.mxu0 0.0
        %4948 = vmatpush1.msra.mxu0 0.0
        %4949 = vmatprep.subr.mxu0 0.0
        %4950 = vmatpush1.msra.mxu0 0.0
        %4951 = vmatprep.subr.mxu0 0.0
        %4952 = vmatpush1.msra.mxu0 0.0
        %4953 = vmatprep.subr.mxu0 0.0
        %4954 = vmatpush1.msra.mxu0 0.0
        %4955 = vmatprep.subr.mxu0 0.0
        %4956 = vmatpush1.msra.mxu0 0.0
        %4957 = vmatprep.subr.mxu0 0.0
        %4958 = vmatpush1.msra.mxu0 0.0
        %4959 = vmatprep.subr.mxu0 0.0
        %4960 = vmatpush1.msra.mxu0 0.0
        %4961 = vmatprep.subr.mxu0 0.0
        %4962 = vmatpush1.msra.mxu0 0.0
        %4963 = vmatprep.subr.mxu0 0.0
        %v4964 = vand.u32 %v4616, 4294901760
        %v4965 = vsub.f32 %v4616, %v4964
        %v4966 = vand.u32 %v4965, 4294901760
        %4967 = vmatpush1.msra.mxu0 %v4966
        %4968 = vmatprep.subr.mxu0 0.0
        %v4969 = vand.u32 %v4615, 4294901760
        %v4970 = vsub.f32 %v4615, %v4969
        %v4971 = vand.u32 %v4970, 4294901760
        %4972 = vmatpush1.msra.mxu0 %v4971
        %4973 = vmatprep.subr.mxu0 0.0
        %4974 = vmatpush2.msra.mxu0 0.0
        %4975 = vmatprep.subr.mxu0 0.0
        %4976 = vmatpush2.msra.mxu0 0.0
        %4977 = vmatprep.subr.mxu0 0.0
        %4978 = vmatpush2.msra.mxu0 0.0
        %4979 = vmatprep.subr.mxu0 0.0
        %4980 = vmatpush2.msra.mxu0 0.0
        %4981 = vmatprep.subr.mxu0 0.0
        %4982 = vmatpush2.msra.mxu0 0.0
        %4983 = vmatprep.subr.mxu0 0.0
        %4984 = vmatpush2.msra.mxu0 0.0
        %4985 = vmatprep.subr.mxu0 0.0
        %4986 = vmatpush2.msra.mxu0 0.0
        %4987 = vmatprep.subr.mxu0 0.0
        %4988 = vmatpush2.msra.mxu0 0.0
        %4989 = vmatprep.subr.mxu0 0.0
        %4990 = vmatpush2.msra.mxu0 0.0
        %4991 = vmatprep.subr.mxu0 0.0
        %4992 = vmatpush2.msra.mxu0 0.0
        %4993 = vmatprep.subr.mxu0 0.0
        %4994 = vmatpush2.msra.mxu0 0.0
        %4995 = vmatprep.subr.mxu0 0.0
        %4996 = vmatpush2.msra.mxu0 0.0
        %4997 = vmatprep.subr.mxu0 0.0
        %4998 = vmatpush2.msra.mxu0 0.0
        %4999 = vmatprep.subr.mxu0 0.0
        %5000 = vmatpush2.msra.mxu0 0.0
        %5001 = vmatprep.subr.mxu0 0.0
        %5002 = vmatpush2.msra.mxu0 0.0
        %5003 = vmatprep.subr.mxu0 0.0
        %5004 = vmatpush2.msra.mxu0 0.0
        %5005 = vmatprep.mubr.f32.mxu0 0.0
        %v5006 = vand.u32 %v4624, 4294901760
        %5007 = vmatmul.mubr.f32.gmra.mxu0 %v5006
        %v5008 = vpop.f32.mrf.mxu0
        %v5009 = vadd.f32 %v4932, %v5008
        %v5010 = vpop.f32.mrf.mxu0
        %5011 = vdwg.mxu0
        %5012 = vmatprep.subr.mxu0 0.0
        %5013 = vmatpush1.msra.mxu0 0.0
        %5014 = vmatprep.subr.mxu0 0.0
        %5015 = vmatpush1.msra.mxu0 0.0
        %5016 = vmatprep.subr.mxu0 0.0
        %5017 = vmatpush1.msra.mxu0 0.0
        %5018 = vmatprep.subr.mxu0 0.0
        %5019 = vmatpush1.msra.mxu0 0.0
        %5020 = vmatprep.subr.mxu0 0.0
        %5021 = vmatpush1.msra.mxu0 0.0
        %5022 = vmatprep.subr.mxu0 0.0
        %5023 = vmatpush1.msra.mxu0 0.0
        %5024 = vmatprep.subr.mxu0 0.0
        %5025 = vmatpush1.msra.mxu0 0.0
        %5026 = vmatprep.subr.mxu0 0.0
        %5027 = vmatpush1.msra.mxu0 0.0
        %5028 = vmatprep.subr.mxu0 0.0
        %5029 = vmatpush1.msra.mxu0 0.0
        %5030 = vmatprep.subr.mxu0 0.0
        %5031 = vmatpush1.msra.mxu0 0.0
        %5032 = vmatprep.subr.mxu0 0.0
        %5033 = vmatpush1.msra.mxu0 0.0
        %5034 = vmatprep.subr.mxu0 0.0
        %5035 = vmatpush1.msra.mxu0 0.0
        %5036 = vmatprep.subr.mxu0 0.0
        %5037 = vmatpush1.msra.mxu0 0.0
        %5038 = vmatprep.subr.mxu0 0.0
        %5039 = vmatpush1.msra.mxu0 0.0
        %5040 = vmatprep.subr.mxu0 0.0
        %v5041 = vand.u32 %v4616, 4294901760
        %5042 = vmatpush1.msra.mxu0 %v5041
        %5043 = vmatprep.subr.mxu0 0.0
        %v5044 = vand.u32 %v4615, 4294901760
        %5045 = vmatpush1.msra.mxu0 %v5044
        %5046 = vmatprep.subr.mxu0 0.0
        %5047 = vmatpush2.msra.mxu0 0.0
        %5048 = vmatprep.subr.mxu0 0.0
        %5049 = vmatpush2.msra.mxu0 0.0
        %5050 = vmatprep.subr.mxu0 0.0
        %5051 = vmatpush2.msra.mxu0 0.0
        %5052 = vmatprep.subr.mxu0 0.0
        %5053 = vmatpush2.msra.mxu0 0.0
        %5054 = vmatprep.subr.mxu0 0.0
        %5055 = vmatpush2.msra.mxu0 0.0
        %5056 = vmatprep.subr.mxu0 0.0
        %5057 = vmatpush2.msra.mxu0 0.0
        %5058 = vmatprep.subr.mxu0 0.0
        %5059 = vmatpush2.msra.mxu0 0.0
        %5060 = vmatprep.subr.mxu0 0.0
        %5061 = vmatpush2.msra.mxu0 0.0
        %5062 = vmatprep.subr.mxu0 0.0
        %5063 = vmatpush2.msra.mxu0 0.0
        %5064 = vmatprep.subr.mxu0 0.0
        %5065 = vmatpush2.msra.mxu0 0.0
        %5066 = vmatprep.subr.mxu0 0.0
        %5067 = vmatpush2.msra.mxu0 0.0
        %5068 = vmatprep.subr.mxu0 0.0
        %5069 = vmatpush2.msra.mxu0 0.0
        %5070 = vmatprep.subr.mxu0 0.0
        %5071 = vmatpush2.msra.mxu0 0.0
        %5072 = vmatprep.subr.mxu0 0.0
        %5073 = vmatpush2.msra.mxu0 0.0
        %5074 = vmatprep.subr.mxu0 0.0
        %5075 = vmatpush2.msra.mxu0 0.0
        %5076 = vmatprep.subr.mxu0 0.0
        %5077 = vmatpush2.msra.mxu0 0.0
        %5078 = vmatprep.mubr.f32.mxu0 0.0
        %v5079 = vand.u32 %v4624, 4294901760
        %5080 = vmatmul.mubr.f32.gmra.mxu0 %v5079
        %v5081 = vpop.f32.mrf.mxu0
        %v5082 = vadd.f32 %v5009, %v5081
        %v5083 = vpop.f32.mrf.mxu0
        %5084 = vdwg.mxu0
        %v5085 = vadd.f32 %v4072, %v5082
        %5086 = vst.msk [vmem:[#allocation2 + $0x8] sm:$0xff] %vm165, %v5085
        %v5087 = vld [vmem:[%s1 + $0x140] sm:$0xff]
        %v5088 = vld [vmem:[%s1 + $0x148] sm:$0xff]
        %v5089 = vld [vmem:[%s1 + $0x150] sm:$0xff]
        %v5090 = vld [vmem:[%s1 + $0x158] sm:$0xff]
        %v5091 = vld [vmem:[%s1 + $0x160] sm:$0xff]
        %v5092 = vld [vmem:[%s1 + $0x168] sm:$0xff]
        %v5093 = vld [vmem:[%s1 + $0x170] sm:$0x1]
        %v5094 = vld [vmem:[#allocation2 + $0x7] sm:$0xff]
        %v5095 = vld [vmem:[#allocation2 + $0x8] sm:$0xff]
        %v5096 = vld [vmem:[#allocation2 + $0x9] sm:$0xff]
        %5098 = vrot.lane.b32.xlu0 %v5095, 16
        %v5099 = vpop.permute.xlu0 %5098
        %5102 = vrot.lane.b32.xlu0 %v5096, 32
        %v5103 = vpop.permute.xlu0 %5102
        %v5105 = vsel %vm165, %v5094, %v5099
        %v5106 = vsel %vm139, %v5105, %v5103
        %v5107 = vlaneseq
        %v5108 = vshrl.u32 %v5107, 7
        %v5109 = vsub.s32 0, %v5108
        %v5110 = vrot.slane %v5093, %v5109
        %v5112 = vsel %vm3085, %v5106, 0
        %5114 = vmatprep.subr.mxu0 0.0
        %5115 = vmatpush1.msra.mxu0 0.0
        %5116 = vmatprep.subr.mxu0 0.0
        %5117 = vmatpush1.msra.mxu0 0.0
        %5118 = vmatprep.subr.mxu0 0.0
        %5119 = vmatpush1.msra.mxu0 0.0
        %5120 = vmatprep.subr.mxu0 0.0
        %5121 = vmatpush1.msra.mxu0 0.0
        %5122 = vmatprep.subr.mxu0 0.0
        %5123 = vmatpush1.msra.mxu0 0.0
        %5124 = vmatprep.subr.mxu0 0.0
        %5125 = vmatpush1.msra.mxu0 0.0
        %5126 = vmatprep.subr.mxu0 0.0
        %5127 = vmatpush1.msra.mxu0 0.0
        %5128 = vmatprep.subr.mxu0 0.0
        %5129 = vmatpush1.msra.mxu0 0.0
        %5130 = vmatprep.subr.mxu0 0.0
        %5131 = vmatpush1.msra.mxu0 0.0
        %5132 = vmatprep.subr.mxu0 0.0
        %5133 = vmatpush1.msra.mxu0 0.0
        %5134 = vmatprep.subr.mxu0 0.0
        %v5135 = vand.u32 %v5092, 4294901760
        %5136 = vmatpush1.msra.mxu0 %v5135
        %5137 = vmatprep.subr.mxu0 0.0
        %v5138 = vand.u32 %v5091, 4294901760
        %5139 = vmatpush1.msra.mxu0 %v5138
        %5140 = vmatprep.subr.mxu0 0.0
        %v5141 = vand.u32 %v5090, 4294901760
        %5142 = vmatpush1.msra.mxu0 %v5141
        %5143 = vmatprep.subr.mxu0 0.0
        %v5144 = vand.u32 %v5089, 4294901760
        %5145 = vmatpush1.msra.mxu0 %v5144
        %5146 = vmatprep.subr.mxu0 0.0
        %v5147 = vand.u32 %v5088, 4294901760
        %5148 = vmatpush1.msra.mxu0 %v5147
        %5149 = vmatprep.subr.mxu0 0.0
        %v5150 = vand.u32 %v5087, 4294901760
        %5151 = vmatpush1.msra.mxu0 %v5150
        %5152 = vmatprep.subr.mxu0 0.0
        %5153 = vmatpush2.msra.mxu0 0.0
        %5154 = vmatprep.subr.mxu0 0.0
        %5155 = vmatpush2.msra.mxu0 0.0
        %5156 = vmatprep.subr.mxu0 0.0
        %5157 = vmatpush2.msra.mxu0 0.0
        %5158 = vmatprep.subr.mxu0 0.0
        %5159 = vmatpush2.msra.mxu0 0.0
        %5160 = vmatprep.subr.mxu0 0.0
        %5161 = vmatpush2.msra.mxu0 0.0
        %5162 = vmatprep.subr.mxu0 0.0
        %5163 = vmatpush2.msra.mxu0 0.0
        %5164 = vmatprep.subr.mxu0 0.0
        %5165 = vmatpush2.msra.mxu0 0.0
        %5166 = vmatprep.subr.mxu0 0.0
        %5167 = vmatpush2.msra.mxu0 0.0
        %5168 = vmatprep.subr.mxu0 0.0
        %5169 = vmatpush2.msra.mxu0 0.0
        %5170 = vmatprep.subr.mxu0 0.0
        %5171 = vmatpush2.msra.mxu0 0.0
        %5172 = vmatprep.subr.mxu0 0.0
        %5173 = vmatpush2.msra.mxu0 0.0
        %5174 = vmatprep.subr.mxu0 0.0
        %5175 = vmatpush2.msra.mxu0 0.0
        %5176 = vmatprep.subr.mxu0 0.0
        %5177 = vmatpush2.msra.mxu0 0.0
        %5178 = vmatprep.subr.mxu0 0.0
        %5179 = vmatpush2.msra.mxu0 0.0
        %5180 = vmatprep.subr.mxu0 0.0
        %5181 = vmatpush2.msra.mxu0 0.0
        %5182 = vmatprep.subr.mxu0 0.0
        %5183 = vmatpush2.msra.mxu0 0.0
        %5184 = vmatprep.mubr.f32.mxu0 0.0
        %v5185 = vand.u32 %v5112, 4294901760
        %v5186 = vsub.f32 %v5112, %v5185
        %v5187 = vand.u32 %v5186, 4294901760
        %v5188 = vsub.f32 %v5186, %v5187
        %v5189 = vand.u32 %v5188, 4294901760
        %5190 = vmatmul.mubr.f32.gmra.mxu0 %v5189
        %v5191 = vpop.f32.mrf.mxu0
        %v5192 = vadd.f32 %v5110, %v5191
        %v5193 = vpop.f32.mrf.mxu0
        %5194 = vdwg.mxu0
        %5195 = vmatprep.subr.mxu0 0.0
        %5196 = vmatpush1.msra.mxu0 0.0
        %5197 = vmatprep.subr.mxu0 0.0
        %5198 = vmatpush1.msra.mxu0 0.0
        %5199 = vmatprep.subr.mxu0 0.0
        %5200 = vmatpush1.msra.mxu0 0.0
        %5201 = vmatprep.subr.mxu0 0.0
        %5202 = vmatpush1.msra.mxu0 0.0
        %5203 = vmatprep.subr.mxu0 0.0
        %5204 = vmatpush1.msra.mxu0 0.0
        %5205 = vmatprep.subr.mxu0 0.0
        %5206 = vmatpush1.msra.mxu0 0.0
        %5207 = vmatprep.subr.mxu0 0.0
        %5208 = vmatpush1.msra.mxu0 0.0
        %5209 = vmatprep.subr.mxu0 0.0
        %5210 = vmatpush1.msra.mxu0 0.0
        %5211 = vmatprep.subr.mxu0 0.0
        %5212 = vmatpush1.msra.mxu0 0.0
        %5213 = vmatprep.subr.mxu0 0.0
        %5214 = vmatpush1.msra.mxu0 0.0
        %5215 = vmatprep.subr.mxu0 0.0
        %v5216 = vand.u32 %v5092, 4294901760
        %v5217 = vsub.f32 %v5092, %v5216
        %v5218 = vand.u32 %v5217, 4294901760
        %v5219 = vsub.f32 %v5217, %v5218
        %v5220 = vand.u32 %v5219, 4294901760
        %5221 = vmatpush1.msra.mxu0 %v5220
        %5222 = vmatprep.subr.mxu0 0.0
        %v5223 = vand.u32 %v5091, 4294901760
        %v5224 = vsub.f32 %v5091, %v5223
        %v5225 = vand.u32 %v5224, 4294901760
        %v5226 = vsub.f32 %v5224, %v5225
        %v5227 = vand.u32 %v5226, 4294901760
        %5228 = vmatpush1.msra.mxu0 %v5227
        %5229 = vmatprep.subr.mxu0 0.0
        %v5230 = vand.u32 %v5090, 4294901760
        %v5231 = vsub.f32 %v5090, %v5230
        %v5232 = vand.u32 %v5231, 4294901760
        %v5233 = vsub.f32 %v5231, %v5232
        %v5234 = vand.u32 %v5233, 4294901760
        %5235 = vmatpush1.msra.mxu0 %v5234
        %5236 = vmatprep.subr.mxu0 0.0
        %v5237 = vand.u32 %v5089, 4294901760
        %v5238 = vsub.f32 %v5089, %v5237
        %v5239 = vand.u32 %v5238, 4294901760
        %v5240 = vsub.f32 %v5238, %v5239
        %v5241 = vand.u32 %v5240, 4294901760
        %5242 = vmatpush1.msra.mxu0 %v5241
        %5243 = vmatprep.subr.mxu0 0.0
        %v5244 = vand.u32 %v5088, 4294901760
        %v5245 = vsub.f32 %v5088, %v5244
        %v5246 = vand.u32 %v5245, 4294901760
        %v5247 = vsub.f32 %v5245, %v5246
        %v5248 = vand.u32 %v5247, 4294901760
        %5249 = vmatpush1.msra.mxu0 %v5248
        %5250 = vmatprep.subr.mxu0 0.0
        %v5251 = vand.u32 %v5087, 4294901760
        %v5252 = vsub.f32 %v5087, %v5251
        %v5253 = vand.u32 %v5252, 4294901760
        %v5254 = vsub.f32 %v5252, %v5253
        %v5255 = vand.u32 %v5254, 4294901760
        %5256 = vmatpush1.msra.mxu0 %v5255
        %5257 = vmatprep.subr.mxu0 0.0
        %5258 = vmatpush2.msra.mxu0 0.0
        %5259 = vmatprep.subr.mxu0 0.0
        %5260 = vmatpush2.msra.mxu0 0.0
        %5261 = vmatprep.subr.mxu0 0.0
        %5262 = vmatpush2.msra.mxu0 0.0
        %5263 = vmatprep.subr.mxu0 0.0
        %5264 = vmatpush2.msra.mxu0 0.0
        %5265 = vmatprep.subr.mxu0 0.0
        %5266 = vmatpush2.msra.mxu0 0.0
        %5267 = vmatprep.subr.mxu0 0.0
        %5268 = vmatpush2.msra.mxu0 0.0
        %5269 = vmatprep.subr.mxu0 0.0
        %5270 = vmatpush2.msra.mxu0 0.0
        %5271 = vmatprep.subr.mxu0 0.0
        %5272 = vmatpush2.msra.mxu0 0.0
        %5273 = vmatprep.subr.mxu0 0.0
        %5274 = vmatpush2.msra.mxu0 0.0
        %5275 = vmatprep.subr.mxu0 0.0
        %5276 = vmatpush2.msra.mxu0 0.0
        %5277 = vmatprep.subr.mxu0 0.0
        %5278 = vmatpush2.msra.mxu0 0.0
        %5279 = vmatprep.subr.mxu0 0.0
        %5280 = vmatpush2.msra.mxu0 0.0
        %5281 = vmatprep.subr.mxu0 0.0
        %5282 = vmatpush2.msra.mxu0 0.0
        %5283 = vmatprep.subr.mxu0 0.0
        %5284 = vmatpush2.msra.mxu0 0.0
        %5285 = vmatprep.subr.mxu0 0.0
        %5286 = vmatpush2.msra.mxu0 0.0
        %5287 = vmatprep.subr.mxu0 0.0
        %5288 = vmatpush2.msra.mxu0 0.0
        %5289 = vmatprep.mubr.f32.mxu0 0.0
        %v5290 = vand.u32 %v5112, 4294901760
        %5291 = vmatmul.mubr.f32.gmra.mxu0 %v5290
        %v5292 = vpop.f32.mrf.mxu0
        %v5293 = vadd.f32 %v5192, %v5292
        %v5294 = vpop.f32.mrf.mxu0
        %5295 = vdwg.mxu0
        %5296 = vmatprep.subr.mxu0 0.0
        %5297 = vmatpush1.msra.mxu0 0.0
        %5298 = vmatprep.subr.mxu0 0.0
        %5299 = vmatpush1.msra.mxu0 0.0
        %5300 = vmatprep.subr.mxu0 0.0
        %5301 = vmatpush1.msra.mxu0 0.0
        %5302 = vmatprep.subr.mxu0 0.0
        %5303 = vmatpush1.msra.mxu0 0.0
        %5304 = vmatprep.subr.mxu0 0.0
        %5305 = vmatpush1.msra.mxu0 0.0
        %5306 = vmatprep.subr.mxu0 0.0
        %5307 = vmatpush1.msra.mxu0 0.0
        %5308 = vmatprep.subr.mxu0 0.0
        %5309 = vmatpush1.msra.mxu0 0.0
        %5310 = vmatprep.subr.mxu0 0.0
        %5311 = vmatpush1.msra.mxu0 0.0
        %5312 = vmatprep.subr.mxu0 0.0
        %5313 = vmatpush1.msra.mxu0 0.0
        %5314 = vmatprep.subr.mxu0 0.0
        %5315 = vmatpush1.msra.mxu0 0.0
        %5316 = vmatprep.subr.mxu0 0.0
        %v5317 = vand.u32 %v5092, 4294901760
        %v5318 = vsub.f32 %v5092, %v5317
        %5319 = vmatpush1.msra.mxu0 %v5318
        %5320 = vmatprep.subr.mxu0 0.0
        %v5321 = vand.u32 %v5091, 4294901760
        %v5322 = vsub.f32 %v5091, %v5321
        %5323 = vmatpush1.msra.mxu0 %v5322
        %5324 = vmatprep.subr.mxu0 0.0
        %v5325 = vand.u32 %v5090, 4294901760
        %v5326 = vsub.f32 %v5090, %v5325
        %5327 = vmatpush1.msra.mxu0 %v5326
        %5328 = vmatprep.subr.mxu0 0.0
        %v5329 = vand.u32 %v5089, 4294901760
        %v5330 = vsub.f32 %v5089, %v5329
        %5331 = vmatpush1.msra.mxu0 %v5330
        %5332 = vmatprep.subr.mxu0 0.0
        %v5333 = vand.u32 %v5088, 4294901760
        %v5334 = vsub.f32 %v5088, %v5333
        %5335 = vmatpush1.msra.mxu0 %v5334
        %5336 = vmatprep.subr.mxu0 0.0
        %v5337 = vand.u32 %v5087, 4294901760
        %v5338 = vsub.f32 %v5087, %v5337
        %5339 = vmatpush1.msra.mxu0 %v5338
        %5340 = vmatprep.subr.mxu0 0.0
        %5341 = vmatpush2.msra.mxu0 0.0
        %5342 = vmatprep.subr.mxu0 0.0
        %5343 = vmatpush2.msra.mxu0 0.0
        %5344 = vmatprep.subr.mxu0 0.0
        %5345 = vmatpush2.msra.mxu0 0.0
        %5346 = vmatprep.subr.mxu0 0.0
        %5347 = vmatpush2.msra.mxu0 0.0
        %5348 = vmatprep.subr.mxu0 0.0
        %5349 = vmatpush2.msra.mxu0 0.0
        %5350 = vmatprep.subr.mxu0 0.0
        %5351 = vmatpush2.msra.mxu0 0.0
        %5352 = vmatprep.subr.mxu0 0.0
        %5353 = vmatpush2.msra.mxu0 0.0
        %5354 = vmatprep.subr.mxu0 0.0
        %5355 = vmatpush2.msra.mxu0 0.0
        %5356 = vmatprep.subr.mxu0 0.0
        %5357 = vmatpush2.msra.mxu0 0.0
        %5358 = vmatprep.subr.mxu0 0.0
        %5359 = vmatpush2.msra.mxu0 0.0
        %5360 = vmatprep.subr.mxu0 0.0
        %5361 = vmatpush2.msra.mxu0 0.0
        %5362 = vmatprep.subr.mxu0 0.0
        %5363 = vmatpush2.msra.mxu0 0.0
        %5364 = vmatprep.subr.mxu0 0.0
        %5365 = vmatpush2.msra.mxu0 0.0
        %5366 = vmatprep.subr.mxu0 0.0
        %5367 = vmatpush2.msra.mxu0 0.0
        %5368 = vmatprep.subr.mxu0 0.0
        %5369 = vmatpush2.msra.mxu0 0.0
        %5370 = vmatprep.subr.mxu0 0.0
        %5371 = vmatpush2.msra.mxu0 0.0
        %5372 = vmatprep.mubr.f32.mxu0 0.0
        %v5373 = vand.u32 %v5112, 4294901760
        %v5374 = vsub.f32 %v5112, %v5373
        %5375 = vmatmul.mubr.f32.gmra.mxu0 %v5374
        %v5376 = vpop.f32.mrf.mxu0
        %v5377 = vadd.f32 %v5293, %v5376
        %v5378 = vpop.f32.mrf.mxu0
        %5379 = vdwg.mxu0
        %5380 = vmatprep.subr.mxu0 0.0
        %5381 = vmatpush1.msra.mxu0 0.0
        %5382 = vmatprep.subr.mxu0 0.0
        %5383 = vmatpush1.msra.mxu0 0.0
        %5384 = vmatprep.subr.mxu0 0.0
        %5385 = vmatpush1.msra.mxu0 0.0
        %5386 = vmatprep.subr.mxu0 0.0
        %5387 = vmatpush1.msra.mxu0 0.0
        %5388 = vmatprep.subr.mxu0 0.0
        %5389 = vmatpush1.msra.mxu0 0.0
        %5390 = vmatprep.subr.mxu0 0.0
        %5391 = vmatpush1.msra.mxu0 0.0
        %5392 = vmatprep.subr.mxu0 0.0
        %5393 = vmatpush1.msra.mxu0 0.0
        %5394 = vmatprep.subr.mxu0 0.0
        %5395 = vmatpush1.msra.mxu0 0.0
        %5396 = vmatprep.subr.mxu0 0.0
        %5397 = vmatpush1.msra.mxu0 0.0
        %5398 = vmatprep.subr.mxu0 0.0
        %5399 = vmatpush1.msra.mxu0 0.0
        %5400 = vmatprep.subr.mxu0 0.0
        %v5401 = vand.u32 %v5092, 4294901760
        %5402 = vmatpush1.msra.mxu0 %v5401
        %5403 = vmatprep.subr.mxu0 0.0
        %v5404 = vand.u32 %v5091, 4294901760
        %5405 = vmatpush1.msra.mxu0 %v5404
        %5406 = vmatprep.subr.mxu0 0.0
        %v5407 = vand.u32 %v5090, 4294901760
        %5408 = vmatpush1.msra.mxu0 %v5407
        %5409 = vmatprep.subr.mxu0 0.0
        %v5410 = vand.u32 %v5089, 4294901760
        %5411 = vmatpush1.msra.mxu0 %v5410
        %5412 = vmatprep.subr.mxu0 0.0
        %v5413 = vand.u32 %v5088, 4294901760
        %5414 = vmatpush1.msra.mxu0 %v5413
        %5415 = vmatprep.subr.mxu0 0.0
        %v5416 = vand.u32 %v5087, 4294901760
        %5417 = vmatpush1.msra.mxu0 %v5416
        %5418 = vmatprep.subr.mxu0 0.0
        %5419 = vmatpush2.msra.mxu0 0.0
        %5420 = vmatprep.subr.mxu0 0.0
        %5421 = vmatpush2.msra.mxu0 0.0
        %5422 = vmatprep.subr.mxu0 0.0
        %5423 = vmatpush2.msra.mxu0 0.0
        %5424 = vmatprep.subr.mxu0 0.0
        %5425 = vmatpush2.msra.mxu0 0.0
        %5426 = vmatprep.subr.mxu0 0.0
        %5427 = vmatpush2.msra.mxu0 0.0
        %5428 = vmatprep.subr.mxu0 0.0
        %5429 = vmatpush2.msra.mxu0 0.0
        %5430 = vmatprep.subr.mxu0 0.0
        %5431 = vmatpush2.msra.mxu0 0.0
        %5432 = vmatprep.subr.mxu0 0.0
        %5433 = vmatpush2.msra.mxu0 0.0
        %5434 = vmatprep.subr.mxu0 0.0
        %5435 = vmatpush2.msra.mxu0 0.0
        %5436 = vmatprep.subr.mxu0 0.0
        %5437 = vmatpush2.msra.mxu0 0.0
        %5438 = vmatprep.subr.mxu0 0.0
        %5439 = vmatpush2.msra.mxu0 0.0
        %5440 = vmatprep.subr.mxu0 0.0
        %5441 = vmatpush2.msra.mxu0 0.0
        %5442 = vmatprep.subr.mxu0 0.0
        %5443 = vmatpush2.msra.mxu0 0.0
        %5444 = vmatprep.subr.mxu0 0.0
        %5445 = vmatpush2.msra.mxu0 0.0
        %5446 = vmatprep.subr.mxu0 0.0
        %5447 = vmatpush2.msra.mxu0 0.0
        %5448 = vmatprep.subr.mxu0 0.0
        %5449 = vmatpush2.msra.mxu0 0.0
        %5450 = vmatprep.mubr.f32.mxu0 0.0
        %v5451 = vand.u32 %v5112, 4294901760
        %v5452 = vsub.f32 %v5112, %v5451
        %v5453 = vand.u32 %v5452, 4294901760
        %5454 = vmatmul.mubr.f32.gmra.mxu0 %v5453
        %v5455 = vpop.f32.mrf.mxu0
        %v5456 = vadd.f32 %v5377, %v5455
        %v5457 = vpop.f32.mrf.mxu0
        %5458 = vdwg.mxu0
        %5459 = vmatprep.subr.mxu0 0.0
        %5460 = vmatpush1.msra.mxu0 0.0
        %5461 = vmatprep.subr.mxu0 0.0
        %5462 = vmatpush1.msra.mxu0 0.0
        %5463 = vmatprep.subr.mxu0 0.0
        %5464 = vmatpush1.msra.mxu0 0.0
        %5465 = vmatprep.subr.mxu0 0.0
        %5466 = vmatpush1.msra.mxu0 0.0
        %5467 = vmatprep.subr.mxu0 0.0
        %5468 = vmatpush1.msra.mxu0 0.0
        %5469 = vmatprep.subr.mxu0 0.0
        %5470 = vmatpush1.msra.mxu0 0.0
        %5471 = vmatprep.subr.mxu0 0.0
        %5472 = vmatpush1.msra.mxu0 0.0
        %5473 = vmatprep.subr.mxu0 0.0
        %5474 = vmatpush1.msra.mxu0 0.0
        %5475 = vmatprep.subr.mxu0 0.0
        %5476 = vmatpush1.msra.mxu0 0.0
        %5477 = vmatprep.subr.mxu0 0.0
        %5478 = vmatpush1.msra.mxu0 0.0
        %5479 = vmatprep.subr.mxu0 0.0
        %v5480 = vand.u32 %v5092, 4294901760
        %v5481 = vsub.f32 %v5092, %v5480
        %v5482 = vand.u32 %v5481, 4294901760
        %5483 = vmatpush1.msra.mxu0 %v5482
        %5484 = vmatprep.subr.mxu0 0.0
        %v5485 = vand.u32 %v5091, 4294901760
        %v5486 = vsub.f32 %v5091, %v5485
        %v5487 = vand.u32 %v5486, 4294901760
        %5488 = vmatpush1.msra.mxu0 %v5487
        %5489 = vmatprep.subr.mxu0 0.0
        %v5490 = vand.u32 %v5090, 4294901760
        %v5491 = vsub.f32 %v5090, %v5490
        %v5492 = vand.u32 %v5491, 4294901760
        %5493 = vmatpush1.msra.mxu0 %v5492
        %5494 = vmatprep.subr.mxu0 0.0
        %v5495 = vand.u32 %v5089, 4294901760
        %v5496 = vsub.f32 %v5089, %v5495
        %v5497 = vand.u32 %v5496, 4294901760
        %5498 = vmatpush1.msra.mxu0 %v5497
        %5499 = vmatprep.subr.mxu0 0.0
        %v5500 = vand.u32 %v5088, 4294901760
        %v5501 = vsub.f32 %v5088, %v5500
        %v5502 = vand.u32 %v5501, 4294901760
        %5503 = vmatpush1.msra.mxu0 %v5502
        %5504 = vmatprep.subr.mxu0 0.0
        %v5505 = vand.u32 %v5087, 4294901760
        %v5506 = vsub.f32 %v5087, %v5505
        %v5507 = vand.u32 %v5506, 4294901760
        %5508 = vmatpush1.msra.mxu0 %v5507
        %5509 = vmatprep.subr.mxu0 0.0
        %5510 = vmatpush2.msra.mxu0 0.0
        %5511 = vmatprep.subr.mxu0 0.0
        %5512 = vmatpush2.msra.mxu0 0.0
        %5513 = vmatprep.subr.mxu0 0.0
        %5514 = vmatpush2.msra.mxu0 0.0
        %5515 = vmatprep.subr.mxu0 0.0
        %5516 = vmatpush2.msra.mxu0 0.0
        %5517 = vmatprep.subr.mxu0 0.0
        %5518 = vmatpush2.msra.mxu0 0.0
        %5519 = vmatprep.subr.mxu0 0.0
        %5520 = vmatpush2.msra.mxu0 0.0
        %5521 = vmatprep.subr.mxu0 0.0
        %5522 = vmatpush2.msra.mxu0 0.0
        %5523 = vmatprep.subr.mxu0 0.0
        %5524 = vmatpush2.msra.mxu0 0.0
        %5525 = vmatprep.subr.mxu0 0.0
        %5526 = vmatpush2.msra.mxu0 0.0
        %5527 = vmatprep.subr.mxu0 0.0
        %5528 = vmatpush2.msra.mxu0 0.0
        %5529 = vmatprep.subr.mxu0 0.0
        %5530 = vmatpush2.msra.mxu0 0.0
        %5531 = vmatprep.subr.mxu0 0.0
        %5532 = vmatpush2.msra.mxu0 0.0
        %5533 = vmatprep.subr.mxu0 0.0
        %5534 = vmatpush2.msra.mxu0 0.0
        %5535 = vmatprep.subr.mxu0 0.0
        %5536 = vmatpush2.msra.mxu0 0.0
        %5537 = vmatprep.subr.mxu0 0.0
        %5538 = vmatpush2.msra.mxu0 0.0
        %5539 = vmatprep.subr.mxu0 0.0
        %5540 = vmatpush2.msra.mxu0 0.0
        %5541 = vmatprep.mubr.f32.mxu0 0.0
        %v5542 = vand.u32 %v5112, 4294901760
        %5543 = vmatmul.mubr.f32.gmra.mxu0 %v5542
        %v5544 = vpop.f32.mrf.mxu0
        %v5545 = vadd.f32 %v5456, %v5544
        %v5546 = vpop.f32.mrf.mxu0
        %5547 = vdwg.mxu0
        %5548 = vmatprep.subr.mxu0 0.0
        %5549 = vmatpush1.msra.mxu0 0.0
        %5550 = vmatprep.subr.mxu0 0.0
        %5551 = vmatpush1.msra.mxu0 0.0
        %5552 = vmatprep.subr.mxu0 0.0
        %5553 = vmatpush1.msra.mxu0 0.0
        %5554 = vmatprep.subr.mxu0 0.0
        %5555 = vmatpush1.msra.mxu0 0.0
        %5556 = vmatprep.subr.mxu0 0.0
        %5557 = vmatpush1.msra.mxu0 0.0
        %5558 = vmatprep.subr.mxu0 0.0
        %5559 = vmatpush1.msra.mxu0 0.0
        %5560 = vmatprep.subr.mxu0 0.0
        %5561 = vmatpush1.msra.mxu0 0.0
        %5562 = vmatprep.subr.mxu0 0.0
        %5563 = vmatpush1.msra.mxu0 0.0
        %5564 = vmatprep.subr.mxu0 0.0
        %5565 = vmatpush1.msra.mxu0 0.0
        %5566 = vmatprep.subr.mxu0 0.0
        %5567 = vmatpush1.msra.mxu0 0.0
        %5568 = vmatprep.subr.mxu0 0.0
        %v5569 = vand.u32 %v5092, 4294901760
        %5570 = vmatpush1.msra.mxu0 %v5569
        %5571 = vmatprep.subr.mxu0 0.0
        %v5572 = vand.u32 %v5091, 4294901760
        %5573 = vmatpush1.msra.mxu0 %v5572
        %5574 = vmatprep.subr.mxu0 0.0
        %v5575 = vand.u32 %v5090, 4294901760
        %5576 = vmatpush1.msra.mxu0 %v5575
        %5577 = vmatprep.subr.mxu0 0.0
        %v5578 = vand.u32 %v5089, 4294901760
        %5579 = vmatpush1.msra.mxu0 %v5578
        %5580 = vmatprep.subr.mxu0 0.0
        %v5581 = vand.u32 %v5088, 4294901760
        %5582 = vmatpush1.msra.mxu0 %v5581
        %5583 = vmatprep.subr.mxu0 0.0
        %v5584 = vand.u32 %v5087, 4294901760
        %5585 = vmatpush1.msra.mxu0 %v5584
        %5586 = vmatprep.subr.mxu0 0.0
        %5587 = vmatpush2.msra.mxu0 0.0
        %5588 = vmatprep.subr.mxu0 0.0
        %5589 = vmatpush2.msra.mxu0 0.0
        %5590 = vmatprep.subr.mxu0 0.0
        %5591 = vmatpush2.msra.mxu0 0.0
        %5592 = vmatprep.subr.mxu0 0.0
        %5593 = vmatpush2.msra.mxu0 0.0
        %5594 = vmatprep.subr.mxu0 0.0
        %5595 = vmatpush2.msra.mxu0 0.0
        %5596 = vmatprep.subr.mxu0 0.0
        %5597 = vmatpush2.msra.mxu0 0.0
        %5598 = vmatprep.subr.mxu0 0.0
        %5599 = vmatpush2.msra.mxu0 0.0
        %5600 = vmatprep.subr.mxu0 0.0
        %5601 = vmatpush2.msra.mxu0 0.0
        %5602 = vmatprep.subr.mxu0 0.0
        %5603 = vmatpush2.msra.mxu0 0.0
        %5604 = vmatprep.subr.mxu0 0.0
        %5605 = vmatpush2.msra.mxu0 0.0
        %5606 = vmatprep.subr.mxu0 0.0
        %5607 = vmatpush2.msra.mxu0 0.0
        %5608 = vmatprep.subr.mxu0 0.0
        %5609 = vmatpush2.msra.mxu0 0.0
        %5610 = vmatprep.subr.mxu0 0.0
        %5611 = vmatpush2.msra.mxu0 0.0
        %5612 = vmatprep.subr.mxu0 0.0
        %5613 = vmatpush2.msra.mxu0 0.0
        %5614 = vmatprep.subr.mxu0 0.0
        %5615 = vmatpush2.msra.mxu0 0.0
        %5616 = vmatprep.subr.mxu0 0.0
        %5617 = vmatpush2.msra.mxu0 0.0
        %5618 = vmatprep.mubr.f32.mxu0 0.0
        %v5619 = vand.u32 %v5112, 4294901760
        %5620 = vmatmul.mubr.f32.gmra.mxu0 %v5619
        %v5621 = vpop.f32.mrf.mxu0
        %v5622 = vadd.f32 %v5545, %v5621
        %v5623 = vpop.f32.mrf.mxu0
        %5624 = vdwg.mxu0
        %5625 = vst.msk [vmem:[#allocation2 + $0x8] sm:$0xff] %vm139, %v5622
        %v5626 = vld [vmem:[%s1 + $0x178] sm:$0xff]
        %v5627 = vld [vmem:[%s1 + $0x180] sm:$0xff]
        %v5628 = vld [vmem:[%s1 + $0x188] sm:$0xff]
        %v5629 = vld [vmem:[%s1 + $0x190] sm:$0xff]
        %v5630 = vld [vmem:[%s1 + $0x198] sm:$0xff]
        %v5631 = vld [vmem:[%s1 + $0x1a0] sm:$0xff]
        %v5632 = vld [vmem:[%s1 + $0x1a8] sm:$0xff]
        %v5633 = vld [vmem:[%s1 + $0x1b0] sm:$0xff]
        %v5634 = vld [vmem:[%s1 + $0x1b8] sm:$0xff]
        %v5635 = vld [vmem:[%s1 + $0x1c0] sm:$0xff]
        %v5636 = vld [vmem:[%s1 + $0x1c8] sm:$0xff]
        %v5637 = vld [vmem:[%s1 + $0x1d0] sm:$0xff]
        %v5638 = vld [vmem:[%s1 + $0x1d8] sm:$0xff]
        %v5639 = vld [vmem:[%s1 + $0x1e0] sm:$0xff]
        %v5640 = vld [vmem:[%s1 + $0x1e8] sm:$0xff]
        %v5641 = vld [vmem:[%s1 + $0x1f0] sm:$0xff]
        %v5642 = vld [vmem:[%s1 + $0x1f8] sm:$0x1]
        %v5643 = vld [vmem:[#allocation2 + $0x8] sm:$0xff]
        %v5644 = vld [vmem:[#allocation2 + $0x7] sm:$0xff]
        %5646 = vrot.lane.b32.xlu0 %v5644, 32
        %v5647 = vpop.permute.xlu0 %5646
        %v5649 = vsel %vm139, %v5643, %v5647
        %v5650 = vlaneseq
        %v5651 = vshrl.u32 %v5650, 7
        %v5652 = vsub.s32 0, %v5651
        %v5653 = vrot.slane %v5642, %v5652
        %vm5654 = vcmask 523264
        %v5656 = vsel %vm5654, %v5649, 0
        %5658 = vmatprep.subr.mxu0 0.0
        %5659 = vmatpush1.msra.mxu0 0.0
        %5660 = vmatprep.subr.mxu0 0.0
        %5661 = vmatpush1.msra.mxu0 0.0
        %5662 = vmatprep.subr.mxu0 0.0
        %5663 = vmatpush1.msra.mxu0 0.0
        %5664 = vmatprep.subr.mxu0 0.0
        %5665 = vmatpush1.msra.mxu0 0.0
        %5666 = vmatprep.subr.mxu0 0.0
        %5667 = vmatpush1.msra.mxu0 0.0
        %5668 = vmatprep.subr.mxu0 0.0
        %5669 = vmatpush1.msra.mxu0 0.0
        %5670 = vmatprep.subr.mxu0 0.0
        %5671 = vmatpush1.msra.mxu0 0.0
        %5672 = vmatprep.subr.mxu0 0.0
        %5673 = vmatpush1.msra.mxu0 0.0
        %5674 = vmatprep.subr.mxu0 0.0
        %v5675 = vand.u32 %v5633, 4294901760
        %5676 = vmatpush1.msra.mxu0 %v5675
        %5677 = vmatprep.subr.mxu0 0.0
        %v5678 = vand.u32 %v5632, 4294901760
        %5679 = vmatpush1.msra.mxu0 %v5678
        %5680 = vmatprep.subr.mxu0 0.0
        %v5681 = vand.u32 %v5631, 4294901760
        %5682 = vmatpush1.msra.mxu0 %v5681
        %5683 = vmatprep.subr.mxu0 0.0
        %v5684 = vand.u32 %v5630, 4294901760
        %5685 = vmatpush1.msra.mxu0 %v5684
        %5686 = vmatprep.subr.mxu0 0.0
        %v5687 = vand.u32 %v5629, 4294901760
        %5688 = vmatpush1.msra.mxu0 %v5687
        %5689 = vmatprep.subr.mxu0 0.0
        %v5690 = vand.u32 %v5628, 4294901760
        %5691 = vmatpush1.msra.mxu0 %v5690
        %5692 = vmatprep.subr.mxu0 0.0
        %v5693 = vand.u32 %v5627, 4294901760
        %5694 = vmatpush1.msra.mxu0 %v5693
        %5695 = vmatprep.subr.mxu0 0.0
        %v5696 = vand.u32 %v5626, 4294901760
        %5697 = vmatpush1.msra.mxu0 %v5696
        %5698 = vmatprep.subr.mxu0 0.0
        %5699 = vmatpush2.msra.mxu0 0.0
        %5700 = vmatprep.subr.mxu0 0.0
        %5701 = vmatpush2.msra.mxu0 0.0
        %5702 = vmatprep.subr.mxu0 0.0
        %5703 = vmatpush2.msra.mxu0 0.0
        %5704 = vmatprep.subr.mxu0 0.0
        %5705 = vmatpush2.msra.mxu0 0.0
        %5706 = vmatprep.subr.mxu0 0.0
        %5707 = vmatpush2.msra.mxu0 0.0
        %5708 = vmatprep.subr.mxu0 0.0
        %5709 = vmatpush2.msra.mxu0 0.0
        %5710 = vmatprep.subr.mxu0 0.0
        %5711 = vmatpush2.msra.mxu0 0.0
        %5712 = vmatprep.subr.mxu0 0.0
        %5713 = vmatpush2.msra.mxu0 0.0
        %5714 = vmatprep.subr.mxu0 0.0
        %5715 = vmatpush2.msra.mxu0 0.0
        %5716 = vmatprep.subr.mxu0 0.0
        %5717 = vmatpush2.msra.mxu0 0.0
        %5718 = vmatprep.subr.mxu0 0.0
        %5719 = vmatpush2.msra.mxu0 0.0
        %5720 = vmatprep.subr.mxu0 0.0
        %5721 = vmatpush2.msra.mxu0 0.0
        %5722 = vmatprep.subr.mxu0 0.0
        %5723 = vmatpush2.msra.mxu0 0.0
        %5724 = vmatprep.subr.mxu0 0.0
        %5725 = vmatpush2.msra.mxu0 0.0
        %5726 = vmatprep.subr.mxu0 0.0
        %5727 = vmatpush2.msra.mxu0 0.0
        %5728 = vmatprep.subr.mxu0 0.0
        %5729 = vmatpush2.msra.mxu0 0.0
        %5730 = vmatprep.mubr.f32.mxu0 0.0
        %v5731 = vand.u32 %v5656, 4294901760
        %v5732 = vsub.f32 %v5656, %v5731
        %v5733 = vand.u32 %v5732, 4294901760
        %v5734 = vsub.f32 %v5732, %v5733
        %v5735 = vand.u32 %v5734, 4294901760
        %5736 = vmatmul.mubr.f32.gmra.mxu0 %v5735
        %v5737 = vpop.f32.mrf.mxu0
        %v5738 = vadd.f32 %v5653, %v5737
        %v5739 = vpop.f32.mrf.mxu0
        %5740 = vdwg.mxu0
        %5741 = vmatprep.subr.mxu0 0.0
        %5742 = vmatpush1.msra.mxu0 0.0
        %5743 = vmatprep.subr.mxu0 0.0
        %5744 = vmatpush1.msra.mxu0 0.0
        %5745 = vmatprep.subr.mxu0 0.0
        %5746 = vmatpush1.msra.mxu0 0.0
        %5747 = vmatprep.subr.mxu0 0.0
        %5748 = vmatpush1.msra.mxu0 0.0
        %5749 = vmatprep.subr.mxu0 0.0
        %5750 = vmatpush1.msra.mxu0 0.0
        %5751 = vmatprep.subr.mxu0 0.0
        %5752 = vmatpush1.msra.mxu0 0.0
        %5753 = vmatprep.subr.mxu0 0.0
        %5754 = vmatpush1.msra.mxu0 0.0
        %5755 = vmatprep.subr.mxu0 0.0
        %5756 = vmatpush1.msra.mxu0 0.0
        %5757 = vmatprep.subr.mxu0 0.0
        %v5758 = vand.u32 %v5633, 4294901760
        %v5759 = vsub.f32 %v5633, %v5758
        %v5760 = vand.u32 %v5759, 4294901760
        %v5761 = vsub.f32 %v5759, %v5760
        %v5762 = vand.u32 %v5761, 4294901760
        %5763 = vmatpush1.msra.mxu0 %v5762
        %5764 = vmatprep.subr.mxu0 0.0
        %v5765 = vand.u32 %v5632, 4294901760
        %v5766 = vsub.f32 %v5632, %v5765
        %v5767 = vand.u32 %v5766, 4294901760
        %v5768 = vsub.f32 %v5766, %v5767
        %v5769 = vand.u32 %v5768, 4294901760
        %5770 = vmatpush1.msra.mxu0 %v5769
        %5771 = vmatprep.subr.mxu0 0.0
        %v5772 = vand.u32 %v5631, 4294901760
        %v5773 = vsub.f32 %v5631, %v5772
        %v5774 = vand.u32 %v5773, 4294901760
        %v5775 = vsub.f32 %v5773, %v5774
        %v5776 = vand.u32 %v5775, 4294901760
        %5777 = vmatpush1.msra.mxu0 %v5776
        %5778 = vmatprep.subr.mxu0 0.0
        %v5779 = vand.u32 %v5630, 4294901760
        %v5780 = vsub.f32 %v5630, %v5779
        %v5781 = vand.u32 %v5780, 4294901760
        %v5782 = vsub.f32 %v5780, %v5781
        %v5783 = vand.u32 %v5782, 4294901760
        %5784 = vmatpush1.msra.mxu0 %v5783
        %5785 = vmatprep.subr.mxu0 0.0
        %v5786 = vand.u32 %v5629, 4294901760
        %v5787 = vsub.f32 %v5629, %v5786
        %v5788 = vand.u32 %v5787, 4294901760
        %v5789 = vsub.f32 %v5787, %v5788
        %v5790 = vand.u32 %v5789, 4294901760
        %5791 = vmatpush1.msra.mxu0 %v5790
        %5792 = vmatprep.subr.mxu0 0.0
        %v5793 = vand.u32 %v5628, 4294901760
        %v5794 = vsub.f32 %v5628, %v5793
        %v5795 = vand.u32 %v5794, 4294901760
        %v5796 = vsub.f32 %v5794, %v5795
        %v5797 = vand.u32 %v5796, 4294901760
        %5798 = vmatpush1.msra.mxu0 %v5797
        %5799 = vmatprep.subr.mxu0 0.0
        %v5800 = vand.u32 %v5627, 4294901760
        %v5801 = vsub.f32 %v5627, %v5800
        %v5802 = vand.u32 %v5801, 4294901760
        %v5803 = vsub.f32 %v5801, %v5802
        %v5804 = vand.u32 %v5803, 4294901760
        %5805 = vmatpush1.msra.mxu0 %v5804
        %5806 = vmatprep.subr.mxu0 0.0
        %v5807 = vand.u32 %v5626, 4294901760
        %v5808 = vsub.f32 %v5626, %v5807
        %v5809 = vand.u32 %v5808, 4294901760
        %v5810 = vsub.f32 %v5808, %v5809
        %v5811 = vand.u32 %v5810, 4294901760
        %5812 = vmatpush1.msra.mxu0 %v5811
        %5813 = vmatprep.subr.mxu0 0.0
        %5814 = vmatpush2.msra.mxu0 0.0
        %5815 = vmatprep.subr.mxu0 0.0
        %5816 = vmatpush2.msra.mxu0 0.0
        %5817 = vmatprep.subr.mxu0 0.0
        %5818 = vmatpush2.msra.mxu0 0.0
        %5819 = vmatprep.subr.mxu0 0.0
        %5820 = vmatpush2.msra.mxu0 0.0
        %5821 = vmatprep.subr.mxu0 0.0
        %5822 = vmatpush2.msra.mxu0 0.0
        %5823 = vmatprep.subr.mxu0 0.0
        %5824 = vmatpush2.msra.mxu0 0.0
        %5825 = vmatprep.subr.mxu0 0.0
        %5826 = vmatpush2.msra.mxu0 0.0
        %5827 = vmatprep.subr.mxu0 0.0
        %5828 = vmatpush2.msra.mxu0 0.0
        %5829 = vmatprep.subr.mxu0 0.0
        %5830 = vmatpush2.msra.mxu0 0.0
        %5831 = vmatprep.subr.mxu0 0.0
        %5832 = vmatpush2.msra.mxu0 0.0
        %5833 = vmatprep.subr.mxu0 0.0
        %5834 = vmatpush2.msra.mxu0 0.0
        %5835 = vmatprep.subr.mxu0 0.0
        %5836 = vmatpush2.msra.mxu0 0.0
        %5837 = vmatprep.subr.mxu0 0.0
        %5838 = vmatpush2.msra.mxu0 0.0
        %5839 = vmatprep.subr.mxu0 0.0
        %5840 = vmatpush2.msra.mxu0 0.0
        %5841 = vmatprep.subr.mxu0 0.0
        %5842 = vmatpush2.msra.mxu0 0.0
        %5843 = vmatprep.subr.mxu0 0.0
        %5844 = vmatpush2.msra.mxu0 0.0
        %5845 = vmatprep.mubr.f32.mxu0 0.0
        %v5846 = vand.u32 %v5656, 4294901760
        %5847 = vmatmul.mubr.f32.gmra.mxu0 %v5846
        %v5848 = vpop.f32.mrf.mxu0
        %v5849 = vadd.f32 %v5738, %v5848
        %v5850 = vpop.f32.mrf.mxu0
        %5851 = vdwg.mxu0
        %5852 = vmatprep.subr.mxu0 0.0
        %5853 = vmatpush1.msra.mxu0 0.0
        %5854 = vmatprep.subr.mxu0 0.0
        %5855 = vmatpush1.msra.mxu0 0.0
        %5856 = vmatprep.subr.mxu0 0.0
        %5857 = vmatpush1.msra.mxu0 0.0
        %5858 = vmatprep.subr.mxu0 0.0
        %5859 = vmatpush1.msra.mxu0 0.0
        %5860 = vmatprep.subr.mxu0 0.0
        %5861 = vmatpush1.msra.mxu0 0.0
        %5862 = vmatprep.subr.mxu0 0.0
        %5863 = vmatpush1.msra.mxu0 0.0
        %5864 = vmatprep.subr.mxu0 0.0
        %5865 = vmatpush1.msra.mxu0 0.0
        %5866 = vmatprep.subr.mxu0 0.0
        %5867 = vmatpush1.msra.mxu0 0.0
        %5868 = vmatprep.subr.mxu0 0.0
        %v5869 = vand.u32 %v5633, 4294901760
        %v5870 = vsub.f32 %v5633, %v5869
        %5871 = vmatpush1.msra.mxu0 %v5870
        %5872 = vmatprep.subr.mxu0 0.0
        %v5873 = vand.u32 %v5632, 4294901760
        %v5874 = vsub.f32 %v5632, %v5873
        %5875 = vmatpush1.msra.mxu0 %v5874
        %5876 = vmatprep.subr.mxu0 0.0
        %v5877 = vand.u32 %v5631, 4294901760
        %v5878 = vsub.f32 %v5631, %v5877
        %5879 = vmatpush1.msra.mxu0 %v5878
        %5880 = vmatprep.subr.mxu0 0.0
        %v5881 = vand.u32 %v5630, 4294901760
        %v5882 = vsub.f32 %v5630, %v5881
        %5883 = vmatpush1.msra.mxu0 %v5882
        %5884 = vmatprep.subr.mxu0 0.0
        %v5885 = vand.u32 %v5629, 4294901760
        %v5886 = vsub.f32 %v5629, %v5885
        %5887 = vmatpush1.msra.mxu0 %v5886
        %5888 = vmatprep.subr.mxu0 0.0
        %v5889 = vand.u32 %v5628, 4294901760
        %v5890 = vsub.f32 %v5628, %v5889
        %5891 = vmatpush1.msra.mxu0 %v5890
        %5892 = vmatprep.subr.mxu0 0.0
        %v5893 = vand.u32 %v5627, 4294901760
        %v5894 = vsub.f32 %v5627, %v5893
        %5895 = vmatpush1.msra.mxu0 %v5894
        %5896 = vmatprep.subr.mxu0 0.0
        %v5897 = vand.u32 %v5626, 4294901760
        %v5898 = vsub.f32 %v5626, %v5897
        %5899 = vmatpush1.msra.mxu0 %v5898
        %5900 = vmatprep.subr.mxu0 0.0
        %5901 = vmatpush2.msra.mxu0 0.0
        %5902 = vmatprep.subr.mxu0 0.0
        %5903 = vmatpush2.msra.mxu0 0.0
        %5904 = vmatprep.subr.mxu0 0.0
        %5905 = vmatpush2.msra.mxu0 0.0
        %5906 = vmatprep.subr.mxu0 0.0
        %5907 = vmatpush2.msra.mxu0 0.0
        %5908 = vmatprep.subr.mxu0 0.0
        %5909 = vmatpush2.msra.mxu0 0.0
        %5910 = vmatprep.subr.mxu0 0.0
        %5911 = vmatpush2.msra.mxu0 0.0
        %5912 = vmatprep.subr.mxu0 0.0
        %5913 = vmatpush2.msra.mxu0 0.0
        %5914 = vmatprep.subr.mxu0 0.0
        %5915 = vmatpush2.msra.mxu0 0.0
        %5916 = vmatprep.subr.mxu0 0.0
        %5917 = vmatpush2.msra.mxu0 0.0
        %5918 = vmatprep.subr.mxu0 0.0
        %5919 = vmatpush2.msra.mxu0 0.0
        %5920 = vmatprep.subr.mxu0 0.0
        %5921 = vmatpush2.msra.mxu0 0.0
        %5922 = vmatprep.subr.mxu0 0.0
        %5923 = vmatpush2.msra.mxu0 0.0
        %5924 = vmatprep.subr.mxu0 0.0
        %5925 = vmatpush2.msra.mxu0 0.0
        %5926 = vmatprep.subr.mxu0 0.0
        %5927 = vmatpush2.msra.mxu0 0.0
        %5928 = vmatprep.subr.mxu0 0.0
        %5929 = vmatpush2.msra.mxu0 0.0
        %5930 = vmatprep.subr.mxu0 0.0
        %5931 = vmatpush2.msra.mxu0 0.0
        %5932 = vmatprep.mubr.f32.mxu0 0.0
        %v5933 = vand.u32 %v5656, 4294901760
        %v5934 = vsub.f32 %v5656, %v5933
        %5935 = vmatmul.mubr.f32.gmra.mxu0 %v5934
        %v5936 = vpop.f32.mrf.mxu0
        %v5937 = vadd.f32 %v5849, %v5936
        %v5938 = vpop.f32.mrf.mxu0
        %5939 = vdwg.mxu0
        %5940 = vmatprep.subr.mxu0 0.0
        %5941 = vmatpush1.msra.mxu0 0.0
        %5942 = vmatprep.subr.mxu0 0.0
        %5943 = vmatpush1.msra.mxu0 0.0
        %5944 = vmatprep.subr.mxu0 0.0
        %5945 = vmatpush1.msra.mxu0 0.0
        %5946 = vmatprep.subr.mxu0 0.0
        %5947 = vmatpush1.msra.mxu0 0.0
        %5948 = vmatprep.subr.mxu0 0.0
        %5949 = vmatpush1.msra.mxu0 0.0
        %5950 = vmatprep.subr.mxu0 0.0
        %5951 = vmatpush1.msra.mxu0 0.0
        %5952 = vmatprep.subr.mxu0 0.0
        %5953 = vmatpush1.msra.mxu0 0.0
        %5954 = vmatprep.subr.mxu0 0.0
        %5955 = vmatpush1.msra.mxu0 0.0
        %5956 = vmatprep.subr.mxu0 0.0
        %v5957 = vand.u32 %v5633, 4294901760
        %5958 = vmatpush1.msra.mxu0 %v5957
        %5959 = vmatprep.subr.mxu0 0.0
        %v5960 = vand.u32 %v5632, 4294901760
        %5961 = vmatpush1.msra.mxu0 %v5960
        %5962 = vmatprep.subr.mxu0 0.0
        %v5963 = vand.u32 %v5631, 4294901760
        %5964 = vmatpush1.msra.mxu0 %v5963
        %5965 = vmatprep.subr.mxu0 0.0
        %v5966 = vand.u32 %v5630, 4294901760
        %5967 = vmatpush1.msra.mxu0 %v5966
        %5968 = vmatprep.subr.mxu0 0.0
        %v5969 = vand.u32 %v5629, 4294901760
        %5970 = vmatpush1.msra.mxu0 %v5969
        %5971 = vmatprep.subr.mxu0 0.0
        %v5972 = vand.u32 %v5628, 4294901760
        %5973 = vmatpush1.msra.mxu0 %v5972
        %5974 = vmatprep.subr.mxu0 0.0
        %v5975 = vand.u32 %v5627, 4294901760
        %5976 = vmatpush1.msra.mxu0 %v5975
        %5977 = vmatprep.subr.mxu0 0.0
        %v5978 = vand.u32 %v5626, 4294901760
        %5979 = vmatpush1.msra.mxu0 %v5978
        %5980 = vmatprep.subr.mxu0 0.0
        %5981 = vmatpush2.msra.mxu0 0.0
        %5982 = vmatprep.subr.mxu0 0.0
        %5983 = vmatpush2.msra.mxu0 0.0
        %5984 = vmatprep.subr.mxu0 0.0
        %5985 = vmatpush2.msra.mxu0 0.0
        %5986 = vmatprep.subr.mxu0 0.0
        %5987 = vmatpush2.msra.mxu0 0.0
        %5988 = vmatprep.subr.mxu0 0.0
        %5989 = vmatpush2.msra.mxu0 0.0
        %5990 = vmatprep.subr.mxu0 0.0
        %5991 = vmatpush2.msra.mxu0 0.0
        %5992 = vmatprep.subr.mxu0 0.0
        %5993 = vmatpush2.msra.mxu0 0.0
        %5994 = vmatprep.subr.mxu0 0.0
        %5995 = vmatpush2.msra.mxu0 0.0
        %5996 = vmatprep.subr.mxu0 0.0
        %5997 = vmatpush2.msra.mxu0 0.0
        %5998 = vmatprep.subr.mxu0 0.0
        %5999 = vmatpush2.msra.mxu0 0.0
        %6000 = vmatprep.subr.mxu0 0.0
        %6001 = vmatpush2.msra.mxu0 0.0
        %6002 = vmatprep.subr.mxu0 0.0
        %6003 = vmatpush2.msra.mxu0 0.0
        %6004 = vmatprep.subr.mxu0 0.0
        %6005 = vmatpush2.msra.mxu0 0.0
        %6006 = vmatprep.subr.mxu0 0.0
        %6007 = vmatpush2.msra.mxu0 0.0
        %6008 = vmatprep.subr.mxu0 0.0
        %6009 = vmatpush2.msra.mxu0 0.0
        %6010 = vmatprep.subr.mxu0 0.0
        %6011 = vmatpush2.msra.mxu0 0.0
        %6012 = vmatprep.mubr.f32.mxu0 0.0
        %v6013 = vand.u32 %v5656, 4294901760
        %v6014 = vsub.f32 %v5656, %v6013
        %v6015 = vand.u32 %v6014, 4294901760
        %6016 = vmatmul.mubr.f32.gmra.mxu0 %v6015
        %v6017 = vpop.f32.mrf.mxu0
        %v6018 = vadd.f32 %v5937, %v6017
        %v6019 = vpop.f32.mrf.mxu0
        %6020 = vdwg.mxu0
        %6021 = vmatprep.subr.mxu0 0.0
        %6022 = vmatpush1.msra.mxu0 0.0
        %6023 = vmatprep.subr.mxu0 0.0
        %6024 = vmatpush1.msra.mxu0 0.0
        %6025 = vmatprep.subr.mxu0 0.0
        %6026 = vmatpush1.msra.mxu0 0.0
        %6027 = vmatprep.subr.mxu0 0.0
        %6028 = vmatpush1.msra.mxu0 0.0
        %6029 = vmatprep.subr.mxu0 0.0
        %6030 = vmatpush1.msra.mxu0 0.0
        %6031 = vmatprep.subr.mxu0 0.0
        %6032 = vmatpush1.msra.mxu0 0.0
        %6033 = vmatprep.subr.mxu0 0.0
        %6034 = vmatpush1.msra.mxu0 0.0
        %6035 = vmatprep.subr.mxu0 0.0
        %6036 = vmatpush1.msra.mxu0 0.0
        %6037 = vmatprep.subr.mxu0 0.0
        %v6038 = vand.u32 %v5633, 4294901760
        %v6039 = vsub.f32 %v5633, %v6038
        %v6040 = vand.u32 %v6039, 4294901760
        %6041 = vmatpush1.msra.mxu0 %v6040
        %6042 = vmatprep.subr.mxu0 0.0
        %v6043 = vand.u32 %v5632, 4294901760
        %v6044 = vsub.f32 %v5632, %v6043
        %v6045 = vand.u32 %v6044, 4294901760
        %6046 = vmatpush1.msra.mxu0 %v6045
        %6047 = vmatprep.subr.mxu0 0.0
        %v6048 = vand.u32 %v5631, 4294901760
        %v6049 = vsub.f32 %v5631, %v6048
        %v6050 = vand.u32 %v6049, 4294901760
        %6051 = vmatpush1.msra.mxu0 %v6050
        %6052 = vmatprep.subr.mxu0 0.0
        %v6053 = vand.u32 %v5630, 4294901760
        %v6054 = vsub.f32 %v5630, %v6053
        %v6055 = vand.u32 %v6054, 4294901760
        %6056 = vmatpush1.msra.mxu0 %v6055
        %6057 = vmatprep.subr.mxu0 0.0
        %v6058 = vand.u32 %v5629, 4294901760
        %v6059 = vsub.f32 %v5629, %v6058
        %v6060 = vand.u32 %v6059, 4294901760
        %6061 = vmatpush1.msra.mxu0 %v6060
        %6062 = vmatprep.subr.mxu0 0.0
        %v6063 = vand.u32 %v5628, 4294901760
        %v6064 = vsub.f32 %v5628, %v6063
        %v6065 = vand.u32 %v6064, 4294901760
        %6066 = vmatpush1.msra.mxu0 %v6065
        %6067 = vmatprep.subr.mxu0 0.0
        %v6068 = vand.u32 %v5627, 4294901760
        %v6069 = vsub.f32 %v5627, %v6068
        %v6070 = vand.u32 %v6069, 4294901760
        %6071 = vmatpush1.msra.mxu0 %v6070
        %6072 = vmatprep.subr.mxu0 0.0
        %v6073 = vand.u32 %v5626, 4294901760
        %v6074 = vsub.f32 %v5626, %v6073
        %v6075 = vand.u32 %v6074, 4294901760
        %6076 = vmatpush1.msra.mxu0 %v6075
        %6077 = vmatprep.subr.mxu0 0.0
        %6078 = vmatpush2.msra.mxu0 0.0
        %6079 = vmatprep.subr.mxu0 0.0
        %6080 = vmatpush2.msra.mxu0 0.0
        %6081 = vmatprep.subr.mxu0 0.0
        %6082 = vmatpush2.msra.mxu0 0.0
        %6083 = vmatprep.subr.mxu0 0.0
        %6084 = vmatpush2.msra.mxu0 0.0
        %6085 = vmatprep.subr.mxu0 0.0
        %6086 = vmatpush2.msra.mxu0 0.0
        %6087 = vmatprep.subr.mxu0 0.0
        %6088 = vmatpush2.msra.mxu0 0.0
        %6089 = vmatprep.subr.mxu0 0.0
        %6090 = vmatpush2.msra.mxu0 0.0
        %6091 = vmatprep.subr.mxu0 0.0
        %6092 = vmatpush2.msra.mxu0 0.0
        %6093 = vmatprep.subr.mxu0 0.0
        %6094 = vmatpush2.msra.mxu0 0.0
        %6095 = vmatprep.subr.mxu0 0.0
        %6096 = vmatpush2.msra.mxu0 0.0
        %6097 = vmatprep.subr.mxu0 0.0
        %6098 = vmatpush2.msra.mxu0 0.0
        %6099 = vmatprep.subr.mxu0 0.0
        %6100 = vmatpush2.msra.mxu0 0.0
        %6101 = vmatprep.subr.mxu0 0.0
        %6102 = vmatpush2.msra.mxu0 0.0
        %6103 = vmatprep.subr.mxu0 0.0
        %6104 = vmatpush2.msra.mxu0 0.0
        %6105 = vmatprep.subr.mxu0 0.0
        %6106 = vmatpush2.msra.mxu0 0.0
        %6107 = vmatprep.subr.mxu0 0.0
        %6108 = vmatpush2.msra.mxu0 0.0
        %6109 = vmatprep.mubr.f32.mxu0 0.0
        %v6110 = vand.u32 %v5656, 4294901760
        %6111 = vmatmul.mubr.f32.gmra.mxu0 %v6110
        %v6112 = vpop.f32.mrf.mxu0
        %v6113 = vadd.f32 %v6018, %v6112
        %v6114 = vpop.f32.mrf.mxu0
        %6115 = vdwg.mxu0
        %6116 = vmatprep.subr.mxu0 0.0
        %6117 = vmatpush1.msra.mxu0 0.0
        %6118 = vmatprep.subr.mxu0 0.0
        %6119 = vmatpush1.msra.mxu0 0.0
        %6120 = vmatprep.subr.mxu0 0.0
        %6121 = vmatpush1.msra.mxu0 0.0
        %6122 = vmatprep.subr.mxu0 0.0
        %6123 = vmatpush1.msra.mxu0 0.0
        %6124 = vmatprep.subr.mxu0 0.0
        %6125 = vmatpush1.msra.mxu0 0.0
        %6126 = vmatprep.subr.mxu0 0.0
        %6127 = vmatpush1.msra.mxu0 0.0
        %6128 = vmatprep.subr.mxu0 0.0
        %6129 = vmatpush1.msra.mxu0 0.0
        %6130 = vmatprep.subr.mxu0 0.0
        %6131 = vmatpush1.msra.mxu0 0.0
        %6132 = vmatprep.subr.mxu0 0.0
        %v6133 = vand.u32 %v5633, 4294901760
        %6134 = vmatpush1.msra.mxu0 %v6133
        %6135 = vmatprep.subr.mxu0 0.0
        %v6136 = vand.u32 %v5632, 4294901760
        %6137 = vmatpush1.msra.mxu0 %v6136
        %6138 = vmatprep.subr.mxu0 0.0
        %v6139 = vand.u32 %v5631, 4294901760
        %6140 = vmatpush1.msra.mxu0 %v6139
        %6141 = vmatprep.subr.mxu0 0.0
        %v6142 = vand.u32 %v5630, 4294901760
        %6143 = vmatpush1.msra.mxu0 %v6142
        %6144 = vmatprep.subr.mxu0 0.0
        %v6145 = vand.u32 %v5629, 4294901760
        %6146 = vmatpush1.msra.mxu0 %v6145
        %6147 = vmatprep.subr.mxu0 0.0
        %v6148 = vand.u32 %v5628, 4294901760
        %6149 = vmatpush1.msra.mxu0 %v6148
        %6150 = vmatprep.subr.mxu0 0.0
        %v6151 = vand.u32 %v5627, 4294901760
        %6152 = vmatpush1.msra.mxu0 %v6151
        %6153 = vmatprep.subr.mxu0 0.0
        %v6154 = vand.u32 %v5626, 4294901760
        %6155 = vmatpush1.msra.mxu0 %v6154
        %6156 = vmatprep.subr.mxu0 0.0
        %6157 = vmatpush2.msra.mxu0 0.0
        %6158 = vmatprep.subr.mxu0 0.0
        %6159 = vmatpush2.msra.mxu0 0.0
        %6160 = vmatprep.subr.mxu0 0.0
        %6161 = vmatpush2.msra.mxu0 0.0
        %6162 = vmatprep.subr.mxu0 0.0
        %6163 = vmatpush2.msra.mxu0 0.0
        %6164 = vmatprep.subr.mxu0 0.0
        %6165 = vmatpush2.msra.mxu0 0.0
        %6166 = vmatprep.subr.mxu0 0.0
        %6167 = vmatpush2.msra.mxu0 0.0
        %6168 = vmatprep.subr.mxu0 0.0
        %6169 = vmatpush2.msra.mxu0 0.0
        %6170 = vmatprep.subr.mxu0 0.0
        %6171 = vmatpush2.msra.mxu0 0.0
        %6172 = vmatprep.subr.mxu0 0.0
        %6173 = vmatpush2.msra.mxu0 0.0
        %6174 = vmatprep.subr.mxu0 0.0
        %6175 = vmatpush2.msra.mxu0 0.0
        %6176 = vmatprep.subr.mxu0 0.0
        %6177 = vmatpush2.msra.mxu0 0.0
        %6178 = vmatprep.subr.mxu0 0.0
        %6179 = vmatpush2.msra.mxu0 0.0
        %6180 = vmatprep.subr.mxu0 0.0
        %6181 = vmatpush2.msra.mxu0 0.0
        %6182 = vmatprep.subr.mxu0 0.0
        %6183 = vmatpush2.msra.mxu0 0.0
        %6184 = vmatprep.subr.mxu0 0.0
        %6185 = vmatpush2.msra.mxu0 0.0
        %6186 = vmatprep.subr.mxu0 0.0
        %6187 = vmatpush2.msra.mxu0 0.0
        %6188 = vmatprep.mubr.f32.mxu0 0.0
        %v6189 = vand.u32 %v5656, 4294901760
        %6190 = vmatmul.mubr.f32.gmra.mxu0 %v6189
        %v6191 = vpop.f32.mrf.mxu0
        %v6192 = vadd.f32 %v6113, %v6191
        %v6193 = vpop.f32.mrf.mxu0
        %6194 = vdwg.mxu0
        %v6195 = vld [vmem:[#allocation2 + $0x9] sm:$0xff]
        %6197 = vrot.lane.b32.xlu0 %v5643, 32
        %v6198 = vpop.permute.xlu0 %6197
        %v6200 = vsel %vm139, %v6195, %v6198
        %v6202 = vsel %vm5654, %v6200, 0
        %6204 = vmatprep.subr.mxu0 0.0
        %6205 = vmatpush1.msra.mxu0 0.0
        %6206 = vmatprep.subr.mxu0 0.0
        %6207 = vmatpush1.msra.mxu0 0.0
        %6208 = vmatprep.subr.mxu0 0.0
        %6209 = vmatpush1.msra.mxu0 0.0
        %6210 = vmatprep.subr.mxu0 0.0
        %6211 = vmatpush1.msra.mxu0 0.0
        %6212 = vmatprep.subr.mxu0 0.0
        %6213 = vmatpush1.msra.mxu0 0.0
        %6214 = vmatprep.subr.mxu0 0.0
        %6215 = vmatpush1.msra.mxu0 0.0
        %6216 = vmatprep.subr.mxu0 0.0
        %6217 = vmatpush1.msra.mxu0 0.0
        %6218 = vmatprep.subr.mxu0 0.0
        %6219 = vmatpush1.msra.mxu0 0.0
        %6220 = vmatprep.subr.mxu0 0.0
        %v6221 = vand.u32 %v5641, 4294901760
        %6222 = vmatpush1.msra.mxu0 %v6221
        %6223 = vmatprep.subr.mxu0 0.0
        %v6224 = vand.u32 %v5640, 4294901760
        %6225 = vmatpush1.msra.mxu0 %v6224
        %6226 = vmatprep.subr.mxu0 0.0
        %v6227 = vand.u32 %v5639, 4294901760
        %6228 = vmatpush1.msra.mxu0 %v6227
        %6229 = vmatprep.subr.mxu0 0.0
        %v6230 = vand.u32 %v5638, 4294901760
        %6231 = vmatpush1.msra.mxu0 %v6230
        %6232 = vmatprep.subr.mxu0 0.0
        %v6233 = vand.u32 %v5637, 4294901760
        %6234 = vmatpush1.msra.mxu0 %v6233
        %6235 = vmatprep.subr.mxu0 0.0
        %v6236 = vand.u32 %v5636, 4294901760
        %6237 = vmatpush1.msra.mxu0 %v6236
        %6238 = vmatprep.subr.mxu0 0.0
        %v6239 = vand.u32 %v5635, 4294901760
        %6240 = vmatpush1.msra.mxu0 %v6239
        %6241 = vmatprep.subr.mxu0 0.0
        %v6242 = vand.u32 %v5634, 4294901760
        %6243 = vmatpush1.msra.mxu0 %v6242
        %6244 = vmatprep.subr.mxu0 0.0
        %6245 = vmatpush2.msra.mxu0 0.0
        %6246 = vmatprep.subr.mxu0 0.0
        %6247 = vmatpush2.msra.mxu0 0.0
        %6248 = vmatprep.subr.mxu0 0.0
        %6249 = vmatpush2.msra.mxu0 0.0
        %6250 = vmatprep.subr.mxu0 0.0
        %6251 = vmatpush2.msra.mxu0 0.0
        %6252 = vmatprep.subr.mxu0 0.0
        %6253 = vmatpush2.msra.mxu0 0.0
        %6254 = vmatprep.subr.mxu0 0.0
        %6255 = vmatpush2.msra.mxu0 0.0
        %6256 = vmatprep.subr.mxu0 0.0
        %6257 = vmatpush2.msra.mxu0 0.0
        %6258 = vmatprep.subr.mxu0 0.0
        %6259 = vmatpush2.msra.mxu0 0.0
        %6260 = vmatprep.subr.mxu0 0.0
        %6261 = vmatpush2.msra.mxu0 0.0
        %6262 = vmatprep.subr.mxu0 0.0
        %6263 = vmatpush2.msra.mxu0 0.0
        %6264 = vmatprep.subr.mxu0 0.0
        %6265 = vmatpush2.msra.mxu0 0.0
        %6266 = vmatprep.subr.mxu0 0.0
        %6267 = vmatpush2.msra.mxu0 0.0
        %6268 = vmatprep.subr.mxu0 0.0
        %6269 = vmatpush2.msra.mxu0 0.0
        %6270 = vmatprep.subr.mxu0 0.0
        %6271 = vmatpush2.msra.mxu0 0.0
        %6272 = vmatprep.subr.mxu0 0.0
        %6273 = vmatpush2.msra.mxu0 0.0
        %6274 = vmatprep.subr.mxu0 0.0
        %6275 = vmatpush2.msra.mxu0 0.0
        %6276 = vmatprep.mubr.f32.mxu0 0.0
        %v6277 = vand.u32 %v6202, 4294901760
        %v6278 = vsub.f32 %v6202, %v6277
        %v6279 = vand.u32 %v6278, 4294901760
        %v6280 = vsub.f32 %v6278, %v6279
        %v6281 = vand.u32 %v6280, 4294901760
        %6282 = vmatmul.mubr.f32.gmra.mxu0 %v6281
        %v6283 = vpop.f32.mrf.mxu0
        %v6284 = vadd.f32 %v5653, %v6283
        %v6285 = vpop.f32.mrf.mxu0
        %6286 = vdwg.mxu0
        %6287 = vmatprep.subr.mxu0 0.0
        %6288 = vmatpush1.msra.mxu0 0.0
        %6289 = vmatprep.subr.mxu0 0.0
        %6290 = vmatpush1.msra.mxu0 0.0
        %6291 = vmatprep.subr.mxu0 0.0
        %6292 = vmatpush1.msra.mxu0 0.0
        %6293 = vmatprep.subr.mxu0 0.0
        %6294 = vmatpush1.msra.mxu0 0.0
        %6295 = vmatprep.subr.mxu0 0.0
        %6296 = vmatpush1.msra.mxu0 0.0
        %6297 = vmatprep.subr.mxu0 0.0
        %6298 = vmatpush1.msra.mxu0 0.0
        %6299 = vmatprep.subr.mxu0 0.0
        %6300 = vmatpush1.msra.mxu0 0.0
        %6301 = vmatprep.subr.mxu0 0.0
        %6302 = vmatpush1.msra.mxu0 0.0
        %6303 = vmatprep.subr.mxu0 0.0
        %v6304 = vand.u32 %v5641, 4294901760
        %v6305 = vsub.f32 %v5641, %v6304
        %v6306 = vand.u32 %v6305, 4294901760
        %v6307 = vsub.f32 %v6305, %v6306
        %v6308 = vand.u32 %v6307, 4294901760
        %6309 = vmatpush1.msra.mxu0 %v6308
        %6310 = vmatprep.subr.mxu0 0.0
        %v6311 = vand.u32 %v5640, 4294901760
        %v6312 = vsub.f32 %v5640, %v6311
        %v6313 = vand.u32 %v6312, 4294901760
        %v6314 = vsub.f32 %v6312, %v6313
        %v6315 = vand.u32 %v6314, 4294901760
        %6316 = vmatpush1.msra.mxu0 %v6315
        %6317 = vmatprep.subr.mxu0 0.0
        %v6318 = vand.u32 %v5639, 4294901760
        %v6319 = vsub.f32 %v5639, %v6318
        %v6320 = vand.u32 %v6319, 4294901760
        %v6321 = vsub.f32 %v6319, %v6320
        %v6322 = vand.u32 %v6321, 4294901760
        %6323 = vmatpush1.msra.mxu0 %v6322
        %6324 = vmatprep.subr.mxu0 0.0
        %v6325 = vand.u32 %v5638, 4294901760
        %v6326 = vsub.f32 %v5638, %v6325
        %v6327 = vand.u32 %v6326, 4294901760
        %v6328 = vsub.f32 %v6326, %v6327
        %v6329 = vand.u32 %v6328, 4294901760
        %6330 = vmatpush1.msra.mxu0 %v6329
        %6331 = vmatprep.subr.mxu0 0.0
        %v6332 = vand.u32 %v5637, 4294901760
        %v6333 = vsub.f32 %v5637, %v6332
        %v6334 = vand.u32 %v6333, 4294901760
        %v6335 = vsub.f32 %v6333, %v6334
        %v6336 = vand.u32 %v6335, 4294901760
        %6337 = vmatpush1.msra.mxu0 %v6336
        %6338 = vmatprep.subr.mxu0 0.0
        %v6339 = vand.u32 %v5636, 4294901760
        %v6340 = vsub.f32 %v5636, %v6339
        %v6341 = vand.u32 %v6340, 4294901760
        %v6342 = vsub.f32 %v6340, %v6341
        %v6343 = vand.u32 %v6342, 4294901760
        %6344 = vmatpush1.msra.mxu0 %v6343
        %6345 = vmatprep.subr.mxu0 0.0
        %v6346 = vand.u32 %v5635, 4294901760
        %v6347 = vsub.f32 %v5635, %v6346
        %v6348 = vand.u32 %v6347, 4294901760
        %v6349 = vsub.f32 %v6347, %v6348
        %v6350 = vand.u32 %v6349, 4294901760
        %6351 = vmatpush1.msra.mxu0 %v6350
        %6352 = vmatprep.subr.mxu0 0.0
        %v6353 = vand.u32 %v5634, 4294901760
        %v6354 = vsub.f32 %v5634, %v6353
        %v6355 = vand.u32 %v6354, 4294901760
        %v6356 = vsub.f32 %v6354, %v6355
        %v6357 = vand.u32 %v6356, 4294901760
        %6358 = vmatpush1.msra.mxu0 %v6357
        %6359 = vmatprep.subr.mxu0 0.0
        %6360 = vmatpush2.msra.mxu0 0.0
        %6361 = vmatprep.subr.mxu0 0.0
        %6362 = vmatpush2.msra.mxu0 0.0
        %6363 = vmatprep.subr.mxu0 0.0
        %6364 = vmatpush2.msra.mxu0 0.0
        %6365 = vmatprep.subr.mxu0 0.0
        %6366 = vmatpush2.msra.mxu0 0.0
        %6367 = vmatprep.subr.mxu0 0.0
        %6368 = vmatpush2.msra.mxu0 0.0
        %6369 = vmatprep.subr.mxu0 0.0
        %6370 = vmatpush2.msra.mxu0 0.0
        %6371 = vmatprep.subr.mxu0 0.0
        %6372 = vmatpush2.msra.mxu0 0.0
        %6373 = vmatprep.subr.mxu0 0.0
        %6374 = vmatpush2.msra.mxu0 0.0
        %6375 = vmatprep.subr.mxu0 0.0
        %6376 = vmatpush2.msra.mxu0 0.0
        %6377 = vmatprep.subr.mxu0 0.0
        %6378 = vmatpush2.msra.mxu0 0.0
        %6379 = vmatprep.subr.mxu0 0.0
        %6380 = vmatpush2.msra.mxu0 0.0
        %6381 = vmatprep.subr.mxu0 0.0
        %6382 = vmatpush2.msra.mxu0 0.0
        %6383 = vmatprep.subr.mxu0 0.0
        %6384 = vmatpush2.msra.mxu0 0.0
        %6385 = vmatprep.subr.mxu0 0.0
        %6386 = vmatpush2.msra.mxu0 0.0
        %6387 = vmatprep.subr.mxu0 0.0
        %6388 = vmatpush2.msra.mxu0 0.0
        %6389 = vmatprep.subr.mxu0 0.0
        %6390 = vmatpush2.msra.mxu0 0.0
        %6391 = vmatprep.mubr.f32.mxu0 0.0
        %v6392 = vand.u32 %v6202, 4294901760
        %6393 = vmatmul.mubr.f32.gmra.mxu0 %v6392
        %v6394 = vpop.f32.mrf.mxu0
        %v6395 = vadd.f32 %v6284, %v6394
        %v6396 = vpop.f32.mrf.mxu0
        %6397 = vdwg.mxu0
        %6398 = vmatprep.subr.mxu0 0.0
        %6399 = vmatpush1.msra.mxu0 0.0
        %6400 = vmatprep.subr.mxu0 0.0
        %6401 = vmatpush1.msra.mxu0 0.0
        %6402 = vmatprep.subr.mxu0 0.0
        %6403 = vmatpush1.msra.mxu0 0.0
        %6404 = vmatprep.subr.mxu0 0.0
        %6405 = vmatpush1.msra.mxu0 0.0
        %6406 = vmatprep.subr.mxu0 0.0
        %6407 = vmatpush1.msra.mxu0 0.0
        %6408 = vmatprep.subr.mxu0 0.0
        %6409 = vmatpush1.msra.mxu0 0.0
        %6410 = vmatprep.subr.mxu0 0.0
        %6411 = vmatpush1.msra.mxu0 0.0
        %6412 = vmatprep.subr.mxu0 0.0
        %6413 = vmatpush1.msra.mxu0 0.0
        %6414 = vmatprep.subr.mxu0 0.0
        %v6415 = vand.u32 %v5641, 4294901760
        %v6416 = vsub.f32 %v5641, %v6415
        %6417 = vmatpush1.msra.mxu0 %v6416
        %6418 = vmatprep.subr.mxu0 0.0
        %v6419 = vand.u32 %v5640, 4294901760
        %v6420 = vsub.f32 %v5640, %v6419
        %6421 = vmatpush1.msra.mxu0 %v6420
        %6422 = vmatprep.subr.mxu0 0.0
        %v6423 = vand.u32 %v5639, 4294901760
        %v6424 = vsub.f32 %v5639, %v6423
        %6425 = vmatpush1.msra.mxu0 %v6424
        %6426 = vmatprep.subr.mxu0 0.0
        %v6427 = vand.u32 %v5638, 4294901760
        %v6428 = vsub.f32 %v5638, %v6427
        %6429 = vmatpush1.msra.mxu0 %v6428
        %6430 = vmatprep.subr.mxu0 0.0
        %v6431 = vand.u32 %v5637, 4294901760
        %v6432 = vsub.f32 %v5637, %v6431
        %6433 = vmatpush1.msra.mxu0 %v6432
        %6434 = vmatprep.subr.mxu0 0.0
        %v6435 = vand.u32 %v5636, 4294901760
        %v6436 = vsub.f32 %v5636, %v6435
        %6437 = vmatpush1.msra.mxu0 %v6436
        %6438 = vmatprep.subr.mxu0 0.0
        %v6439 = vand.u32 %v5635, 4294901760
        %v6440 = vsub.f32 %v5635, %v6439
        %6441 = vmatpush1.msra.mxu0 %v6440
        %6442 = vmatprep.subr.mxu0 0.0
        %v6443 = vand.u32 %v5634, 4294901760
        %v6444 = vsub.f32 %v5634, %v6443
        %6445 = vmatpush1.msra.mxu0 %v6444
        %6446 = vmatprep.subr.mxu0 0.0
        %6447 = vmatpush2.msra.mxu0 0.0
        %6448 = vmatprep.subr.mxu0 0.0
        %6449 = vmatpush2.msra.mxu0 0.0
        %6450 = vmatprep.subr.mxu0 0.0
        %6451 = vmatpush2.msra.mxu0 0.0
        %6452 = vmatprep.subr.mxu0 0.0
        %6453 = vmatpush2.msra.mxu0 0.0
        %6454 = vmatprep.subr.mxu0 0.0
        %6455 = vmatpush2.msra.mxu0 0.0
        %6456 = vmatprep.subr.mxu0 0.0
        %6457 = vmatpush2.msra.mxu0 0.0
        %6458 = vmatprep.subr.mxu0 0.0
        %6459 = vmatpush2.msra.mxu0 0.0
        %6460 = vmatprep.subr.mxu0 0.0
        %6461 = vmatpush2.msra.mxu0 0.0
        %6462 = vmatprep.subr.mxu0 0.0
        %6463 = vmatpush2.msra.mxu0 0.0
        %6464 = vmatprep.subr.mxu0 0.0
        %6465 = vmatpush2.msra.mxu0 0.0
        %6466 = vmatprep.subr.mxu0 0.0
        %6467 = vmatpush2.msra.mxu0 0.0
        %6468 = vmatprep.subr.mxu0 0.0
        %6469 = vmatpush2.msra.mxu0 0.0
        %6470 = vmatprep.subr.mxu0 0.0
        %6471 = vmatpush2.msra.mxu0 0.0
        %6472 = vmatprep.subr.mxu0 0.0
        %6473 = vmatpush2.msra.mxu0 0.0
        %6474 = vmatprep.subr.mxu0 0.0
        %6475 = vmatpush2.msra.mxu0 0.0
        %6476 = vmatprep.subr.mxu0 0.0
        %6477 = vmatpush2.msra.mxu0 0.0
        %6478 = vmatprep.mubr.f32.mxu0 0.0
        %v6479 = vand.u32 %v6202, 4294901760
        %v6480 = vsub.f32 %v6202, %v6479
        %6481 = vmatmul.mubr.f32.gmra.mxu0 %v6480
        %v6482 = vpop.f32.mrf.mxu0
        %v6483 = vadd.f32 %v6395, %v6482
        %v6484 = vpop.f32.mrf.mxu0
        %6485 = vdwg.mxu0
        %6486 = vmatprep.subr.mxu0 0.0
        %6487 = vmatpush1.msra.mxu0 0.0
        %6488 = vmatprep.subr.mxu0 0.0
        %6489 = vmatpush1.msra.mxu0 0.0
        %6490 = vmatprep.subr.mxu0 0.0
        %6491 = vmatpush1.msra.mxu0 0.0
        %6492 = vmatprep.subr.mxu0 0.0
        %6493 = vmatpush1.msra.mxu0 0.0
        %6494 = vmatprep.subr.mxu0 0.0
        %6495 = vmatpush1.msra.mxu0 0.0
        %6496 = vmatprep.subr.mxu0 0.0
        %6497 = vmatpush1.msra.mxu0 0.0
        %6498 = vmatprep.subr.mxu0 0.0
        %6499 = vmatpush1.msra.mxu0 0.0
        %6500 = vmatprep.subr.mxu0 0.0
        %6501 = vmatpush1.msra.mxu0 0.0
        %6502 = vmatprep.subr.mxu0 0.0
        %v6503 = vand.u32 %v5641, 4294901760
        %6504 = vmatpush1.msra.mxu0 %v6503
        %6505 = vmatprep.subr.mxu0 0.0
        %v6506 = vand.u32 %v5640, 4294901760
        %6507 = vmatpush1.msra.mxu0 %v6506
        %6508 = vmatprep.subr.mxu0 0.0
        %v6509 = vand.u32 %v5639, 4294901760
        %6510 = vmatpush1.msra.mxu0 %v6509
        %6511 = vmatprep.subr.mxu0 0.0
        %v6512 = vand.u32 %v5638, 4294901760
        %6513 = vmatpush1.msra.mxu0 %v6512
        %6514 = vmatprep.subr.mxu0 0.0
        %v6515 = vand.u32 %v5637, 4294901760
        %6516 = vmatpush1.msra.mxu0 %v6515
        %6517 = vmatprep.subr.mxu0 0.0
        %v6518 = vand.u32 %v5636, 4294901760
        %6519 = vmatpush1.msra.mxu0 %v6518
        %6520 = vmatprep.subr.mxu0 0.0
        %v6521 = vand.u32 %v5635, 4294901760
        %6522 = vmatpush1.msra.mxu0 %v6521
        %6523 = vmatprep.subr.mxu0 0.0
        %v6524 = vand.u32 %v5634, 4294901760
        %6525 = vmatpush1.msra.mxu0 %v6524
        %6526 = vmatprep.subr.mxu0 0.0
        %6527 = vmatpush2.msra.mxu0 0.0
        %6528 = vmatprep.subr.mxu0 0.0
        %6529 = vmatpush2.msra.mxu0 0.0
        %6530 = vmatprep.subr.mxu0 0.0
        %6531 = vmatpush2.msra.mxu0 0.0
        %6532 = vmatprep.subr.mxu0 0.0
        %6533 = vmatpush2.msra.mxu0 0.0
        %6534 = vmatprep.subr.mxu0 0.0
        %6535 = vmatpush2.msra.mxu0 0.0
        %6536 = vmatprep.subr.mxu0 0.0
        %6537 = vmatpush2.msra.mxu0 0.0
        %6538 = vmatprep.subr.mxu0 0.0
        %6539 = vmatpush2.msra.mxu0 0.0
        %6540 = vmatprep.subr.mxu0 0.0
        %6541 = vmatpush2.msra.mxu0 0.0
        %6542 = vmatprep.subr.mxu0 0.0
        %6543 = vmatpush2.msra.mxu0 0.0
        %6544 = vmatprep.subr.mxu0 0.0
        %6545 = vmatpush2.msra.mxu0 0.0
        %6546 = vmatprep.subr.mxu0 0.0
        %6547 = vmatpush2.msra.mxu0 0.0
        %6548 = vmatprep.subr.mxu0 0.0
        %6549 = vmatpush2.msra.mxu0 0.0
        %6550 = vmatprep.subr.mxu0 0.0
        %6551 = vmatpush2.msra.mxu0 0.0
        %6552 = vmatprep.subr.mxu0 0.0
        %6553 = vmatpush2.msra.mxu0 0.0
        %6554 = vmatprep.subr.mxu0 0.0
        %6555 = vmatpush2.msra.mxu0 0.0
        %6556 = vmatprep.subr.mxu0 0.0
        %6557 = vmatpush2.msra.mxu0 0.0
        %6558 = vmatprep.mubr.f32.mxu0 0.0
        %v6559 = vand.u32 %v6202, 4294901760
        %v6560 = vsub.f32 %v6202, %v6559
        %v6561 = vand.u32 %v6560, 4294901760
        %6562 = vmatmul.mubr.f32.gmra.mxu0 %v6561
        %v6563 = vpop.f32.mrf.mxu0
        %v6564 = vadd.f32 %v6483, %v6563
        %v6565 = vpop.f32.mrf.mxu0
        %6566 = vdwg.mxu0
        %6567 = vmatprep.subr.mxu0 0.0
        %6568 = vmatpush1.msra.mxu0 0.0
        %6569 = vmatprep.subr.mxu0 0.0
        %6570 = vmatpush1.msra.mxu0 0.0
        %6571 = vmatprep.subr.mxu0 0.0
        %6572 = vmatpush1.msra.mxu0 0.0
        %6573 = vmatprep.subr.mxu0 0.0
        %6574 = vmatpush1.msra.mxu0 0.0
        %6575 = vmatprep.subr.mxu0 0.0
        %6576 = vmatpush1.msra.mxu0 0.0
        %6577 = vmatprep.subr.mxu0 0.0
        %6578 = vmatpush1.msra.mxu0 0.0
        %6579 = vmatprep.subr.mxu0 0.0
        %6580 = vmatpush1.msra.mxu0 0.0
        %6581 = vmatprep.subr.mxu0 0.0
        %6582 = vmatpush1.msra.mxu0 0.0
        %6583 = vmatprep.subr.mxu0 0.0
        %v6584 = vand.u32 %v5641, 4294901760
        %v6585 = vsub.f32 %v5641, %v6584
        %v6586 = vand.u32 %v6585, 4294901760
        %6587 = vmatpush1.msra.mxu0 %v6586
        %6588 = vmatprep.subr.mxu0 0.0
        %v6589 = vand.u32 %v5640, 4294901760
        %v6590 = vsub.f32 %v5640, %v6589
        %v6591 = vand.u32 %v6590, 4294901760
        %6592 = vmatpush1.msra.mxu0 %v6591
        %6593 = vmatprep.subr.mxu0 0.0
        %v6594 = vand.u32 %v5639, 4294901760
        %v6595 = vsub.f32 %v5639, %v6594
        %v6596 = vand.u32 %v6595, 4294901760
        %6597 = vmatpush1.msra.mxu0 %v6596
        %6598 = vmatprep.subr.mxu0 0.0
        %v6599 = vand.u32 %v5638, 4294901760
        %v6600 = vsub.f32 %v5638, %v6599
        %v6601 = vand.u32 %v6600, 4294901760
        %6602 = vmatpush1.msra.mxu0 %v6601
        %6603 = vmatprep.subr.mxu0 0.0
        %v6604 = vand.u32 %v5637, 4294901760
        %v6605 = vsub.f32 %v5637, %v6604
        %v6606 = vand.u32 %v6605, 4294901760
        %6607 = vmatpush1.msra.mxu0 %v6606
        %6608 = vmatprep.subr.mxu0 0.0
        %v6609 = vand.u32 %v5636, 4294901760
        %v6610 = vsub.f32 %v5636, %v6609
        %v6611 = vand.u32 %v6610, 4294901760
        %6612 = vmatpush1.msra.mxu0 %v6611
        %6613 = vmatprep.subr.mxu0 0.0
        %v6614 = vand.u32 %v5635, 4294901760
        %v6615 = vsub.f32 %v5635, %v6614
        %v6616 = vand.u32 %v6615, 4294901760
        %6617 = vmatpush1.msra.mxu0 %v6616
        %6618 = vmatprep.subr.mxu0 0.0
        %v6619 = vand.u32 %v5634, 4294901760
        %v6620 = vsub.f32 %v5634, %v6619
        %v6621 = vand.u32 %v6620, 4294901760
        %6622 = vmatpush1.msra.mxu0 %v6621
        %6623 = vmatprep.subr.mxu0 0.0
        %6624 = vmatpush2.msra.mxu0 0.0
        %6625 = vmatprep.subr.mxu0 0.0
        %6626 = vmatpush2.msra.mxu0 0.0
        %6627 = vmatprep.subr.mxu0 0.0
        %6628 = vmatpush2.msra.mxu0 0.0
        %6629 = vmatprep.subr.mxu0 0.0
        %6630 = vmatpush2.msra.mxu0 0.0
        %6631 = vmatprep.subr.mxu0 0.0
        %6632 = vmatpush2.msra.mxu0 0.0
        %6633 = vmatprep.subr.mxu0 0.0
        %6634 = vmatpush2.msra.mxu0 0.0
        %6635 = vmatprep.subr.mxu0 0.0
        %6636 = vmatpush2.msra.mxu0 0.0
        %6637 = vmatprep.subr.mxu0 0.0
        %6638 = vmatpush2.msra.mxu0 0.0
        %6639 = vmatprep.subr.mxu0 0.0
        %6640 = vmatpush2.msra.mxu0 0.0
        %6641 = vmatprep.subr.mxu0 0.0
        %6642 = vmatpush2.msra.mxu0 0.0
        %6643 = vmatprep.subr.mxu0 0.0
        %6644 = vmatpush2.msra.mxu0 0.0
        %6645 = vmatprep.subr.mxu0 0.0
        %6646 = vmatpush2.msra.mxu0 0.0
        %6647 = vmatprep.subr.mxu0 0.0
        %6648 = vmatpush2.msra.mxu0 0.0
        %6649 = vmatprep.subr.mxu0 0.0
        %6650 = vmatpush2.msra.mxu0 0.0
        %6651 = vmatprep.subr.mxu0 0.0
        %6652 = vmatpush2.msra.mxu0 0.0
        %6653 = vmatprep.subr.mxu0 0.0
        %6654 = vmatpush2.msra.mxu0 0.0
        %6655 = vmatprep.mubr.f32.mxu0 0.0
        %v6656 = vand.u32 %v6202, 4294901760
        %6657 = vmatmul.mubr.f32.gmra.mxu0 %v6656
        %v6658 = vpop.f32.mrf.mxu0
        %v6659 = vadd.f32 %v6564, %v6658
        %v6660 = vpop.f32.mrf.mxu0
        %6661 = vdwg.mxu0
        %6662 = vmatprep.subr.mxu0 0.0
        %6663 = vmatpush1.msra.mxu0 0.0
        %6664 = vmatprep.subr.mxu0 0.0
        %6665 = vmatpush1.msra.mxu0 0.0
        %6666 = vmatprep.subr.mxu0 0.0
        %6667 = vmatpush1.msra.mxu0 0.0
        %6668 = vmatprep.subr.mxu0 0.0
        %6669 = vmatpush1.msra.mxu0 0.0
        %6670 = vmatprep.subr.mxu0 0.0
        %6671 = vmatpush1.msra.mxu0 0.0
        %6672 = vmatprep.subr.mxu0 0.0
        %6673 = vmatpush1.msra.mxu0 0.0
        %6674 = vmatprep.subr.mxu0 0.0
        %6675 = vmatpush1.msra.mxu0 0.0
        %6676 = vmatprep.subr.mxu0 0.0
        %6677 = vmatpush1.msra.mxu0 0.0
        %6678 = vmatprep.subr.mxu0 0.0
        %v6679 = vand.u32 %v5641, 4294901760
        %6680 = vmatpush1.msra.mxu0 %v6679
        %6681 = vmatprep.subr.mxu0 0.0
        %v6682 = vand.u32 %v5640, 4294901760
        %6683 = vmatpush1.msra.mxu0 %v6682
        %6684 = vmatprep.subr.mxu0 0.0
        %v6685 = vand.u32 %v5639, 4294901760
        %6686 = vmatpush1.msra.mxu0 %v6685
        %6687 = vmatprep.subr.mxu0 0.0
        %v6688 = vand.u32 %v5638, 4294901760
        %6689 = vmatpush1.msra.mxu0 %v6688
        %6690 = vmatprep.subr.mxu0 0.0
        %v6691 = vand.u32 %v5637, 4294901760
        %6692 = vmatpush1.msra.mxu0 %v6691
        %6693 = vmatprep.subr.mxu0 0.0
        %v6694 = vand.u32 %v5636, 4294901760
        %6695 = vmatpush1.msra.mxu0 %v6694
        %6696 = vmatprep.subr.mxu0 0.0
        %v6697 = vand.u32 %v5635, 4294901760
        %6698 = vmatpush1.msra.mxu0 %v6697
        %6699 = vmatprep.subr.mxu0 0.0
        %v6700 = vand.u32 %v5634, 4294901760
        %6701 = vmatpush1.msra.mxu0 %v6700
        %6702 = vmatprep.subr.mxu0 0.0
        %6703 = vmatpush2.msra.mxu0 0.0
        %6704 = vmatprep.subr.mxu0 0.0
        %6705 = vmatpush2.msra.mxu0 0.0
        %6706 = vmatprep.subr.mxu0 0.0
        %6707 = vmatpush2.msra.mxu0 0.0
        %6708 = vmatprep.subr.mxu0 0.0
        %6709 = vmatpush2.msra.mxu0 0.0
        %6710 = vmatprep.subr.mxu0 0.0
        %6711 = vmatpush2.msra.mxu0 0.0
        %6712 = vmatprep.subr.mxu0 0.0
        %6713 = vmatpush2.msra.mxu0 0.0
        %6714 = vmatprep.subr.mxu0 0.0
        %6715 = vmatpush2.msra.mxu0 0.0
        %6716 = vmatprep.subr.mxu0 0.0
        %6717 = vmatpush2.msra.mxu0 0.0
        %6718 = vmatprep.subr.mxu0 0.0
        %6719 = vmatpush2.msra.mxu0 0.0
        %6720 = vmatprep.subr.mxu0 0.0
        %6721 = vmatpush2.msra.mxu0 0.0
        %6722 = vmatprep.subr.mxu0 0.0
        %6723 = vmatpush2.msra.mxu0 0.0
        %6724 = vmatprep.subr.mxu0 0.0
        %6725 = vmatpush2.msra.mxu0 0.0
        %6726 = vmatprep.subr.mxu0 0.0
        %6727 = vmatpush2.msra.mxu0 0.0
        %6728 = vmatprep.subr.mxu0 0.0
        %6729 = vmatpush2.msra.mxu0 0.0
        %6730 = vmatprep.subr.mxu0 0.0
        %6731 = vmatpush2.msra.mxu0 0.0
        %6732 = vmatprep.subr.mxu0 0.0
        %6733 = vmatpush2.msra.mxu0 0.0
        %6734 = vmatprep.mubr.f32.mxu0 0.0
        %v6735 = vand.u32 %v6202, 4294901760
        %6736 = vmatmul.mubr.f32.gmra.mxu0 %v6735
        %v6737 = vpop.f32.mrf.mxu0
        %v6738 = vadd.f32 %v6659, %v6737
        %v6739 = vpop.f32.mrf.mxu0
        %6740 = vdwg.mxu0
        %6741 = vst.msk [vmem:[#allocation2 + $0x8] sm:$0xff] %vm139, %v6192
        %s6742 = scalar_lea.vmem [#allocation2], 24
        %6743 = vst.msk [vmem:[%s6742 + $0x8] sm:$0xff] %vm139, %v6738
        %v6744 = vld [vmem:[%s1 + $0x200] sm:$0xff]
        %v6745 = vld [vmem:[%s1 + $0x208] sm:$0xff]
        %v6746 = vld [vmem:[%s1 + $0x210] sm:$0xff]
        %v6747 = vld [vmem:[%s1 + $0x218] sm:$0xff]
        %v6748 = vld [vmem:[%s1 + $0x220] sm:$0xff]
        %v6749 = vld [vmem:[%s1 + $0x228] sm:$0xff]
        %v6750 = vld [vmem:[%s1 + $0x230] sm:$0xff]
        %v6751 = vld [vmem:[%s1 + $0x238] sm:$0xff]
        %v6752 = vld [vmem:[%s1 + $0x240] sm:$0xff]
        %v6753 = vld [vmem:[%s1 + $0x248] sm:$0xff]
        %v6754 = vld [vmem:[%s1 + $0x250] sm:$0xff]
        %v6755 = vld [vmem:[%s1 + $0x258] sm:$0xff]
        %v6756 = vld [vmem:[%s1 + $0x260] sm:$0x1]
        %v6757 = vld [vmem:[%s6742 + $0x7] sm:$0xff]
        %v6758 = vld [vmem:[#allocation2 + $0x8] sm:$0xff]
        %v6759 = vld [vmem:[%s6742 + $0x8] sm:$0xff]
        %6761 = vrot.lane.b32.xlu0 %v6758, 32
        %v6762 = vpop.permute.xlu0 %6761
        %6765 = vrot.lane.b32.xlu0 %v6759, 64
        %v6766 = vpop.permute.xlu0 %6765
        %v6768 = vsel %vm139, %v6757, %v6762
        %v6769 = vsel %vm5654, %v6768, %v6766
        %v6770 = vlaneseq
        %v6771 = vshrl.u32 %v6770, 7
        %v6772 = vsub.s32 0, %v6771
        %v6773 = vrot.slane %v6756, %v6772
        %vm6774 = vcmask 785408
        %v6776 = vsel %vm6774, %v6769, 0
        %6778 = vmatprep.subr.mxu0 0.0
        %6779 = vmatpush1.msra.mxu0 0.0
        %6780 = vmatprep.subr.mxu0 0.0
        %6781 = vmatpush1.msra.mxu0 0.0
        %6782 = vmatprep.subr.mxu0 0.0
        %6783 = vmatpush1.msra.mxu0 0.0
        %6784 = vmatprep.subr.mxu0 0.0
        %6785 = vmatpush1.msra.mxu0 0.0
        %6786 = vmatprep.subr.mxu0 0.0
        %v6787 = vand.u32 %v6755, 4294901760
        %6788 = vmatpush1.msra.mxu0 %v6787
        %6789 = vmatprep.subr.mxu0 0.0
        %v6790 = vand.u32 %v6754, 4294901760
        %6791 = vmatpush1.msra.mxu0 %v6790
        %6792 = vmatprep.subr.mxu0 0.0
        %v6793 = vand.u32 %v6753, 4294901760
        %6794 = vmatpush1.msra.mxu0 %v6793
        %6795 = vmatprep.subr.mxu0 0.0
        %v6796 = vand.u32 %v6752, 4294901760
        %6797 = vmatpush1.msra.mxu0 %v6796
        %6798 = vmatprep.subr.mxu0 0.0
        %v6799 = vand.u32 %v6751, 4294901760
        %6800 = vmatpush1.msra.mxu0 %v6799
        %6801 = vmatprep.subr.mxu0 0.0
        %v6802 = vand.u32 %v6750, 4294901760
        %6803 = vmatpush1.msra.mxu0 %v6802
        %6804 = vmatprep.subr.mxu0 0.0
        %v6805 = vand.u32 %v6749, 4294901760
        %6806 = vmatpush1.msra.mxu0 %v6805
        %6807 = vmatprep.subr.mxu0 0.0
        %v6808 = vand.u32 %v6748, 4294901760
        %6809 = vmatpush1.msra.mxu0 %v6808
        %6810 = vmatprep.subr.mxu0 0.0
        %v6811 = vand.u32 %v6747, 4294901760
        %6812 = vmatpush1.msra.mxu0 %v6811
        %6813 = vmatprep.subr.mxu0 0.0
        %v6814 = vand.u32 %v6746, 4294901760
        %6815 = vmatpush1.msra.mxu0 %v6814
        %6816 = vmatprep.subr.mxu0 0.0
        %v6817 = vand.u32 %v6745, 4294901760
        %6818 = vmatpush1.msra.mxu0 %v6817
        %6819 = vmatprep.subr.mxu0 0.0
        %v6820 = vand.u32 %v6744, 4294901760
        %6821 = vmatpush1.msra.mxu0 %v6820
        %6822 = vmatprep.subr.mxu0 0.0
        %6823 = vmatpush2.msra.mxu0 0.0
        %6824 = vmatprep.subr.mxu0 0.0
        %6825 = vmatpush2.msra.mxu0 0.0
        %6826 = vmatprep.subr.mxu0 0.0
        %6827 = vmatpush2.msra.mxu0 0.0
        %6828 = vmatprep.subr.mxu0 0.0
        %6829 = vmatpush2.msra.mxu0 0.0
        %6830 = vmatprep.subr.mxu0 0.0
        %6831 = vmatpush2.msra.mxu0 0.0
        %6832 = vmatprep.subr.mxu0 0.0
        %6833 = vmatpush2.msra.mxu0 0.0
        %6834 = vmatprep.subr.mxu0 0.0
        %6835 = vmatpush2.msra.mxu0 0.0
        %6836 = vmatprep.subr.mxu0 0.0
        %6837 = vmatpush2.msra.mxu0 0.0
        %6838 = vmatprep.subr.mxu0 0.0
        %6839 = vmatpush2.msra.mxu0 0.0
        %6840 = vmatprep.subr.mxu0 0.0
        %6841 = vmatpush2.msra.mxu0 0.0
        %6842 = vmatprep.subr.mxu0 0.0
        %6843 = vmatpush2.msra.mxu0 0.0
        %6844 = vmatprep.subr.mxu0 0.0
        %6845 = vmatpush2.msra.mxu0 0.0
        %6846 = vmatprep.subr.mxu0 0.0
        %6847 = vmatpush2.msra.mxu0 0.0
        %6848 = vmatprep.subr.mxu0 0.0
        %6849 = vmatpush2.msra.mxu0 0.0
        %6850 = vmatprep.subr.mxu0 0.0
        %6851 = vmatpush2.msra.mxu0 0.0
        %6852 = vmatprep.subr.mxu0 0.0
        %6853 = vmatpush2.msra.mxu0 0.0
        %6854 = vmatprep.mubr.f32.mxu0 0.0
        %v6855 = vand.u32 %v6776, 4294901760
        %v6856 = vsub.f32 %v6776, %v6855
        %v6857 = vand.u32 %v6856, 4294901760
        %v6858 = vsub.f32 %v6856, %v6857
        %v6859 = vand.u32 %v6858, 4294901760
        %6860 = vmatmul.mubr.f32.gmra.mxu0 %v6859
        %v6861 = vpop.f32.mrf.mxu0
        %v6862 = vadd.f32 %v6773, %v6861
        %v6863 = vpop.f32.mrf.mxu0
        %6864 = vdwg.mxu0
        %6865 = vmatprep.subr.mxu0 0.0
        %6866 = vmatpush1.msra.mxu0 0.0
        %6867 = vmatprep.subr.mxu0 0.0
        %6868 = vmatpush1.msra.mxu0 0.0
        %6869 = vmatprep.subr.mxu0 0.0
        %6870 = vmatpush1.msra.mxu0 0.0
        %6871 = vmatprep.subr.mxu0 0.0
        %6872 = vmatpush1.msra.mxu0 0.0
        %6873 = vmatprep.subr.mxu0 0.0
        %v6874 = vand.u32 %v6755, 4294901760
        %v6875 = vsub.f32 %v6755, %v6874
        %v6876 = vand.u32 %v6875, 4294901760
        %v6877 = vsub.f32 %v6875, %v6876
        %v6878 = vand.u32 %v6877, 4294901760
        %6879 = vmatpush1.msra.mxu0 %v6878
        %6880 = vmatprep.subr.mxu0 0.0
        %v6881 = vand.u32 %v6754, 4294901760
        %v6882 = vsub.f32 %v6754, %v6881
        %v6883 = vand.u32 %v6882, 4294901760
        %v6884 = vsub.f32 %v6882, %v6883
        %v6885 = vand.u32 %v6884, 4294901760
        %6886 = vmatpush1.msra.mxu0 %v6885
        %6887 = vmatprep.subr.mxu0 0.0
        %v6888 = vand.u32 %v6753, 4294901760
        %v6889 = vsub.f32 %v6753, %v6888
        %v6890 = vand.u32 %v6889, 4294901760
        %v6891 = vsub.f32 %v6889, %v6890
        %v6892 = vand.u32 %v6891, 4294901760
        %6893 = vmatpush1.msra.mxu0 %v6892
        %6894 = vmatprep.subr.mxu0 0.0
        %v6895 = vand.u32 %v6752, 4294901760
        %v6896 = vsub.f32 %v6752, %v6895
        %v6897 = vand.u32 %v6896, 4294901760
        %v6898 = vsub.f32 %v6896, %v6897
        %v6899 = vand.u32 %v6898, 4294901760
        %6900 = vmatpush1.msra.mxu0 %v6899
        %6901 = vmatprep.subr.mxu0 0.0
        %v6902 = vand.u32 %v6751, 4294901760
        %v6903 = vsub.f32 %v6751, %v6902
        %v6904 = vand.u32 %v6903, 4294901760
        %v6905 = vsub.f32 %v6903, %v6904
        %v6906 = vand.u32 %v6905, 4294901760
        %6907 = vmatpush1.msra.mxu0 %v6906
        %6908 = vmatprep.subr.mxu0 0.0
        %v6909 = vand.u32 %v6750, 4294901760
        %v6910 = vsub.f32 %v6750, %v6909
        %v6911 = vand.u32 %v6910, 4294901760
        %v6912 = vsub.f32 %v6910, %v6911
        %v6913 = vand.u32 %v6912, 4294901760
        %6914 = vmatpush1.msra.mxu0 %v6913
        %6915 = vmatprep.subr.mxu0 0.0
        %v6916 = vand.u32 %v6749, 4294901760
        %v6917 = vsub.f32 %v6749, %v6916
        %v6918 = vand.u32 %v6917, 4294901760
        %v6919 = vsub.f32 %v6917, %v6918
        %v6920 = vand.u32 %v6919, 4294901760
        %6921 = vmatpush1.msra.mxu0 %v6920
        %6922 = vmatprep.subr.mxu0 0.0
        %v6923 = vand.u32 %v6748, 4294901760
        %v6924 = vsub.f32 %v6748, %v6923
        %v6925 = vand.u32 %v6924, 4294901760
        %v6926 = vsub.f32 %v6924, %v6925
        %v6927 = vand.u32 %v6926, 4294901760
        %6928 = vmatpush1.msra.mxu0 %v6927
        %6929 = vmatprep.subr.mxu0 0.0
        %v6930 = vand.u32 %v6747, 4294901760
        %v6931 = vsub.f32 %v6747, %v6930
        %v6932 = vand.u32 %v6931, 4294901760
        %v6933 = vsub.f32 %v6931, %v6932
        %v6934 = vand.u32 %v6933, 4294901760
        %6935 = vmatpush1.msra.mxu0 %v6934
        %6936 = vmatprep.subr.mxu0 0.0
        %v6937 = vand.u32 %v6746, 4294901760
        %v6938 = vsub.f32 %v6746, %v6937
        %v6939 = vand.u32 %v6938, 4294901760
        %v6940 = vsub.f32 %v6938, %v6939
        %v6941 = vand.u32 %v6940, 4294901760
        %6942 = vmatpush1.msra.mxu0 %v6941
        %6943 = vmatprep.subr.mxu0 0.0
        %v6944 = vand.u32 %v6745, 4294901760
        %v6945 = vsub.f32 %v6745, %v6944
        %v6946 = vand.u32 %v6945, 4294901760
        %v6947 = vsub.f32 %v6945, %v6946
        %v6948 = vand.u32 %v6947, 4294901760
        %6949 = vmatpush1.msra.mxu0 %v6948
        %6950 = vmatprep.subr.mxu0 0.0
        %v6951 = vand.u32 %v6744, 4294901760
        %v6952 = vsub.f32 %v6744, %v6951
        %v6953 = vand.u32 %v6952, 4294901760
        %v6954 = vsub.f32 %v6952, %v6953
        %v6955 = vand.u32 %v6954, 4294901760
        %6956 = vmatpush1.msra.mxu0 %v6955
        %6957 = vmatprep.subr.mxu0 0.0
        %6958 = vmatpush2.msra.mxu0 0.0
        %6959 = vmatprep.subr.mxu0 0.0
        %6960 = vmatpush2.msra.mxu0 0.0
        %6961 = vmatprep.subr.mxu0 0.0
        %6962 = vmatpush2.msra.mxu0 0.0
        %6963 = vmatprep.subr.mxu0 0.0
        %6964 = vmatpush2.msra.mxu0 0.0
        %6965 = vmatprep.subr.mxu0 0.0
        %6966 = vmatpush2.msra.mxu0 0.0
        %6967 = vmatprep.subr.mxu0 0.0
        %6968 = vmatpush2.msra.mxu0 0.0
        %6969 = vmatprep.subr.mxu0 0.0
        %6970 = vmatpush2.msra.mxu0 0.0
        %6971 = vmatprep.subr.mxu0 0.0
        %6972 = vmatpush2.msra.mxu0 0.0
        %6973 = vmatprep.subr.mxu0 0.0
        %6974 = vmatpush2.msra.mxu0 0.0
        %6975 = vmatprep.subr.mxu0 0.0
        %6976 = vmatpush2.msra.mxu0 0.0
        %6977 = vmatprep.subr.mxu0 0.0
        %6978 = vmatpush2.msra.mxu0 0.0
        %6979 = vmatprep.subr.mxu0 0.0
        %6980 = vmatpush2.msra.mxu0 0.0
        %6981 = vmatprep.subr.mxu0 0.0
        %6982 = vmatpush2.msra.mxu0 0.0
        %6983 = vmatprep.subr.mxu0 0.0
        %6984 = vmatpush2.msra.mxu0 0.0
        %6985 = vmatprep.subr.mxu0 0.0
        %6986 = vmatpush2.msra.mxu0 0.0
        %6987 = vmatprep.subr.mxu0 0.0
        %6988 = vmatpush2.msra.mxu0 0.0
        %6989 = vmatprep.mubr.f32.mxu0 0.0
        %v6990 = vand.u32 %v6776, 4294901760
        %6991 = vmatmul.mubr.f32.gmra.mxu0 %v6990
        %v6992 = vpop.f32.mrf.mxu0
        %v6993 = vadd.f32 %v6862, %v6992
        %v6994 = vpop.f32.mrf.mxu0
        %6995 = vdwg.mxu0
        %6996 = vmatprep.subr.mxu0 0.0
        %6997 = vmatpush1.msra.mxu0 0.0
        %6998 = vmatprep.subr.mxu0 0.0
        %6999 = vmatpush1.msra.mxu0 0.0
        %7000 = vmatprep.subr.mxu0 0.0
        %7001 = vmatpush1.msra.mxu0 0.0
        %7002 = vmatprep.subr.mxu0 0.0
        %7003 = vmatpush1.msra.mxu0 0.0
        %7004 = vmatprep.subr.mxu0 0.0
        %v7005 = vand.u32 %v6755, 4294901760
        %v7006 = vsub.f32 %v6755, %v7005
        %7007 = vmatpush1.msra.mxu0 %v7006
        %7008 = vmatprep.subr.mxu0 0.0
        %v7009 = vand.u32 %v6754, 4294901760
        %v7010 = vsub.f32 %v6754, %v7009
        %7011 = vmatpush1.msra.mxu0 %v7010
        %7012 = vmatprep.subr.mxu0 0.0
        %v7013 = vand.u32 %v6753, 4294901760
        %v7014 = vsub.f32 %v6753, %v7013
        %7015 = vmatpush1.msra.mxu0 %v7014
        %7016 = vmatprep.subr.mxu0 0.0
        %v7017 = vand.u32 %v6752, 4294901760
        %v7018 = vsub.f32 %v6752, %v7017
        %7019 = vmatpush1.msra.mxu0 %v7018
        %7020 = vmatprep.subr.mxu0 0.0
        %v7021 = vand.u32 %v6751, 4294901760
        %v7022 = vsub.f32 %v6751, %v7021
        %7023 = vmatpush1.msra.mxu0 %v7022
        %7024 = vmatprep.subr.mxu0 0.0
        %v7025 = vand.u32 %v6750, 4294901760
        %v7026 = vsub.f32 %v6750, %v7025
        %7027 = vmatpush1.msra.mxu0 %v7026
        %7028 = vmatprep.subr.mxu0 0.0
        %v7029 = vand.u32 %v6749, 4294901760
        %v7030 = vsub.f32 %v6749, %v7029
        %7031 = vmatpush1.msra.mxu0 %v7030
        %7032 = vmatprep.subr.mxu0 0.0
        %v7033 = vand.u32 %v6748, 4294901760
        %v7034 = vsub.f32 %v6748, %v7033
        %7035 = vmatpush1.msra.mxu0 %v7034
        %7036 = vmatprep.subr.mxu0 0.0
        %v7037 = vand.u32 %v6747, 4294901760
        %v7038 = vsub.f32 %v6747, %v7037
        %7039 = vmatpush1.msra.mxu0 %v7038
        %7040 = vmatprep.subr.mxu0 0.0
        %v7041 = vand.u32 %v6746, 4294901760
        %v7042 = vsub.f32 %v6746, %v7041
        %7043 = vmatpush1.msra.mxu0 %v7042
        %7044 = vmatprep.subr.mxu0 0.0
        %v7045 = vand.u32 %v6745, 4294901760
        %v7046 = vsub.f32 %v6745, %v7045
        %7047 = vmatpush1.msra.mxu0 %v7046
        %7048 = vmatprep.subr.mxu0 0.0
        %v7049 = vand.u32 %v6744, 4294901760
        %v7050 = vsub.f32 %v6744, %v7049
        %7051 = vmatpush1.msra.mxu0 %v7050
        %7052 = vmatprep.subr.mxu0 0.0
        %7053 = vmatpush2.msra.mxu0 0.0
        %7054 = vmatprep.subr.mxu0 0.0
        %7055 = vmatpush2.msra.mxu0 0.0
        %7056 = vmatprep.subr.mxu0 0.0
        %7057 = vmatpush2.msra.mxu0 0.0
        %7058 = vmatprep.subr.mxu0 0.0
        %7059 = vmatpush2.msra.mxu0 0.0
        %7060 = vmatprep.subr.mxu0 0.0
        %7061 = vmatpush2.msra.mxu0 0.0
        %7062 = vmatprep.subr.mxu0 0.0
        %7063 = vmatpush2.msra.mxu0 0.0
        %7064 = vmatprep.subr.mxu0 0.0
        %7065 = vmatpush2.msra.mxu0 0.0
        %7066 = vmatprep.subr.mxu0 0.0
        %7067 = vmatpush2.msra.mxu0 0.0
        %7068 = vmatprep.subr.mxu0 0.0
        %7069 = vmatpush2.msra.mxu0 0.0
        %7070 = vmatprep.subr.mxu0 0.0
        %7071 = vmatpush2.msra.mxu0 0.0
        %7072 = vmatprep.subr.mxu0 0.0
        %7073 = vmatpush2.msra.mxu0 0.0
        %7074 = vmatprep.subr.mxu0 0.0
        %7075 = vmatpush2.msra.mxu0 0.0
        %7076 = vmatprep.subr.mxu0 0.0
        %7077 = vmatpush2.msra.mxu0 0.0
        %7078 = vmatprep.subr.mxu0 0.0
        %7079 = vmatpush2.msra.mxu0 0.0
        %7080 = vmatprep.subr.mxu0 0.0
        %7081 = vmatpush2.msra.mxu0 0.0
        %7082 = vmatprep.subr.mxu0 0.0
        %7083 = vmatpush2.msra.mxu0 0.0
        %7084 = vmatprep.mubr.f32.mxu0 0.0
        %v7085 = vand.u32 %v6776, 4294901760
        %v7086 = vsub.f32 %v6776, %v7085
        %7087 = vmatmul.mubr.f32.gmra.mxu0 %v7086
        %v7088 = vpop.f32.mrf.mxu0
        %v7089 = vadd.f32 %v6993, %v7088
        %v7090 = vpop.f32.mrf.mxu0
        %7091 = vdwg.mxu0
        %7092 = vmatprep.subr.mxu0 0.0
        %7093 = vmatpush1.msra.mxu0 0.0
        %7094 = vmatprep.subr.mxu0 0.0
        %7095 = vmatpush1.msra.mxu0 0.0
        %7096 = vmatprep.subr.mxu0 0.0
        %7097 = vmatpush1.msra.mxu0 0.0
        %7098 = vmatprep.subr.mxu0 0.0
        %7099 = vmatpush1.msra.mxu0 0.0
        %7100 = vmatprep.subr.mxu0 0.0
        %v7101 = vand.u32 %v6755, 4294901760
        %7102 = vmatpush1.msra.mxu0 %v7101
        %7103 = vmatprep.subr.mxu0 0.0
        %v7104 = vand.u32 %v6754, 4294901760
        %7105 = vmatpush1.msra.mxu0 %v7104
        %7106 = vmatprep.subr.mxu0 0.0
        %v7107 = vand.u32 %v6753, 4294901760
        %7108 = vmatpush1.msra.mxu0 %v7107
        %7109 = vmatprep.subr.mxu0 0.0
        %v7110 = vand.u32 %v6752, 4294901760
        %7111 = vmatpush1.msra.mxu0 %v7110
        %7112 = vmatprep.subr.mxu0 0.0
        %v7113 = vand.u32 %v6751, 4294901760
        %7114 = vmatpush1.msra.mxu0 %v7113
        %7115 = vmatprep.subr.mxu0 0.0
        %v7116 = vand.u32 %v6750, 4294901760
        %7117 = vmatpush1.msra.mxu0 %v7116
        %7118 = vmatprep.subr.mxu0 0.0
        %v7119 = vand.u32 %v6749, 4294901760
        %7120 = vmatpush1.msra.mxu0 %v7119
        %7121 = vmatprep.subr.mxu0 0.0
        %v7122 = vand.u32 %v6748, 4294901760
        %7123 = vmatpush1.msra.mxu0 %v7122
        %7124 = vmatprep.subr.mxu0 0.0
        %v7125 = vand.u32 %v6747, 4294901760
        %7126 = vmatpush1.msra.mxu0 %v7125
        %7127 = vmatprep.subr.mxu0 0.0
        %v7128 = vand.u32 %v6746, 4294901760
        %7129 = vmatpush1.msra.mxu0 %v7128
        %7130 = vmatprep.subr.mxu0 0.0
        %v7131 = vand.u32 %v6745, 4294901760
        %7132 = vmatpush1.msra.mxu0 %v7131
        %7133 = vmatprep.subr.mxu0 0.0
        %v7134 = vand.u32 %v6744, 4294901760
        %7135 = vmatpush1.msra.mxu0 %v7134
        %7136 = vmatprep.subr.mxu0 0.0
        %7137 = vmatpush2.msra.mxu0 0.0
        %7138 = vmatprep.subr.mxu0 0.0
        %7139 = vmatpush2.msra.mxu0 0.0
        %7140 = vmatprep.subr.mxu0 0.0
        %7141 = vmatpush2.msra.mxu0 0.0
        %7142 = vmatprep.subr.mxu0 0.0
        %7143 = vmatpush2.msra.mxu0 0.0
        %7144 = vmatprep.subr.mxu0 0.0
        %7145 = vmatpush2.msra.mxu0 0.0
        %7146 = vmatprep.subr.mxu0 0.0
        %7147 = vmatpush2.msra.mxu0 0.0
        %7148 = vmatprep.subr.mxu0 0.0
        %7149 = vmatpush2.msra.mxu0 0.0
        %7150 = vmatprep.subr.mxu0 0.0
        %7151 = vmatpush2.msra.mxu0 0.0
        %7152 = vmatprep.subr.mxu0 0.0
        %7153 = vmatpush2.msra.mxu0 0.0
        %7154 = vmatprep.subr.mxu0 0.0
        %7155 = vmatpush2.msra.mxu0 0.0
        %7156 = vmatprep.subr.mxu0 0.0
        %7157 = vmatpush2.msra.mxu0 0.0
        %7158 = vmatprep.subr.mxu0 0.0
        %7159 = vmatpush2.msra.mxu0 0.0
        %7160 = vmatprep.subr.mxu0 0.0
        %7161 = vmatpush2.msra.mxu0 0.0
        %7162 = vmatprep.subr.mxu0 0.0
        %7163 = vmatpush2.msra.mxu0 0.0
        %7164 = vmatprep.subr.mxu0 0.0
        %7165 = vmatpush2.msra.mxu0 0.0
        %7166 = vmatprep.subr.mxu0 0.0
        %7167 = vmatpush2.msra.mxu0 0.0
        %7168 = vmatprep.mubr.f32.mxu0 0.0
        %v7169 = vand.u32 %v6776, 4294901760
        %v7170 = vsub.f32 %v6776, %v7169
        %v7171 = vand.u32 %v7170, 4294901760
        %7172 = vmatmul.mubr.f32.gmra.mxu0 %v7171
        %v7173 = vpop.f32.mrf.mxu0
        %v7174 = vadd.f32 %v7089, %v7173
        %v7175 = vpop.f32.mrf.mxu0
        %7176 = vdwg.mxu0
        %7177 = vmatprep.subr.mxu0 0.0
        %7178 = vmatpush1.msra.mxu0 0.0
        %7179 = vmatprep.subr.mxu0 0.0
        %7180 = vmatpush1.msra.mxu0 0.0
        %7181 = vmatprep.subr.mxu0 0.0
        %7182 = vmatpush1.msra.mxu0 0.0
        %7183 = vmatprep.subr.mxu0 0.0
        %7184 = vmatpush1.msra.mxu0 0.0
        %7185 = vmatprep.subr.mxu0 0.0
        %v7186 = vand.u32 %v6755, 4294901760
        %v7187 = vsub.f32 %v6755, %v7186
        %v7188 = vand.u32 %v7187, 4294901760
        %7189 = vmatpush1.msra.mxu0 %v7188
        %7190 = vmatprep.subr.mxu0 0.0
        %v7191 = vand.u32 %v6754, 4294901760
        %v7192 = vsub.f32 %v6754, %v7191
        %v7193 = vand.u32 %v7192, 4294901760
        %7194 = vmatpush1.msra.mxu0 %v7193
        %7195 = vmatprep.subr.mxu0 0.0
        %v7196 = vand.u32 %v6753, 4294901760
        %v7197 = vsub.f32 %v6753, %v7196
        %v7198 = vand.u32 %v7197, 4294901760
        %7199 = vmatpush1.msra.mxu0 %v7198
        %7200 = vmatprep.subr.mxu0 0.0
        %v7201 = vand.u32 %v6752, 4294901760
        %v7202 = vsub.f32 %v6752, %v7201
        %v7203 = vand.u32 %v7202, 4294901760
        %7204 = vmatpush1.msra.mxu0 %v7203
        %7205 = vmatprep.subr.mxu0 0.0
        %v7206 = vand.u32 %v6751, 4294901760
        %v7207 = vsub.f32 %v6751, %v7206
        %v7208 = vand.u32 %v7207, 4294901760
        %7209 = vmatpush1.msra.mxu0 %v7208
        %7210 = vmatprep.subr.mxu0 0.0
        %v7211 = vand.u32 %v6750, 4294901760
        %v7212 = vsub.f32 %v6750, %v7211
        %v7213 = vand.u32 %v7212, 4294901760
        %7214 = vmatpush1.msra.mxu0 %v7213
        %7215 = vmatprep.subr.mxu0 0.0
        %v7216 = vand.u32 %v6749, 4294901760
        %v7217 = vsub.f32 %v6749, %v7216
        %v7218 = vand.u32 %v7217, 4294901760
        %7219 = vmatpush1.msra.mxu0 %v7218
        %7220 = vmatprep.subr.mxu0 0.0
        %v7221 = vand.u32 %v6748, 4294901760
        %v7222 = vsub.f32 %v6748, %v7221
        %v7223 = vand.u32 %v7222, 4294901760
        %7224 = vmatpush1.msra.mxu0 %v7223
        %7225 = vmatprep.subr.mxu0 0.0
        %v7226 = vand.u32 %v6747, 4294901760
        %v7227 = vsub.f32 %v6747, %v7226
        %v7228 = vand.u32 %v7227, 4294901760
        %7229 = vmatpush1.msra.mxu0 %v7228
        %7230 = vmatprep.subr.mxu0 0.0
        %v7231 = vand.u32 %v6746, 4294901760
        %v7232 = vsub.f32 %v6746, %v7231
        %v7233 = vand.u32 %v7232, 4294901760
        %7234 = vmatpush1.msra.mxu0 %v7233
        %7235 = vmatprep.subr.mxu0 0.0
        %v7236 = vand.u32 %v6745, 4294901760
        %v7237 = vsub.f32 %v6745, %v7236
        %v7238 = vand.u32 %v7237, 4294901760
        %7239 = vmatpush1.msra.mxu0 %v7238
        %7240 = vmatprep.subr.mxu0 0.0
        %v7241 = vand.u32 %v6744, 4294901760
        %v7242 = vsub.f32 %v6744, %v7241
        %v7243 = vand.u32 %v7242, 4294901760
        %7244 = vmatpush1.msra.mxu0 %v7243
        %7245 = vmatprep.subr.mxu0 0.0
        %7246 = vmatpush2.msra.mxu0 0.0
        %7247 = vmatprep.subr.mxu0 0.0
        %7248 = vmatpush2.msra.mxu0 0.0
        %7249 = vmatprep.subr.mxu0 0.0
        %7250 = vmatpush2.msra.mxu0 0.0
        %7251 = vmatprep.subr.mxu0 0.0
        %7252 = vmatpush2.msra.mxu0 0.0
        %7253 = vmatprep.subr.mxu0 0.0
        %7254 = vmatpush2.msra.mxu0 0.0
        %7255 = vmatprep.subr.mxu0 0.0
        %7256 = vmatpush2.msra.mxu0 0.0
        %7257 = vmatprep.subr.mxu0 0.0
        %7258 = vmatpush2.msra.mxu0 0.0
        %7259 = vmatprep.subr.mxu0 0.0
        %7260 = vmatpush2.msra.mxu0 0.0
        %7261 = vmatprep.subr.mxu0 0.0
        %7262 = vmatpush2.msra.mxu0 0.0
        %7263 = vmatprep.subr.mxu0 0.0
        %7264 = vmatpush2.msra.mxu0 0.0
        %7265 = vmatprep.subr.mxu0 0.0
        %7266 = vmatpush2.msra.mxu0 0.0
        %7267 = vmatprep.subr.mxu0 0.0
        %7268 = vmatpush2.msra.mxu0 0.0
        %7269 = vmatprep.subr.mxu0 0.0
        %7270 = vmatpush2.msra.mxu0 0.0
        %7271 = vmatprep.subr.mxu0 0.0
        %7272 = vmatpush2.msra.mxu0 0.0
        %7273 = vmatprep.subr.mxu0 0.0
        %7274 = vmatpush2.msra.mxu0 0.0
        %7275 = vmatprep.subr.mxu0 0.0
        %7276 = vmatpush2.msra.mxu0 0.0
        %7277 = vmatprep.mubr.f32.mxu0 0.0
        %v7278 = vand.u32 %v6776, 4294901760
        %7279 = vmatmul.mubr.f32.gmra.mxu0 %v7278
        %v7280 = vpop.f32.mrf.mxu0
        %v7281 = vadd.f32 %v7174, %v7280
        %v7282 = vpop.f32.mrf.mxu0
        %7283 = vdwg.mxu0
        %7284 = vmatprep.subr.mxu0 0.0
        %7285 = vmatpush1.msra.mxu0 0.0
        %7286 = vmatprep.subr.mxu0 0.0
        %7287 = vmatpush1.msra.mxu0 0.0
        %7288 = vmatprep.subr.mxu0 0.0
        %7289 = vmatpush1.msra.mxu0 0.0
        %7290 = vmatprep.subr.mxu0 0.0
        %7291 = vmatpush1.msra.mxu0 0.0
        %7292 = vmatprep.subr.mxu0 0.0
        %v7293 = vand.u32 %v6755, 4294901760
        %7294 = vmatpush1.msra.mxu0 %v7293
        %7295 = vmatprep.subr.mxu0 0.0
        %v7296 = vand.u32 %v6754, 4294901760
        %7297 = vmatpush1.msra.mxu0 %v7296
        %7298 = vmatprep.subr.mxu0 0.0
        %v7299 = vand.u32 %v6753, 4294901760
        %7300 = vmatpush1.msra.mxu0 %v7299
        %7301 = vmatprep.subr.mxu0 0.0
        %v7302 = vand.u32 %v6752, 4294901760
        %7303 = vmatpush1.msra.mxu0 %v7302
        %7304 = vmatprep.subr.mxu0 0.0
        %v7305 = vand.u32 %v6751, 4294901760
        %7306 = vmatpush1.msra.mxu0 %v7305
        %7307 = vmatprep.subr.mxu0 0.0
        %v7308 = vand.u32 %v6750, 4294901760
        %7309 = vmatpush1.msra.mxu0 %v7308
        %7310 = vmatprep.subr.mxu0 0.0
        %v7311 = vand.u32 %v6749, 4294901760
        %7312 = vmatpush1.msra.mxu0 %v7311
        %7313 = vmatprep.subr.mxu0 0.0
        %v7314 = vand.u32 %v6748, 4294901760
        %7315 = vmatpush1.msra.mxu0 %v7314
        %7316 = vmatprep.subr.mxu0 0.0
        %v7317 = vand.u32 %v6747, 4294901760
        %7318 = vmatpush1.msra.mxu0 %v7317
        %7319 = vmatprep.subr.mxu0 0.0
        %v7320 = vand.u32 %v6746, 4294901760
        %7321 = vmatpush1.msra.mxu0 %v7320
        %7322 = vmatprep.subr.mxu0 0.0
        %v7323 = vand.u32 %v6745, 4294901760
        %7324 = vmatpush1.msra.mxu0 %v7323
        %7325 = vmatprep.subr.mxu0 0.0
        %v7326 = vand.u32 %v6744, 4294901760
        %7327 = vmatpush1.msra.mxu0 %v7326
        %7328 = vmatprep.subr.mxu0 0.0
        %7329 = vmatpush2.msra.mxu0 0.0
        %7330 = vmatprep.subr.mxu0 0.0
        %7331 = vmatpush2.msra.mxu0 0.0
        %7332 = vmatprep.subr.mxu0 0.0
        %7333 = vmatpush2.msra.mxu0 0.0
        %7334 = vmatprep.subr.mxu0 0.0
        %7335 = vmatpush2.msra.mxu0 0.0
        %7336 = vmatprep.subr.mxu0 0.0
        %7337 = vmatpush2.msra.mxu0 0.0
        %7338 = vmatprep.subr.mxu0 0.0
        %7339 = vmatpush2.msra.mxu0 0.0
        %7340 = vmatprep.subr.mxu0 0.0
        %7341 = vmatpush2.msra.mxu0 0.0
        %7342 = vmatprep.subr.mxu0 0.0
        %7343 = vmatpush2.msra.mxu0 0.0
        %7344 = vmatprep.subr.mxu0 0.0
        %7345 = vmatpush2.msra.mxu0 0.0
        %7346 = vmatprep.subr.mxu0 0.0
        %7347 = vmatpush2.msra.mxu0 0.0
        %7348 = vmatprep.subr.mxu0 0.0
        %7349 = vmatpush2.msra.mxu0 0.0
        %7350 = vmatprep.subr.mxu0 0.0
        %7351 = vmatpush2.msra.mxu0 0.0
        %7352 = vmatprep.subr.mxu0 0.0
        %7353 = vmatpush2.msra.mxu0 0.0
        %7354 = vmatprep.subr.mxu0 0.0
        %7355 = vmatpush2.msra.mxu0 0.0
        %7356 = vmatprep.subr.mxu0 0.0
        %7357 = vmatpush2.msra.mxu0 0.0
        %7358 = vmatprep.subr.mxu0 0.0
        %7359 = vmatpush2.msra.mxu0 0.0
        %7360 = vmatprep.mubr.f32.mxu0 0.0
        %v7361 = vand.u32 %v6776, 4294901760
        %7362 = vmatmul.mubr.f32.gmra.mxu0 %v7361
        %v7363 = vpop.f32.mrf.mxu0
        %v7364 = vadd.f32 %v7281, %v7363
        %v7365 = vpop.f32.mrf.mxu0
        %7366 = vdwg.mxu0
        %v7367 = vmax.f32 %v7364, 0.0
        %v7368 = vld [vmem:[#allocation2 + $0x9] sm:$0xff]
        %7369 = vrot.lane.b32.xlu0 %v6759, 32
        %v7370 = vpop.permute.xlu0 %7369
        %7373 = vrot.lane.b32.xlu0 %v7368, 64
        %v7374 = vpop.permute.xlu0 %7373
        %v7376 = vsel %vm139, %v6758, %v7370
        %v7377 = vsel %vm5654, %v7376, %v7374
        %v7379 = vsel %vm6774, %v7377, 0
        %7381 = vmatprep.subr.mxu0 0.0
        %7382 = vmatpush1.msra.mxu0 0.0
        %7383 = vmatprep.subr.mxu0 0.0
        %7384 = vmatpush1.msra.mxu0 0.0
        %7385 = vmatprep.subr.mxu0 0.0
        %7386 = vmatpush1.msra.mxu0 0.0
        %7387 = vmatprep.subr.mxu0 0.0
        %7388 = vmatpush1.msra.mxu0 0.0
        %7389 = vmatprep.subr.mxu0 0.0
        %v7390 = vand.u32 %v6755, 4294901760
        %7391 = vmatpush1.msra.mxu0 %v7390
        %7392 = vmatprep.subr.mxu0 0.0
        %v7393 = vand.u32 %v6754, 4294901760
        %7394 = vmatpush1.msra.mxu0 %v7393
        %7395 = vmatprep.subr.mxu0 0.0
        %v7396 = vand.u32 %v6753, 4294901760
        %7397 = vmatpush1.msra.mxu0 %v7396
        %7398 = vmatprep.subr.mxu0 0.0
        %v7399 = vand.u32 %v6752, 4294901760
        %7400 = vmatpush1.msra.mxu0 %v7399
        %7401 = vmatprep.subr.mxu0 0.0
        %v7402 = vand.u32 %v6751, 4294901760
        %7403 = vmatpush1.msra.mxu0 %v7402
        %7404 = vmatprep.subr.mxu0 0.0
        %v7405 = vand.u32 %v6750, 4294901760
        %7406 = vmatpush1.msra.mxu0 %v7405
        %7407 = vmatprep.subr.mxu0 0.0
        %v7408 = vand.u32 %v6749, 4294901760
        %7409 = vmatpush1.msra.mxu0 %v7408
        %7410 = vmatprep.subr.mxu0 0.0
        %v7411 = vand.u32 %v6748, 4294901760
        %7412 = vmatpush1.msra.mxu0 %v7411
        %7413 = vmatprep.subr.mxu0 0.0
        %v7414 = vand.u32 %v6747, 4294901760
        %7415 = vmatpush1.msra.mxu0 %v7414
        %7416 = vmatprep.subr.mxu0 0.0
        %v7417 = vand.u32 %v6746, 4294901760
        %7418 = vmatpush1.msra.mxu0 %v7417
        %7419 = vmatprep.subr.mxu0 0.0
        %v7420 = vand.u32 %v6745, 4294901760
        %7421 = vmatpush1.msra.mxu0 %v7420
        %7422 = vmatprep.subr.mxu0 0.0
        %v7423 = vand.u32 %v6744, 4294901760
        %7424 = vmatpush1.msra.mxu0 %v7423
        %7425 = vmatprep.subr.mxu0 0.0
        %7426 = vmatpush2.msra.mxu0 0.0
        %7427 = vmatprep.subr.mxu0 0.0
        %7428 = vmatpush2.msra.mxu0 0.0
        %7429 = vmatprep.subr.mxu0 0.0
        %7430 = vmatpush2.msra.mxu0 0.0
        %7431 = vmatprep.subr.mxu0 0.0
        %7432 = vmatpush2.msra.mxu0 0.0
        %7433 = vmatprep.subr.mxu0 0.0
        %7434 = vmatpush2.msra.mxu0 0.0
        %7435 = vmatprep.subr.mxu0 0.0
        %7436 = vmatpush2.msra.mxu0 0.0
        %7437 = vmatprep.subr.mxu0 0.0
        %7438 = vmatpush2.msra.mxu0 0.0
        %7439 = vmatprep.subr.mxu0 0.0
        %7440 = vmatpush2.msra.mxu0 0.0
        %7441 = vmatprep.subr.mxu0 0.0
        %7442 = vmatpush2.msra.mxu0 0.0
        %7443 = vmatprep.subr.mxu0 0.0
        %7444 = vmatpush2.msra.mxu0 0.0
        %7445 = vmatprep.subr.mxu0 0.0
        %7446 = vmatpush2.msra.mxu0 0.0
        %7447 = vmatprep.subr.mxu0 0.0
        %7448 = vmatpush2.msra.mxu0 0.0
        %7449 = vmatprep.subr.mxu0 0.0
        %7450 = vmatpush2.msra.mxu0 0.0
        %7451 = vmatprep.subr.mxu0 0.0
        %7452 = vmatpush2.msra.mxu0 0.0
        %7453 = vmatprep.subr.mxu0 0.0
        %7454 = vmatpush2.msra.mxu0 0.0
        %7455 = vmatprep.subr.mxu0 0.0
        %7456 = vmatpush2.msra.mxu0 0.0
        %7457 = vmatprep.mubr.f32.mxu0 0.0
        %v7458 = vand.u32 %v7379, 4294901760
        %v7459 = vsub.f32 %v7379, %v7458
        %v7460 = vand.u32 %v7459, 4294901760
        %v7461 = vsub.f32 %v7459, %v7460
        %v7462 = vand.u32 %v7461, 4294901760
        %7463 = vmatmul.mubr.f32.gmra.mxu0 %v7462
        %v7464 = vpop.f32.mrf.mxu0
        %v7465 = vadd.f32 %v6773, %v7464
        %v7466 = vpop.f32.mrf.mxu0
        %7467 = vdwg.mxu0
        %7468 = vmatprep.subr.mxu0 0.0
        %7469 = vmatpush1.msra.mxu0 0.0
        %7470 = vmatprep.subr.mxu0 0.0
        %7471 = vmatpush1.msra.mxu0 0.0
        %7472 = vmatprep.subr.mxu0 0.0
        %7473 = vmatpush1.msra.mxu0 0.0
        %7474 = vmatprep.subr.mxu0 0.0
        %7475 = vmatpush1.msra.mxu0 0.0
        %7476 = vmatprep.subr.mxu0 0.0
        %v7477 = vand.u32 %v6755, 4294901760
        %v7478 = vsub.f32 %v6755, %v7477
        %v7479 = vand.u32 %v7478, 4294901760
        %v7480 = vsub.f32 %v7478, %v7479
        %v7481 = vand.u32 %v7480, 4294901760
        %7482 = vmatpush1.msra.mxu0 %v7481
        %7483 = vmatprep.subr.mxu0 0.0
        %v7484 = vand.u32 %v6754, 4294901760
        %v7485 = vsub.f32 %v6754, %v7484
        %v7486 = vand.u32 %v7485, 4294901760
        %v7487 = vsub.f32 %v7485, %v7486
        %v7488 = vand.u32 %v7487, 4294901760
        %7489 = vmatpush1.msra.mxu0 %v7488
        %7490 = vmatprep.subr.mxu0 0.0
        %v7491 = vand.u32 %v6753, 4294901760
        %v7492 = vsub.f32 %v6753, %v7491
        %v7493 = vand.u32 %v7492, 4294901760
        %v7494 = vsub.f32 %v7492, %v7493
        %v7495 = vand.u32 %v7494, 4294901760
        %7496 = vmatpush1.msra.mxu0 %v7495
        %7497 = vmatprep.subr.mxu0 0.0
        %v7498 = vand.u32 %v6752, 4294901760
        %v7499 = vsub.f32 %v6752, %v7498
        %v7500 = vand.u32 %v7499, 4294901760
        %v7501 = vsub.f32 %v7499, %v7500
        %v7502 = vand.u32 %v7501, 4294901760
        %7503 = vmatpush1.msra.mxu0 %v7502
        %7504 = vmatprep.subr.mxu0 0.0
        %v7505 = vand.u32 %v6751, 4294901760
        %v7506 = vsub.f32 %v6751, %v7505
        %v7507 = vand.u32 %v7506, 4294901760
        %v7508 = vsub.f32 %v7506, %v7507
        %v7509 = vand.u32 %v7508, 4294901760
        %7510 = vmatpush1.msra.mxu0 %v7509
        %7511 = vmatprep.subr.mxu0 0.0
        %v7512 = vand.u32 %v6750, 4294901760
        %v7513 = vsub.f32 %v6750, %v7512
        %v7514 = vand.u32 %v7513, 4294901760
        %v7515 = vsub.f32 %v7513, %v7514
        %v7516 = vand.u32 %v7515, 4294901760
        %7517 = vmatpush1.msra.mxu0 %v7516
        %7518 = vmatprep.subr.mxu0 0.0
        %v7519 = vand.u32 %v6749, 4294901760
        %v7520 = vsub.f32 %v6749, %v7519
        %v7521 = vand.u32 %v7520, 4294901760
        %v7522 = vsub.f32 %v7520, %v7521
        %v7523 = vand.u32 %v7522, 4294901760
        %7524 = vmatpush1.msra.mxu0 %v7523
        %7525 = vmatprep.subr.mxu0 0.0
        %v7526 = vand.u32 %v6748, 4294901760
        %v7527 = vsub.f32 %v6748, %v7526
        %v7528 = vand.u32 %v7527, 4294901760
        %v7529 = vsub.f32 %v7527, %v7528
        %v7530 = vand.u32 %v7529, 4294901760
        %7531 = vmatpush1.msra.mxu0 %v7530
        %7532 = vmatprep.subr.mxu0 0.0
        %v7533 = vand.u32 %v6747, 4294901760
        %v7534 = vsub.f32 %v6747, %v7533
        %v7535 = vand.u32 %v7534, 4294901760
        %v7536 = vsub.f32 %v7534, %v7535
        %v7537 = vand.u32 %v7536, 4294901760
        %7538 = vmatpush1.msra.mxu0 %v7537
        %7539 = vmatprep.subr.mxu0 0.0
        %v7540 = vand.u32 %v6746, 4294901760
        %v7541 = vsub.f32 %v6746, %v7540
        %v7542 = vand.u32 %v7541, 4294901760
        %v7543 = vsub.f32 %v7541, %v7542
        %v7544 = vand.u32 %v7543, 4294901760
        %7545 = vmatpush1.msra.mxu0 %v7544
        %7546 = vmatprep.subr.mxu0 0.0
        %v7547 = vand.u32 %v6745, 4294901760
        %v7548 = vsub.f32 %v6745, %v7547
        %v7549 = vand.u32 %v7548, 4294901760
        %v7550 = vsub.f32 %v7548, %v7549
        %v7551 = vand.u32 %v7550, 4294901760
        %7552 = vmatpush1.msra.mxu0 %v7551
        %7553 = vmatprep.subr.mxu0 0.0
        %v7554 = vand.u32 %v6744, 4294901760
        %v7555 = vsub.f32 %v6744, %v7554
        %v7556 = vand.u32 %v7555, 4294901760
        %v7557 = vsub.f32 %v7555, %v7556
        %v7558 = vand.u32 %v7557, 4294901760
        %7559 = vmatpush1.msra.mxu0 %v7558
        %7560 = vmatprep.subr.mxu0 0.0
        %7561 = vmatpush2.msra.mxu0 0.0
        %7562 = vmatprep.subr.mxu0 0.0
        %7563 = vmatpush2.msra.mxu0 0.0
        %7564 = vmatprep.subr.mxu0 0.0
        %7565 = vmatpush2.msra.mxu0 0.0
        %7566 = vmatprep.subr.mxu0 0.0
        %7567 = vmatpush2.msra.mxu0 0.0
        %7568 = vmatprep.subr.mxu0 0.0
        %7569 = vmatpush2.msra.mxu0 0.0
        %7570 = vmatprep.subr.mxu0 0.0
        %7571 = vmatpush2.msra.mxu0 0.0
        %7572 = vmatprep.subr.mxu0 0.0
        %7573 = vmatpush2.msra.mxu0 0.0
        %7574 = vmatprep.subr.mxu0 0.0
        %7575 = vmatpush2.msra.mxu0 0.0
        %7576 = vmatprep.subr.mxu0 0.0
        %7577 = vmatpush2.msra.mxu0 0.0
        %7578 = vmatprep.subr.mxu0 0.0
        %7579 = vmatpush2.msra.mxu0 0.0
        %7580 = vmatprep.subr.mxu0 0.0
        %7581 = vmatpush2.msra.mxu0 0.0
        %7582 = vmatprep.subr.mxu0 0.0
        %7583 = vmatpush2.msra.mxu0 0.0
        %7584 = vmatprep.subr.mxu0 0.0
        %7585 = vmatpush2.msra.mxu0 0.0
        %7586 = vmatprep.subr.mxu0 0.0
        %7587 = vmatpush2.msra.mxu0 0.0
        %7588 = vmatprep.subr.mxu0 0.0
        %7589 = vmatpush2.msra.mxu0 0.0
        %7590 = vmatprep.subr.mxu0 0.0
        %7591 = vmatpush2.msra.mxu0 0.0
        %7592 = vmatprep.mubr.f32.mxu0 0.0
        %v7593 = vand.u32 %v7379, 4294901760
        %7594 = vmatmul.mubr.f32.gmra.mxu0 %v7593
        %v7595 = vpop.f32.mrf.mxu0
        %v7596 = vadd.f32 %v7465, %v7595
        %v7597 = vpop.f32.mrf.mxu0
        %7598 = vdwg.mxu0
        %7599 = vmatprep.subr.mxu0 0.0
        %7600 = vmatpush1.msra.mxu0 0.0
        %7601 = vmatprep.subr.mxu0 0.0
        %7602 = vmatpush1.msra.mxu0 0.0
        %7603 = vmatprep.subr.mxu0 0.0
        %7604 = vmatpush1.msra.mxu0 0.0
        %7605 = vmatprep.subr.mxu0 0.0
        %7606 = vmatpush1.msra.mxu0 0.0
        %7607 = vmatprep.subr.mxu0 0.0
        %v7608 = vand.u32 %v6755, 4294901760
        %v7609 = vsub.f32 %v6755, %v7608
        %7610 = vmatpush1.msra.mxu0 %v7609
        %7611 = vmatprep.subr.mxu0 0.0
        %v7612 = vand.u32 %v6754, 4294901760
        %v7613 = vsub.f32 %v6754, %v7612
        %7614 = vmatpush1.msra.mxu0 %v7613
        %7615 = vmatprep.subr.mxu0 0.0
        %v7616 = vand.u32 %v6753, 4294901760
        %v7617 = vsub.f32 %v6753, %v7616
        %7618 = vmatpush1.msra.mxu0 %v7617
        %7619 = vmatprep.subr.mxu0 0.0
        %v7620 = vand.u32 %v6752, 4294901760
        %v7621 = vsub.f32 %v6752, %v7620
        %7622 = vmatpush1.msra.mxu0 %v7621
        %7623 = vmatprep.subr.mxu0 0.0
        %v7624 = vand.u32 %v6751, 4294901760
        %v7625 = vsub.f32 %v6751, %v7624
        %7626 = vmatpush1.msra.mxu0 %v7625
        %7627 = vmatprep.subr.mxu0 0.0
        %v7628 = vand.u32 %v6750, 4294901760
        %v7629 = vsub.f32 %v6750, %v7628
        %7630 = vmatpush1.msra.mxu0 %v7629
        %7631 = vmatprep.subr.mxu0 0.0
        %v7632 = vand.u32 %v6749, 4294901760
        %v7633 = vsub.f32 %v6749, %v7632
        %7634 = vmatpush1.msra.mxu0 %v7633
        %7635 = vmatprep.subr.mxu0 0.0
        %v7636 = vand.u32 %v6748, 4294901760
        %v7637 = vsub.f32 %v6748, %v7636
        %7638 = vmatpush1.msra.mxu0 %v7637
        %7639 = vmatprep.subr.mxu0 0.0
        %v7640 = vand.u32 %v6747, 4294901760
        %v7641 = vsub.f32 %v6747, %v7640
        %7642 = vmatpush1.msra.mxu0 %v7641
        %7643 = vmatprep.subr.mxu0 0.0
        %v7644 = vand.u32 %v6746, 4294901760
        %v7645 = vsub.f32 %v6746, %v7644
        %7646 = vmatpush1.msra.mxu0 %v7645
        %7647 = vmatprep.subr.mxu0 0.0
        %v7648 = vand.u32 %v6745, 4294901760
        %v7649 = vsub.f32 %v6745, %v7648
        %7650 = vmatpush1.msra.mxu0 %v7649
        %7651 = vmatprep.subr.mxu0 0.0
        %v7652 = vand.u32 %v6744, 4294901760
        %v7653 = vsub.f32 %v6744, %v7652
        %7654 = vmatpush1.msra.mxu0 %v7653
        %7655 = vmatprep.subr.mxu0 0.0
        %7656 = vmatpush2.msra.mxu0 0.0
        %7657 = vmatprep.subr.mxu0 0.0
        %7658 = vmatpush2.msra.mxu0 0.0
        %7659 = vmatprep.subr.mxu0 0.0
        %7660 = vmatpush2.msra.mxu0 0.0
        %7661 = vmatprep.subr.mxu0 0.0
        %7662 = vmatpush2.msra.mxu0 0.0
        %7663 = vmatprep.subr.mxu0 0.0
        %7664 = vmatpush2.msra.mxu0 0.0
        %7665 = vmatprep.subr.mxu0 0.0
        %7666 = vmatpush2.msra.mxu0 0.0
        %7667 = vmatprep.subr.mxu0 0.0
        %7668 = vmatpush2.msra.mxu0 0.0
        %7669 = vmatprep.subr.mxu0 0.0
        %7670 = vmatpush2.msra.mxu0 0.0
        %7671 = vmatprep.subr.mxu0 0.0
        %7672 = vmatpush2.msra.mxu0 0.0
        %7673 = vmatprep.subr.mxu0 0.0
        %7674 = vmatpush2.msra.mxu0 0.0
        %7675 = vmatprep.subr.mxu0 0.0
        %7676 = vmatpush2.msra.mxu0 0.0
        %7677 = vmatprep.subr.mxu0 0.0
        %7678 = vmatpush2.msra.mxu0 0.0
        %7679 = vmatprep.subr.mxu0 0.0
        %7680 = vmatpush2.msra.mxu0 0.0
        %7681 = vmatprep.subr.mxu0 0.0
        %7682 = vmatpush2.msra.mxu0 0.0
        %7683 = vmatprep.subr.mxu0 0.0
        %7684 = vmatpush2.msra.mxu0 0.0
        %7685 = vmatprep.subr.mxu0 0.0
        %7686 = vmatpush2.msra.mxu0 0.0
        %7687 = vmatprep.mubr.f32.mxu0 0.0
        %v7688 = vand.u32 %v7379, 4294901760
        %v7689 = vsub.f32 %v7379, %v7688
        %7690 = vmatmul.mubr.f32.gmra.mxu0 %v7689
        %v7691 = vpop.f32.mrf.mxu0
        %v7692 = vadd.f32 %v7596, %v7691
        %v7693 = vpop.f32.mrf.mxu0
        %7694 = vdwg.mxu0
        %7695 = vmatprep.subr.mxu0 0.0
        %7696 = vmatpush1.msra.mxu0 0.0
        %7697 = vmatprep.subr.mxu0 0.0
        %7698 = vmatpush1.msra.mxu0 0.0
        %7699 = vmatprep.subr.mxu0 0.0
        %7700 = vmatpush1.msra.mxu0 0.0
        %7701 = vmatprep.subr.mxu0 0.0
        %7702 = vmatpush1.msra.mxu0 0.0
        %7703 = vmatprep.subr.mxu0 0.0
        %v7704 = vand.u32 %v6755, 4294901760
        %7705 = vmatpush1.msra.mxu0 %v7704
        %7706 = vmatprep.subr.mxu0 0.0
        %v7707 = vand.u32 %v6754, 4294901760
        %7708 = vmatpush1.msra.mxu0 %v7707
        %7709 = vmatprep.subr.mxu0 0.0
        %v7710 = vand.u32 %v6753, 4294901760
        %7711 = vmatpush1.msra.mxu0 %v7710
        %7712 = vmatprep.subr.mxu0 0.0
        %v7713 = vand.u32 %v6752, 4294901760
        %7714 = vmatpush1.msra.mxu0 %v7713
        %7715 = vmatprep.subr.mxu0 0.0
        %v7716 = vand.u32 %v6751, 4294901760
        %7717 = vmatpush1.msra.mxu0 %v7716
        %7718 = vmatprep.subr.mxu0 0.0
        %v7719 = vand.u32 %v6750, 4294901760
        %7720 = vmatpush1.msra.mxu0 %v7719
        %7721 = vmatprep.subr.mxu0 0.0
        %v7722 = vand.u32 %v6749, 4294901760
        %7723 = vmatpush1.msra.mxu0 %v7722
        %7724 = vmatprep.subr.mxu0 0.0
        %v7725 = vand.u32 %v6748, 4294901760
        %7726 = vmatpush1.msra.mxu0 %v7725
        %7727 = vmatprep.subr.mxu0 0.0
        %v7728 = vand.u32 %v6747, 4294901760
        %7729 = vmatpush1.msra.mxu0 %v7728
        %7730 = vmatprep.subr.mxu0 0.0
        %v7731 = vand.u32 %v6746, 4294901760
        %7732 = vmatpush1.msra.mxu0 %v7731
        %7733 = vmatprep.subr.mxu0 0.0
        %v7734 = vand.u32 %v6745, 4294901760
        %7735 = vmatpush1.msra.mxu0 %v7734
        %7736 = vmatprep.subr.mxu0 0.0
        %v7737 = vand.u32 %v6744, 4294901760
        %7738 = vmatpush1.msra.mxu0 %v7737
        %7739 = vmatprep.subr.mxu0 0.0
        %7740 = vmatpush2.msra.mxu0 0.0
        %7741 = vmatprep.subr.mxu0 0.0
        %7742 = vmatpush2.msra.mxu0 0.0
        %7743 = vmatprep.subr.mxu0 0.0
        %7744 = vmatpush2.msra.mxu0 0.0
        %7745 = vmatprep.subr.mxu0 0.0
        %7746 = vmatpush2.msra.mxu0 0.0
        %7747 = vmatprep.subr.mxu0 0.0
        %7748 = vmatpush2.msra.mxu0 0.0
        %7749 = vmatprep.subr.mxu0 0.0
        %7750 = vmatpush2.msra.mxu0 0.0
        %7751 = vmatprep.subr.mxu0 0.0
        %7752 = vmatpush2.msra.mxu0 0.0
        %7753 = vmatprep.subr.mxu0 0.0
        %7754 = vmatpush2.msra.mxu0 0.0
        %7755 = vmatprep.subr.mxu0 0.0
        %7756 = vmatpush2.msra.mxu0 0.0
        %7757 = vmatprep.subr.mxu0 0.0
        %7758 = vmatpush2.msra.mxu0 0.0
        %7759 = vmatprep.subr.mxu0 0.0
        %7760 = vmatpush2.msra.mxu0 0.0
        %7761 = vmatprep.subr.mxu0 0.0
        %7762 = vmatpush2.msra.mxu0 0.0
        %7763 = vmatprep.subr.mxu0 0.0
        %7764 = vmatpush2.msra.mxu0 0.0
        %7765 = vmatprep.subr.mxu0 0.0
        %7766 = vmatpush2.msra.mxu0 0.0
        %7767 = vmatprep.subr.mxu0 0.0
        %7768 = vmatpush2.msra.mxu0 0.0
        %7769 = vmatprep.subr.mxu0 0.0
        %7770 = vmatpush2.msra.mxu0 0.0
        %7771 = vmatprep.mubr.f32.mxu0 0.0
        %v7772 = vand.u32 %v7379, 4294901760
        %v7773 = vsub.f32 %v7379, %v7772
        %v7774 = vand.u32 %v7773, 4294901760
        %7775 = vmatmul.mubr.f32.gmra.mxu0 %v7774
        %v7776 = vpop.f32.mrf.mxu0
        %v7777 = vadd.f32 %v7692, %v7776
        %v7778 = vpop.f32.mrf.mxu0
        %7779 = vdwg.mxu0
        %7780 = vmatprep.subr.mxu0 0.0
        %7781 = vmatpush1.msra.mxu0 0.0
        %7782 = vmatprep.subr.mxu0 0.0
        %7783 = vmatpush1.msra.mxu0 0.0
        %7784 = vmatprep.subr.mxu0 0.0
        %7785 = vmatpush1.msra.mxu0 0.0
        %7786 = vmatprep.subr.mxu0 0.0
        %7787 = vmatpush1.msra.mxu0 0.0
        %7788 = vmatprep.subr.mxu0 0.0
        %v7789 = vand.u32 %v6755, 4294901760
        %v7790 = vsub.f32 %v6755, %v7789
        %v7791 = vand.u32 %v7790, 4294901760
        %7792 = vmatpush1.msra.mxu0 %v7791
        %7793 = vmatprep.subr.mxu0 0.0
        %v7794 = vand.u32 %v6754, 4294901760
        %v7795 = vsub.f32 %v6754, %v7794
        %v7796 = vand.u32 %v7795, 4294901760
        %7797 = vmatpush1.msra.mxu0 %v7796
        %7798 = vmatprep.subr.mxu0 0.0
        %v7799 = vand.u32 %v6753, 4294901760
        %v7800 = vsub.f32 %v6753, %v7799
        %v7801 = vand.u32 %v7800, 4294901760
        %7802 = vmatpush1.msra.mxu0 %v7801
        %7803 = vmatprep.subr.mxu0 0.0
        %v7804 = vand.u32 %v6752, 4294901760
        %v7805 = vsub.f32 %v6752, %v7804
        %v7806 = vand.u32 %v7805, 4294901760
        %7807 = vmatpush1.msra.mxu0 %v7806
        %7808 = vmatprep.subr.mxu0 0.0
        %v7809 = vand.u32 %v6751, 4294901760
        %v7810 = vsub.f32 %v6751, %v7809
        %v7811 = vand.u32 %v7810, 4294901760
        %7812 = vmatpush1.msra.mxu0 %v7811
        %7813 = vmatprep.subr.mxu0 0.0
        %v7814 = vand.u32 %v6750, 4294901760
        %v7815 = vsub.f32 %v6750, %v7814
        %v7816 = vand.u32 %v7815, 4294901760
        %7817 = vmatpush1.msra.mxu0 %v7816
        %7818 = vmatprep.subr.mxu0 0.0
        %v7819 = vand.u32 %v6749, 4294901760
        %v7820 = vsub.f32 %v6749, %v7819
        %v7821 = vand.u32 %v7820, 4294901760
        %7822 = vmatpush1.msra.mxu0 %v7821
        %7823 = vmatprep.subr.mxu0 0.0
        %v7824 = vand.u32 %v6748, 4294901760
        %v7825 = vsub.f32 %v6748, %v7824
        %v7826 = vand.u32 %v7825, 4294901760
        %7827 = vmatpush1.msra.mxu0 %v7826
        %7828 = vmatprep.subr.mxu0 0.0
        %v7829 = vand.u32 %v6747, 4294901760
        %v7830 = vsub.f32 %v6747, %v7829
        %v7831 = vand.u32 %v7830, 4294901760
        %7832 = vmatpush1.msra.mxu0 %v7831
        %7833 = vmatprep.subr.mxu0 0.0
        %v7834 = vand.u32 %v6746, 4294901760
        %v7835 = vsub.f32 %v6746, %v7834
        %v7836 = vand.u32 %v7835, 4294901760
        %7837 = vmatpush1.msra.mxu0 %v7836
        %7838 = vmatprep.subr.mxu0 0.0
        %v7839 = vand.u32 %v6745, 4294901760
        %v7840 = vsub.f32 %v6745, %v7839
        %v7841 = vand.u32 %v7840, 4294901760
        %7842 = vmatpush1.msra.mxu0 %v7841
        %7843 = vmatprep.subr.mxu0 0.0
        %v7844 = vand.u32 %v6744, 4294901760
        %v7845 = vsub.f32 %v6744, %v7844
        %v7846 = vand.u32 %v7845, 4294901760
        %7847 = vmatpush1.msra.mxu0 %v7846
        %7848 = vmatprep.subr.mxu0 0.0
        %7849 = vmatpush2.msra.mxu0 0.0
        %7850 = vmatprep.subr.mxu0 0.0
        %7851 = vmatpush2.msra.mxu0 0.0
        %7852 = vmatprep.subr.mxu0 0.0
        %7853 = vmatpush2.msra.mxu0 0.0
        %7854 = vmatprep.subr.mxu0 0.0
        %7855 = vmatpush2.msra.mxu0 0.0
        %7856 = vmatprep.subr.mxu0 0.0
        %7857 = vmatpush2.msra.mxu0 0.0
        %7858 = vmatprep.subr.mxu0 0.0
        %7859 = vmatpush2.msra.mxu0 0.0
        %7860 = vmatprep.subr.mxu0 0.0
        %7861 = vmatpush2.msra.mxu0 0.0
        %7862 = vmatprep.subr.mxu0 0.0
        %7863 = vmatpush2.msra.mxu0 0.0
        %7864 = vmatprep.subr.mxu0 0.0
        %7865 = vmatpush2.msra.mxu0 0.0
        %7866 = vmatprep.subr.mxu0 0.0
        %7867 = vmatpush2.msra.mxu0 0.0
        %7868 = vmatprep.subr.mxu0 0.0
        %7869 = vmatpush2.msra.mxu0 0.0
        %7870 = vmatprep.subr.mxu0 0.0
        %7871 = vmatpush2.msra.mxu0 0.0
        %7872 = vmatprep.subr.mxu0 0.0
        %7873 = vmatpush2.msra.mxu0 0.0
        %7874 = vmatprep.subr.mxu0 0.0
        %7875 = vmatpush2.msra.mxu0 0.0
        %7876 = vmatprep.subr.mxu0 0.0
        %7877 = vmatpush2.msra.mxu0 0.0
        %7878 = vmatprep.subr.mxu0 0.0
        %7879 = vmatpush2.msra.mxu0 0.0
        %7880 = vmatprep.mubr.f32.mxu0 0.0
        %v7881 = vand.u32 %v7379, 4294901760
        %7882 = vmatmul.mubr.f32.gmra.mxu0 %v7881
        %v7883 = vpop.f32.mrf.mxu0
        %v7884 = vadd.f32 %v7777, %v7883
        %v7885 = vpop.f32.mrf.mxu0
        %7886 = vdwg.mxu0
        %7887 = vmatprep.subr.mxu0 0.0
        %7888 = vmatpush1.msra.mxu0 0.0
        %7889 = vmatprep.subr.mxu0 0.0
        %7890 = vmatpush1.msra.mxu0 0.0
        %7891 = vmatprep.subr.mxu0 0.0
        %7892 = vmatpush1.msra.mxu0 0.0
        %7893 = vmatprep.subr.mxu0 0.0
        %7894 = vmatpush1.msra.mxu0 0.0
        %7895 = vmatprep.subr.mxu0 0.0
        %v7896 = vand.u32 %v6755, 4294901760
        %7897 = vmatpush1.msra.mxu0 %v7896
        %7898 = vmatprep.subr.mxu0 0.0
        %v7899 = vand.u32 %v6754, 4294901760
        %7900 = vmatpush1.msra.mxu0 %v7899
        %7901 = vmatprep.subr.mxu0 0.0
        %v7902 = vand.u32 %v6753, 4294901760
        %7903 = vmatpush1.msra.mxu0 %v7902
        %7904 = vmatprep.subr.mxu0 0.0
        %v7905 = vand.u32 %v6752, 4294901760
        %7906 = vmatpush1.msra.mxu0 %v7905
        %7907 = vmatprep.subr.mxu0 0.0
        %v7908 = vand.u32 %v6751, 4294901760
        %7909 = vmatpush1.msra.mxu0 %v7908
        %7910 = vmatprep.subr.mxu0 0.0
        %v7911 = vand.u32 %v6750, 4294901760
        %7912 = vmatpush1.msra.mxu0 %v7911
        %7913 = vmatprep.subr.mxu0 0.0
        %v7914 = vand.u32 %v6749, 4294901760
        %7915 = vmatpush1.msra.mxu0 %v7914
        %7916 = vmatprep.subr.mxu0 0.0
        %v7917 = vand.u32 %v6748, 4294901760
        %7918 = vmatpush1.msra.mxu0 %v7917
        %7919 = vmatprep.subr.mxu0 0.0
        %v7920 = vand.u32 %v6747, 4294901760
        %7921 = vmatpush1.msra.mxu0 %v7920
        %7922 = vmatprep.subr.mxu0 0.0
        %v7923 = vand.u32 %v6746, 4294901760
        %7924 = vmatpush1.msra.mxu0 %v7923
        %7925 = vmatprep.subr.mxu0 0.0
        %v7926 = vand.u32 %v6745, 4294901760
        %7927 = vmatpush1.msra.mxu0 %v7926
        %7928 = vmatprep.subr.mxu0 0.0
        %v7929 = vand.u32 %v6744, 4294901760
        %7930 = vmatpush1.msra.mxu0 %v7929
        %7931 = vmatprep.subr.mxu0 0.0
        %7932 = vmatpush2.msra.mxu0 0.0
        %7933 = vmatprep.subr.mxu0 0.0
        %7934 = vmatpush2.msra.mxu0 0.0
        %7935 = vmatprep.subr.mxu0 0.0
        %7936 = vmatpush2.msra.mxu0 0.0
        %7937 = vmatprep.subr.mxu0 0.0
        %7938 = vmatpush2.msra.mxu0 0.0
        %7939 = vmatprep.subr.mxu0 0.0
        %7940 = vmatpush2.msra.mxu0 0.0
        %7941 = vmatprep.subr.mxu0 0.0
        %7942 = vmatpush2.msra.mxu0 0.0
        %7943 = vmatprep.subr.mxu0 0.0
        %7944 = vmatpush2.msra.mxu0 0.0
        %7945 = vmatprep.subr.mxu0 0.0
        %7946 = vmatpush2.msra.mxu0 0.0
        %7947 = vmatprep.subr.mxu0 0.0
        %7948 = vmatpush2.msra.mxu0 0.0
        %7949 = vmatprep.subr.mxu0 0.0
        %7950 = vmatpush2.msra.mxu0 0.0
        %7951 = vmatprep.subr.mxu0 0.0
        %7952 = vmatpush2.msra.mxu0 0.0
        %7953 = vmatprep.subr.mxu0 0.0
        %7954 = vmatpush2.msra.mxu0 0.0
        %7955 = vmatprep.subr.mxu0 0.0
        %7956 = vmatpush2.msra.mxu0 0.0
        %7957 = vmatprep.subr.mxu0 0.0
        %7958 = vmatpush2.msra.mxu0 0.0
        %7959 = vmatprep.subr.mxu0 0.0
        %7960 = vmatpush2.msra.mxu0 0.0
        %7961 = vmatprep.subr.mxu0 0.0
        %7962 = vmatpush2.msra.mxu0 0.0
        %7963 = vmatprep.mubr.f32.mxu0 0.0
        %v7964 = vand.u32 %v7379, 4294901760
        %7965 = vmatmul.mubr.f32.gmra.mxu0 %v7964
        %v7966 = vpop.f32.mrf.mxu0
        %v7967 = vadd.f32 %v7884, %v7966
        %v7968 = vpop.f32.mrf.mxu0
        %7969 = vdwg.mxu0
        %v7970 = vmax.f32 %v7967, 0.0
        %7971 = vst.msk [vmem:[#allocation2 + $0x8] sm:$0xff] %vm139, %v7367
        %7972 = vst.msk [vmem:[%s6742 + $0x8] sm:$0xff] %vm139, %v7970
        %v7973 = vld [vmem:[%s1 + $0x268] sm:$0xff]
        %v7974 = vld [vmem:[%s1 + $0x270] sm:$0xff]
        %v7975 = vld [vmem:[%s1 + $0x278] sm:$0xff]
        %v7976 = vld [vmem:[%s1 + $0x280] sm:$0xff]
        %v7977 = vld [vmem:[%s1 + $0x288] sm:$0xff]
        %v7978 = vld [vmem:[%s1 + $0x290] sm:$0xff]
        %v7979 = vld [vmem:[%s1 + $0x298] sm:$0xff]
        %v7980 = vld [vmem:[%s1 + $0x2a0] sm:$0xff]
        %v7981 = vld [vmem:[%s1 + $0x2a8] sm:$0xff]
        %v7982 = vld [vmem:[%s1 + $0x2b0] sm:$0xff]
        %v7983 = vld [vmem:[%s1 + $0x2b8] sm:$0xff]
        %v7984 = vld [vmem:[%s1 + $0x2c0] sm:$0xff]
        %v7985 = vld [vmem:[%s1 + $0x2c8] sm:$0x1]
        %v7986 = vld [vmem:[%s6742 + $0x7] sm:$0xff]
        %v7987 = vld [vmem:[#allocation2 + $0x8] sm:$0xff]
        %v7988 = vld [vmem:[%s6742 + $0x8] sm:$0xff]
        %7990 = vrot.lane.b32.xlu0 %v7987, 32
        %v7991 = vpop.permute.xlu0 %7990
        %7994 = vrot.lane.b32.xlu0 %v7988, 64
        %v7995 = vpop.permute.xlu0 %7994
        %v7997 = vsel %vm139, %v7986, %v7991
        %v7998 = vsel %vm5654, %v7997, %v7995
        %v7999 = vlaneseq
        %v8000 = vshrl.u32 %v7999, 7
        %v8001 = vsub.s32 0, %v8000
        %v8002 = vrot.slane %v7985, %v8001
        %v8004 = vsel %vm6774, %v7998, 0
        %8006 = vmatprep.subr.mxu0 0.0
        %8007 = vmatpush1.msra.mxu0 0.0
        %8008 = vmatprep.subr.mxu0 0.0
        %8009 = vmatpush1.msra.mxu0 0.0
        %8010 = vmatprep.subr.mxu0 0.0
        %8011 = vmatpush1.msra.mxu0 0.0
        %8012 = vmatprep.subr.mxu0 0.0
        %8013 = vmatpush1.msra.mxu0 0.0
        %8014 = vmatprep.subr.mxu0 0.0
        %v8015 = vand.u32 %v7984, 4294901760
        %8016 = vmatpush1.msra.mxu0 %v8015
        %8017 = vmatprep.subr.mxu0 0.0
        %v8018 = vand.u32 %v7983, 4294901760
        %8019 = vmatpush1.msra.mxu0 %v8018
        %8020 = vmatprep.subr.mxu0 0.0
        %v8021 = vand.u32 %v7982, 4294901760
        %8022 = vmatpush1.msra.mxu0 %v8021
        %8023 = vmatprep.subr.mxu0 0.0
        %v8024 = vand.u32 %v7981, 4294901760
        %8025 = vmatpush1.msra.mxu0 %v8024
        %8026 = vmatprep.subr.mxu0 0.0
        %v8027 = vand.u32 %v7980, 4294901760
        %8028 = vmatpush1.msra.mxu0 %v8027
        %8029 = vmatprep.subr.mxu0 0.0
        %v8030 = vand.u32 %v7979, 4294901760
        %8031 = vmatpush1.msra.mxu0 %v8030
        %8032 = vmatprep.subr.mxu0 0.0
        %v8033 = vand.u32 %v7978, 4294901760
        %8034 = vmatpush1.msra.mxu0 %v8033
        %8035 = vmatprep.subr.mxu0 0.0
        %v8036 = vand.u32 %v7977, 4294901760
        %8037 = vmatpush1.msra.mxu0 %v8036
        %8038 = vmatprep.subr.mxu0 0.0
        %v8039 = vand.u32 %v7976, 4294901760
        %8040 = vmatpush1.msra.mxu0 %v8039
        %8041 = vmatprep.subr.mxu0 0.0
        %v8042 = vand.u32 %v7975, 4294901760
        %8043 = vmatpush1.msra.mxu0 %v8042
        %8044 = vmatprep.subr.mxu0 0.0
        %v8045 = vand.u32 %v7974, 4294901760
        %8046 = vmatpush1.msra.mxu0 %v8045
        %8047 = vmatprep.subr.mxu0 0.0
        %v8048 = vand.u32 %v7973, 4294901760
        %8049 = vmatpush1.msra.mxu0 %v8048
        %8050 = vmatprep.subr.mxu0 0.0
        %8051 = vmatpush2.msra.mxu0 0.0
        %8052 = vmatprep.subr.mxu0 0.0
        %8053 = vmatpush2.msra.mxu0 0.0
        %8054 = vmatprep.subr.mxu0 0.0
        %8055 = vmatpush2.msra.mxu0 0.0
        %8056 = vmatprep.subr.mxu0 0.0
        %8057 = vmatpush2.msra.mxu0 0.0
        %8058 = vmatprep.subr.mxu0 0.0
        %8059 = vmatpush2.msra.mxu0 0.0
        %8060 = vmatprep.subr.mxu0 0.0
        %8061 = vmatpush2.msra.mxu0 0.0
        %8062 = vmatprep.subr.mxu0 0.0
        %8063 = vmatpush2.msra.mxu0 0.0
        %8064 = vmatprep.subr.mxu0 0.0
        %8065 = vmatpush2.msra.mxu0 0.0
        %8066 = vmatprep.subr.mxu0 0.0
        %8067 = vmatpush2.msra.mxu0 0.0
        %8068 = vmatprep.subr.mxu0 0.0
        %8069 = vmatpush2.msra.mxu0 0.0
        %8070 = vmatprep.subr.mxu0 0.0
        %8071 = vmatpush2.msra.mxu0 0.0
        %8072 = vmatprep.subr.mxu0 0.0
        %8073 = vmatpush2.msra.mxu0 0.0
        %8074 = vmatprep.subr.mxu0 0.0
        %8075 = vmatpush2.msra.mxu0 0.0
        %8076 = vmatprep.subr.mxu0 0.0
        %8077 = vmatpush2.msra.mxu0 0.0
        %8078 = vmatprep.subr.mxu0 0.0
        %8079 = vmatpush2.msra.mxu0 0.0
        %8080 = vmatprep.subr.mxu0 0.0
        %8081 = vmatpush2.msra.mxu0 0.0
        %8082 = vmatprep.mubr.f32.mxu0 0.0
        %v8083 = vand.u32 %v8004, 4294901760
        %v8084 = vsub.f32 %v8004, %v8083
        %v8085 = vand.u32 %v8084, 4294901760
        %v8086 = vsub.f32 %v8084, %v8085
        %v8087 = vand.u32 %v8086, 4294901760
        %8088 = vmatmul.mubr.f32.gmra.mxu0 %v8087
        %v8089 = vpop.f32.mrf.mxu0
        %v8090 = vadd.f32 %v8002, %v8089
        %v8091 = vpop.f32.mrf.mxu0
        %8092 = vdwg.mxu0
        %8093 = vmatprep.subr.mxu0 0.0
        %8094 = vmatpush1.msra.mxu0 0.0
        %8095 = vmatprep.subr.mxu0 0.0
        %8096 = vmatpush1.msra.mxu0 0.0
        %8097 = vmatprep.subr.mxu0 0.0
        %8098 = vmatpush1.msra.mxu0 0.0
        %8099 = vmatprep.subr.mxu0 0.0
        %8100 = vmatpush1.msra.mxu0 0.0
        %8101 = vmatprep.subr.mxu0 0.0
        %v8102 = vand.u32 %v7984, 4294901760
        %v8103 = vsub.f32 %v7984, %v8102
        %v8104 = vand.u32 %v8103, 4294901760
        %v8105 = vsub.f32 %v8103, %v8104
        %v8106 = vand.u32 %v8105, 4294901760
        %8107 = vmatpush1.msra.mxu0 %v8106
        %8108 = vmatprep.subr.mxu0 0.0
        %v8109 = vand.u32 %v7983, 4294901760
        %v8110 = vsub.f32 %v7983, %v8109
        %v8111 = vand.u32 %v8110, 4294901760
        %v8112 = vsub.f32 %v8110, %v8111
        %v8113 = vand.u32 %v8112, 4294901760
        %8114 = vmatpush1.msra.mxu0 %v8113
        %8115 = vmatprep.subr.mxu0 0.0
        %v8116 = vand.u32 %v7982, 4294901760
        %v8117 = vsub.f32 %v7982, %v8116
        %v8118 = vand.u32 %v8117, 4294901760
        %v8119 = vsub.f32 %v8117, %v8118
        %v8120 = vand.u32 %v8119, 4294901760
        %8121 = vmatpush1.msra.mxu0 %v8120
        %8122 = vmatprep.subr.mxu0 0.0
        %v8123 = vand.u32 %v7981, 4294901760
        %v8124 = vsub.f32 %v7981, %v8123
        %v8125 = vand.u32 %v8124, 4294901760
        %v8126 = vsub.f32 %v8124, %v8125
        %v8127 = vand.u32 %v8126, 4294901760
        %8128 = vmatpush1.msra.mxu0 %v8127
        %8129 = vmatprep.subr.mxu0 0.0
        %v8130 = vand.u32 %v7980, 4294901760
        %v8131 = vsub.f32 %v7980, %v8130
        %v8132 = vand.u32 %v8131, 4294901760
        %v8133 = vsub.f32 %v8131, %v8132
        %v8134 = vand.u32 %v8133, 4294901760
        %8135 = vmatpush1.msra.mxu0 %v8134
        %8136 = vmatprep.subr.mxu0 0.0
        %v8137 = vand.u32 %v7979, 4294901760
        %v8138 = vsub.f32 %v7979, %v8137
        %v8139 = vand.u32 %v8138, 4294901760
        %v8140 = vsub.f32 %v8138, %v8139
        %v8141 = vand.u32 %v8140, 4294901760
        %8142 = vmatpush1.msra.mxu0 %v8141
        %8143 = vmatprep.subr.mxu0 0.0
        %v8144 = vand.u32 %v7978, 4294901760
        %v8145 = vsub.f32 %v7978, %v8144
        %v8146 = vand.u32 %v8145, 4294901760
        %v8147 = vsub.f32 %v8145, %v8146
        %v8148 = vand.u32 %v8147, 4294901760
        %8149 = vmatpush1.msra.mxu0 %v8148
        %8150 = vmatprep.subr.mxu0 0.0
        %v8151 = vand.u32 %v7977, 4294901760
        %v8152 = vsub.f32 %v7977, %v8151
        %v8153 = vand.u32 %v8152, 4294901760
        %v8154 = vsub.f32 %v8152, %v8153
        %v8155 = vand.u32 %v8154, 4294901760
        %8156 = vmatpush1.msra.mxu0 %v8155
        %8157 = vmatprep.subr.mxu0 0.0
        %v8158 = vand.u32 %v7976, 4294901760
        %v8159 = vsub.f32 %v7976, %v8158
        %v8160 = vand.u32 %v8159, 4294901760
        %v8161 = vsub.f32 %v8159, %v8160
        %v8162 = vand.u32 %v8161, 4294901760
        %8163 = vmatpush1.msra.mxu0 %v8162
        %8164 = vmatprep.subr.mxu0 0.0
        %v8165 = vand.u32 %v7975, 4294901760
        %v8166 = vsub.f32 %v7975, %v8165
        %v8167 = vand.u32 %v8166, 4294901760
        %v8168 = vsub.f32 %v8166, %v8167
        %v8169 = vand.u32 %v8168, 4294901760
        %8170 = vmatpush1.msra.mxu0 %v8169
        %8171 = vmatprep.subr.mxu0 0.0
        %v8172 = vand.u32 %v7974, 4294901760
        %v8173 = vsub.f32 %v7974, %v8172
        %v8174 = vand.u32 %v8173, 4294901760
        %v8175 = vsub.f32 %v8173, %v8174
        %v8176 = vand.u32 %v8175, 4294901760
        %8177 = vmatpush1.msra.mxu0 %v8176
        %8178 = vmatprep.subr.mxu0 0.0
        %v8179 = vand.u32 %v7973, 4294901760
        %v8180 = vsub.f32 %v7973, %v8179
        %v8181 = vand.u32 %v8180, 4294901760
        %v8182 = vsub.f32 %v8180, %v8181
        %v8183 = vand.u32 %v8182, 4294901760
        %8184 = vmatpush1.msra.mxu0 %v8183
        %8185 = vmatprep.subr.mxu0 0.0
        %8186 = vmatpush2.msra.mxu0 0.0
        %8187 = vmatprep.subr.mxu0 0.0
        %8188 = vmatpush2.msra.mxu0 0.0
        %8189 = vmatprep.subr.mxu0 0.0
        %8190 = vmatpush2.msra.mxu0 0.0
        %8191 = vmatprep.subr.mxu0 0.0
        %8192 = vmatpush2.msra.mxu0 0.0
        %8193 = vmatprep.subr.mxu0 0.0
        %8194 = vmatpush2.msra.mxu0 0.0
        %8195 = vmatprep.subr.mxu0 0.0
        %8196 = vmatpush2.msra.mxu0 0.0
        %8197 = vmatprep.subr.mxu0 0.0
        %8198 = vmatpush2.msra.mxu0 0.0
        %8199 = vmatprep.subr.mxu0 0.0
        %8200 = vmatpush2.msra.mxu0 0.0
        %8201 = vmatprep.subr.mxu0 0.0
        %8202 = vmatpush2.msra.mxu0 0.0
        %8203 = vmatprep.subr.mxu0 0.0
        %8204 = vmatpush2.msra.mxu0 0.0
        %8205 = vmatprep.subr.mxu0 0.0
        %8206 = vmatpush2.msra.mxu0 0.0
        %8207 = vmatprep.subr.mxu0 0.0
        %8208 = vmatpush2.msra.mxu0 0.0
        %8209 = vmatprep.subr.mxu0 0.0
        %8210 = vmatpush2.msra.mxu0 0.0
        %8211 = vmatprep.subr.mxu0 0.0
        %8212 = vmatpush2.msra.mxu0 0.0
        %8213 = vmatprep.subr.mxu0 0.0
        %8214 = vmatpush2.msra.mxu0 0.0
        %8215 = vmatprep.subr.mxu0 0.0
        %8216 = vmatpush2.msra.mxu0 0.0
        %8217 = vmatprep.mubr.f32.mxu0 0.0
        %v8218 = vand.u32 %v8004, 4294901760
        %8219 = vmatmul.mubr.f32.gmra.mxu0 %v8218
        %v8220 = vpop.f32.mrf.mxu0
        %v8221 = vadd.f32 %v8090, %v8220
        %v8222 = vpop.f32.mrf.mxu0
        %8223 = vdwg.mxu0
        %8224 = vmatprep.subr.mxu0 0.0
        %8225 = vmatpush1.msra.mxu0 0.0
        %8226 = vmatprep.subr.mxu0 0.0
        %8227 = vmatpush1.msra.mxu0 0.0
        %8228 = vmatprep.subr.mxu0 0.0
        %8229 = vmatpush1.msra.mxu0 0.0
        %8230 = vmatprep.subr.mxu0 0.0
        %8231 = vmatpush1.msra.mxu0 0.0
        %8232 = vmatprep.subr.mxu0 0.0
        %v8233 = vand.u32 %v7984, 4294901760
        %v8234 = vsub.f32 %v7984, %v8233
        %8235 = vmatpush1.msra.mxu0 %v8234
        %8236 = vmatprep.subr.mxu0 0.0
        %v8237 = vand.u32 %v7983, 4294901760
        %v8238 = vsub.f32 %v7983, %v8237
        %8239 = vmatpush1.msra.mxu0 %v8238
        %8240 = vmatprep.subr.mxu0 0.0
        %v8241 = vand.u32 %v7982, 4294901760
        %v8242 = vsub.f32 %v7982, %v8241
        %8243 = vmatpush1.msra.mxu0 %v8242
        %8244 = vmatprep.subr.mxu0 0.0
        %v8245 = vand.u32 %v7981, 4294901760
        %v8246 = vsub.f32 %v7981, %v8245
        %8247 = vmatpush1.msra.mxu0 %v8246
        %8248 = vmatprep.subr.mxu0 0.0
        %v8249 = vand.u32 %v7980, 4294901760
        %v8250 = vsub.f32 %v7980, %v8249
        %8251 = vmatpush1.msra.mxu0 %v8250
        %8252 = vmatprep.subr.mxu0 0.0
        %v8253 = vand.u32 %v7979, 4294901760
        %v8254 = vsub.f32 %v7979, %v8253
        %8255 = vmatpush1.msra.mxu0 %v8254
        %8256 = vmatprep.subr.mxu0 0.0
        %v8257 = vand.u32 %v7978, 4294901760
        %v8258 = vsub.f32 %v7978, %v8257
        %8259 = vmatpush1.msra.mxu0 %v8258
        %8260 = vmatprep.subr.mxu0 0.0
        %v8261 = vand.u32 %v7977, 4294901760
        %v8262 = vsub.f32 %v7977, %v8261
        %8263 = vmatpush1.msra.mxu0 %v8262
        %8264 = vmatprep.subr.mxu0 0.0
        %v8265 = vand.u32 %v7976, 4294901760
        %v8266 = vsub.f32 %v7976, %v8265
        %8267 = vmatpush1.msra.mxu0 %v8266
        %8268 = vmatprep.subr.mxu0 0.0
        %v8269 = vand.u32 %v7975, 4294901760
        %v8270 = vsub.f32 %v7975, %v8269
        %8271 = vmatpush1.msra.mxu0 %v8270
        %8272 = vmatprep.subr.mxu0 0.0
        %v8273 = vand.u32 %v7974, 4294901760
        %v8274 = vsub.f32 %v7974, %v8273
        %8275 = vmatpush1.msra.mxu0 %v8274
        %8276 = vmatprep.subr.mxu0 0.0
        %v8277 = vand.u32 %v7973, 4294901760
        %v8278 = vsub.f32 %v7973, %v8277
        %8279 = vmatpush1.msra.mxu0 %v8278
        %8280 = vmatprep.subr.mxu0 0.0
        %8281 = vmatpush2.msra.mxu0 0.0
        %8282 = vmatprep.subr.mxu0 0.0
        %8283 = vmatpush2.msra.mxu0 0.0
        %8284 = vmatprep.subr.mxu0 0.0
        %8285 = vmatpush2.msra.mxu0 0.0
        %8286 = vmatprep.subr.mxu0 0.0
        %8287 = vmatpush2.msra.mxu0 0.0
        %8288 = vmatprep.subr.mxu0 0.0
        %8289 = vmatpush2.msra.mxu0 0.0
        %8290 = vmatprep.subr.mxu0 0.0
        %8291 = vmatpush2.msra.mxu0 0.0
        %8292 = vmatprep.subr.mxu0 0.0
        %8293 = vmatpush2.msra.mxu0 0.0
        %8294 = vmatprep.subr.mxu0 0.0
        %8295 = vmatpush2.msra.mxu0 0.0
        %8296 = vmatprep.subr.mxu0 0.0
        %8297 = vmatpush2.msra.mxu0 0.0
        %8298 = vmatprep.subr.mxu0 0.0
        %8299 = vmatpush2.msra.mxu0 0.0
        %8300 = vmatprep.subr.mxu0 0.0
        %8301 = vmatpush2.msra.mxu0 0.0
        %8302 = vmatprep.subr.mxu0 0.0
        %8303 = vmatpush2.msra.mxu0 0.0
        %8304 = vmatprep.subr.mxu0 0.0
        %8305 = vmatpush2.msra.mxu0 0.0
        %8306 = vmatprep.subr.mxu0 0.0
        %8307 = vmatpush2.msra.mxu0 0.0
        %8308 = vmatprep.subr.mxu0 0.0
        %8309 = vmatpush2.msra.mxu0 0.0
        %8310 = vmatprep.subr.mxu0 0.0
        %8311 = vmatpush2.msra.mxu0 0.0
        %8312 = vmatprep.mubr.f32.mxu0 0.0
        %v8313 = vand.u32 %v8004, 4294901760
        %v8314 = vsub.f32 %v8004, %v8313
        %8315 = vmatmul.mubr.f32.gmra.mxu0 %v8314
        %v8316 = vpop.f32.mrf.mxu0
        %v8317 = vadd.f32 %v8221, %v8316
        %v8318 = vpop.f32.mrf.mxu0
        %8319 = vdwg.mxu0
        %8320 = vmatprep.subr.mxu0 0.0
        %8321 = vmatpush1.msra.mxu0 0.0
        %8322 = vmatprep.subr.mxu0 0.0
        %8323 = vmatpush1.msra.mxu0 0.0
        %8324 = vmatprep.subr.mxu0 0.0
        %8325 = vmatpush1.msra.mxu0 0.0
        %8326 = vmatprep.subr.mxu0 0.0
        %8327 = vmatpush1.msra.mxu0 0.0
        %8328 = vmatprep.subr.mxu0 0.0
        %v8329 = vand.u32 %v7984, 4294901760
        %8330 = vmatpush1.msra.mxu0 %v8329
        %8331 = vmatprep.subr.mxu0 0.0
        %v8332 = vand.u32 %v7983, 4294901760
        %8333 = vmatpush1.msra.mxu0 %v8332
        %8334 = vmatprep.subr.mxu0 0.0
        %v8335 = vand.u32 %v7982, 4294901760
        %8336 = vmatpush1.msra.mxu0 %v8335
        %8337 = vmatprep.subr.mxu0 0.0
        %v8338 = vand.u32 %v7981, 4294901760
        %8339 = vmatpush1.msra.mxu0 %v8338
        %8340 = vmatprep.subr.mxu0 0.0
        %v8341 = vand.u32 %v7980, 4294901760
        %8342 = vmatpush1.msra.mxu0 %v8341
        %8343 = vmatprep.subr.mxu0 0.0
        %v8344 = vand.u32 %v7979, 4294901760
        %8345 = vmatpush1.msra.mxu0 %v8344
        %8346 = vmatprep.subr.mxu0 0.0
        %v8347 = vand.u32 %v7978, 4294901760
        %8348 = vmatpush1.msra.mxu0 %v8347
        %8349 = vmatprep.subr.mxu0 0.0
        %v8350 = vand.u32 %v7977, 4294901760
        %8351 = vmatpush1.msra.mxu0 %v8350
        %8352 = vmatprep.subr.mxu0 0.0
        %v8353 = vand.u32 %v7976, 4294901760
        %8354 = vmatpush1.msra.mxu0 %v8353
        %8355 = vmatprep.subr.mxu0 0.0
        %v8356 = vand.u32 %v7975, 4294901760
        %8357 = vmatpush1.msra.mxu0 %v8356
        %8358 = vmatprep.subr.mxu0 0.0
        %v8359 = vand.u32 %v7974, 4294901760
        %8360 = vmatpush1.msra.mxu0 %v8359
        %8361 = vmatprep.subr.mxu0 0.0
        %v8362 = vand.u32 %v7973, 4294901760
        %8363 = vmatpush1.msra.mxu0 %v8362
        %8364 = vmatprep.subr.mxu0 0.0
        %8365 = vmatpush2.msra.mxu0 0.0
        %8366 = vmatprep.subr.mxu0 0.0
        %8367 = vmatpush2.msra.mxu0 0.0
        %8368 = vmatprep.subr.mxu0 0.0
        %8369 = vmatpush2.msra.mxu0 0.0
        %8370 = vmatprep.subr.mxu0 0.0
        %8371 = vmatpush2.msra.mxu0 0.0
        %8372 = vmatprep.subr.mxu0 0.0
        %8373 = vmatpush2.msra.mxu0 0.0
        %8374 = vmatprep.subr.mxu0 0.0
        %8375 = vmatpush2.msra.mxu0 0.0
        %8376 = vmatprep.subr.mxu0 0.0
        %8377 = vmatpush2.msra.mxu0 0.0
        %8378 = vmatprep.subr.mxu0 0.0
        %8379 = vmatpush2.msra.mxu0 0.0
        %8380 = vmatprep.subr.mxu0 0.0
        %8381 = vmatpush2.msra.mxu0 0.0
        %8382 = vmatprep.subr.mxu0 0.0
        %8383 = vmatpush2.msra.mxu0 0.0
        %8384 = vmatprep.subr.mxu0 0.0
        %8385 = vmatpush2.msra.mxu0 0.0
        %8386 = vmatprep.subr.mxu0 0.0
        %8387 = vmatpush2.msra.mxu0 0.0
        %8388 = vmatprep.subr.mxu0 0.0
        %8389 = vmatpush2.msra.mxu0 0.0
        %8390 = vmatprep.subr.mxu0 0.0
        %8391 = vmatpush2.msra.mxu0 0.0
        %8392 = vmatprep.subr.mxu0 0.0
        %8393 = vmatpush2.msra.mxu0 0.0
        %8394 = vmatprep.subr.mxu0 0.0
        %8395 = vmatpush2.msra.mxu0 0.0
        %8396 = vmatprep.mubr.f32.mxu0 0.0
        %v8397 = vand.u32 %v8004, 4294901760
        %v8398 = vsub.f32 %v8004, %v8397
        %v8399 = vand.u32 %v8398, 4294901760
        %8400 = vmatmul.mubr.f32.gmra.mxu0 %v8399
        %v8401 = vpop.f32.mrf.mxu0
        %v8402 = vadd.f32 %v8317, %v8401
        %v8403 = vpop.f32.mrf.mxu0
        %8404 = vdwg.mxu0
        %8405 = vmatprep.subr.mxu0 0.0
        %8406 = vmatpush1.msra.mxu0 0.0
        %8407 = vmatprep.subr.mxu0 0.0
        %8408 = vmatpush1.msra.mxu0 0.0
        %8409 = vmatprep.subr.mxu0 0.0
        %8410 = vmatpush1.msra.mxu0 0.0
        %8411 = vmatprep.subr.mxu0 0.0
        %8412 = vmatpush1.msra.mxu0 0.0
        %8413 = vmatprep.subr.mxu0 0.0
        %v8414 = vand.u32 %v7984, 4294901760
        %v8415 = vsub.f32 %v7984, %v8414
        %v8416 = vand.u32 %v8415, 4294901760
        %8417 = vmatpush1.msra.mxu0 %v8416
        %8418 = vmatprep.subr.mxu0 0.0
        %v8419 = vand.u32 %v7983, 4294901760
        %v8420 = vsub.f32 %v7983, %v8419
        %v8421 = vand.u32 %v8420, 4294901760
        %8422 = vmatpush1.msra.mxu0 %v8421
        %8423 = vmatprep.subr.mxu0 0.0
        %v8424 = vand.u32 %v7982, 4294901760
        %v8425 = vsub.f32 %v7982, %v8424
        %v8426 = vand.u32 %v8425, 4294901760
        %8427 = vmatpush1.msra.mxu0 %v8426
        %8428 = vmatprep.subr.mxu0 0.0
        %v8429 = vand.u32 %v7981, 4294901760
        %v8430 = vsub.f32 %v7981, %v8429
        %v8431 = vand.u32 %v8430, 4294901760
        %8432 = vmatpush1.msra.mxu0 %v8431
        %8433 = vmatprep.subr.mxu0 0.0
        %v8434 = vand.u32 %v7980, 4294901760
        %v8435 = vsub.f32 %v7980, %v8434
        %v8436 = vand.u32 %v8435, 4294901760
        %8437 = vmatpush1.msra.mxu0 %v8436
        %8438 = vmatprep.subr.mxu0 0.0
        %v8439 = vand.u32 %v7979, 4294901760
        %v8440 = vsub.f32 %v7979, %v8439
        %v8441 = vand.u32 %v8440, 4294901760
        %8442 = vmatpush1.msra.mxu0 %v8441
        %8443 = vmatprep.subr.mxu0 0.0
        %v8444 = vand.u32 %v7978, 4294901760
        %v8445 = vsub.f32 %v7978, %v8444
        %v8446 = vand.u32 %v8445, 4294901760
        %8447 = vmatpush1.msra.mxu0 %v8446
        %8448 = vmatprep.subr.mxu0 0.0
        %v8449 = vand.u32 %v7977, 4294901760
        %v8450 = vsub.f32 %v7977, %v8449
        %v8451 = vand.u32 %v8450, 4294901760
        %8452 = vmatpush1.msra.mxu0 %v8451
        %8453 = vmatprep.subr.mxu0 0.0
        %v8454 = vand.u32 %v7976, 4294901760
        %v8455 = vsub.f32 %v7976, %v8454
        %v8456 = vand.u32 %v8455, 4294901760
        %8457 = vmatpush1.msra.mxu0 %v8456
        %8458 = vmatprep.subr.mxu0 0.0
        %v8459 = vand.u32 %v7975, 4294901760
        %v8460 = vsub.f32 %v7975, %v8459
        %v8461 = vand.u32 %v8460, 4294901760
        %8462 = vmatpush1.msra.mxu0 %v8461
        %8463 = vmatprep.subr.mxu0 0.0
        %v8464 = vand.u32 %v7974, 4294901760
        %v8465 = vsub.f32 %v7974, %v8464
        %v8466 = vand.u32 %v8465, 4294901760
        %8467 = vmatpush1.msra.mxu0 %v8466
        %8468 = vmatprep.subr.mxu0 0.0
        %v8469 = vand.u32 %v7973, 4294901760
        %v8470 = vsub.f32 %v7973, %v8469
        %v8471 = vand.u32 %v8470, 4294901760
        %8472 = vmatpush1.msra.mxu0 %v8471
        %8473 = vmatprep.subr.mxu0 0.0
        %8474 = vmatpush2.msra.mxu0 0.0
        %8475 = vmatprep.subr.mxu0 0.0
        %8476 = vmatpush2.msra.mxu0 0.0
        %8477 = vmatprep.subr.mxu0 0.0
        %8478 = vmatpush2.msra.mxu0 0.0
        %8479 = vmatprep.subr.mxu0 0.0
        %8480 = vmatpush2.msra.mxu0 0.0
        %8481 = vmatprep.subr.mxu0 0.0
        %8482 = vmatpush2.msra.mxu0 0.0
        %8483 = vmatprep.subr.mxu0 0.0
        %8484 = vmatpush2.msra.mxu0 0.0
        %8485 = vmatprep.subr.mxu0 0.0
        %8486 = vmatpush2.msra.mxu0 0.0
        %8487 = vmatprep.subr.mxu0 0.0
        %8488 = vmatpush2.msra.mxu0 0.0
        %8489 = vmatprep.subr.mxu0 0.0
        %8490 = vmatpush2.msra.mxu0 0.0
        %8491 = vmatprep.subr.mxu0 0.0
        %8492 = vmatpush2.msra.mxu0 0.0
        %8493 = vmatprep.subr.mxu0 0.0
        %8494 = vmatpush2.msra.mxu0 0.0
        %8495 = vmatprep.subr.mxu0 0.0
        %8496 = vmatpush2.msra.mxu0 0.0
        %8497 = vmatprep.subr.mxu0 0.0
        %8498 = vmatpush2.msra.mxu0 0.0
        %8499 = vmatprep.subr.mxu0 0.0
        %8500 = vmatpush2.msra.mxu0 0.0
        %8501 = vmatprep.subr.mxu0 0.0
        %8502 = vmatpush2.msra.mxu0 0.0
        %8503 = vmatprep.subr.mxu0 0.0
        %8504 = vmatpush2.msra.mxu0 0.0
        %8505 = vmatprep.mubr.f32.mxu0 0.0
        %v8506 = vand.u32 %v8004, 4294901760
        %8507 = vmatmul.mubr.f32.gmra.mxu0 %v8506
        %v8508 = vpop.f32.mrf.mxu0
        %v8509 = vadd.f32 %v8402, %v8508
        %v8510 = vpop.f32.mrf.mxu0
        %8511 = vdwg.mxu0
        %8512 = vmatprep.subr.mxu0 0.0
        %8513 = vmatpush1.msra.mxu0 0.0
        %8514 = vmatprep.subr.mxu0 0.0
        %8515 = vmatpush1.msra.mxu0 0.0
        %8516 = vmatprep.subr.mxu0 0.0
        %8517 = vmatpush1.msra.mxu0 0.0
        %8518 = vmatprep.subr.mxu0 0.0
        %8519 = vmatpush1.msra.mxu0 0.0
        %8520 = vmatprep.subr.mxu0 0.0
        %v8521 = vand.u32 %v7984, 4294901760
        %8522 = vmatpush1.msra.mxu0 %v8521
        %8523 = vmatprep.subr.mxu0 0.0
        %v8524 = vand.u32 %v7983, 4294901760
        %8525 = vmatpush1.msra.mxu0 %v8524
        %8526 = vmatprep.subr.mxu0 0.0
        %v8527 = vand.u32 %v7982, 4294901760
        %8528 = vmatpush1.msra.mxu0 %v8527
        %8529 = vmatprep.subr.mxu0 0.0
        %v8530 = vand.u32 %v7981, 4294901760
        %8531 = vmatpush1.msra.mxu0 %v8530
        %8532 = vmatprep.subr.mxu0 0.0
        %v8533 = vand.u32 %v7980, 4294901760
        %8534 = vmatpush1.msra.mxu0 %v8533
        %8535 = vmatprep.subr.mxu0 0.0
        %v8536 = vand.u32 %v7979, 4294901760
        %8537 = vmatpush1.msra.mxu0 %v8536
        %8538 = vmatprep.subr.mxu0 0.0
        %v8539 = vand.u32 %v7978, 4294901760
        %8540 = vmatpush1.msra.mxu0 %v8539
        %8541 = vmatprep.subr.mxu0 0.0
        %v8542 = vand.u32 %v7977, 4294901760
        %8543 = vmatpush1.msra.mxu0 %v8542
        %8544 = vmatprep.subr.mxu0 0.0
        %v8545 = vand.u32 %v7976, 4294901760
        %8546 = vmatpush1.msra.mxu0 %v8545
        %8547 = vmatprep.subr.mxu0 0.0
        %v8548 = vand.u32 %v7975, 4294901760
        %8549 = vmatpush1.msra.mxu0 %v8548
        %8550 = vmatprep.subr.mxu0 0.0
        %v8551 = vand.u32 %v7974, 4294901760
        %8552 = vmatpush1.msra.mxu0 %v8551
        %8553 = vmatprep.subr.mxu0 0.0
        %v8554 = vand.u32 %v7973, 4294901760
        %8555 = vmatpush1.msra.mxu0 %v8554
        %8556 = vmatprep.subr.mxu0 0.0
        %8557 = vmatpush2.msra.mxu0 0.0
        %8558 = vmatprep.subr.mxu0 0.0
        %8559 = vmatpush2.msra.mxu0 0.0
        %8560 = vmatprep.subr.mxu0 0.0
        %8561 = vmatpush2.msra.mxu0 0.0
        %8562 = vmatprep.subr.mxu0 0.0
        %8563 = vmatpush2.msra.mxu0 0.0
        %8564 = vmatprep.subr.mxu0 0.0
        %8565 = vmatpush2.msra.mxu0 0.0
        %8566 = vmatprep.subr.mxu0 0.0
        %8567 = vmatpush2.msra.mxu0 0.0
        %8568 = vmatprep.subr.mxu0 0.0
        %8569 = vmatpush2.msra.mxu0 0.0
        %8570 = vmatprep.subr.mxu0 0.0
        %8571 = vmatpush2.msra.mxu0 0.0
        %8572 = vmatprep.subr.mxu0 0.0
        %8573 = vmatpush2.msra.mxu0 0.0
        %8574 = vmatprep.subr.mxu0 0.0
        %8575 = vmatpush2.msra.mxu0 0.0
        %8576 = vmatprep.subr.mxu0 0.0
        %8577 = vmatpush2.msra.mxu0 0.0
        %8578 = vmatprep.subr.mxu0 0.0
        %8579 = vmatpush2.msra.mxu0 0.0
        %8580 = vmatprep.subr.mxu0 0.0
        %8581 = vmatpush2.msra.mxu0 0.0
        %8582 = vmatprep.subr.mxu0 0.0
        %8583 = vmatpush2.msra.mxu0 0.0
        %8584 = vmatprep.subr.mxu0 0.0
        %8585 = vmatpush2.msra.mxu0 0.0
        %8586 = vmatprep.subr.mxu0 0.0
        %8587 = vmatpush2.msra.mxu0 0.0
        %8588 = vmatprep.mubr.f32.mxu0 0.0
        %v8589 = vand.u32 %v8004, 4294901760
        %8590 = vmatmul.mubr.f32.gmra.mxu0 %v8589
        %v8591 = vpop.f32.mrf.mxu0
        %v8592 = vadd.f32 %v8509, %v8591
        %v8593 = vpop.f32.mrf.mxu0
        %8594 = vdwg.mxu0
        %v8595 = vld [vmem:[#allocation2 + $0x9] sm:$0xff]
        %8596 = vrot.lane.b32.xlu0 %v7988, 32
        %v8597 = vpop.permute.xlu0 %8596
        %8600 = vrot.lane.b32.xlu0 %v8595, 64
        %v8601 = vpop.permute.xlu0 %8600
        %v8603 = vsel %vm139, %v7987, %v8597
        %v8604 = vsel %vm5654, %v8603, %v8601
        %v8606 = vsel %vm6774, %v8604, 0
        %8608 = vmatprep.subr.mxu0 0.0
        %8609 = vmatpush1.msra.mxu0 0.0
        %8610 = vmatprep.subr.mxu0 0.0
        %8611 = vmatpush1.msra.mxu0 0.0
        %8612 = vmatprep.subr.mxu0 0.0
        %8613 = vmatpush1.msra.mxu0 0.0
        %8614 = vmatprep.subr.mxu0 0.0
        %8615 = vmatpush1.msra.mxu0 0.0
        %8616 = vmatprep.subr.mxu0 0.0
        %v8617 = vand.u32 %v7984, 4294901760
        %8618 = vmatpush1.msra.mxu0 %v8617
        %8619 = vmatprep.subr.mxu0 0.0
        %v8620 = vand.u32 %v7983, 4294901760
        %8621 = vmatpush1.msra.mxu0 %v8620
        %8622 = vmatprep.subr.mxu0 0.0
        %v8623 = vand.u32 %v7982, 4294901760
        %8624 = vmatpush1.msra.mxu0 %v8623
        %8625 = vmatprep.subr.mxu0 0.0
        %v8626 = vand.u32 %v7981, 4294901760
        %8627 = vmatpush1.msra.mxu0 %v8626
        %8628 = vmatprep.subr.mxu0 0.0
        %v8629 = vand.u32 %v7980, 4294901760
        %8630 = vmatpush1.msra.mxu0 %v8629
        %8631 = vmatprep.subr.mxu0 0.0
        %v8632 = vand.u32 %v7979, 4294901760
        %8633 = vmatpush1.msra.mxu0 %v8632
        %8634 = vmatprep.subr.mxu0 0.0
        %v8635 = vand.u32 %v7978, 4294901760
        %8636 = vmatpush1.msra.mxu0 %v8635
        %8637 = vmatprep.subr.mxu0 0.0
        %v8638 = vand.u32 %v7977, 4294901760
        %8639 = vmatpush1.msra.mxu0 %v8638
        %8640 = vmatprep.subr.mxu0 0.0
        %v8641 = vand.u32 %v7976, 4294901760
        %8642 = vmatpush1.msra.mxu0 %v8641
        %8643 = vmatprep.subr.mxu0 0.0
        %v8644 = vand.u32 %v7975, 4294901760
        %8645 = vmatpush1.msra.mxu0 %v8644
        %8646 = vmatprep.subr.mxu0 0.0
        %v8647 = vand.u32 %v7974, 4294901760
        %8648 = vmatpush1.msra.mxu0 %v8647
        %8649 = vmatprep.subr.mxu0 0.0
        %v8650 = vand.u32 %v7973, 4294901760
        %8651 = vmatpush1.msra.mxu0 %v8650
        %8652 = vmatprep.subr.mxu0 0.0
        %8653 = vmatpush2.msra.mxu0 0.0
        %8654 = vmatprep.subr.mxu0 0.0
        %8655 = vmatpush2.msra.mxu0 0.0
        %8656 = vmatprep.subr.mxu0 0.0
        %8657 = vmatpush2.msra.mxu0 0.0
        %8658 = vmatprep.subr.mxu0 0.0
        %8659 = vmatpush2.msra.mxu0 0.0
        %8660 = vmatprep.subr.mxu0 0.0
        %8661 = vmatpush2.msra.mxu0 0.0
        %8662 = vmatprep.subr.mxu0 0.0
        %8663 = vmatpush2.msra.mxu0 0.0
        %8664 = vmatprep.subr.mxu0 0.0
        %8665 = vmatpush2.msra.mxu0 0.0
        %8666 = vmatprep.subr.mxu0 0.0
        %8667 = vmatpush2.msra.mxu0 0.0
        %8668 = vmatprep.subr.mxu0 0.0
        %8669 = vmatpush2.msra.mxu0 0.0
        %8670 = vmatprep.subr.mxu0 0.0
        %8671 = vmatpush2.msra.mxu0 0.0
        %8672 = vmatprep.subr.mxu0 0.0
        %8673 = vmatpush2.msra.mxu0 0.0
        %8674 = vmatprep.subr.mxu0 0.0
        %8675 = vmatpush2.msra.mxu0 0.0
        %8676 = vmatprep.subr.mxu0 0.0
        %8677 = vmatpush2.msra.mxu0 0.0
        %8678 = vmatprep.subr.mxu0 0.0
        %8679 = vmatpush2.msra.mxu0 0.0
        %8680 = vmatprep.subr.mxu0 0.0
        %8681 = vmatpush2.msra.mxu0 0.0
        %8682 = vmatprep.subr.mxu0 0.0
        %8683 = vmatpush2.msra.mxu0 0.0
        %8684 = vmatprep.mubr.f32.mxu0 0.0
        %v8685 = vand.u32 %v8606, 4294901760
        %v8686 = vsub.f32 %v8606, %v8685
        %v8687 = vand.u32 %v8686, 4294901760
        %v8688 = vsub.f32 %v8686, %v8687
        %v8689 = vand.u32 %v8688, 4294901760
        %8690 = vmatmul.mubr.f32.gmra.mxu0 %v8689
        %v8691 = vpop.f32.mrf.mxu0
        %v8692 = vadd.f32 %v8002, %v8691
        %v8693 = vpop.f32.mrf.mxu0
        %8694 = vdwg.mxu0
        %8695 = vmatprep.subr.mxu0 0.0
        %8696 = vmatpush1.msra.mxu0 0.0
        %8697 = vmatprep.subr.mxu0 0.0
        %8698 = vmatpush1.msra.mxu0 0.0
        %8699 = vmatprep.subr.mxu0 0.0
        %8700 = vmatpush1.msra.mxu0 0.0
        %8701 = vmatprep.subr.mxu0 0.0
        %8702 = vmatpush1.msra.mxu0 0.0
        %8703 = vmatprep.subr.mxu0 0.0
        %v8704 = vand.u32 %v7984, 4294901760
        %v8705 = vsub.f32 %v7984, %v8704
        %v8706 = vand.u32 %v8705, 4294901760
        %v8707 = vsub.f32 %v8705, %v8706
        %v8708 = vand.u32 %v8707, 4294901760
        %8709 = vmatpush1.msra.mxu0 %v8708
        %8710 = vmatprep.subr.mxu0 0.0
        %v8711 = vand.u32 %v7983, 4294901760
        %v8712 = vsub.f32 %v7983, %v8711
        %v8713 = vand.u32 %v8712, 4294901760
        %v8714 = vsub.f32 %v8712, %v8713
        %v8715 = vand.u32 %v8714, 4294901760
        %8716 = vmatpush1.msra.mxu0 %v8715
        %8717 = vmatprep.subr.mxu0 0.0
        %v8718 = vand.u32 %v7982, 4294901760
        %v8719 = vsub.f32 %v7982, %v8718
        %v8720 = vand.u32 %v8719, 4294901760
        %v8721 = vsub.f32 %v8719, %v8720
        %v8722 = vand.u32 %v8721, 4294901760
        %8723 = vmatpush1.msra.mxu0 %v8722
        %8724 = vmatprep.subr.mxu0 0.0
        %v8725 = vand.u32 %v7981, 4294901760
        %v8726 = vsub.f32 %v7981, %v8725
        %v8727 = vand.u32 %v8726, 4294901760
        %v8728 = vsub.f32 %v8726, %v8727
        %v8729 = vand.u32 %v8728, 4294901760
        %8730 = vmatpush1.msra.mxu0 %v8729
        %8731 = vmatprep.subr.mxu0 0.0
        %v8732 = vand.u32 %v7980, 4294901760
        %v8733 = vsub.f32 %v7980, %v8732
        %v8734 = vand.u32 %v8733, 4294901760
        %v8735 = vsub.f32 %v8733, %v8734
        %v8736 = vand.u32 %v8735, 4294901760
        %8737 = vmatpush1.msra.mxu0 %v8736
        %8738 = vmatprep.subr.mxu0 0.0
        %v8739 = vand.u32 %v7979, 4294901760
        %v8740 = vsub.f32 %v7979, %v8739
        %v8741 = vand.u32 %v8740, 4294901760
        %v8742 = vsub.f32 %v8740, %v8741
        %v8743 = vand.u32 %v8742, 4294901760
        %8744 = vmatpush1.msra.mxu0 %v8743
        %8745 = vmatprep.subr.mxu0 0.0
        %v8746 = vand.u32 %v7978, 4294901760
        %v8747 = vsub.f32 %v7978, %v8746
        %v8748 = vand.u32 %v8747, 4294901760
        %v8749 = vsub.f32 %v8747, %v8748
        %v8750 = vand.u32 %v8749, 4294901760
        %8751 = vmatpush1.msra.mxu0 %v8750
        %8752 = vmatprep.subr.mxu0 0.0
        %v8753 = vand.u32 %v7977, 4294901760
        %v8754 = vsub.f32 %v7977, %v8753
        %v8755 = vand.u32 %v8754, 4294901760
        %v8756 = vsub.f32 %v8754, %v8755
        %v8757 = vand.u32 %v8756, 4294901760
        %8758 = vmatpush1.msra.mxu0 %v8757
        %8759 = vmatprep.subr.mxu0 0.0
        %v8760 = vand.u32 %v7976, 4294901760
        %v8761 = vsub.f32 %v7976, %v8760
        %v8762 = vand.u32 %v8761, 4294901760
        %v8763 = vsub.f32 %v8761, %v8762
        %v8764 = vand.u32 %v8763, 4294901760
        %8765 = vmatpush1.msra.mxu0 %v8764
        %8766 = vmatprep.subr.mxu0 0.0
        %v8767 = vand.u32 %v7975, 4294901760
        %v8768 = vsub.f32 %v7975, %v8767
        %v8769 = vand.u32 %v8768, 4294901760
        %v8770 = vsub.f32 %v8768, %v8769
        %v8771 = vand.u32 %v8770, 4294901760
        %8772 = vmatpush1.msra.mxu0 %v8771
        %8773 = vmatprep.subr.mxu0 0.0
        %v8774 = vand.u32 %v7974, 4294901760
        %v8775 = vsub.f32 %v7974, %v8774
        %v8776 = vand.u32 %v8775, 4294901760
        %v8777 = vsub.f32 %v8775, %v8776
        %v8778 = vand.u32 %v8777, 4294901760
        %8779 = vmatpush1.msra.mxu0 %v8778
        %8780 = vmatprep.subr.mxu0 0.0
        %v8781 = vand.u32 %v7973, 4294901760
        %v8782 = vsub.f32 %v7973, %v8781
        %v8783 = vand.u32 %v8782, 4294901760
        %v8784 = vsub.f32 %v8782, %v8783
        %v8785 = vand.u32 %v8784, 4294901760
        %8786 = vmatpush1.msra.mxu0 %v8785
        %8787 = vmatprep.subr.mxu0 0.0
        %8788 = vmatpush2.msra.mxu0 0.0
        %8789 = vmatprep.subr.mxu0 0.0
        %8790 = vmatpush2.msra.mxu0 0.0
        %8791 = vmatprep.subr.mxu0 0.0
        %8792 = vmatpush2.msra.mxu0 0.0
        %8793 = vmatprep.subr.mxu0 0.0
        %8794 = vmatpush2.msra.mxu0 0.0
        %8795 = vmatprep.subr.mxu0 0.0
        %8796 = vmatpush2.msra.mxu0 0.0
        %8797 = vmatprep.subr.mxu0 0.0
        %8798 = vmatpush2.msra.mxu0 0.0
        %8799 = vmatprep.subr.mxu0 0.0
        %8800 = vmatpush2.msra.mxu0 0.0
        %8801 = vmatprep.subr.mxu0 0.0
        %8802 = vmatpush2.msra.mxu0 0.0
        %8803 = vmatprep.subr.mxu0 0.0
        %8804 = vmatpush2.msra.mxu0 0.0
        %8805 = vmatprep.subr.mxu0 0.0
        %8806 = vmatpush2.msra.mxu0 0.0
        %8807 = vmatprep.subr.mxu0 0.0
        %8808 = vmatpush2.msra.mxu0 0.0
        %8809 = vmatprep.subr.mxu0 0.0
        %8810 = vmatpush2.msra.mxu0 0.0
        %8811 = vmatprep.subr.mxu0 0.0
        %8812 = vmatpush2.msra.mxu0 0.0
        %8813 = vmatprep.subr.mxu0 0.0
        %8814 = vmatpush2.msra.mxu0 0.0
        %8815 = vmatprep.subr.mxu0 0.0
        %8816 = vmatpush2.msra.mxu0 0.0
        %8817 = vmatprep.subr.mxu0 0.0
        %8818 = vmatpush2.msra.mxu0 0.0
        %8819 = vmatprep.mubr.f32.mxu0 0.0
        %v8820 = vand.u32 %v8606, 4294901760
        %8821 = vmatmul.mubr.f32.gmra.mxu0 %v8820
        %v8822 = vpop.f32.mrf.mxu0
        %v8823 = vadd.f32 %v8692, %v8822
        %v8824 = vpop.f32.mrf.mxu0
        %8825 = vdwg.mxu0
        %8826 = vmatprep.subr.mxu0 0.0
        %8827 = vmatpush1.msra.mxu0 0.0
        %8828 = vmatprep.subr.mxu0 0.0
        %8829 = vmatpush1.msra.mxu0 0.0
        %8830 = vmatprep.subr.mxu0 0.0
        %8831 = vmatpush1.msra.mxu0 0.0
        %8832 = vmatprep.subr.mxu0 0.0
        %8833 = vmatpush1.msra.mxu0 0.0
        %8834 = vmatprep.subr.mxu0 0.0
        %v8835 = vand.u32 %v7984, 4294901760
        %v8836 = vsub.f32 %v7984, %v8835
        %8837 = vmatpush1.msra.mxu0 %v8836
        %8838 = vmatprep.subr.mxu0 0.0
        %v8839 = vand.u32 %v7983, 4294901760
        %v8840 = vsub.f32 %v7983, %v8839
        %8841 = vmatpush1.msra.mxu0 %v8840
        %8842 = vmatprep.subr.mxu0 0.0
        %v8843 = vand.u32 %v7982, 4294901760
        %v8844 = vsub.f32 %v7982, %v8843
        %8845 = vmatpush1.msra.mxu0 %v8844
        %8846 = vmatprep.subr.mxu0 0.0
        %v8847 = vand.u32 %v7981, 4294901760
        %v8848 = vsub.f32 %v7981, %v8847
        %8849 = vmatpush1.msra.mxu0 %v8848
        %8850 = vmatprep.subr.mxu0 0.0
        %v8851 = vand.u32 %v7980, 4294901760
        %v8852 = vsub.f32 %v7980, %v8851
        %8853 = vmatpush1.msra.mxu0 %v8852
        %8854 = vmatprep.subr.mxu0 0.0
        %v8855 = vand.u32 %v7979, 4294901760
        %v8856 = vsub.f32 %v7979, %v8855
        %8857 = vmatpush1.msra.mxu0 %v8856
        %8858 = vmatprep.subr.mxu0 0.0
        %v8859 = vand.u32 %v7978, 4294901760
        %v8860 = vsub.f32 %v7978, %v8859
        %8861 = vmatpush1.msra.mxu0 %v8860
        %8862 = vmatprep.subr.mxu0 0.0
        %v8863 = vand.u32 %v7977, 4294901760
        %v8864 = vsub.f32 %v7977, %v8863
        %8865 = vmatpush1.msra.mxu0 %v8864
        %8866 = vmatprep.subr.mxu0 0.0
        %v8867 = vand.u32 %v7976, 4294901760
        %v8868 = vsub.f32 %v7976, %v8867
        %8869 = vmatpush1.msra.mxu0 %v8868
        %8870 = vmatprep.subr.mxu0 0.0
        %v8871 = vand.u32 %v7975, 4294901760
        %v8872 = vsub.f32 %v7975, %v8871
        %8873 = vmatpush1.msra.mxu0 %v8872
        %8874 = vmatprep.subr.mxu0 0.0
        %v8875 = vand.u32 %v7974, 4294901760
        %v8876 = vsub.f32 %v7974, %v8875
        %8877 = vmatpush1.msra.mxu0 %v8876
        %8878 = vmatprep.subr.mxu0 0.0
        %v8879 = vand.u32 %v7973, 4294901760
        %v8880 = vsub.f32 %v7973, %v8879
        %8881 = vmatpush1.msra.mxu0 %v8880
        %8882 = vmatprep.subr.mxu0 0.0
        %8883 = vmatpush2.msra.mxu0 0.0
        %8884 = vmatprep.subr.mxu0 0.0
        %8885 = vmatpush2.msra.mxu0 0.0
        %8886 = vmatprep.subr.mxu0 0.0
        %8887 = vmatpush2.msra.mxu0 0.0
        %8888 = vmatprep.subr.mxu0 0.0
        %8889 = vmatpush2.msra.mxu0 0.0
        %8890 = vmatprep.subr.mxu0 0.0
        %8891 = vmatpush2.msra.mxu0 0.0
        %8892 = vmatprep.subr.mxu0 0.0
        %8893 = vmatpush2.msra.mxu0 0.0
        %8894 = vmatprep.subr.mxu0 0.0
        %8895 = vmatpush2.msra.mxu0 0.0
        %8896 = vmatprep.subr.mxu0 0.0
        %8897 = vmatpush2.msra.mxu0 0.0
        %8898 = vmatprep.subr.mxu0 0.0
        %8899 = vmatpush2.msra.mxu0 0.0
        %8900 = vmatprep.subr.mxu0 0.0
        %8901 = vmatpush2.msra.mxu0 0.0
        %8902 = vmatprep.subr.mxu0 0.0
        %8903 = vmatpush2.msra.mxu0 0.0
        %8904 = vmatprep.subr.mxu0 0.0
        %8905 = vmatpush2.msra.mxu0 0.0
        %8906 = vmatprep.subr.mxu0 0.0
        %8907 = vmatpush2.msra.mxu0 0.0
        %8908 = vmatprep.subr.mxu0 0.0
        %8909 = vmatpush2.msra.mxu0 0.0
        %8910 = vmatprep.subr.mxu0 0.0
        %8911 = vmatpush2.msra.mxu0 0.0
        %8912 = vmatprep.subr.mxu0 0.0
        %8913 = vmatpush2.msra.mxu0 0.0
        %8914 = vmatprep.mubr.f32.mxu0 0.0
        %v8915 = vand.u32 %v8606, 4294901760
        %v8916 = vsub.f32 %v8606, %v8915
        %8917 = vmatmul.mubr.f32.gmra.mxu0 %v8916
        %v8918 = vpop.f32.mrf.mxu0
        %v8919 = vadd.f32 %v8823, %v8918
        %v8920 = vpop.f32.mrf.mxu0
        %8921 = vdwg.mxu0
        %8922 = vmatprep.subr.mxu0 0.0
        %8923 = vmatpush1.msra.mxu0 0.0
        %8924 = vmatprep.subr.mxu0 0.0
        %8925 = vmatpush1.msra.mxu0 0.0
        %8926 = vmatprep.subr.mxu0 0.0
        %8927 = vmatpush1.msra.mxu0 0.0
        %8928 = vmatprep.subr.mxu0 0.0
        %8929 = vmatpush1.msra.mxu0 0.0
        %8930 = vmatprep.subr.mxu0 0.0
        %v8931 = vand.u32 %v7984, 4294901760
        %8932 = vmatpush1.msra.mxu0 %v8931
        %8933 = vmatprep.subr.mxu0 0.0
        %v8934 = vand.u32 %v7983, 4294901760
        %8935 = vmatpush1.msra.mxu0 %v8934
        %8936 = vmatprep.subr.mxu0 0.0
        %v8937 = vand.u32 %v7982, 4294901760
        %8938 = vmatpush1.msra.mxu0 %v8937
        %8939 = vmatprep.subr.mxu0 0.0
        %v8940 = vand.u32 %v7981, 4294901760
        %8941 = vmatpush1.msra.mxu0 %v8940
        %8942 = vmatprep.subr.mxu0 0.0
        %v8943 = vand.u32 %v7980, 4294901760
        %8944 = vmatpush1.msra.mxu0 %v8943
        %8945 = vmatprep.subr.mxu0 0.0
        %v8946 = vand.u32 %v7979, 4294901760
        %8947 = vmatpush1.msra.mxu0 %v8946
        %8948 = vmatprep.subr.mxu0 0.0
        %v8949 = vand.u32 %v7978, 4294901760
        %8950 = vmatpush1.msra.mxu0 %v8949
        %8951 = vmatprep.subr.mxu0 0.0
        %v8952 = vand.u32 %v7977, 4294901760
        %8953 = vmatpush1.msra.mxu0 %v8952
        %8954 = vmatprep.subr.mxu0 0.0
        %v8955 = vand.u32 %v7976, 4294901760
        %8956 = vmatpush1.msra.mxu0 %v8955
        %8957 = vmatprep.subr.mxu0 0.0
        %v8958 = vand.u32 %v7975, 4294901760
        %8959 = vmatpush1.msra.mxu0 %v8958
        %8960 = vmatprep.subr.mxu0 0.0
        %v8961 = vand.u32 %v7974, 4294901760
        %8962 = vmatpush1.msra.mxu0 %v8961
        %8963 = vmatprep.subr.mxu0 0.0
        %v8964 = vand.u32 %v7973, 4294901760
        %8965 = vmatpush1.msra.mxu0 %v8964
        %8966 = vmatprep.subr.mxu0 0.0
        %8967 = vmatpush2.msra.mxu0 0.0
        %8968 = vmatprep.subr.mxu0 0.0
        %8969 = vmatpush2.msra.mxu0 0.0
        %8970 = vmatprep.subr.mxu0 0.0
        %8971 = vmatpush2.msra.mxu0 0.0
        %8972 = vmatprep.subr.mxu0 0.0
        %8973 = vmatpush2.msra.mxu0 0.0
        %8974 = vmatprep.subr.mxu0 0.0
        %8975 = vmatpush2.msra.mxu0 0.0
        %8976 = vmatprep.subr.mxu0 0.0
        %8977 = vmatpush2.msra.mxu0 0.0
        %8978 = vmatprep.subr.mxu0 0.0
        %8979 = vmatpush2.msra.mxu0 0.0
        %8980 = vmatprep.subr.mxu0 0.0
        %8981 = vmatpush2.msra.mxu0 0.0
        %8982 = vmatprep.subr.mxu0 0.0
        %8983 = vmatpush2.msra.mxu0 0.0
        %8984 = vmatprep.subr.mxu0 0.0
        %8985 = vmatpush2.msra.mxu0 0.0
        %8986 = vmatprep.subr.mxu0 0.0
        %8987 = vmatpush2.msra.mxu0 0.0
        %8988 = vmatprep.subr.mxu0 0.0
        %8989 = vmatpush2.msra.mxu0 0.0
        %8990 = vmatprep.subr.mxu0 0.0
        %8991 = vmatpush2.msra.mxu0 0.0
        %8992 = vmatprep.subr.mxu0 0.0
        %8993 = vmatpush2.msra.mxu0 0.0
        %8994 = vmatprep.subr.mxu0 0.0
        %8995 = vmatpush2.msra.mxu0 0.0
        %8996 = vmatprep.subr.mxu0 0.0
        %8997 = vmatpush2.msra.mxu0 0.0
        %8998 = vmatprep.mubr.f32.mxu0 0.0
        %v8999 = vand.u32 %v8606, 4294901760
        %v9000 = vsub.f32 %v8606, %v8999
        %v9001 = vand.u32 %v9000, 4294901760
        %9002 = vmatmul.mubr.f32.gmra.mxu0 %v9001
        %v9003 = vpop.f32.mrf.mxu0
        %v9004 = vadd.f32 %v8919, %v9003
        %v9005 = vpop.f32.mrf.mxu0
        %9006 = vdwg.mxu0
        %9007 = vmatprep.subr.mxu0 0.0
        %9008 = vmatpush1.msra.mxu0 0.0
        %9009 = vmatprep.subr.mxu0 0.0
        %9010 = vmatpush1.msra.mxu0 0.0
        %9011 = vmatprep.subr.mxu0 0.0
        %9012 = vmatpush1.msra.mxu0 0.0
        %9013 = vmatprep.subr.mxu0 0.0
        %9014 = vmatpush1.msra.mxu0 0.0
        %9015 = vmatprep.subr.mxu0 0.0
        %v9016 = vand.u32 %v7984, 4294901760
        %v9017 = vsub.f32 %v7984, %v9016
        %v9018 = vand.u32 %v9017, 4294901760
        %9019 = vmatpush1.msra.mxu0 %v9018
        %9020 = vmatprep.subr.mxu0 0.0
        %v9021 = vand.u32 %v7983, 4294901760
        %v9022 = vsub.f32 %v7983, %v9021
        %v9023 = vand.u32 %v9022, 4294901760
        %9024 = vmatpush1.msra.mxu0 %v9023
        %9025 = vmatprep.subr.mxu0 0.0
        %v9026 = vand.u32 %v7982, 4294901760
        %v9027 = vsub.f32 %v7982, %v9026
        %v9028 = vand.u32 %v9027, 4294901760
        %9029 = vmatpush1.msra.mxu0 %v9028
        %9030 = vmatprep.subr.mxu0 0.0
        %v9031 = vand.u32 %v7981, 4294901760
        %v9032 = vsub.f32 %v7981, %v9031
        %v9033 = vand.u32 %v9032, 4294901760
        %9034 = vmatpush1.msra.mxu0 %v9033
        %9035 = vmatprep.subr.mxu0 0.0
        %v9036 = vand.u32 %v7980, 4294901760
        %v9037 = vsub.f32 %v7980, %v9036
        %v9038 = vand.u32 %v9037, 4294901760
        %9039 = vmatpush1.msra.mxu0 %v9038
        %9040 = vmatprep.subr.mxu0 0.0
        %v9041 = vand.u32 %v7979, 4294901760
        %v9042 = vsub.f32 %v7979, %v9041
        %v9043 = vand.u32 %v9042, 4294901760
        %9044 = vmatpush1.msra.mxu0 %v9043
        %9045 = vmatprep.subr.mxu0 0.0
        %v9046 = vand.u32 %v7978, 4294901760
        %v9047 = vsub.f32 %v7978, %v9046
        %v9048 = vand.u32 %v9047, 4294901760
        %9049 = vmatpush1.msra.mxu0 %v9048
        %9050 = vmatprep.subr.mxu0 0.0
        %v9051 = vand.u32 %v7977, 4294901760
        %v9052 = vsub.f32 %v7977, %v9051
        %v9053 = vand.u32 %v9052, 4294901760
        %9054 = vmatpush1.msra.mxu0 %v9053
        %9055 = vmatprep.subr.mxu0 0.0
        %v9056 = vand.u32 %v7976, 4294901760
        %v9057 = vsub.f32 %v7976, %v9056
        %v9058 = vand.u32 %v9057, 4294901760
        %9059 = vmatpush1.msra.mxu0 %v9058
        %9060 = vmatprep.subr.mxu0 0.0
        %v9061 = vand.u32 %v7975, 4294901760
        %v9062 = vsub.f32 %v7975, %v9061
        %v9063 = vand.u32 %v9062, 4294901760
        %9064 = vmatpush1.msra.mxu0 %v9063
        %9065 = vmatprep.subr.mxu0 0.0
        %v9066 = vand.u32 %v7974, 4294901760
        %v9067 = vsub.f32 %v7974, %v9066
        %v9068 = vand.u32 %v9067, 4294901760
        %9069 = vmatpush1.msra.mxu0 %v9068
        %9070 = vmatprep.subr.mxu0 0.0
        %v9071 = vand.u32 %v7973, 4294901760
        %v9072 = vsub.f32 %v7973, %v9071
        %v9073 = vand.u32 %v9072, 4294901760
        %9074 = vmatpush1.msra.mxu0 %v9073
        %9075 = vmatprep.subr.mxu0 0.0
        %9076 = vmatpush2.msra.mxu0 0.0
        %9077 = vmatprep.subr.mxu0 0.0
        %9078 = vmatpush2.msra.mxu0 0.0
        %9079 = vmatprep.subr.mxu0 0.0
        %9080 = vmatpush2.msra.mxu0 0.0
        %9081 = vmatprep.subr.mxu0 0.0
        %9082 = vmatpush2.msra.mxu0 0.0
        %9083 = vmatprep.subr.mxu0 0.0
        %9084 = vmatpush2.msra.mxu0 0.0
        %9085 = vmatprep.subr.mxu0 0.0
        %9086 = vmatpush2.msra.mxu0 0.0
        %9087 = vmatprep.subr.mxu0 0.0
        %9088 = vmatpush2.msra.mxu0 0.0
        %9089 = vmatprep.subr.mxu0 0.0
        %9090 = vmatpush2.msra.mxu0 0.0
        %9091 = vmatprep.subr.mxu0 0.0
        %9092 = vmatpush2.msra.mxu0 0.0
        %9093 = vmatprep.subr.mxu0 0.0
        %9094 = vmatpush2.msra.mxu0 0.0
        %9095 = vmatprep.subr.mxu0 0.0
        %9096 = vmatpush2.msra.mxu0 0.0
        %9097 = vmatprep.subr.mxu0 0.0
        %9098 = vmatpush2.msra.mxu0 0.0
        %9099 = vmatprep.subr.mxu0 0.0
        %9100 = vmatpush2.msra.mxu0 0.0
        %9101 = vmatprep.subr.mxu0 0.0
        %9102 = vmatpush2.msra.mxu0 0.0
        %9103 = vmatprep.subr.mxu0 0.0
        %9104 = vmatpush2.msra.mxu0 0.0
        %9105 = vmatprep.subr.mxu0 0.0
        %9106 = vmatpush2.msra.mxu0 0.0
        %9107 = vmatprep.mubr.f32.mxu0 0.0
        %v9108 = vand.u32 %v8606, 4294901760
        %9109 = vmatmul.mubr.f32.gmra.mxu0 %v9108
        %v9110 = vpop.f32.mrf.mxu0
        %v9111 = vadd.f32 %v9004, %v9110
        %v9112 = vpop.f32.mrf.mxu0
        %9113 = vdwg.mxu0
        %9114 = vmatprep.subr.mxu0 0.0
        %9115 = vmatpush1.msra.mxu0 0.0
        %9116 = vmatprep.subr.mxu0 0.0
        %9117 = vmatpush1.msra.mxu0 0.0
        %9118 = vmatprep.subr.mxu0 0.0
        %9119 = vmatpush1.msra.mxu0 0.0
        %9120 = vmatprep.subr.mxu0 0.0
        %9121 = vmatpush1.msra.mxu0 0.0
        %9122 = vmatprep.subr.mxu0 0.0
        %v9123 = vand.u32 %v7984, 4294901760
        %9124 = vmatpush1.msra.mxu0 %v9123
        %9125 = vmatprep.subr.mxu0 0.0
        %v9126 = vand.u32 %v7983, 4294901760
        %9127 = vmatpush1.msra.mxu0 %v9126
        %9128 = vmatprep.subr.mxu0 0.0
        %v9129 = vand.u32 %v7982, 4294901760
        %9130 = vmatpush1.msra.mxu0 %v9129
        %9131 = vmatprep.subr.mxu0 0.0
        %v9132 = vand.u32 %v7981, 4294901760
        %9133 = vmatpush1.msra.mxu0 %v9132
        %9134 = vmatprep.subr.mxu0 0.0
        %v9135 = vand.u32 %v7980, 4294901760
        %9136 = vmatpush1.msra.mxu0 %v9135
        %9137 = vmatprep.subr.mxu0 0.0
        %v9138 = vand.u32 %v7979, 4294901760
        %9139 = vmatpush1.msra.mxu0 %v9138
        %9140 = vmatprep.subr.mxu0 0.0
        %v9141 = vand.u32 %v7978, 4294901760
        %9142 = vmatpush1.msra.mxu0 %v9141
        %9143 = vmatprep.subr.mxu0 0.0
        %v9144 = vand.u32 %v7977, 4294901760
        %9145 = vmatpush1.msra.mxu0 %v9144
        %9146 = vmatprep.subr.mxu0 0.0
        %v9147 = vand.u32 %v7976, 4294901760
        %9148 = vmatpush1.msra.mxu0 %v9147
        %9149 = vmatprep.subr.mxu0 0.0
        %v9150 = vand.u32 %v7975, 4294901760
        %9151 = vmatpush1.msra.mxu0 %v9150
        %9152 = vmatprep.subr.mxu0 0.0
        %v9153 = vand.u32 %v7974, 4294901760
        %9154 = vmatpush1.msra.mxu0 %v9153
        %9155 = vmatprep.subr.mxu0 0.0
        %v9156 = vand.u32 %v7973, 4294901760
        %9157 = vmatpush1.msra.mxu0 %v9156
        %9158 = vmatprep.subr.mxu0 0.0
        %9159 = vmatpush2.msra.mxu0 0.0
        %9160 = vmatprep.subr.mxu0 0.0
        %9161 = vmatpush2.msra.mxu0 0.0
        %9162 = vmatprep.subr.mxu0 0.0
        %9163 = vmatpush2.msra.mxu0 0.0
        %9164 = vmatprep.subr.mxu0 0.0
        %9165 = vmatpush2.msra.mxu0 0.0
        %9166 = vmatprep.subr.mxu0 0.0
        %9167 = vmatpush2.msra.mxu0 0.0
        %9168 = vmatprep.subr.mxu0 0.0
        %9169 = vmatpush2.msra.mxu0 0.0
        %9170 = vmatprep.subr.mxu0 0.0
        %9171 = vmatpush2.msra.mxu0 0.0
        %9172 = vmatprep.subr.mxu0 0.0
        %9173 = vmatpush2.msra.mxu0 0.0
        %9174 = vmatprep.subr.mxu0 0.0
        %9175 = vmatpush2.msra.mxu0 0.0
        %9176 = vmatprep.subr.mxu0 0.0
        %9177 = vmatpush2.msra.mxu0 0.0
        %9178 = vmatprep.subr.mxu0 0.0
        %9179 = vmatpush2.msra.mxu0 0.0
        %9180 = vmatprep.subr.mxu0 0.0
        %9181 = vmatpush2.msra.mxu0 0.0
        %9182 = vmatprep.subr.mxu0 0.0
        %9183 = vmatpush2.msra.mxu0 0.0
        %9184 = vmatprep.subr.mxu0 0.0
        %9185 = vmatpush2.msra.mxu0 0.0
        %9186 = vmatprep.subr.mxu0 0.0
        %9187 = vmatpush2.msra.mxu0 0.0
        %9188 = vmatprep.subr.mxu0 0.0
        %9189 = vmatpush2.msra.mxu0 0.0
        %9190 = vmatprep.mubr.f32.mxu0 0.0
        %v9191 = vand.u32 %v8606, 4294901760
        %9192 = vmatmul.mubr.f32.gmra.mxu0 %v9191
        %v9193 = vpop.f32.mrf.mxu0
        %v9194 = vadd.f32 %v9111, %v9193
        %v9195 = vpop.f32.mrf.mxu0
        %9196 = vdwg.mxu0
        %9197 = vst.msk [vmem:[%s134] sm:$0xff] %vm171, %v8592
        %s9198 = scalar_lea.vmem %s134, 8 [#allocation3]
        %9199 = vst.msk [vmem:[%s9198] sm:$0xff] %vm171, %v9194
        %s9200 = sand.u32 %s71, 1
        %s9201 = scalar_lea.sflag [#allocation4], %s9200
        %s9202 = sand.u32 %s71, 1
        %s9203 = smul.addr %s9202, 16
        %s9204 = scalar_lea.vmem [#allocation3], %s9203
        // Predicated region
        $region29: #{tpu_custom_call.1} parent=27 // pred_check
          %p9205 = pneg %p81
        $region30: #{tpu_custom_call.1} parent=27 // pred_check_branch
          %9207 = sbr.rel (%p9205) target = $region32
        $region31: #{tpu_custom_call.1} parent=27 // pred_region
          %s9209 = ssub.s32 256, 256
          %9210 = vsyncadd %s9201, %s9209
          %s9211 = smul.addr %s16, 128
          %s9212 = scalar_lea.hbm %s2, %s9211
          %s9213 = sshll.u32 %s9204, 4
          %s9214 = int_to_ptr.vmem [resolvable:$true] %s9213
          %9219 = dma.vmem_to_hbm [thread:$0]  %s9214, 256, %s9212, %s9201, 128, 256, 8
        $region32: #{tpu_custom_call.1} parent=27 // pred_fallthru
          _
      $region28: #{tpu_custom_call.1} parent=5 // pred_fallthru
        _
      %p9220 = scmp.le.s32.totalorder 2, %s11
      // Predicated region
      $region33: #{tpu_custom_call.1} parent=5 // pred_check
        %p9221 = pneg %p9220
      $region34: #{tpu_custom_call.1} parent=5 // pred_check_branch
        %9223 = sbr.rel (%p9221) target = $region36
      $region35: #{tpu_custom_call.1} parent=5 // pred_region
        %s9224 = ssub.s32 %s11, 2
        // Predicated region
        $region37: #{tpu_custom_call.1} parent=35 // pred_check
          %p9225 = pneg %p87
        $region38: #{tpu_custom_call.1} parent=35 // pred_check_branch
          %9227 = sbr.rel (%p9225) target = $region40
        $region39: #{tpu_custom_call.1} parent=35 // pred_region
          %s9228 = sand.u32 %s72, 1
          %s9229 = scalar_lea.sflag [#allocation4], %s9228
          %s9230 = sand.u32 %s72, 1
          %s9231 = smul.addr %s9230, 16
          %s9232 = scalar_lea.vmem [#allocation3], %s9231
          %9233 = dma.done %s9229, 256
        $region40: #{tpu_custom_call.1} parent=35 // pred_fallthru
          _
      $region36: #{tpu_custom_call.1} parent=5 // pred_fallthru
        _
    $region6: #{tpu_custom_call.1} parent=1 // loop_footer
      %s15 = sadd.s32 1, %s11
    $region7: #{tpu_custom_call.1} parent=1 // loop_footer_branch
      %10 = sbr.rel target = $region3
    $region8: #{tpu_custom_call.1} parent=1 // loop_exit
      _
    %9234 = vsyncpa [#allocation4], 1
    %s9235 = scalar_lea.sflag [#allocation4], 1
    %9236 = vsyncpa %s9235, 1

</llo_original>
